<compile_context>
chip_gen: v7x
topology: tpu7x:2x2x1
jax: 0.10.0
libtpu: 0.0.40
codegen_flags: <defaults>
</compile_context>

<pallas_src>
from functools import partial

import numpy as np
import jax
import jax.numpy as jnp
from jax.experimental import pallas as pl
from jax.experimental.pallas import tpu as pltpu


def _make_relative_position_index(window_size):
    """Replicates the relative_position_index buffer from the PyTorch module."""
    wh, ww = window_size
    coords = np.stack(np.meshgrid(np.arange(wh), np.arange(ww), indexing="ij"))  # (2, wh, ww)
    coords_flatten = coords.reshape(2, -1)                                       # (2, N)
    relative_coords = coords_flatten[:, :, None] - coords_flatten[:, None, :]    # (2, N, N)
    relative_coords = relative_coords.transpose(1, 2, 0).copy()                  # (N, N, 2)
    relative_coords[:, :, 0] += wh - 1
    relative_coords[:, :, 1] += ww - 1
    relative_coords[:, :, 0] *= 2 * ww - 1
    return relative_coords.sum(-1)                                               # (N, N)


def prepare_params(w_qkv, b_qkv, w_proj, b_proj, rel_pos_table, window_size, num_heads, n_pad):
    """One-time parameter prep (NOT per-call): scale fold, per-head proj split, bias gather+pad."""
    C = w_qkv.shape[0]
    H = num_heads
    hd = C // H
    scale = hd ** (-0.5)
    N = window_size[0] * window_size[1]

    # Fold the softmax scale into the Q columns of the QKV projection (free at runtime;
    # done here rather than inside the jitted wrapper so the weight is not re-materialized
    # on every call).
    w_qkv_s = w_qkv.at[:, :C].multiply(scale)
    b_qkv_s = b_qkv.at[:, :C].multiply(scale)

    # Output projection pre-split per head so the head-concat can be folded into it.
    w_proj_h = w_proj.reshape(H, hd, C)                                          # (H, hd, C)

    # Relative position bias gather -> (H, N, N); pad to (H, Np, Np) with -1e9 so padded
    # key columns are masked out of the softmax (padded query rows are dropped wrapper-side).
    rel_idx = _make_relative_position_index(window_size)                         # (N, N) numpy
    bias = rel_pos_table[rel_idx.reshape(-1)].reshape(N, N, H)
    bias = jnp.transpose(bias, (2, 0, 1))                                        # (H, N, N)
    bias = jnp.pad(bias, ((0, 0), (0, n_pad - N), (0, n_pad - N)), constant_values=-1e9)
    bias = bias.reshape(H, 1, n_pad, n_pad)                                      # broadcast over B
    return w_qkv_s, b_qkv_s, w_proj_h, b_proj, bias


def _make_kernel(B, Np, H):
    """Kernel body closed over the static window count, padded tokens and head count."""

    def kernel(x_ref, wqkv_ref, bqkv_ref, wproj_ref, bproj_ref, bias_ref, o_ref):
        T, C = x_ref.shape                        # T = B * Np padded tokens
        hd = C // H
        f32, bf16 = jnp.float32, jnp.bfloat16

        # ---- fused QKV projection: ONE 2-D MXU push over all padded tokens ----
        qkv = jnp.dot(x_ref[...].astype(bf16), wqkv_ref[...].astype(bf16),
                      preferred_element_type=f32)
        qkv = qkv + bqkv_ref[...]                 # (T, 3C), scale already folded into Q part

        # ---- head split into a (H*B, Np, hd) head-major batch.
        # Only lane slices + layout-preserving reshapes + leading-axis concat are used
        # (no sublane<->batch transpose), so every relayout is in Mosaic's supported set.
        def heads(s):                             # s: 0=Q, 1=K, 2=V
            parts = [
                qkv[:, (s * H + h) * hd:(s * H + h + 1) * hd].reshape(B, Np, hd)
                for h in range(H)
            ]
            return jnp.concatenate(parts, axis=0)  # (H*B, Np, hd), head-major batch

        q, k, v = heads(0), heads(1), heads(2)

        # ---- attention scores: a single batched MXU stream over all windows*heads ----
        s = jnp.einsum("znd,zmd->znm", q.astype(bf16), k.astype(bf16),
                       preferred_element_type=f32)                       # (H*B, Np, Np)
        # Add relative position bias (with -1e9 on padded key columns) via a free
        # leading-dim reshape + broadcast.
        s = (s.reshape(H, B, Np, Np) + bias_ref[...]).reshape(H * B, Np, Np)

        # ---- numerically-stable softmax in f32; reciprocal goes to the EUP slot ----
        s = s - jnp.max(s, axis=-1, keepdims=True)
        p = jnp.exp(s)
        p = p * pl.reciprocal(jnp.sum(p, axis=-1, keepdims=True), approx=True)

        # TODO(synk): attn_drop / proj_drop are identity at rate 0.0 (eval mode); dropout omitted.

        # ---- P @ V, batched over windows*heads ----
        ctx = jnp.einsum("znm,zmd->znd", p.astype(bf16), v.astype(bf16),
                         preferred_element_type=f32)                     # (H*B, Np, hd)

        # ---- output projection with the head concat folded in:
        #      out = sum_h ctx_h @ W_proj[h], accumulated in registers (no scratch,
        #      no width-4 masked scatter stores).
        wp = wproj_ref[...]                                              # (H, hd, C)
        out = None
        for h in range(H):
            ctx_h = ctx[h * B:(h + 1) * B].reshape(T, hd)                # (T, hd)
            contrib = jnp.dot(ctx_h.astype(bf16), wp[h].astype(bf16),
                              preferred_element_type=f32)                # (T, C)
            out = contrib if out is None else out + contrib
        out = out + bproj_ref[...]
        o_ref[...] = out.astype(o_ref.dtype)

    return kernel


@partial(jax.jit, static_argnames=("num_heads",))
def window_attention_pallas(x, w_qkv_s, b_qkv_s, w_proj_h, b_proj, bias, num_heads):
    """
    x:        (B, N, C)        float32
    w_qkv_s:  (C, 3C)          float32  (scale pre-folded into Q columns)
    b_qkv_s:  (1, 3C)          float32
    w_proj_h: (H, hd, C)       float32  (output projection pre-split per head)
    b_proj:   (1, C)           float32
    bias:     (H, 1, Np, Np)   float32  (rel-pos bias, -1e9 on padded key columns)
    """
    B, N, C = x.shape
    Np = bias.shape[-1]

    # Pad the token axis to the 8-sublane tiling and flatten windows*tokens wrapper-side
    # (cheap XLA layout ops) so all in-kernel reshapes are layout-preserving and the
    # projections are single lane-denser 2-D matmuls with M = B*Np rows.
    x_p = jnp.pad(x, ((0, 0), (0, Np - N), (0, 0))).reshape(B * Np, C)

    vmem = pltpu.MemorySpace.VMEM
    out = pl.pallas_call(
        _make_kernel(B, Np, num_heads),
        out_shape=jax.ShapeDtypeStruct((B * Np, C), x.dtype),
        in_specs=[pl.BlockSpec(memory_space=vmem)] * 6,   # everything VMEM-resident, no grid
        out_specs=pl.BlockSpec(memory_space=vmem),
    )(x_p, w_qkv_s, b_qkv_s, w_proj_h, b_proj, bias)

    # Drop the padded query rows wrapper-side.
    return out.reshape(B, Np, C)[:, :N, :]


def window_attention_reference(x, w_qkv, b_qkv, w_proj, b_proj, rel_pos_bias, num_heads):
    """Pure-JAX reference mirroring the PyTorch forward (raw, unscaled weights)."""
    B, N, C = x.shape
    H = num_heads
    hd = C // H
    scale = hd ** (-0.5)

    qkv = x @ w_qkv + b_qkv[0]                                     # (B, N, 3C)
    qkv = qkv.reshape(B, N, 3, H, hd).transpose(2, 0, 3, 1, 4)     # (3, B, H, N, hd)
    q, k, v = qkv[0], qkv[1], qkv[2]
    attn = jnp.einsum("bhnd,bhmd->bhnm", q, k) * scale
    attn = attn + rel_pos_bias[None]                               # (B, H, N, N)
    attn = jax.nn.softmax(attn, axis=-1)
    out = jnp.einsum("bhnm,bhmd->bhnd", attn, v)
    out = out.transpose(0, 2, 1, 3).reshape(B, N, C)
    return out @ w_proj + b_proj[0]


if __name__ == "__main__":
    # Shapes implied by the module's usage: x = torch.randn(10, 25, 16)
    # => B=10 windows, N=25 tokens (window_size=(5,5)), C=dim=16, num_heads=4.
    B, N, C = 10, 25, 16
    window_size = (5, 5)
    num_heads = 4

    key = jax.random.PRNGKey(0)
    k_x, k_wqkv, k_bqkv, k_wproj, k_bproj, k_table = jax.random.split(key, 6)

    x = jax.random.normal(k_x, (B, N, C), dtype=jnp.float32)

    # Deterministic synthetic parameters (Linear weights stored transposed: (in, out)).
    w_qkv = jax.random.normal(k_wqkv, (C, 3 * C), dtype=jnp.float32) * 0.05
    b_qkv = jax.random.normal(k_bqkv, (1, 3 * C), dtype=jnp.float32) * 0.01
    w_proj = jax.random.normal(k_wproj, (C, C), dtype=jnp.float32) * 0.05
    b_proj = jax.random.normal(k_bproj, (1, C), dtype=jnp.float32) * 0.01

    # Relative position bias table ((2*wh-1)*(2*ww-1), num_heads), ~trunc_normal(std=0.02).
    table_rows = (2 * window_size[0] - 1) * (2 * window_size[1] - 1)
    rel_pos_table = jax.random.normal(k_table, (table_rows, num_heads), dtype=jnp.float32) * 0.02

    # One-time parameter prep (outside the per-call jitted wrapper).
    Np = ((N + 7) // 8) * 8
    params = prepare_params(w_qkv, b_qkv, w_proj, b_proj, rel_pos_table,
                            window_size, num_heads, Np)

    out = window_attention_pallas(x, *params, num_heads=num_heads)
    out = jax.block_until_ready(out)

    # Reference uses the raw (unscaled) parameters and the unpadded bias.
    rel_idx = _make_relative_position_index(window_size)
    rel_pos_bias = rel_pos_table[rel_idx.reshape(-1)].reshape(N, N, num_heads)
    rel_pos_bias = jnp.transpose(rel_pos_bias, (2, 0, 1))          # (H, N, N)
    ref = window_attention_reference(x, w_qkv, b_qkv, w_proj, b_proj, rel_pos_bias, num_heads)
    ref = jax.block_until_ready(ref)

    # Tolerance: bf16 MXU operands (f32 accumulation) + EUP approximate reciprocal in the
    # softmax normalizer; worst-case drift is ~1e-3 absolute at these magnitudes.
    np.testing.assert_allclose(np.asarray(out), np.asarray(ref), rtol=5e-2, atol=5e-3)
    print("KERNEL_OK")
</pallas_src>

<mosaic_0001>
module attributes {stable_mosaic.version = 11 : i64} {
  func.func @kernel(%arg0: memref<320x16xf32, #tpu.memory_space<vmem>>, %arg1: memref<16x48xf32, #tpu.memory_space<vmem>>, %arg2: memref<1x48xf32, #tpu.memory_space<vmem>>, %arg3: memref<4x4x16xf32, #tpu.memory_space<vmem>>, %arg4: memref<1x16xf32, #tpu.memory_space<vmem>>, %arg5: memref<4x1x32x32xf32, #tpu.memory_space<vmem>>, %arg6: memref<320x16xf32, #tpu.memory_space<vmem>>) attributes {dimension_semantics = [], scalar_prefetch = 0 : i64, scratch_operands = 0 : i64, tpu.core_type = #tpu.core_type<tc>} {
    %c0 = arith.constant 0 : index
    %c0_0 = arith.constant 0 : index
    %0 = vector.load %arg0[%c0, %c0_0] : memref<320x16xf32, #tpu.memory_space<vmem>>, vector<320x16xf32>
    %1 = arith.truncf %0 : vector<320x16xf32> to vector<320x16xbf16>
    %c0_1 = arith.constant 0 : index
    %c0_2 = arith.constant 0 : index
    %2 = vector.load %arg1[%c0_1, %c0_2] : memref<16x48xf32, #tpu.memory_space<vmem>>, vector<16x48xf32>
    %3 = arith.truncf %2 : vector<16x48xf32> to vector<16x48xbf16>
    %cst = arith.constant dense<0.000000e+00> : vector<320x48xf32>
    %4 = tpu.matmul %1, %3, %cst {dimension_numbers = #tpu.dot_dimension_numbers<[1], [0], [0], [1], [0, 0, 1, 1], [], []>} : vector<320x16xbf16>, vector<16x48xbf16>, vector<320x48xf32> -> vector<320x48xf32>
    %c0_3 = arith.constant 0 : index
    %c0_4 = arith.constant 0 : index
    %5 = vector.load %arg2[%c0_3, %c0_4] : memref<1x48xf32, #tpu.memory_space<vmem>>, vector<1x48xf32>
    %6 = vector.broadcast %5 : vector<1x48xf32> to vector<320x48xf32>
    %7 = arith.addf %4, %6 : vector<320x48xf32>
    %8 = vector.extract_strided_slice %7 {offsets = [0, 0], sizes = [320, 4], strides = [1, 1]} : vector<320x48xf32> to vector<320x4xf32>
    %9 = vector.shape_cast %8 : vector<320x4xf32> to vector<10x32x4xf32>
    %10 = vector.extract_strided_slice %7 {offsets = [0, 4], sizes = [320, 4], strides = [1, 1]} : vector<320x48xf32> to vector<320x4xf32>
    %11 = vector.shape_cast %10 : vector<320x4xf32> to vector<10x32x4xf32>
    %12 = vector.extract_strided_slice %7 {offsets = [0, 8], sizes = [320, 4], strides = [1, 1]} : vector<320x48xf32> to vector<320x4xf32>
    %13 = vector.shape_cast %12 : vector<320x4xf32> to vector<10x32x4xf32>
    %14 = vector.extract_strided_slice %7 {offsets = [0, 12], sizes = [320, 4], strides = [1, 1]} : vector<320x48xf32> to vector<320x4xf32>
    %15 = vector.shape_cast %14 : vector<320x4xf32> to vector<10x32x4xf32>
    %16 = tpu.concatenate %9, %11, %13, %15 in 0 : vector<10x32x4xf32>, vector<10x32x4xf32>, vector<10x32x4xf32>, vector<10x32x4xf32> -> vector<40x32x4xf32>
    %17 = vector.extract_strided_slice %7 {offsets = [0, 16], sizes = [320, 4], strides = [1, 1]} : vector<320x48xf32> to vector<320x4xf32>
    %18 = vector.shape_cast %17 : vector<320x4xf32> to vector<10x32x4xf32>
    %19 = vector.extract_strided_slice %7 {offsets = [0, 20], sizes = [320, 4], strides = [1, 1]} : vector<320x48xf32> to vector<320x4xf32>
    %20 = vector.shape_cast %19 : vector<320x4xf32> to vector<10x32x4xf32>
    %21 = vector.extract_strided_slice %7 {offsets = [0, 24], sizes = [320, 4], strides = [1, 1]} : vector<320x48xf32> to vector<320x4xf32>
    %22 = vector.shape_cast %21 : vector<320x4xf32> to vector<10x32x4xf32>
    %23 = vector.extract_strided_slice %7 {offsets = [0, 28], sizes = [320, 4], strides = [1, 1]} : vector<320x48xf32> to vector<320x4xf32>
    %24 = vector.shape_cast %23 : vector<320x4xf32> to vector<10x32x4xf32>
    %25 = tpu.concatenate %18, %20, %22, %24 in 0 : vector<10x32x4xf32>, vector<10x32x4xf32>, vector<10x32x4xf32>, vector<10x32x4xf32> -> vector<40x32x4xf32>
    %26 = vector.extract_strided_slice %7 {offsets = [0, 32], sizes = [320, 4], strides = [1, 1]} : vector<320x48xf32> to vector<320x4xf32>
    %27 = vector.shape_cast %26 : vector<320x4xf32> to vector<10x32x4xf32>
    %28 = vector.extract_strided_slice %7 {offsets = [0, 36], sizes = [320, 4], strides = [1, 1]} : vector<320x48xf32> to vector<320x4xf32>
    %29 = vector.shape_cast %28 : vector<320x4xf32> to vector<10x32x4xf32>
    %30 = vector.extract_strided_slice %7 {offsets = [0, 40], sizes = [320, 4], strides = [1, 1]} : vector<320x48xf32> to vector<320x4xf32>
    %31 = vector.shape_cast %30 : vector<320x4xf32> to vector<10x32x4xf32>
    %32 = vector.extract_strided_slice %7 {offsets = [0, 44], sizes = [320, 4], strides = [1, 1]} : vector<320x48xf32> to vector<320x4xf32>
    %33 = vector.shape_cast %32 : vector<320x4xf32> to vector<10x32x4xf32>
    %34 = tpu.concatenate %27, %29, %31, %33 in 0 : vector<10x32x4xf32>, vector<10x32x4xf32>, vector<10x32x4xf32>, vector<10x32x4xf32> -> vector<40x32x4xf32>
    %35 = arith.truncf %16 : vector<40x32x4xf32> to vector<40x32x4xbf16>
    %36 = arith.truncf %25 : vector<40x32x4xf32> to vector<40x32x4xbf16>
    "tpu.trace_start"() <{level = 10 : i32, message = "znd,zmd->znm"}> : () -> ()
    %cst_5 = arith.constant dense<0.000000e+00> : vector<40x32x32xf32>
    %37 = tpu.matmul %35, %36, %cst_5 {dimension_numbers = #tpu.dot_dimension_numbers<[2], [2], [1], [1], [0, 0, 0, 1, 1, 1], [0], [0]>} : vector<40x32x4xbf16>, vector<40x32x4xbf16>, vector<40x32x32xf32> -> vector<40x32x32xf32>
    "tpu.trace_stop"() : () -> ()
    %38 = vector.shape_cast %37 : vector<40x32x32xf32> to vector<4x10x32x32xf32>
    %c0_6 = arith.constant 0 : index
    %c0_7 = arith.constant 0 : index
    %c0_8 = arith.constant 0 : index
    %c0_9 = arith.constant 0 : index
    %39 = vector.load %arg5[%c0_6, %c0_7, %c0_8, %c0_9] : memref<4x1x32x32xf32, #tpu.memory_space<vmem>>, vector<4x1x32x32xf32>
    %40 = vector.broadcast %39 : vector<4x1x32x32xf32> to vector<4x10x32x32xf32>
    %41 = arith.addf %38, %40 : vector<4x10x32x32xf32>
    %42 = vector.shape_cast %41 : vector<4x10x32x32xf32> to vector<40x32x32xf32>
    %cst_10 = arith.constant dense<0xFF800000> : vector<40x32xf32>
    %43 = vector.multi_reduction <maximumf>, %42, %cst_10 [2] : vector<40x32x32xf32> to vector<40x32xf32>
    %44 = vector.shape_cast %43 : vector<40x32xf32> to vector<40x32x1xf32>
    %45 = vector.broadcast %44 : vector<40x32x1xf32> to vector<40x32x32xf32>
    %46 = arith.subf %42, %45 : vector<40x32x32xf32>
    %47 = math.exp %46 : vector<40x32x32xf32>
    %cst_11 = arith.constant dense<0.000000e+00> : vector<40x32xf32>
    %48 = vector.multi_reduction <add>, %47, %cst_11 [2] : vector<40x32x32xf32> to vector<40x32xf32>
    %49 = vector.shape_cast %48 : vector<40x32xf32> to vector<40x32x1xf32>
    %50 = tpu.reciprocal %49 {approx = true} : vector<40x32x1xf32> -> vector<40x32x1xf32>
    %51 = vector.broadcast %50 : vector<40x32x1xf32> to vector<40x32x32xf32>
    %52 = arith.mulf %47, %51 : vector<40x32x32xf32>
    %53 = arith.truncf %52 : vector<40x32x32xf32> to vector<40x32x32xbf16>
    %54 = arith.truncf %34 : vector<40x32x4xf32> to vector<40x32x4xbf16>
    "tpu.trace_start"() <{level = 10 : i32, message = "znm,zmd->znd"}> : () -> ()
    %cst_12 = arith.constant dense<0.000000e+00> : vector<40x32x4xf32>
    %55 = tpu.matmul %53, %54, %cst_12 {dimension_numbers = #tpu.dot_dimension_numbers<[2], [1], [1], [2], [0, 0, 0, 1, 1, 2], [0], [0]>} : vector<40x32x32xbf16>, vector<40x32x4xbf16>, vector<40x32x4xf32> -> vector<40x32x4xf32>
    "tpu.trace_stop"() : () -> ()
    %c0_13 = arith.constant 0 : index
    %c0_14 = arith.constant 0 : index
    %c0_15 = arith.constant 0 : index
    %56 = vector.load %arg3[%c0_13, %c0_14, %c0_15] : memref<4x4x16xf32, #tpu.memory_space<vmem>>, vector<4x4x16xf32>
    %57 = vector.extract_strided_slice %55 {offsets = [0, 0, 0], sizes = [10, 32, 4], strides = [1, 1, 1]} : vector<40x32x4xf32> to vector<10x32x4xf32>
    %58 = vector.shape_cast %57 : vector<10x32x4xf32> to vector<320x4xf32>
    %59 = arith.truncf %58 : vector<320x4xf32> to vector<320x4xbf16>
    %60 = vector.extract_strided_slice %56 {offsets = [0, 0, 0], sizes = [1, 4, 16], strides = [1, 1, 1]} : vector<4x4x16xf32> to vector<1x4x16xf32>
    %61 = vector.shape_cast %60 : vector<1x4x16xf32> to vector<4x16xf32>
    %62 = arith.truncf %61 : vector<4x16xf32> to vector<4x16xbf16>
    %cst_16 = arith.constant dense<0.000000e+00> : vector<320x16xf32>
    %63 = tpu.matmul %59, %62, %cst_16 {dimension_numbers = #tpu.dot_dimension_numbers<[1], [0], [0], [1], [0, 0, 1, 1], [], []>} : vector<320x4xbf16>, vector<4x16xbf16>, vector<320x16xf32> -> vector<320x16xf32>
    %64 = vector.extract_strided_slice %55 {offsets = [10, 0, 0], sizes = [10, 32, 4], strides = [1, 1, 1]} : vector<40x32x4xf32> to vector<10x32x4xf32>
    %65 = vector.shape_cast %64 : vector<10x32x4xf32> to vector<320x4xf32>
    %66 = arith.truncf %65 : vector<320x4xf32> to vector<320x4xbf16>
    %67 = vector.extract_strided_slice %56 {offsets = [1, 0, 0], sizes = [1, 4, 16], strides = [1, 1, 1]} : vector<4x4x16xf32> to vector<1x4x16xf32>
    %68 = vector.shape_cast %67 : vector<1x4x16xf32> to vector<4x16xf32>
    %69 = arith.truncf %68 : vector<4x16xf32> to vector<4x16xbf16>
    %cst_17 = arith.constant dense<0.000000e+00> : vector<320x16xf32>
    %70 = tpu.matmul %66, %69, %cst_17 {dimension_numbers = #tpu.dot_dimension_numbers<[1], [0], [0], [1], [0, 0, 1, 1], [], []>} : vector<320x4xbf16>, vector<4x16xbf16>, vector<320x16xf32> -> vector<320x16xf32>
    %71 = arith.addf %63, %70 : vector<320x16xf32>
    %72 = vector.extract_strided_slice %55 {offsets = [20, 0, 0], sizes = [10, 32, 4], strides = [1, 1, 1]} : vector<40x32x4xf32> to vector<10x32x4xf32>
    %73 = vector.shape_cast %72 : vector<10x32x4xf32> to vector<320x4xf32>
    %74 = arith.truncf %73 : vector<320x4xf32> to vector<320x4xbf16>
    %75 = vector.extract_strided_slice %56 {offsets = [2, 0, 0], sizes = [1, 4, 16], strides = [1, 1, 1]} : vector<4x4x16xf32> to vector<1x4x16xf32>
    %76 = vector.shape_cast %75 : vector<1x4x16xf32> to vector<4x16xf32>
    %77 = arith.truncf %76 : vector<4x16xf32> to vector<4x16xbf16>
    %cst_18 = arith.constant dense<0.000000e+00> : vector<320x16xf32>
    %78 = tpu.matmul %74, %77, %cst_18 {dimension_numbers = #tpu.dot_dimension_numbers<[1], [0], [0], [1], [0, 0, 1, 1], [], []>} : vector<320x4xbf16>, vector<4x16xbf16>, vector<320x16xf32> -> vector<320x16xf32>
    %79 = arith.addf %71, %78 : vector<320x16xf32>
    %80 = vector.extract_strided_slice %55 {offsets = [30, 0, 0], sizes = [10, 32, 4], strides = [1, 1, 1]} : vector<40x32x4xf32> to vector<10x32x4xf32>
    %81 = vector.shape_cast %80 : vector<10x32x4xf32> to vector<320x4xf32>
    %82 = arith.truncf %81 : vector<320x4xf32> to vector<320x4xbf16>
    %83 = vector.extract_strided_slice %56 {offsets = [3, 0, 0], sizes = [1, 4, 16], strides = [1, 1, 1]} : vector<4x4x16xf32> to vector<1x4x16xf32>
    %84 = vector.shape_cast %83 : vector<1x4x16xf32> to vector<4x16xf32>
    %85 = arith.truncf %84 : vector<4x16xf32> to vector<4x16xbf16>
    %cst_19 = arith.constant dense<0.000000e+00> : vector<320x16xf32>
    %86 = tpu.matmul %82, %85, %cst_19 {dimension_numbers = #tpu.dot_dimension_numbers<[1], [0], [0], [1], [0, 0, 1, 1], [], []>} : vector<320x4xbf16>, vector<4x16xbf16>, vector<320x16xf32> -> vector<320x16xf32>
    %87 = arith.addf %79, %86 : vector<320x16xf32>
    %c0_20 = arith.constant 0 : index
    %c0_21 = arith.constant 0 : index
    %88 = vector.load %arg4[%c0_20, %c0_21] : memref<1x16xf32, #tpu.memory_space<vmem>>, vector<1x16xf32>
    %89 = vector.broadcast %88 : vector<1x16xf32> to vector<320x16xf32>
    %90 = arith.addf %87, %89 : vector<320x16xf32>
    %c0_22 = arith.constant 0 : index
    %c0_23 = arith.constant 0 : index
    %91 = vector.load %arg6[%c0_22, %c0_23] : memref<320x16xf32, #tpu.memory_space<vmem>>, vector<320x16xf32>
    tpu.vector_store %arg6[%c0_22, %c0_23], %90 {strides = array<i32>} : memref<320x16xf32, #tpu.memory_space<vmem>>, vector<320x16xf32>,
    return
  }
}

</mosaic_0001>

<llo_original>
// kernel: window_attention_pallas.1
$region0: #{window_attention_pallas.1}
  #allocation0 [shape = 'u32[]', space=smem, size = 0x4, offset = 0x4, fixed_abs, tag = 'smem constant byte address 0x4 - core index']
  #allocation1 [shape = 'u32[144,128]{1,0:T(1,128)}', space=vmem, size = 0x12000, scoped, tag = 'internal scratch']
  %s0 = inlined_call_operand.vmem [shape: f32[320,16], index: 0, kind: input, shape index: {}]
  %s1 = inlined_call_operand.vmem [shape: f32[16,48], index: 1, kind: input, shape index: {}]
  %s2 = inlined_call_operand.vmem [shape: f32[1,48], index: 2, kind: input, shape index: {}]
  %s3 = inlined_call_operand.vmem [shape: f32[4,4,16], index: 3, kind: input, shape index: {}]
  %s4 = inlined_call_operand.vmem [shape: f32[1,16], index: 4, kind: input, shape index: {}]
  %s5 = inlined_call_operand.vmem [shape: f32[4,1,32,32], index: 5, kind: input, shape index: {}]
  %s6 = inlined_call_operand.vmem [shape: f32[320,16], index: 6, kind: output, shape index: {}]
  %s7 = sld [smem:[#allocation0]]
  $region34: #{window_attention_pallas.1} parent=0
    _
  %s9 = ssub.s32 1, %s7
  %s10 = scalar_select 0, %s9, %s7
  // Predicated region
  $region2: #{window_attention_pallas.1} parent=0 // pred_check
    _
  $region3: #{window_attention_pallas.1} parent=0 // pred_check_branch
    %12 = sbr.rel (0) target = $region5
  $region4: #{window_attention_pallas.1} parent=0 // pred_region
    _
  $region5: #{window_attention_pallas.1} parent=0 // pred_fallthru
    _
  // Predicated region
  $region6: #{window_attention_pallas.1} parent=0 // pred_check
    _
  $region7: #{window_attention_pallas.1} parent=0 // pred_check_branch
    %14 = sbr.rel (0) target = $region9
  $region8: #{window_attention_pallas.1} parent=0 // pred_region
    _
  $region9: #{window_attention_pallas.1} parent=0 // pred_fallthru
    _
  // Predicated region
  $region10: #{window_attention_pallas.1} parent=0 // pred_check
    _
  $region11: #{window_attention_pallas.1} parent=0 // pred_check_branch
    %16 = sbr.rel (0) target = $region13
  $region12: #{window_attention_pallas.1} parent=0 // pred_region
    _
  $region13: #{window_attention_pallas.1} parent=0 // pred_fallthru
    _
  // Predicated region
  $region14: #{window_attention_pallas.1} parent=0 // pred_check
    _
  $region15: #{window_attention_pallas.1} parent=0 // pred_check_branch
    %18 = sbr.rel (0) target = $region17
  $region16: #{window_attention_pallas.1} parent=0 // pred_region
    _
  $region17: #{window_attention_pallas.1} parent=0 // pred_fallthru
    _
  // Predicated region
  $region18: #{window_attention_pallas.1} parent=0 // pred_check
    _
  $region19: #{window_attention_pallas.1} parent=0 // pred_check_branch
    %20 = sbr.rel (0) target = $region21
  $region20: #{window_attention_pallas.1} parent=0 // pred_region
    _
  $region21: #{window_attention_pallas.1} parent=0 // pred_fallthru
    _
  // Predicated region
  $region22: #{window_attention_pallas.1} parent=0 // pred_check
    _
  $region23: #{window_attention_pallas.1} parent=0 // pred_check_branch
    %22 = sbr.rel (0) target = $region25
  $region24: #{window_attention_pallas.1} parent=0 // pred_region
    _
  $region25: #{window_attention_pallas.1} parent=0 // pred_fallthru
    _
  %v24 = vld [vmem:[%s0] sm:$0xff]
  %v25 = vld [vmem:[%s0 + $0x8] sm:$0xff]
  %v26 = vld [vmem:[%s0 + $0x10] sm:$0xff]
  %v27 = vld [vmem:[%s0 + $0x18] sm:$0xff]
  %v28 = vld [vmem:[%s0 + $0x20] sm:$0xff]
  %v29 = vld [vmem:[%s0 + $0x28] sm:$0xff]
  %v30 = vld [vmem:[%s0 + $0x30] sm:$0xff]
  %v31 = vld [vmem:[%s0 + $0x38] sm:$0xff]
  %v32 = vld [vmem:[%s0 + $0x40] sm:$0xff]
  %v33 = vld [vmem:[%s0 + $0x48] sm:$0xff]
  %v34 = vld [vmem:[%s0 + $0x50] sm:$0xff]
  %v35 = vld [vmem:[%s0 + $0x58] sm:$0xff]
  %v36 = vld [vmem:[%s0 + $0x60] sm:$0xff]
  %v37 = vld [vmem:[%s0 + $0x68] sm:$0xff]
  %v38 = vld [vmem:[%s0 + $0x70] sm:$0xff]
  %v39 = vld [vmem:[%s0 + $0x78] sm:$0xff]
  %v40 = vld [vmem:[%s0 + $0x80] sm:$0xff]
  %v41 = vld [vmem:[%s0 + $0x88] sm:$0xff]
  %v42 = vld [vmem:[%s0 + $0x90] sm:$0xff]
  %v43 = vld [vmem:[%s0 + $0x98] sm:$0xff]
  %v44 = vld [vmem:[%s0 + $0xa0] sm:$0xff]
  %v45 = vld [vmem:[%s0 + $0xa8] sm:$0xff]
  %v46 = vld [vmem:[%s0 + $0xb0] sm:$0xff]
  %v47 = vld [vmem:[%s0 + $0xb8] sm:$0xff]
  %v48 = vld [vmem:[%s0 + $0xc0] sm:$0xff]
  %v49 = vld [vmem:[%s0 + $0xc8] sm:$0xff]
  %v50 = vld [vmem:[%s0 + $0xd0] sm:$0xff]
  %v51 = vld [vmem:[%s0 + $0xd8] sm:$0xff]
  %v52 = vld [vmem:[%s0 + $0xe0] sm:$0xff]
  %v53 = vld [vmem:[%s0 + $0xe8] sm:$0xff]
  %v54 = vld [vmem:[%s0 + $0xf0] sm:$0xff]
  %v55 = vld [vmem:[%s0 + $0xf8] sm:$0xff]
  %v56 = vld [vmem:[%s0 + $0x100] sm:$0xff]
  %v57 = vld [vmem:[%s0 + $0x108] sm:$0xff]
  %v58 = vld [vmem:[%s0 + $0x110] sm:$0xff]
  %v59 = vld [vmem:[%s0 + $0x118] sm:$0xff]
  %v60 = vld [vmem:[%s0 + $0x120] sm:$0xff]
  %v61 = vld [vmem:[%s0 + $0x128] sm:$0xff]
  %v62 = vld [vmem:[%s0 + $0x130] sm:$0xff]
  %v63 = vld [vmem:[%s0 + $0x138] sm:$0xff]
  %v64 = vpack.c.bf16 %v25, %v24
  %v65 = vpack.c.bf16 %v27, %v26
  %v66 = vpack.c.bf16 %v29, %v28
  %v67 = vpack.c.bf16 %v31, %v30
  %v68 = vpack.c.bf16 %v33, %v32
  %v69 = vpack.c.bf16 %v35, %v34
  %v70 = vpack.c.bf16 %v37, %v36
  %v71 = vpack.c.bf16 %v39, %v38
  %v72 = vpack.c.bf16 %v41, %v40
  %v73 = vpack.c.bf16 %v43, %v42
  %v74 = vpack.c.bf16 %v45, %v44
  %v75 = vpack.c.bf16 %v47, %v46
  %v76 = vpack.c.bf16 %v49, %v48
  %v77 = vpack.c.bf16 %v51, %v50
  %v78 = vpack.c.bf16 %v53, %v52
  %v79 = vpack.c.bf16 %v55, %v54
  %v80 = vpack.c.bf16 %v57, %v56
  %v81 = vpack.c.bf16 %v59, %v58
  %v82 = vpack.c.bf16 %v61, %v60
  %v83 = vpack.c.bf16 %v63, %v62
  %v84 = vld [vmem:[%s1] sm:$0xff]
  %v85 = vld [vmem:[%s1 + $0x8] sm:$0xff]
  %v86 = vpack.c.bf16 %v85, %v84
  %v87 = vld [vmem:[%s2] sm:$0x1]
  %v89 = vlaneseq
  %v90 = vshrl.u32 %v89, 7
  %v91 = vsub.s32 0, %v90
  %v92 = vrot.slane %v87, %v91
  %vm94 = vcmask 130048
  %v96 = vsel %vm94, %v64, 0
  %v99 = vsel %vm94, %v65, 0
  %v102 = vsel %vm94, %v66, 0
  %v105 = vsel %vm94, %v67, 0
  %v108 = vsel %vm94, %v68, 0
  %v111 = vsel %vm94, %v69, 0
  %v114 = vsel %vm94, %v70, 0
  %v117 = vsel %vm94, %v71, 0
  %v120 = vsel %vm94, %v72, 0
  %v123 = vsel %vm94, %v73, 0
  %v126 = vsel %vm94, %v74, 0
  %v129 = vsel %vm94, %v75, 0
  %v132 = vsel %vm94, %v76, 0
  %v135 = vsel %vm94, %v77, 0
  %v138 = vsel %vm94, %v78, 0
  %v141 = vsel %vm94, %v79, 0
  %v144 = vsel %vm94, %v80, 0
  %v147 = vsel %vm94, %v81, 0
  %v150 = vsel %vm94, %v82, 0
  %v153 = vsel %vm94, %v83, 0
  %155 = vmatprep.subr.bf16.mxu0 0
  %156 = vmatpush1.bf16.msra.mxu0 %v86
  %157 = vmatprep.subr.bf16.mxu0 0
  %158 = vmatpush1.bf16.msra.mxu0 0
  %159 = vmatprep.subr.bf16.mxu0 0
  %160 = vmatpush1.bf16.msra.mxu0 0
  %161 = vmatprep.subr.bf16.mxu0 0
  %162 = vmatpush1.bf16.msra.mxu0 0
  %163 = vmatprep.subr.bf16.mxu0 0
  %164 = vmatpush1.bf16.msra.mxu0 0
  %165 = vmatprep.subr.bf16.mxu0 0
  %166 = vmatpush1.bf16.msra.mxu0 0
  %167 = vmatprep.subr.bf16.mxu0 0
  %168 = vmatpush1.bf16.msra.mxu0 0
  %169 = vmatprep.subr.bf16.mxu0 0
  %170 = vmatpush1.bf16.msra.mxu0 0
  %171 = vmatprep.subr.bf16.mxu0 0
  %172 = vmatpush1.bf16.msra.mxu0 0
  %173 = vmatprep.subr.bf16.mxu0 0
  %174 = vmatpush1.bf16.msra.mxu0 0
  %175 = vmatprep.subr.bf16.mxu0 0
  %176 = vmatpush1.bf16.msra.mxu0 0
  %177 = vmatprep.subr.bf16.mxu0 0
  %178 = vmatpush1.bf16.msra.mxu0 0
  %179 = vmatprep.subr.bf16.mxu0 0
  %180 = vmatpush1.bf16.msra.mxu0 0
  %181 = vmatprep.subr.bf16.mxu0 0
  %182 = vmatpush1.bf16.msra.mxu0 0
  %183 = vmatprep.subr.bf16.mxu0 0
  %184 = vmatpush1.bf16.msra.mxu0 0
  %185 = vmatprep.subr.bf16.mxu0 0
  %186 = vmatpush1.bf16.msra.mxu0 0
  %187 = vmatprep.mubr.bf16.mxu0 0
  %188 = vmatmul.mubr.bf16.gmra.mrb[0].mxu0 %v96
  %v189 = vpop.f32.mrb[0].mxu0
  %v190 = vadd.f32 %v92, %v189
  %v191 = vpop.f32.mrb[0].mxu0
  %v192 = vpop.f32.mrb[0].mxu0
  %v193 = vadd.f32 %v92, %v192
  %v194 = vpop.f32.mrb[0].mxu0
  %195 = vmatprep.mubr.bf16.mxu0 0
  %196 = vmatmul.mubr.bf16.gmra.mrb[0].mxu0 %v99
  %v197 = vpop.f32.mrb[0].mxu0
  %v198 = vadd.f32 %v92, %v197
  %v199 = vpop.f32.mrb[0].mxu0
  %v200 = vpop.f32.mrb[0].mxu0
  %v201 = vadd.f32 %v92, %v200
  %v202 = vpop.f32.mrb[0].mxu0
  %203 = vmatprep.mubr.bf16.mxu0 0
  %204 = vmatmul.mubr.bf16.gmra.mrb[0].mxu0 %v102
  %v205 = vpop.f32.mrb[0].mxu0
  %v206 = vadd.f32 %v92, %v205
  %v207 = vpop.f32.mrb[0].mxu0
  %v208 = vpop.f32.mrb[0].mxu0
  %v209 = vadd.f32 %v92, %v208
  %v210 = vpop.f32.mrb[0].mxu0
  %211 = vmatprep.mubr.bf16.mxu0 0
  %212 = vmatmul.mubr.bf16.gmra.mrb[0].mxu0 %v105
  %v213 = vpop.f32.mrb[0].mxu0
  %v214 = vadd.f32 %v92, %v213
  %v215 = vpop.f32.mrb[0].mxu0
  %v216 = vpop.f32.mrb[0].mxu0
  %v217 = vadd.f32 %v92, %v216
  %v218 = vpop.f32.mrb[0].mxu0
  %219 = vmatprep.mubr.bf16.mxu0 0
  %220 = vmatmul.mubr.bf16.gmra.mrb[0].mxu0 %v108
  %v221 = vpop.f32.mrb[0].mxu0
  %v222 = vadd.f32 %v92, %v221
  %v223 = vpop.f32.mrb[0].mxu0
  %v224 = vpop.f32.mrb[0].mxu0
  %v225 = vadd.f32 %v92, %v224
  %v226 = vpop.f32.mrb[0].mxu0
  %227 = vmatprep.mubr.bf16.mxu0 0
  %228 = vmatmul.mubr.bf16.gmra.mrb[0].mxu0 %v111
  %v229 = vpop.f32.mrb[0].mxu0
  %v230 = vadd.f32 %v92, %v229
  %v231 = vpop.f32.mrb[0].mxu0
  %v232 = vpop.f32.mrb[0].mxu0
  %v233 = vadd.f32 %v92, %v232
  %v234 = vpop.f32.mrb[0].mxu0
  %235 = vmatprep.mubr.bf16.mxu0 0
  %236 = vmatmul.mubr.bf16.gmra.mrb[0].mxu0 %v114
  %v237 = vpop.f32.mrb[0].mxu0
  %v238 = vadd.f32 %v92, %v237
  %v239 = vpop.f32.mrb[0].mxu0
  %v240 = vpop.f32.mrb[0].mxu0
  %v241 = vadd.f32 %v92, %v240
  %v242 = vpop.f32.mrb[0].mxu0
  %243 = vmatprep.mubr.bf16.mxu0 0
  %244 = vmatmul.mubr.bf16.gmra.mrb[0].mxu0 %v117
  %v245 = vpop.f32.mrb[0].mxu0
  %v246 = vadd.f32 %v92, %v245
  %v247 = vpop.f32.mrb[0].mxu0
  %v248 = vpop.f32.mrb[0].mxu0
  %v249 = vadd.f32 %v92, %v248
  %v250 = vpop.f32.mrb[0].mxu0
  %251 = vmatprep.mubr.bf16.mxu0 0
  %252 = vmatmul.mubr.bf16.gmra.mrb[0].mxu0 %v120
  %v253 = vpop.f32.mrb[0].mxu0
  %v254 = vadd.f32 %v92, %v253
  %v255 = vpop.f32.mrb[0].mxu0
  %v256 = vpop.f32.mrb[0].mxu0
  %v257 = vadd.f32 %v92, %v256
  %v258 = vpop.f32.mrb[0].mxu0
  %259 = vmatprep.mubr.bf16.mxu0 0
  %260 = vmatmul.mubr.bf16.gmra.mrb[0].mxu0 %v123
  %v261 = vpop.f32.mrb[0].mxu0
  %v262 = vadd.f32 %v92, %v261
  %v263 = vpop.f32.mrb[0].mxu0
  %v264 = vpop.f32.mrb[0].mxu0
  %v265 = vadd.f32 %v92, %v264
  %v266 = vpop.f32.mrb[0].mxu0
  %267 = vmatprep.mubr.bf16.mxu0 0
  %268 = vmatmul.mubr.bf16.gmra.mrb[0].mxu0 %v126
  %v269 = vpop.f32.mrb[0].mxu0
  %v270 = vadd.f32 %v92, %v269
  %v271 = vpop.f32.mrb[0].mxu0
  %v272 = vpop.f32.mrb[0].mxu0
  %v273 = vadd.f32 %v92, %v272
  %v274 = vpop.f32.mrb[0].mxu0
  %275 = vmatprep.mubr.bf16.mxu0 0
  %276 = vmatmul.mubr.bf16.gmra.mrb[0].mxu0 %v129
  %v277 = vpop.f32.mrb[0].mxu0
  %v278 = vadd.f32 %v92, %v277
  %v279 = vpop.f32.mrb[0].mxu0
  %v280 = vpop.f32.mrb[0].mxu0
  %v281 = vadd.f32 %v92, %v280
  %v282 = vpop.f32.mrb[0].mxu0
  %283 = vmatprep.mubr.bf16.mxu0 0
  %284 = vmatmul.mubr.bf16.gmra.mrb[0].mxu0 %v132
  %v285 = vpop.f32.mrb[0].mxu0
  %v286 = vadd.f32 %v92, %v285
  %v287 = vpop.f32.mrb[0].mxu0
  %v288 = vpop.f32.mrb[0].mxu0
  %v289 = vadd.f32 %v92, %v288
  %v290 = vpop.f32.mrb[0].mxu0
  %291 = vmatprep.mubr.bf16.mxu0 0
  %292 = vmatmul.mubr.bf16.gmra.mrb[0].mxu0 %v135
  %v293 = vpop.f32.mrb[0].mxu0
  %v294 = vadd.f32 %v92, %v293
  %v295 = vpop.f32.mrb[0].mxu0
  %v296 = vpop.f32.mrb[0].mxu0
  %v297 = vadd.f32 %v92, %v296
  %v298 = vpop.f32.mrb[0].mxu0
  %299 = vmatprep.mubr.bf16.mxu0 0
  %300 = vmatmul.mubr.bf16.gmra.mrb[0].mxu0 %v138
  %v301 = vpop.f32.mrb[0].mxu0
  %v302 = vadd.f32 %v92, %v301
  %v303 = vpop.f32.mrb[0].mxu0
  %v304 = vpop.f32.mrb[0].mxu0
  %v305 = vadd.f32 %v92, %v304
  %v306 = vpop.f32.mrb[0].mxu0
  %307 = vmatprep.mubr.bf16.mxu0 0
  %308 = vmatmul.mubr.bf16.gmra.mrb[0].mxu0 %v141
  %v309 = vpop.f32.mrb[0].mxu0
  %v310 = vadd.f32 %v92, %v309
  %v311 = vpop.f32.mrb[0].mxu0
  %v312 = vpop.f32.mrb[0].mxu0
  %v313 = vadd.f32 %v92, %v312
  %v314 = vpop.f32.mrb[0].mxu0
  %315 = vmatprep.mubr.bf16.mxu0 0
  %316 = vmatmul.mubr.bf16.gmra.mrb[0].mxu0 %v144
  %v317 = vpop.f32.mrb[0].mxu0
  %v318 = vadd.f32 %v92, %v317
  %v319 = vpop.f32.mrb[0].mxu0
  %v320 = vpop.f32.mrb[0].mxu0
  %v321 = vadd.f32 %v92, %v320
  %v322 = vpop.f32.mrb[0].mxu0
  %323 = vmatprep.mubr.bf16.mxu0 0
  %324 = vmatmul.mubr.bf16.gmra.mrb[0].mxu0 %v147
  %v325 = vpop.f32.mrb[0].mxu0
  %v326 = vadd.f32 %v92, %v325
  %v327 = vpop.f32.mrb[0].mxu0
  %v328 = vpop.f32.mrb[0].mxu0
  %v329 = vadd.f32 %v92, %v328
  %v330 = vpop.f32.mrb[0].mxu0
  %331 = vmatprep.mubr.bf16.mxu0 0
  %332 = vmatmul.mubr.bf16.gmra.mrb[0].mxu0 %v150
  %v333 = vpop.f32.mrb[0].mxu0
  %v334 = vadd.f32 %v92, %v333
  %v335 = vpop.f32.mrb[0].mxu0
  %v336 = vpop.f32.mrb[0].mxu0
  %v337 = vadd.f32 %v92, %v336
  %v338 = vpop.f32.mrb[0].mxu0
  %339 = vmatprep.mubr.bf16.mxu0 0
  %340 = vmatmul.mubr.bf16.gmra.mrb[0].mxu0 %v153
  %v341 = vpop.f32.mrb[0].mxu0
  %v342 = vadd.f32 %v92, %v341
  %v343 = vpop.f32.mrb[0].mxu0
  %v344 = vpop.f32.mrb[0].mxu0
  %v345 = vadd.f32 %v92, %v344
  %v346 = vpop.f32.mrb[0].mxu0
  %347 = vdwg.mxu0
  %388 = vrot.lane.b32.xlu0 %v190, 124
  %v389 = vpop.permute.xlu0 %388
  %390 = vrot.lane.b32.xlu0 %v193, 124
  %v391 = vpop.permute.xlu0 %390
  %392 = vrot.lane.b32.xlu0 %v198, 124
  %v393 = vpop.permute.xlu0 %392
  %394 = vrot.lane.b32.xlu0 %v201, 124
  %v395 = vpop.permute.xlu0 %394
  %396 = vrot.lane.b32.xlu0 %v206, 124
  %v397 = vpop.permute.xlu0 %396
  %398 = vrot.lane.b32.xlu0 %v209, 124
  %v399 = vpop.permute.xlu0 %398
  %400 = vrot.lane.b32.xlu0 %v214, 124
  %v401 = vpop.permute.xlu0 %400
  %402 = vrot.lane.b32.xlu0 %v217, 124
  %v403 = vpop.permute.xlu0 %402
  %404 = vrot.lane.b32.xlu0 %v222, 124
  %v405 = vpop.permute.xlu0 %404
  %406 = vrot.lane.b32.xlu0 %v225, 124
  %v407 = vpop.permute.xlu0 %406
  %408 = vrot.lane.b32.xlu0 %v230, 124
  %v409 = vpop.permute.xlu0 %408
  %410 = vrot.lane.b32.xlu0 %v233, 124
  %v411 = vpop.permute.xlu0 %410
  %412 = vrot.lane.b32.xlu0 %v238, 124
  %v413 = vpop.permute.xlu0 %412
  %414 = vrot.lane.b32.xlu0 %v241, 124
  %v415 = vpop.permute.xlu0 %414
  %416 = vrot.lane.b32.xlu0 %v246, 124
  %v417 = vpop.permute.xlu0 %416
  %418 = vrot.lane.b32.xlu0 %v249, 124
  %v419 = vpop.permute.xlu0 %418
  %420 = vrot.lane.b32.xlu0 %v254, 124
  %v421 = vpop.permute.xlu0 %420
  %422 = vrot.lane.b32.xlu0 %v257, 124
  %v423 = vpop.permute.xlu0 %422
  %424 = vrot.lane.b32.xlu0 %v262, 124
  %v425 = vpop.permute.xlu0 %424
  %426 = vrot.lane.b32.xlu0 %v265, 124
  %v427 = vpop.permute.xlu0 %426
  %428 = vrot.lane.b32.xlu0 %v270, 124
  %v429 = vpop.permute.xlu0 %428
  %430 = vrot.lane.b32.xlu0 %v273, 124
  %v431 = vpop.permute.xlu0 %430
  %432 = vrot.lane.b32.xlu0 %v278, 124
  %v433 = vpop.permute.xlu0 %432
  %434 = vrot.lane.b32.xlu0 %v281, 124
  %v435 = vpop.permute.xlu0 %434
  %436 = vrot.lane.b32.xlu0 %v286, 124
  %v437 = vpop.permute.xlu0 %436
  %438 = vrot.lane.b32.xlu0 %v289, 124
  %v439 = vpop.permute.xlu0 %438
  %440 = vrot.lane.b32.xlu0 %v294, 124
  %v441 = vpop.permute.xlu0 %440
  %442 = vrot.lane.b32.xlu0 %v297, 124
  %v443 = vpop.permute.xlu0 %442
  %444 = vrot.lane.b32.xlu0 %v302, 124
  %v445 = vpop.permute.xlu0 %444
  %446 = vrot.lane.b32.xlu0 %v305, 124
  %v447 = vpop.permute.xlu0 %446
  %448 = vrot.lane.b32.xlu0 %v310, 124
  %v449 = vpop.permute.xlu0 %448
  %450 = vrot.lane.b32.xlu0 %v313, 124
  %v451 = vpop.permute.xlu0 %450
  %452 = vrot.lane.b32.xlu0 %v318, 124
  %v453 = vpop.permute.xlu0 %452
  %454 = vrot.lane.b32.xlu0 %v321, 124
  %v455 = vpop.permute.xlu0 %454
  %456 = vrot.lane.b32.xlu0 %v326, 124
  %v457 = vpop.permute.xlu0 %456
  %458 = vrot.lane.b32.xlu0 %v329, 124
  %v459 = vpop.permute.xlu0 %458
  %460 = vrot.lane.b32.xlu0 %v334, 124
  %v461 = vpop.permute.xlu0 %460
  %462 = vrot.lane.b32.xlu0 %v337, 124
  %v463 = vpop.permute.xlu0 %462
  %464 = vrot.lane.b32.xlu0 %v342, 124
  %v465 = vpop.permute.xlu0 %464
  %466 = vrot.lane.b32.xlu0 %v345, 124
  %v467 = vpop.permute.xlu0 %466
  %508 = vrot.lane.b32.xlu0 %v190, 120
  %v509 = vpop.permute.xlu0 %508
  %510 = vrot.lane.b32.xlu0 %v193, 120
  %v511 = vpop.permute.xlu0 %510
  %512 = vrot.lane.b32.xlu0 %v198, 120
  %v513 = vpop.permute.xlu0 %512
  %514 = vrot.lane.b32.xlu0 %v201, 120
  %v515 = vpop.permute.xlu0 %514
  %516 = vrot.lane.b32.xlu0 %v206, 120
  %v517 = vpop.permute.xlu0 %516
  %518 = vrot.lane.b32.xlu0 %v209, 120
  %v519 = vpop.permute.xlu0 %518
  %520 = vrot.lane.b32.xlu0 %v214, 120
  %v521 = vpop.permute.xlu0 %520
  %522 = vrot.lane.b32.xlu0 %v217, 120
  %v523 = vpop.permute.xlu0 %522
  %524 = vrot.lane.b32.xlu0 %v222, 120
  %v525 = vpop.permute.xlu0 %524
  %526 = vrot.lane.b32.xlu0 %v225, 120
  %v527 = vpop.permute.xlu0 %526
  %528 = vrot.lane.b32.xlu0 %v230, 120
  %v529 = vpop.permute.xlu0 %528
  %530 = vrot.lane.b32.xlu0 %v233, 120
  %v531 = vpop.permute.xlu0 %530
  %532 = vrot.lane.b32.xlu0 %v238, 120
  %v533 = vpop.permute.xlu0 %532
  %534 = vrot.lane.b32.xlu0 %v241, 120
  %v535 = vpop.permute.xlu0 %534
  %536 = vrot.lane.b32.xlu0 %v246, 120
  %v537 = vpop.permute.xlu0 %536
  %538 = vrot.lane.b32.xlu0 %v249, 120
  %v539 = vpop.permute.xlu0 %538
  %540 = vrot.lane.b32.xlu0 %v254, 120
  %v541 = vpop.permute.xlu0 %540
  %542 = vrot.lane.b32.xlu0 %v257, 120
  %v543 = vpop.permute.xlu0 %542
  %544 = vrot.lane.b32.xlu0 %v262, 120
  %v545 = vpop.permute.xlu0 %544
  %546 = vrot.lane.b32.xlu0 %v265, 120
  %v547 = vpop.permute.xlu0 %546
  %548 = vrot.lane.b32.xlu0 %v270, 120
  %v549 = vpop.permute.xlu0 %548
  %550 = vrot.lane.b32.xlu0 %v273, 120
  %v551 = vpop.permute.xlu0 %550
  %552 = vrot.lane.b32.xlu0 %v278, 120
  %v553 = vpop.permute.xlu0 %552
  %554 = vrot.lane.b32.xlu0 %v281, 120
  %v555 = vpop.permute.xlu0 %554
  %556 = vrot.lane.b32.xlu0 %v286, 120
  %v557 = vpop.permute.xlu0 %556
  %558 = vrot.lane.b32.xlu0 %v289, 120
  %v559 = vpop.permute.xlu0 %558
  %560 = vrot.lane.b32.xlu0 %v294, 120
  %v561 = vpop.permute.xlu0 %560
  %562 = vrot.lane.b32.xlu0 %v297, 120
  %v563 = vpop.permute.xlu0 %562
  %564 = vrot.lane.b32.xlu0 %v302, 120
  %v565 = vpop.permute.xlu0 %564
  %566 = vrot.lane.b32.xlu0 %v305, 120
  %v567 = vpop.permute.xlu0 %566
  %568 = vrot.lane.b32.xlu0 %v310, 120
  %v569 = vpop.permute.xlu0 %568
  %570 = vrot.lane.b32.xlu0 %v313, 120
  %v571 = vpop.permute.xlu0 %570
  %572 = vrot.lane.b32.xlu0 %v318, 120
  %v573 = vpop.permute.xlu0 %572
  %574 = vrot.lane.b32.xlu0 %v321, 120
  %v575 = vpop.permute.xlu0 %574
  %576 = vrot.lane.b32.xlu0 %v326, 120
  %v577 = vpop.permute.xlu0 %576
  %578 = vrot.lane.b32.xlu0 %v329, 120
  %v579 = vpop.permute.xlu0 %578
  %580 = vrot.lane.b32.xlu0 %v334, 120
  %v581 = vpop.permute.xlu0 %580
  %582 = vrot.lane.b32.xlu0 %v337, 120
  %v583 = vpop.permute.xlu0 %582
  %584 = vrot.lane.b32.xlu0 %v342, 120
  %v585 = vpop.permute.xlu0 %584
  %586 = vrot.lane.b32.xlu0 %v345, 120
  %v587 = vpop.permute.xlu0 %586
  %628 = vrot.lane.b32.xlu0 %v190, 116
  %v629 = vpop.permute.xlu0 %628
  %630 = vrot.lane.b32.xlu0 %v193, 116
  %v631 = vpop.permute.xlu0 %630
  %632 = vrot.lane.b32.xlu0 %v198, 116
  %v633 = vpop.permute.xlu0 %632
  %634 = vrot.lane.b32.xlu0 %v201, 116
  %v635 = vpop.permute.xlu0 %634
  %636 = vrot.lane.b32.xlu0 %v206, 116
  %v637 = vpop.permute.xlu0 %636
  %638 = vrot.lane.b32.xlu0 %v209, 116
  %v639 = vpop.permute.xlu0 %638
  %640 = vrot.lane.b32.xlu0 %v214, 116
  %v641 = vpop.permute.xlu0 %640
  %642 = vrot.lane.b32.xlu0 %v217, 116
  %v643 = vpop.permute.xlu0 %642
  %644 = vrot.lane.b32.xlu0 %v222, 116
  %v645 = vpop.permute.xlu0 %644
  %646 = vrot.lane.b32.xlu0 %v225, 116
  %v647 = vpop.permute.xlu0 %646
  %648 = vrot.lane.b32.xlu0 %v230, 116
  %v649 = vpop.permute.xlu0 %648
  %650 = vrot.lane.b32.xlu0 %v233, 116
  %v651 = vpop.permute.xlu0 %650
  %652 = vrot.lane.b32.xlu0 %v238, 116
  %v653 = vpop.permute.xlu0 %652
  %654 = vrot.lane.b32.xlu0 %v241, 116
  %v655 = vpop.permute.xlu0 %654
  %656 = vrot.lane.b32.xlu0 %v246, 116
  %v657 = vpop.permute.xlu0 %656
  %658 = vrot.lane.b32.xlu0 %v249, 116
  %v659 = vpop.permute.xlu0 %658
  %660 = vrot.lane.b32.xlu0 %v254, 116
  %v661 = vpop.permute.xlu0 %660
  %662 = vrot.lane.b32.xlu0 %v257, 116
  %v663 = vpop.permute.xlu0 %662
  %664 = vrot.lane.b32.xlu0 %v262, 116
  %v665 = vpop.permute.xlu0 %664
  %666 = vrot.lane.b32.xlu0 %v265, 116
  %v667 = vpop.permute.xlu0 %666
  %668 = vrot.lane.b32.xlu0 %v270, 116
  %v669 = vpop.permute.xlu0 %668
  %670 = vrot.lane.b32.xlu0 %v273, 116
  %v671 = vpop.permute.xlu0 %670
  %672 = vrot.lane.b32.xlu0 %v278, 116
  %v673 = vpop.permute.xlu0 %672
  %674 = vrot.lane.b32.xlu0 %v281, 116
  %v675 = vpop.permute.xlu0 %674
  %676 = vrot.lane.b32.xlu0 %v286, 116
  %v677 = vpop.permute.xlu0 %676
  %678 = vrot.lane.b32.xlu0 %v289, 116
  %v679 = vpop.permute.xlu0 %678
  %680 = vrot.lane.b32.xlu0 %v294, 116
  %v681 = vpop.permute.xlu0 %680
  %682 = vrot.lane.b32.xlu0 %v297, 116
  %v683 = vpop.permute.xlu0 %682
  %684 = vrot.lane.b32.xlu0 %v302, 116
  %v685 = vpop.permute.xlu0 %684
  %686 = vrot.lane.b32.xlu0 %v305, 116
  %v687 = vpop.permute.xlu0 %686
  %688 = vrot.lane.b32.xlu0 %v310, 116
  %v689 = vpop.permute.xlu0 %688
  %690 = vrot.lane.b32.xlu0 %v313, 116
  %v691 = vpop.permute.xlu0 %690
  %692 = vrot.lane.b32.xlu0 %v318, 116
  %v693 = vpop.permute.xlu0 %692
  %694 = vrot.lane.b32.xlu0 %v321, 116
  %v695 = vpop.permute.xlu0 %694
  %696 = vrot.lane.b32.xlu0 %v326, 116
  %v697 = vpop.permute.xlu0 %696
  %698 = vrot.lane.b32.xlu0 %v329, 116
  %v699 = vpop.permute.xlu0 %698
  %700 = vrot.lane.b32.xlu0 %v334, 116
  %v701 = vpop.permute.xlu0 %700
  %702 = vrot.lane.b32.xlu0 %v337, 116
  %v703 = vpop.permute.xlu0 %702
  %704 = vrot.lane.b32.xlu0 %v342, 116
  %v705 = vpop.permute.xlu0 %704
  %706 = vrot.lane.b32.xlu0 %v345, 116
  %v707 = vpop.permute.xlu0 %706
  %v748 = vpack.c.bf16 %v193, %v190
  %v749 = vpack.c.bf16 %v201, %v198
  %v750 = vpack.c.bf16 %v209, %v206
  %v751 = vpack.c.bf16 %v217, %v214
  %v752 = vpack.c.bf16 %v225, %v222
  %v753 = vpack.c.bf16 %v233, %v230
  %v754 = vpack.c.bf16 %v241, %v238
  %v755 = vpack.c.bf16 %v249, %v246
  %v756 = vpack.c.bf16 %v257, %v254
  %v757 = vpack.c.bf16 %v265, %v262
  %v758 = vpack.c.bf16 %v273, %v270
  %v759 = vpack.c.bf16 %v281, %v278
  %v760 = vpack.c.bf16 %v289, %v286
  %v761 = vpack.c.bf16 %v297, %v294
  %v762 = vpack.c.bf16 %v305, %v302
  %v763 = vpack.c.bf16 %v313, %v310
  %v764 = vpack.c.bf16 %v321, %v318
  %v765 = vpack.c.bf16 %v329, %v326
  %v766 = vpack.c.bf16 %v337, %v334
  %v767 = vpack.c.bf16 %v345, %v342
  %v768 = vpack.c.bf16 %v391, %v389
  %v769 = vpack.c.bf16 %v395, %v393
  %v770 = vpack.c.bf16 %v399, %v397
  %v771 = vpack.c.bf16 %v403, %v401
  %v772 = vpack.c.bf16 %v407, %v405
  %v773 = vpack.c.bf16 %v411, %v409
  %v774 = vpack.c.bf16 %v415, %v413
  %v775 = vpack.c.bf16 %v419, %v417
  %v776 = vpack.c.bf16 %v423, %v421
  %v777 = vpack.c.bf16 %v427, %v425
  %v778 = vpack.c.bf16 %v431, %v429
  %v779 = vpack.c.bf16 %v435, %v433
  %v780 = vpack.c.bf16 %v439, %v437
  %v781 = vpack.c.bf16 %v443, %v441
  %v782 = vpack.c.bf16 %v447, %v445
  %v783 = vpack.c.bf16 %v451, %v449
  %v784 = vpack.c.bf16 %v455, %v453
  %v785 = vpack.c.bf16 %v459, %v457
  %v786 = vpack.c.bf16 %v463, %v461
  %v787 = vpack.c.bf16 %v467, %v465
  %v788 = vpack.c.bf16 %v511, %v509
  %v789 = vpack.c.bf16 %v515, %v513
  %v790 = vpack.c.bf16 %v519, %v517
  %v791 = vpack.c.bf16 %v523, %v521
  %v792 = vpack.c.bf16 %v527, %v525
  %v793 = vpack.c.bf16 %v531, %v529
  %v794 = vpack.c.bf16 %v535, %v533
  %v795 = vpack.c.bf16 %v539, %v537
  %v796 = vpack.c.bf16 %v543, %v541
  %v797 = vpack.c.bf16 %v547, %v545
  %v798 = vpack.c.bf16 %v551, %v549
  %v799 = vpack.c.bf16 %v555, %v553
  %v800 = vpack.c.bf16 %v559, %v557
  %v801 = vpack.c.bf16 %v563, %v561
  %v802 = vpack.c.bf16 %v567, %v565
  %v803 = vpack.c.bf16 %v571, %v569
  %v804 = vpack.c.bf16 %v575, %v573
  %v805 = vpack.c.bf16 %v579, %v577
  %v806 = vpack.c.bf16 %v583, %v581
  %v807 = vpack.c.bf16 %v587, %v585
  %v808 = vpack.c.bf16 %v631, %v629
  %v809 = vpack.c.bf16 %v635, %v633
  %v810 = vpack.c.bf16 %v639, %v637
  %v811 = vpack.c.bf16 %v643, %v641
  %v812 = vpack.c.bf16 %v647, %v645
  %v813 = vpack.c.bf16 %v651, %v649
  %v814 = vpack.c.bf16 %v655, %v653
  %v815 = vpack.c.bf16 %v659, %v657
  %v816 = vpack.c.bf16 %v663, %v661
  %v817 = vpack.c.bf16 %v667, %v665
  %v818 = vpack.c.bf16 %v671, %v669
  %v819 = vpack.c.bf16 %v675, %v673
  %v820 = vpack.c.bf16 %v679, %v677
  %v821 = vpack.c.bf16 %v683, %v681
  %v822 = vpack.c.bf16 %v687, %v685
  %v823 = vpack.c.bf16 %v691, %v689
  %v824 = vpack.c.bf16 %v695, %v693
  %v825 = vpack.c.bf16 %v699, %v697
  %v826 = vpack.c.bf16 %v703, %v701
  %v827 = vpack.c.bf16 %v707, %v705
  %830 = vrot.lane.b32.xlu0 %v748, 112
  %v831 = vpop.permute.xlu0 %830
  %832 = vrot.lane.b32.xlu0 %v749, 112
  %v833 = vpop.permute.xlu0 %832
  %vm834 = vcmask 31744
  %v836 = vsel %vm834, %v748, 0
  %v839 = vsel %vm834, %v749, 0
  %v842 = vsel %vm834, %v831, 0
  %v845 = vsel %vm834, %v833, 0
  %847 = vmatprep.subr.bf16.mxu0 0
  %848 = vmatpush1.bf16.xpose.msra.mxu0 %v842
  %849 = vmatprep.subr.bf16.mxu0 0
  %850 = vmatpush1.bf16.xpose.msra.mxu0 %v845
  %851 = vmatprep.subr.bf16.mxu0 0
  %852 = vmatpush1.bf16.xpose.msra.mxu0 0
  %853 = vmatprep.subr.bf16.mxu0 0
  %854 = vmatpush1.bf16.xpose.msra.mxu0 0
  %855 = vmatprep.subr.bf16.mxu0 0
  %856 = vmatpush1.bf16.xpose.msra.mxu0 0
  %857 = vmatprep.subr.bf16.mxu0 0
  %858 = vmatpush1.bf16.xpose.msra.mxu0 0
  %859 = vmatprep.subr.bf16.mxu0 0
  %860 = vmatpush1.bf16.xpose.msra.mxu0 0
  %861 = vmatprep.subr.bf16.mxu0 0
  %862 = vmatpush1.bf16.xpose.msra.mxu0 0
  %863 = vmatprep.subr.bf16.mxu0 0
  %864 = vmatpush1.bf16.xpose.msra.mxu0 0
  %865 = vmatprep.subr.bf16.mxu0 0
  %866 = vmatpush1.bf16.xpose.msra.mxu0 0
  %867 = vmatprep.subr.bf16.mxu0 0
  %868 = vmatpush1.bf16.xpose.msra.mxu0 0
  %869 = vmatprep.subr.bf16.mxu0 0
  %870 = vmatpush1.bf16.xpose.msra.mxu0 0
  %871 = vmatprep.subr.bf16.mxu0 0
  %872 = vmatpush1.bf16.xpose.msra.mxu0 0
  %873 = vmatprep.subr.bf16.mxu0 0
  %874 = vmatpush1.bf16.xpose.msra.mxu0 0
  %875 = vmatprep.subr.bf16.mxu0 0
  %876 = vmatpush1.bf16.xpose.msra.mxu0 0
  %877 = vmatprep.subr.bf16.mxu0 0
  %878 = vmatpush1.bf16.xpose.msra.mxu0 0
  %879 = vmatprep.mubr.bf16.mxu0 0
  %880 = vmatmul.mubr.bf16.gmra.mrb[0].mxu0 %v836
  %v881 = vpop.f32.mrb[0].mxu0
  %v882 = vadd.f32 0.0, %v881
  %v883 = vpop.f32.mrb[0].mxu0
  %v884 = vpop.f32.mrb[0].mxu0
  %v885 = vadd.f32 0.0, %v884
  %v886 = vpop.f32.mrb[0].mxu0
  %887 = vmatprep.mubr.bf16.mxu0 0
  %888 = vmatmul.mubr.bf16.gmra.mrb[0].mxu0 %v839
  %v889 = vpop.f32.mrb[0].mxu0
  %v890 = vadd.f32 0.0, %v889
  %v891 = vpop.f32.mrb[0].mxu0
  %v892 = vpop.f32.mrb[0].mxu0
  %v893 = vadd.f32 0.0, %v892
  %v894 = vpop.f32.mrb[0].mxu0
  %895 = vdwg.mxu0
  %898 = vrot.lane.b32.xlu0 %v750, 112
  %v899 = vpop.permute.xlu0 %898
  %900 = vrot.lane.b32.xlu0 %v751, 112
  %v901 = vpop.permute.xlu0 %900
  %v903 = vsel %vm834, %v750, 0
  %v906 = vsel %vm834, %v751, 0
  %v909 = vsel %vm834, %v899, 0
  %v912 = vsel %vm834, %v901, 0
  %914 = vmatprep.subr.bf16.mxu0 0
  %915 = vmatpush1.bf16.xpose.msra.mxu0 %v909
  %916 = vmatprep.subr.bf16.mxu0 0
  %917 = vmatpush1.bf16.xpose.msra.mxu0 %v912
  %918 = vmatprep.subr.bf16.mxu0 0
  %919 = vmatpush1.bf16.xpose.msra.mxu0 0
  %920 = vmatprep.subr.bf16.mxu0 0
  %921 = vmatpush1.bf16.xpose.msra.mxu0 0
  %922 = vmatprep.subr.bf16.mxu0 0
  %923 = vmatpush1.bf16.xpose.msra.mxu0 0
  %924 = vmatprep.subr.bf16.mxu0 0
  %925 = vmatpush1.bf16.xpose.msra.mxu0 0
  %926 = vmatprep.subr.bf16.mxu0 0
  %927 = vmatpush1.bf16.xpose.msra.mxu0 0
  %928 = vmatprep.subr.bf16.mxu0 0
  %929 = vmatpush1.bf16.xpose.msra.mxu0 0
  %930 = vmatprep.subr.bf16.mxu0 0
  %931 = vmatpush1.bf16.xpose.msra.mxu0 0
  %932 = vmatprep.subr.bf16.mxu0 0
  %933 = vmatpush1.bf16.xpose.msra.mxu0 0
  %934 = vmatprep.subr.bf16.mxu0 0
  %935 = vmatpush1.bf16.xpose.msra.mxu0 0
  %936 = vmatprep.subr.bf16.mxu0 0
  %937 = vmatpush1.bf16.xpose.msra.mxu0 0
  %938 = vmatprep.subr.bf16.mxu0 0
  %939 = vmatpush1.bf16.xpose.msra.mxu0 0
  %940 = vmatprep.subr.bf16.mxu0 0
  %941 = vmatpush1.bf16.xpose.msra.mxu0 0
  %942 = vmatprep.subr.bf16.mxu0 0
  %943 = vmatpush1.bf16.xpose.msra.mxu0 0
  %944 = vmatprep.subr.bf16.mxu0 0
  %945 = vmatpush1.bf16.xpose.msra.mxu0 0
  %946 = vmatprep.mubr.bf16.mxu0 0
  %947 = vmatmul.mubr.bf16.gmra.mrb[0].mxu0 %v903
  %v948 = vpop.f32.mrb[0].mxu0
  %v949 = vadd.f32 0.0, %v948
  %v950 = vpop.f32.mrb[0].mxu0
  %v951 = vpop.f32.mrb[0].mxu0
  %v952 = vadd.f32 0.0, %v951
  %v953 = vpop.f32.mrb[0].mxu0
  %954 = vmatprep.mubr.bf16.mxu0 0
  %955 = vmatmul.mubr.bf16.gmra.mrb[0].mxu0 %v906
  %v956 = vpop.f32.mrb[0].mxu0
  %v957 = vadd.f32 0.0, %v956
  %v958 = vpop.f32.mrb[0].mxu0
  %v959 = vpop.f32.mrb[0].mxu0
  %v960 = vadd.f32 0.0, %v959
  %v961 = vpop.f32.mrb[0].mxu0
  %962 = vdwg.mxu0
  %965 = vrot.lane.b32.xlu0 %v752, 112
  %v966 = vpop.permute.xlu0 %965
  %967 = vrot.lane.b32.xlu0 %v753, 112
  %v968 = vpop.permute.xlu0 %967
  %v970 = vsel %vm834, %v752, 0
  %v973 = vsel %vm834, %v753, 0
  %v976 = vsel %vm834, %v966, 0
  %v979 = vsel %vm834, %v968, 0
  %981 = vmatprep.subr.bf16.mxu0 0
  %982 = vmatpush1.bf16.xpose.msra.mxu0 %v976
  %983 = vmatprep.subr.bf16.mxu0 0
  %984 = vmatpush1.bf16.xpose.msra.mxu0 %v979
  %985 = vmatprep.subr.bf16.mxu0 0
  %986 = vmatpush1.bf16.xpose.msra.mxu0 0
  %987 = vmatprep.subr.bf16.mxu0 0
  %988 = vmatpush1.bf16.xpose.msra.mxu0 0
  %989 = vmatprep.subr.bf16.mxu0 0
  %990 = vmatpush1.bf16.xpose.msra.mxu0 0
  %991 = vmatprep.subr.bf16.mxu0 0
  %992 = vmatpush1.bf16.xpose.msra.mxu0 0
  %993 = vmatprep.subr.bf16.mxu0 0
  %994 = vmatpush1.bf16.xpose.msra.mxu0 0
  %995 = vmatprep.subr.bf16.mxu0 0
  %996 = vmatpush1.bf16.xpose.msra.mxu0 0
  %997 = vmatprep.subr.bf16.mxu0 0
  %998 = vmatpush1.bf16.xpose.msra.mxu0 0
  %999 = vmatprep.subr.bf16.mxu0 0
  %1000 = vmatpush1.bf16.xpose.msra.mxu0 0
  %1001 = vmatprep.subr.bf16.mxu0 0
  %1002 = vmatpush1.bf16.xpose.msra.mxu0 0
  %1003 = vmatprep.subr.bf16.mxu0 0
  %1004 = vmatpush1.bf16.xpose.msra.mxu0 0
  %1005 = vmatprep.subr.bf16.mxu0 0
  %1006 = vmatpush1.bf16.xpose.msra.mxu0 0
  %1007 = vmatprep.subr.bf16.mxu0 0
  %1008 = vmatpush1.bf16.xpose.msra.mxu0 0
  %1009 = vmatprep.subr.bf16.mxu0 0
  %1010 = vmatpush1.bf16.xpose.msra.mxu0 0
  %1011 = vmatprep.subr.bf16.mxu0 0
  %1012 = vmatpush1.bf16.xpose.msra.mxu0 0
  %1013 = vmatprep.mubr.bf16.mxu0 0
  %1014 = vmatmul.mubr.bf16.gmra.mrb[0].mxu0 %v970
  %v1015 = vpop.f32.mrb[0].mxu0
  %v1016 = vadd.f32 0.0, %v1015
  %v1017 = vpop.f32.mrb[0].mxu0
  %v1018 = vpop.f32.mrb[0].mxu0
  %v1019 = vadd.f32 0.0, %v1018
  %v1020 = vpop.f32.mrb[0].mxu0
  %1021 = vmatprep.mubr.bf16.mxu0 0
  %1022 = vmatmul.mubr.bf16.gmra.mrb[0].mxu0 %v973
  %v1023 = vpop.f32.mrb[0].mxu0
  %v1024 = vadd.f32 0.0, %v1023
  %v1025 = vpop.f32.mrb[0].mxu0
  %v1026 = vpop.f32.mrb[0].mxu0
  %v1027 = vadd.f32 0.0, %v1026
  %v1028 = vpop.f32.mrb[0].mxu0
  %1029 = vdwg.mxu0
  %1032 = vrot.lane.b32.xlu0 %v754, 112
  %v1033 = vpop.permute.xlu0 %1032
  %1034 = vrot.lane.b32.xlu0 %v755, 112
  %v1035 = vpop.permute.xlu0 %1034
  %v1037 = vsel %vm834, %v754, 0
  %v1040 = vsel %vm834, %v755, 0
  %v1043 = vsel %vm834, %v1033, 0
  %v1046 = vsel %vm834, %v1035, 0
  %1048 = vmatprep.subr.bf16.mxu0 0
  %1049 = vmatpush1.bf16.xpose.msra.mxu0 %v1043
  %1050 = vmatprep.subr.bf16.mxu0 0
  %1051 = vmatpush1.bf16.xpose.msra.mxu0 %v1046
  %1052 = vmatprep.subr.bf16.mxu0 0
  %1053 = vmatpush1.bf16.xpose.msra.mxu0 0
  %1054 = vmatprep.subr.bf16.mxu0 0
  %1055 = vmatpush1.bf16.xpose.msra.mxu0 0
  %1056 = vmatprep.subr.bf16.mxu0 0
  %1057 = vmatpush1.bf16.xpose.msra.mxu0 0
  %1058 = vmatprep.subr.bf16.mxu0 0
  %1059 = vmatpush1.bf16.xpose.msra.mxu0 0
  %1060 = vmatprep.subr.bf16.mxu0 0
  %1061 = vmatpush1.bf16.xpose.msra.mxu0 0
  %1062 = vmatprep.subr.bf16.mxu0 0
  %1063 = vmatpush1.bf16.xpose.msra.mxu0 0
  %1064 = vmatprep.subr.bf16.mxu0 0
  %1065 = vmatpush1.bf16.xpose.msra.mxu0 0
  %1066 = vmatprep.subr.bf16.mxu0 0
  %1067 = vmatpush1.bf16.xpose.msra.mxu0 0
  %1068 = vmatprep.subr.bf16.mxu0 0
  %1069 = vmatpush1.bf16.xpose.msra.mxu0 0
  %1070 = vmatprep.subr.bf16.mxu0 0
  %1071 = vmatpush1.bf16.xpose.msra.mxu0 0
  %1072 = vmatprep.subr.bf16.mxu0 0
  %1073 = vmatpush1.bf16.xpose.msra.mxu0 0
  %1074 = vmatprep.subr.bf16.mxu0 0
  %1075 = vmatpush1.bf16.xpose.msra.mxu0 0
  %1076 = vmatprep.subr.bf16.mxu0 0
  %1077 = vmatpush1.bf16.xpose.msra.mxu0 0
  %1078 = vmatprep.subr.bf16.mxu0 0
  %1079 = vmatpush1.bf16.xpose.msra.mxu0 0
  %1080 = vmatprep.mubr.bf16.mxu0 0
  %1081 = vmatmul.mubr.bf16.gmra.mrb[0].mxu0 %v1037
  %v1082 = vpop.f32.mrb[0].mxu0
  %v1083 = vadd.f32 0.0, %v1082
  %v1084 = vpop.f32.mrb[0].mxu0
  %v1085 = vpop.f32.mrb[0].mxu0
  %v1086 = vadd.f32 0.0, %v1085
  %v1087 = vpop.f32.mrb[0].mxu0
  %1088 = vmatprep.mubr.bf16.mxu0 0
  %1089 = vmatmul.mubr.bf16.gmra.mrb[0].mxu0 %v1040
  %v1090 = vpop.f32.mrb[0].mxu0
  %v1091 = vadd.f32 0.0, %v1090
  %v1092 = vpop.f32.mrb[0].mxu0
  %v1093 = vpop.f32.mrb[0].mxu0
  %v1094 = vadd.f32 0.0, %v1093
  %v1095 = vpop.f32.mrb[0].mxu0
  %1096 = vdwg.mxu0
  %1099 = vrot.lane.b32.xlu0 %v756, 112
  %v1100 = vpop.permute.xlu0 %1099
  %1101 = vrot.lane.b32.xlu0 %v757, 112
  %v1102 = vpop.permute.xlu0 %1101
  %v1104 = vsel %vm834, %v756, 0
  %v1107 = vsel %vm834, %v757, 0
  %v1110 = vsel %vm834, %v1100, 0
  %v1113 = vsel %vm834, %v1102, 0
  %1115 = vmatprep.subr.bf16.mxu0 0
  %1116 = vmatpush1.bf16.xpose.msra.mxu0 %v1110
  %1117 = vmatprep.subr.bf16.mxu0 0
  %1118 = vmatpush1.bf16.xpose.msra.mxu0 %v1113
  %1119 = vmatprep.subr.bf16.mxu0 0
  %1120 = vmatpush1.bf16.xpose.msra.mxu0 0
  %1121 = vmatprep.subr.bf16.mxu0 0
  %1122 = vmatpush1.bf16.xpose.msra.mxu0 0
  %1123 = vmatprep.subr.bf16.mxu0 0
  %1124 = vmatpush1.bf16.xpose.msra.mxu0 0
  %1125 = vmatprep.subr.bf16.mxu0 0
  %1126 = vmatpush1.bf16.xpose.msra.mxu0 0
  %1127 = vmatprep.subr.bf16.mxu0 0
  %1128 = vmatpush1.bf16.xpose.msra.mxu0 0
  %1129 = vmatprep.subr.bf16.mxu0 0
  %1130 = vmatpush1.bf16.xpose.msra.mxu0 0
  %1131 = vmatprep.subr.bf16.mxu0 0
  %1132 = vmatpush1.bf16.xpose.msra.mxu0 0
  %1133 = vmatprep.subr.bf16.mxu0 0
  %1134 = vmatpush1.bf16.xpose.msra.mxu0 0
  %1135 = vmatprep.subr.bf16.mxu0 0
  %1136 = vmatpush1.bf16.xpose.msra.mxu0 0
  %1137 = vmatprep.subr.bf16.mxu0 0
  %1138 = vmatpush1.bf16.xpose.msra.mxu0 0
  %1139 = vmatprep.subr.bf16.mxu0 0
  %1140 = vmatpush1.bf16.xpose.msra.mxu0 0
  %1141 = vmatprep.subr.bf16.mxu0 0
  %1142 = vmatpush1.bf16.xpose.msra.mxu0 0
  %1143 = vmatprep.subr.bf16.mxu0 0
  %1144 = vmatpush1.bf16.xpose.msra.mxu0 0
  %1145 = vmatprep.subr.bf16.mxu0 0
  %1146 = vmatpush1.bf16.xpose.msra.mxu0 0
  %1147 = vmatprep.mubr.bf16.mxu0 0
  %1148 = vmatmul.mubr.bf16.gmra.mrb[0].mxu0 %v1104
  %v1149 = vpop.f32.mrb[0].mxu0
  %v1150 = vadd.f32 0.0, %v1149
  %v1151 = vpop.f32.mrb[0].mxu0
  %v1152 = vpop.f32.mrb[0].mxu0
  %v1153 = vadd.f32 0.0, %v1152
  %v1154 = vpop.f32.mrb[0].mxu0
  %1155 = vmatprep.mubr.bf16.mxu0 0
  %1156 = vmatmul.mubr.bf16.gmra.mrb[0].mxu0 %v1107
  %v1157 = vpop.f32.mrb[0].mxu0
  %v1158 = vadd.f32 0.0, %v1157
  %v1159 = vpop.f32.mrb[0].mxu0
  %v1160 = vpop.f32.mrb[0].mxu0
  %v1161 = vadd.f32 0.0, %v1160
  %v1162 = vpop.f32.mrb[0].mxu0
  %1163 = vdwg.mxu0
  %1166 = vrot.lane.b32.xlu0 %v758, 112
  %v1167 = vpop.permute.xlu0 %1166
  %1168 = vrot.lane.b32.xlu0 %v759, 112
  %v1169 = vpop.permute.xlu0 %1168
  %v1171 = vsel %vm834, %v758, 0
  %v1174 = vsel %vm834, %v759, 0
  %v1177 = vsel %vm834, %v1167, 0
  %v1180 = vsel %vm834, %v1169, 0
  %1182 = vmatprep.subr.bf16.mxu0 0
  %1183 = vmatpush1.bf16.xpose.msra.mxu0 %v1177
  %1184 = vmatprep.subr.bf16.mxu0 0
  %1185 = vmatpush1.bf16.xpose.msra.mxu0 %v1180
  %1186 = vmatprep.subr.bf16.mxu0 0
  %1187 = vmatpush1.bf16.xpose.msra.mxu0 0
  %1188 = vmatprep.subr.bf16.mxu0 0
  %1189 = vmatpush1.bf16.xpose.msra.mxu0 0
  %1190 = vmatprep.subr.bf16.mxu0 0
  %1191 = vmatpush1.bf16.xpose.msra.mxu0 0
  %1192 = vmatprep.subr.bf16.mxu0 0
  %1193 = vmatpush1.bf16.xpose.msra.mxu0 0
  %1194 = vmatprep.subr.bf16.mxu0 0
  %1195 = vmatpush1.bf16.xpose.msra.mxu0 0
  %1196 = vmatprep.subr.bf16.mxu0 0
  %1197 = vmatpush1.bf16.xpose.msra.mxu0 0
  %1198 = vmatprep.subr.bf16.mxu0 0
  %1199 = vmatpush1.bf16.xpose.msra.mxu0 0
  %1200 = vmatprep.subr.bf16.mxu0 0
  %1201 = vmatpush1.bf16.xpose.msra.mxu0 0
  %1202 = vmatprep.subr.bf16.mxu0 0
  %1203 = vmatpush1.bf16.xpose.msra.mxu0 0
  %1204 = vmatprep.subr.bf16.mxu0 0
  %1205 = vmatpush1.bf16.xpose.msra.mxu0 0
  %1206 = vmatprep.subr.bf16.mxu0 0
  %1207 = vmatpush1.bf16.xpose.msra.mxu0 0
  %1208 = vmatprep.subr.bf16.mxu0 0
  %1209 = vmatpush1.bf16.xpose.msra.mxu0 0
  %1210 = vmatprep.subr.bf16.mxu0 0
  %1211 = vmatpush1.bf16.xpose.msra.mxu0 0
  %1212 = vmatprep.subr.bf16.mxu0 0
  %1213 = vmatpush1.bf16.xpose.msra.mxu0 0
  %1214 = vmatprep.mubr.bf16.mxu0 0
  %1215 = vmatmul.mubr.bf16.gmra.mrb[0].mxu0 %v1171
  %v1216 = vpop.f32.mrb[0].mxu0
  %v1217 = vadd.f32 0.0, %v1216
  %v1218 = vpop.f32.mrb[0].mxu0
  %v1219 = vpop.f32.mrb[0].mxu0
  %v1220 = vadd.f32 0.0, %v1219
  %v1221 = vpop.f32.mrb[0].mxu0
  %1222 = vmatprep.mubr.bf16.mxu0 0
  %1223 = vmatmul.mubr.bf16.gmra.mrb[0].mxu0 %v1174
  %v1224 = vpop.f32.mrb[0].mxu0
  %v1225 = vadd.f32 0.0, %v1224
  %v1226 = vpop.f32.mrb[0].mxu0
  %v1227 = vpop.f32.mrb[0].mxu0
  %v1228 = vadd.f32 0.0, %v1227
  %v1229 = vpop.f32.mrb[0].mxu0
  %1230 = vdwg.mxu0
  %1233 = vrot.lane.b32.xlu0 %v760, 112
  %v1234 = vpop.permute.xlu0 %1233
  %1235 = vrot.lane.b32.xlu0 %v761, 112
  %v1236 = vpop.permute.xlu0 %1235
  %v1238 = vsel %vm834, %v760, 0
  %v1241 = vsel %vm834, %v761, 0
  %v1244 = vsel %vm834, %v1234, 0
  %v1247 = vsel %vm834, %v1236, 0
  %1249 = vmatprep.subr.bf16.mxu0 0
  %1250 = vmatpush1.bf16.xpose.msra.mxu0 %v1244
  %1251 = vmatprep.subr.bf16.mxu0 0
  %1252 = vmatpush1.bf16.xpose.msra.mxu0 %v1247
  %1253 = vmatprep.subr.bf16.mxu0 0
  %1254 = vmatpush1.bf16.xpose.msra.mxu0 0
  %1255 = vmatprep.subr.bf16.mxu0 0
  %1256 = vmatpush1.bf16.xpose.msra.mxu0 0
  %1257 = vmatprep.subr.bf16.mxu0 0
  %1258 = vmatpush1.bf16.xpose.msra.mxu0 0
  %1259 = vmatprep.subr.bf16.mxu0 0
  %1260 = vmatpush1.bf16.xpose.msra.mxu0 0
  %1261 = vmatprep.subr.bf16.mxu0 0
  %1262 = vmatpush1.bf16.xpose.msra.mxu0 0
  %1263 = vmatprep.subr.bf16.mxu0 0
  %1264 = vmatpush1.bf16.xpose.msra.mxu0 0
  %1265 = vmatprep.subr.bf16.mxu0 0
  %1266 = vmatpush1.bf16.xpose.msra.mxu0 0
  %1267 = vmatprep.subr.bf16.mxu0 0
  %1268 = vmatpush1.bf16.xpose.msra.mxu0 0
  %1269 = vmatprep.subr.bf16.mxu0 0
  %1270 = vmatpush1.bf16.xpose.msra.mxu0 0
  %1271 = vmatprep.subr.bf16.mxu0 0
  %1272 = vmatpush1.bf16.xpose.msra.mxu0 0
  %1273 = vmatprep.subr.bf16.mxu0 0
  %1274 = vmatpush1.bf16.xpose.msra.mxu0 0
  %1275 = vmatprep.subr.bf16.mxu0 0
  %1276 = vmatpush1.bf16.xpose.msra.mxu0 0
  %1277 = vmatprep.subr.bf16.mxu0 0
  %1278 = vmatpush1.bf16.xpose.msra.mxu0 0
  %1279 = vmatprep.subr.bf16.mxu0 0
  %1280 = vmatpush1.bf16.xpose.msra.mxu0 0
  %1281 = vmatprep.mubr.bf16.mxu0 0
  %1282 = vmatmul.mubr.bf16.gmra.mrb[0].mxu0 %v1238
  %v1283 = vpop.f32.mrb[0].mxu0
  %v1284 = vadd.f32 0.0, %v1283
  %v1285 = vpop.f32.mrb[0].mxu0
  %v1286 = vpop.f32.mrb[0].mxu0
  %v1287 = vadd.f32 0.0, %v1286
  %v1288 = vpop.f32.mrb[0].mxu0
  %1289 = vmatprep.mubr.bf16.mxu0 0
  %1290 = vmatmul.mubr.bf16.gmra.mrb[0].mxu0 %v1241
  %v1291 = vpop.f32.mrb[0].mxu0
  %v1292 = vadd.f32 0.0, %v1291
  %v1293 = vpop.f32.mrb[0].mxu0
  %v1294 = vpop.f32.mrb[0].mxu0
  %v1295 = vadd.f32 0.0, %v1294
  %v1296 = vpop.f32.mrb[0].mxu0
  %1297 = vdwg.mxu0
  %1300 = vrot.lane.b32.xlu0 %v762, 112
  %v1301 = vpop.permute.xlu0 %1300
  %1302 = vrot.lane.b32.xlu0 %v763, 112
  %v1303 = vpop.permute.xlu0 %1302
  %v1305 = vsel %vm834, %v762, 0
  %v1308 = vsel %vm834, %v763, 0
  %v1311 = vsel %vm834, %v1301, 0
  %v1314 = vsel %vm834, %v1303, 0
  %1316 = vmatprep.subr.bf16.mxu0 0
  %1317 = vmatpush1.bf16.xpose.msra.mxu0 %v1311
  %1318 = vmatprep.subr.bf16.mxu0 0
  %1319 = vmatpush1.bf16.xpose.msra.mxu0 %v1314
  %1320 = vmatprep.subr.bf16.mxu0 0
  %1321 = vmatpush1.bf16.xpose.msra.mxu0 0
  %1322 = vmatprep.subr.bf16.mxu0 0
  %1323 = vmatpush1.bf16.xpose.msra.mxu0 0
  %1324 = vmatprep.subr.bf16.mxu0 0
  %1325 = vmatpush1.bf16.xpose.msra.mxu0 0
  %1326 = vmatprep.subr.bf16.mxu0 0
  %1327 = vmatpush1.bf16.xpose.msra.mxu0 0
  %1328 = vmatprep.subr.bf16.mxu0 0
  %1329 = vmatpush1.bf16.xpose.msra.mxu0 0
  %1330 = vmatprep.subr.bf16.mxu0 0
  %1331 = vmatpush1.bf16.xpose.msra.mxu0 0
  %1332 = vmatprep.subr.bf16.mxu0 0
  %1333 = vmatpush1.bf16.xpose.msra.mxu0 0
  %1334 = vmatprep.subr.bf16.mxu0 0
  %1335 = vmatpush1.bf16.xpose.msra.mxu0 0
  %1336 = vmatprep.subr.bf16.mxu0 0
  %1337 = vmatpush1.bf16.xpose.msra.mxu0 0
  %1338 = vmatprep.subr.bf16.mxu0 0
  %1339 = vmatpush1.bf16.xpose.msra.mxu0 0
  %1340 = vmatprep.subr.bf16.mxu0 0
  %1341 = vmatpush1.bf16.xpose.msra.mxu0 0
  %1342 = vmatprep.subr.bf16.mxu0 0
  %1343 = vmatpush1.bf16.xpose.msra.mxu0 0
  %1344 = vmatprep.subr.bf16.mxu0 0
  %1345 = vmatpush1.bf16.xpose.msra.mxu0 0
  %1346 = vmatprep.subr.bf16.mxu0 0
  %1347 = vmatpush1.bf16.xpose.msra.mxu0 0
  %1348 = vmatprep.mubr.bf16.mxu0 0
  %1349 = vmatmul.mubr.bf16.gmra.mrb[0].mxu0 %v1305
  %v1350 = vpop.f32.mrb[0].mxu0
  %v1351 = vadd.f32 0.0, %v1350
  %v1352 = vpop.f32.mrb[0].mxu0
  %v1353 = vpop.f32.mrb[0].mxu0
  %v1354 = vadd.f32 0.0, %v1353
  %v1355 = vpop.f32.mrb[0].mxu0
  %1356 = vmatprep.mubr.bf16.mxu0 0
  %1357 = vmatmul.mubr.bf16.gmra.mrb[0].mxu0 %v1308
  %v1358 = vpop.f32.mrb[0].mxu0
  %v1359 = vadd.f32 0.0, %v1358
  %v1360 = vpop.f32.mrb[0].mxu0
  %v1361 = vpop.f32.mrb[0].mxu0
  %v1362 = vadd.f32 0.0, %v1361
  %v1363 = vpop.f32.mrb[0].mxu0
  %1364 = vdwg.mxu0
  %1367 = vrot.lane.b32.xlu0 %v764, 112
  %v1368 = vpop.permute.xlu0 %1367
  %1369 = vrot.lane.b32.xlu0 %v765, 112
  %v1370 = vpop.permute.xlu0 %1369
  %v1372 = vsel %vm834, %v764, 0
  %v1375 = vsel %vm834, %v765, 0
  %v1378 = vsel %vm834, %v1368, 0
  %v1381 = vsel %vm834, %v1370, 0
  %1383 = vmatprep.subr.bf16.mxu0 0
  %1384 = vmatpush1.bf16.xpose.msra.mxu0 %v1378
  %1385 = vmatprep.subr.bf16.mxu0 0
  %1386 = vmatpush1.bf16.xpose.msra.mxu0 %v1381
  %1387 = vmatprep.subr.bf16.mxu0 0
  %1388 = vmatpush1.bf16.xpose.msra.mxu0 0
  %1389 = vmatprep.subr.bf16.mxu0 0
  %1390 = vmatpush1.bf16.xpose.msra.mxu0 0
  %1391 = vmatprep.subr.bf16.mxu0 0
  %1392 = vmatpush1.bf16.xpose.msra.mxu0 0
  %1393 = vmatprep.subr.bf16.mxu0 0
  %1394 = vmatpush1.bf16.xpose.msra.mxu0 0
  %1395 = vmatprep.subr.bf16.mxu0 0
  %1396 = vmatpush1.bf16.xpose.msra.mxu0 0
  %1397 = vmatprep.subr.bf16.mxu0 0
  %1398 = vmatpush1.bf16.xpose.msra.mxu0 0
  %1399 = vmatprep.subr.bf16.mxu0 0
  %1400 = vmatpush1.bf16.xpose.msra.mxu0 0
  %1401 = vmatprep.subr.bf16.mxu0 0
  %1402 = vmatpush1.bf16.xpose.msra.mxu0 0
  %1403 = vmatprep.subr.bf16.mxu0 0
  %1404 = vmatpush1.bf16.xpose.msra.mxu0 0
  %1405 = vmatprep.subr.bf16.mxu0 0
  %1406 = vmatpush1.bf16.xpose.msra.mxu0 0
  %1407 = vmatprep.subr.bf16.mxu0 0
  %1408 = vmatpush1.bf16.xpose.msra.mxu0 0
  %1409 = vmatprep.subr.bf16.mxu0 0
  %1410 = vmatpush1.bf16.xpose.msra.mxu0 0
  %1411 = vmatprep.subr.bf16.mxu0 0
  %1412 = vmatpush1.bf16.xpose.msra.mxu0 0
  %1413 = vmatprep.subr.bf16.mxu0 0
  %1414 = vmatpush1.bf16.xpose.msra.mxu0 0
  %1415 = vmatprep.mubr.bf16.mxu0 0
  %1416 = vmatmul.mubr.bf16.gmra.mrb[0].mxu0 %v1372
  %v1417 = vpop.f32.mrb[0].mxu0
  %v1418 = vadd.f32 0.0, %v1417
  %v1419 = vpop.f32.mrb[0].mxu0
  %v1420 = vpop.f32.mrb[0].mxu0
  %v1421 = vadd.f32 0.0, %v1420
  %v1422 = vpop.f32.mrb[0].mxu0
  %1423 = vmatprep.mubr.bf16.mxu0 0
  %1424 = vmatmul.mubr.bf16.gmra.mrb[0].mxu0 %v1375
  %v1425 = vpop.f32.mrb[0].mxu0
  %v1426 = vadd.f32 0.0, %v1425
  %v1427 = vpop.f32.mrb[0].mxu0
  %v1428 = vpop.f32.mrb[0].mxu0
  %v1429 = vadd.f32 0.0, %v1428
  %v1430 = vpop.f32.mrb[0].mxu0
  %1431 = vdwg.mxu0
  %1434 = vrot.lane.b32.xlu0 %v766, 112
  %v1435 = vpop.permute.xlu0 %1434
  %1436 = vrot.lane.b32.xlu0 %v767, 112
  %v1437 = vpop.permute.xlu0 %1436
  %v1439 = vsel %vm834, %v766, 0
  %v1442 = vsel %vm834, %v767, 0
  %v1445 = vsel %vm834, %v1435, 0
  %v1448 = vsel %vm834, %v1437, 0
  %1450 = vmatprep.subr.bf16.mxu0 0
  %1451 = vmatpush1.bf16.xpose.msra.mxu0 %v1445
  %1452 = vmatprep.subr.bf16.mxu0 0
  %1453 = vmatpush1.bf16.xpose.msra.mxu0 %v1448
  %1454 = vmatprep.subr.bf16.mxu0 0
  %1455 = vmatpush1.bf16.xpose.msra.mxu0 0
  %1456 = vmatprep.subr.bf16.mxu0 0
  %1457 = vmatpush1.bf16.xpose.msra.mxu0 0
  %1458 = vmatprep.subr.bf16.mxu0 0
  %1459 = vmatpush1.bf16.xpose.msra.mxu0 0
  %1460 = vmatprep.subr.bf16.mxu0 0
  %1461 = vmatpush1.bf16.xpose.msra.mxu0 0
  %1462 = vmatprep.subr.bf16.mxu0 0
  %1463 = vmatpush1.bf16.xpose.msra.mxu0 0
  %1464 = vmatprep.subr.bf16.mxu0 0
  %1465 = vmatpush1.bf16.xpose.msra.mxu0 0
  %1466 = vmatprep.subr.bf16.mxu0 0
  %1467 = vmatpush1.bf16.xpose.msra.mxu0 0
  %1468 = vmatprep.subr.bf16.mxu0 0
  %1469 = vmatpush1.bf16.xpose.msra.mxu0 0
  %1470 = vmatprep.subr.bf16.mxu0 0
  %1471 = vmatpush1.bf16.xpose.msra.mxu0 0
  %1472 = vmatprep.subr.bf16.mxu0 0
  %1473 = vmatpush1.bf16.xpose.msra.mxu0 0
  %1474 = vmatprep.subr.bf16.mxu0 0
  %1475 = vmatpush1.bf16.xpose.msra.mxu0 0
  %1476 = vmatprep.subr.bf16.mxu0 0
  %1477 = vmatpush1.bf16.xpose.msra.mxu0 0
  %1478 = vmatprep.subr.bf16.mxu0 0
  %1479 = vmatpush1.bf16.xpose.msra.mxu0 0
  %1480 = vmatprep.subr.bf16.mxu0 0
  %1481 = vmatpush1.bf16.xpose.msra.mxu0 0
  %1482 = vmatprep.mubr.bf16.mxu0 0
  %1483 = vmatmul.mubr.bf16.gmra.mrb[0].mxu0 %v1439
  %v1484 = vpop.f32.mrb[0].mxu0
  %v1485 = vadd.f32 0.0, %v1484
  %v1486 = vpop.f32.mrb[0].mxu0
  %v1487 = vpop.f32.mrb[0].mxu0
  %v1488 = vadd.f32 0.0, %v1487
  %v1489 = vpop.f32.mrb[0].mxu0
  %1490 = vmatprep.mubr.bf16.mxu0 0
  %1491 = vmatmul.mubr.bf16.gmra.mrb[0].mxu0 %v1442
  %v1492 = vpop.f32.mrb[0].mxu0
  %v1493 = vadd.f32 0.0, %v1492
  %v1494 = vpop.f32.mrb[0].mxu0
  %v1495 = vpop.f32.mrb[0].mxu0
  %v1496 = vadd.f32 0.0, %v1495
  %v1497 = vpop.f32.mrb[0].mxu0
  %1498 = vdwg.mxu0
  %1501 = vrot.lane.b32.xlu0 %v768, 112
  %v1502 = vpop.permute.xlu0 %1501
  %1503 = vrot.lane.b32.xlu0 %v769, 112
  %v1504 = vpop.permute.xlu0 %1503
  %v1506 = vsel %vm834, %v768, 0
  %v1509 = vsel %vm834, %v769, 0
  %v1512 = vsel %vm834, %v1502, 0
  %v1515 = vsel %vm834, %v1504, 0
  %1517 = vmatprep.subr.bf16.mxu0 0
  %1518 = vmatpush1.bf16.xpose.msra.mxu0 %v1512
  %1519 = vmatprep.subr.bf16.mxu0 0
  %1520 = vmatpush1.bf16.xpose.msra.mxu0 %v1515
  %1521 = vmatprep.subr.bf16.mxu0 0
  %1522 = vmatpush1.bf16.xpose.msra.mxu0 0
  %1523 = vmatprep.subr.bf16.mxu0 0
  %1524 = vmatpush1.bf16.xpose.msra.mxu0 0
  %1525 = vmatprep.subr.bf16.mxu0 0
  %1526 = vmatpush1.bf16.xpose.msra.mxu0 0
  %1527 = vmatprep.subr.bf16.mxu0 0
  %1528 = vmatpush1.bf16.xpose.msra.mxu0 0
  %1529 = vmatprep.subr.bf16.mxu0 0
  %1530 = vmatpush1.bf16.xpose.msra.mxu0 0
  %1531 = vmatprep.subr.bf16.mxu0 0
  %1532 = vmatpush1.bf16.xpose.msra.mxu0 0
  %1533 = vmatprep.subr.bf16.mxu0 0
  %1534 = vmatpush1.bf16.xpose.msra.mxu0 0
  %1535 = vmatprep.subr.bf16.mxu0 0
  %1536 = vmatpush1.bf16.xpose.msra.mxu0 0
  %1537 = vmatprep.subr.bf16.mxu0 0
  %1538 = vmatpush1.bf16.xpose.msra.mxu0 0
  %1539 = vmatprep.subr.bf16.mxu0 0
  %1540 = vmatpush1.bf16.xpose.msra.mxu0 0
  %1541 = vmatprep.subr.bf16.mxu0 0
  %1542 = vmatpush1.bf16.xpose.msra.mxu0 0
  %1543 = vmatprep.subr.bf16.mxu0 0
  %1544 = vmatpush1.bf16.xpose.msra.mxu0 0
  %1545 = vmatprep.subr.bf16.mxu0 0
  %1546 = vmatpush1.bf16.xpose.msra.mxu0 0
  %1547 = vmatprep.subr.bf16.mxu0 0
  %1548 = vmatpush1.bf16.xpose.msra.mxu0 0
  %1549 = vmatprep.mubr.bf16.mxu0 0
  %1550 = vmatmul.mubr.bf16.gmra.mrb[0].mxu0 %v1506
  %v1551 = vpop.f32.mrb[0].mxu0
  %v1552 = vadd.f32 0.0, %v1551
  %v1553 = vpop.f32.mrb[0].mxu0
  %v1554 = vpop.f32.mrb[0].mxu0
  %v1555 = vadd.f32 0.0, %v1554
  %v1556 = vpop.f32.mrb[0].mxu0
  %1557 = vmatprep.mubr.bf16.mxu0 0
  %1558 = vmatmul.mubr.bf16.gmra.mrb[0].mxu0 %v1509
  %v1559 = vpop.f32.mrb[0].mxu0
  %v1560 = vadd.f32 0.0, %v1559
  %v1561 = vpop.f32.mrb[0].mxu0
  %v1562 = vpop.f32.mrb[0].mxu0
  %v1563 = vadd.f32 0.0, %v1562
  %v1564 = vpop.f32.mrb[0].mxu0
  %1565 = vdwg.mxu0
  %1568 = vrot.lane.b32.xlu0 %v770, 112
  %v1569 = vpop.permute.xlu0 %1568
  %1570 = vrot.lane.b32.xlu0 %v771, 112
  %v1571 = vpop.permute.xlu0 %1570
  %v1573 = vsel %vm834, %v770, 0
  %v1576 = vsel %vm834, %v771, 0
  %v1579 = vsel %vm834, %v1569, 0
  %v1582 = vsel %vm834, %v1571, 0
  %1584 = vmatprep.subr.bf16.mxu0 0
  %1585 = vmatpush1.bf16.xpose.msra.mxu0 %v1579
  %1586 = vmatprep.subr.bf16.mxu0 0
  %1587 = vmatpush1.bf16.xpose.msra.mxu0 %v1582
  %1588 = vmatprep.subr.bf16.mxu0 0
  %1589 = vmatpush1.bf16.xpose.msra.mxu0 0
  %1590 = vmatprep.subr.bf16.mxu0 0
  %1591 = vmatpush1.bf16.xpose.msra.mxu0 0
  %1592 = vmatprep.subr.bf16.mxu0 0
  %1593 = vmatpush1.bf16.xpose.msra.mxu0 0
  %1594 = vmatprep.subr.bf16.mxu0 0
  %1595 = vmatpush1.bf16.xpose.msra.mxu0 0
  %1596 = vmatprep.subr.bf16.mxu0 0
  %1597 = vmatpush1.bf16.xpose.msra.mxu0 0
  %1598 = vmatprep.subr.bf16.mxu0 0
  %1599 = vmatpush1.bf16.xpose.msra.mxu0 0
  %1600 = vmatprep.subr.bf16.mxu0 0
  %1601 = vmatpush1.bf16.xpose.msra.mxu0 0
  %1602 = vmatprep.subr.bf16.mxu0 0
  %1603 = vmatpush1.bf16.xpose.msra.mxu0 0
  %1604 = vmatprep.subr.bf16.mxu0 0
  %1605 = vmatpush1.bf16.xpose.msra.mxu0 0
  %1606 = vmatprep.subr.bf16.mxu0 0
  %1607 = vmatpush1.bf16.xpose.msra.mxu0 0
  %1608 = vmatprep.subr.bf16.mxu0 0
  %1609 = vmatpush1.bf16.xpose.msra.mxu0 0
  %1610 = vmatprep.subr.bf16.mxu0 0
  %1611 = vmatpush1.bf16.xpose.msra.mxu0 0
  %1612 = vmatprep.subr.bf16.mxu0 0
  %1613 = vmatpush1.bf16.xpose.msra.mxu0 0
  %1614 = vmatprep.subr.bf16.mxu0 0
  %1615 = vmatpush1.bf16.xpose.msra.mxu0 0
  %1616 = vmatprep.mubr.bf16.mxu0 0
  %1617 = vmatmul.mubr.bf16.gmra.mrb[0].mxu0 %v1573
  %v1618 = vpop.f32.mrb[0].mxu0
  %v1619 = vadd.f32 0.0, %v1618
  %v1620 = vpop.f32.mrb[0].mxu0
  %v1621 = vpop.f32.mrb[0].mxu0
  %v1622 = vadd.f32 0.0, %v1621
  %v1623 = vpop.f32.mrb[0].mxu0
  %1624 = vmatprep.mubr.bf16.mxu0 0
  %1625 = vmatmul.mubr.bf16.gmra.mrb[0].mxu0 %v1576
  %v1626 = vpop.f32.mrb[0].mxu0
  %v1627 = vadd.f32 0.0, %v1626
  %v1628 = vpop.f32.mrb[0].mxu0
  %v1629 = vpop.f32.mrb[0].mxu0
  %v1630 = vadd.f32 0.0, %v1629
  %v1631 = vpop.f32.mrb[0].mxu0
  %1632 = vdwg.mxu0
  %1635 = vrot.lane.b32.xlu0 %v772, 112
  %v1636 = vpop.permute.xlu0 %1635
  %1637 = vrot.lane.b32.xlu0 %v773, 112
  %v1638 = vpop.permute.xlu0 %1637
  %v1640 = vsel %vm834, %v772, 0
  %v1643 = vsel %vm834, %v773, 0
  %v1646 = vsel %vm834, %v1636, 0
  %v1649 = vsel %vm834, %v1638, 0
  %1651 = vmatprep.subr.bf16.mxu0 0
  %1652 = vmatpush1.bf16.xpose.msra.mxu0 %v1646
  %1653 = vmatprep.subr.bf16.mxu0 0
  %1654 = vmatpush1.bf16.xpose.msra.mxu0 %v1649
  %1655 = vmatprep.subr.bf16.mxu0 0
  %1656 = vmatpush1.bf16.xpose.msra.mxu0 0
  %1657 = vmatprep.subr.bf16.mxu0 0
  %1658 = vmatpush1.bf16.xpose.msra.mxu0 0
  %1659 = vmatprep.subr.bf16.mxu0 0
  %1660 = vmatpush1.bf16.xpose.msra.mxu0 0
  %1661 = vmatprep.subr.bf16.mxu0 0
  %1662 = vmatpush1.bf16.xpose.msra.mxu0 0
  %1663 = vmatprep.subr.bf16.mxu0 0
  %1664 = vmatpush1.bf16.xpose.msra.mxu0 0
  %1665 = vmatprep.subr.bf16.mxu0 0
  %1666 = vmatpush1.bf16.xpose.msra.mxu0 0
  %1667 = vmatprep.subr.bf16.mxu0 0
  %1668 = vmatpush1.bf16.xpose.msra.mxu0 0
  %1669 = vmatprep.subr.bf16.mxu0 0
  %1670 = vmatpush1.bf16.xpose.msra.mxu0 0
  %1671 = vmatprep.subr.bf16.mxu0 0
  %1672 = vmatpush1.bf16.xpose.msra.mxu0 0
  %1673 = vmatprep.subr.bf16.mxu0 0
  %1674 = vmatpush1.bf16.xpose.msra.mxu0 0
  %1675 = vmatprep.subr.bf16.mxu0 0
  %1676 = vmatpush1.bf16.xpose.msra.mxu0 0
  %1677 = vmatprep.subr.bf16.mxu0 0
  %1678 = vmatpush1.bf16.xpose.msra.mxu0 0
  %1679 = vmatprep.subr.bf16.mxu0 0
  %1680 = vmatpush1.bf16.xpose.msra.mxu0 0
  %1681 = vmatprep.subr.bf16.mxu0 0
  %1682 = vmatpush1.bf16.xpose.msra.mxu0 0
  %1683 = vmatprep.mubr.bf16.mxu0 0
  %1684 = vmatmul.mubr.bf16.gmra.mrb[0].mxu0 %v1640
  %v1685 = vpop.f32.mrb[0].mxu0
  %v1686 = vadd.f32 0.0, %v1685
  %v1687 = vpop.f32.mrb[0].mxu0
  %v1688 = vpop.f32.mrb[0].mxu0
  %v1689 = vadd.f32 0.0, %v1688
  %v1690 = vpop.f32.mrb[0].mxu0
  %1691 = vmatprep.mubr.bf16.mxu0 0
  %1692 = vmatmul.mubr.bf16.gmra.mrb[0].mxu0 %v1643
  %v1693 = vpop.f32.mrb[0].mxu0
  %v1694 = vadd.f32 0.0, %v1693
  %v1695 = vpop.f32.mrb[0].mxu0
  %v1696 = vpop.f32.mrb[0].mxu0
  %v1697 = vadd.f32 0.0, %v1696
  %v1698 = vpop.f32.mrb[0].mxu0
  %1699 = vdwg.mxu0
  %1702 = vrot.lane.b32.xlu0 %v774, 112
  %v1703 = vpop.permute.xlu0 %1702
  %1704 = vrot.lane.b32.xlu0 %v775, 112
  %v1705 = vpop.permute.xlu0 %1704
  %v1707 = vsel %vm834, %v774, 0
  %v1710 = vsel %vm834, %v775, 0
  %v1713 = vsel %vm834, %v1703, 0
  %v1716 = vsel %vm834, %v1705, 0
  %1718 = vmatprep.subr.bf16.mxu0 0
  %1719 = vmatpush1.bf16.xpose.msra.mxu0 %v1713
  %1720 = vmatprep.subr.bf16.mxu0 0
  %1721 = vmatpush1.bf16.xpose.msra.mxu0 %v1716
  %1722 = vmatprep.subr.bf16.mxu0 0
  %1723 = vmatpush1.bf16.xpose.msra.mxu0 0
  %1724 = vmatprep.subr.bf16.mxu0 0
  %1725 = vmatpush1.bf16.xpose.msra.mxu0 0
  %1726 = vmatprep.subr.bf16.mxu0 0
  %1727 = vmatpush1.bf16.xpose.msra.mxu0 0
  %1728 = vmatprep.subr.bf16.mxu0 0
  %1729 = vmatpush1.bf16.xpose.msra.mxu0 0
  %1730 = vmatprep.subr.bf16.mxu0 0
  %1731 = vmatpush1.bf16.xpose.msra.mxu0 0
  %1732 = vmatprep.subr.bf16.mxu0 0
  %1733 = vmatpush1.bf16.xpose.msra.mxu0 0
  %1734 = vmatprep.subr.bf16.mxu0 0
  %1735 = vmatpush1.bf16.xpose.msra.mxu0 0
  %1736 = vmatprep.subr.bf16.mxu0 0
  %1737 = vmatpush1.bf16.xpose.msra.mxu0 0
  %1738 = vmatprep.subr.bf16.mxu0 0
  %1739 = vmatpush1.bf16.xpose.msra.mxu0 0
  %1740 = vmatprep.subr.bf16.mxu0 0
  %1741 = vmatpush1.bf16.xpose.msra.mxu0 0
  %1742 = vmatprep.subr.bf16.mxu0 0
  %1743 = vmatpush1.bf16.xpose.msra.mxu0 0
  %1744 = vmatprep.subr.bf16.mxu0 0
  %1745 = vmatpush1.bf16.xpose.msra.mxu0 0
  %1746 = vmatprep.subr.bf16.mxu0 0
  %1747 = vmatpush1.bf16.xpose.msra.mxu0 0
  %1748 = vmatprep.subr.bf16.mxu0 0
  %1749 = vmatpush1.bf16.xpose.msra.mxu0 0
  %1750 = vmatprep.mubr.bf16.mxu0 0
  %1751 = vmatmul.mubr.bf16.gmra.mrb[0].mxu0 %v1707
  %v1752 = vpop.f32.mrb[0].mxu0
  %v1753 = vadd.f32 0.0, %v1752
  %v1754 = vpop.f32.mrb[0].mxu0
  %v1755 = vpop.f32.mrb[0].mxu0
  %v1756 = vadd.f32 0.0, %v1755
  %v1757 = vpop.f32.mrb[0].mxu0
  %1758 = vmatprep.mubr.bf16.mxu0 0
  %1759 = vmatmul.mubr.bf16.gmra.mrb[0].mxu0 %v1710
  %v1760 = vpop.f32.mrb[0].mxu0
  %v1761 = vadd.f32 0.0, %v1760
  %v1762 = vpop.f32.mrb[0].mxu0
  %v1763 = vpop.f32.mrb[0].mxu0
  %v1764 = vadd.f32 0.0, %v1763
  %v1765 = vpop.f32.mrb[0].mxu0
  %1766 = vdwg.mxu0
  %1769 = vrot.lane.b32.xlu0 %v776, 112
  %v1770 = vpop.permute.xlu0 %1769
  %1771 = vrot.lane.b32.xlu0 %v777, 112
  %v1772 = vpop.permute.xlu0 %1771
  %v1774 = vsel %vm834, %v776, 0
  %v1777 = vsel %vm834, %v777, 0
  %v1780 = vsel %vm834, %v1770, 0
  %v1783 = vsel %vm834, %v1772, 0
  %1785 = vmatprep.subr.bf16.mxu0 0
  %1786 = vmatpush1.bf16.xpose.msra.mxu0 %v1780
  %1787 = vmatprep.subr.bf16.mxu0 0
  %1788 = vmatpush1.bf16.xpose.msra.mxu0 %v1783
  %1789 = vmatprep.subr.bf16.mxu0 0
  %1790 = vmatpush1.bf16.xpose.msra.mxu0 0
  %1791 = vmatprep.subr.bf16.mxu0 0
  %1792 = vmatpush1.bf16.xpose.msra.mxu0 0
  %1793 = vmatprep.subr.bf16.mxu0 0
  %1794 = vmatpush1.bf16.xpose.msra.mxu0 0
  %1795 = vmatprep.subr.bf16.mxu0 0
  %1796 = vmatpush1.bf16.xpose.msra.mxu0 0
  %1797 = vmatprep.subr.bf16.mxu0 0
  %1798 = vmatpush1.bf16.xpose.msra.mxu0 0
  %1799 = vmatprep.subr.bf16.mxu0 0
  %1800 = vmatpush1.bf16.xpose.msra.mxu0 0
  %1801 = vmatprep.subr.bf16.mxu0 0
  %1802 = vmatpush1.bf16.xpose.msra.mxu0 0
  %1803 = vmatprep.subr.bf16.mxu0 0
  %1804 = vmatpush1.bf16.xpose.msra.mxu0 0
  %1805 = vmatprep.subr.bf16.mxu0 0
  %1806 = vmatpush1.bf16.xpose.msra.mxu0 0
  %1807 = vmatprep.subr.bf16.mxu0 0
  %1808 = vmatpush1.bf16.xpose.msra.mxu0 0
  %1809 = vmatprep.subr.bf16.mxu0 0
  %1810 = vmatpush1.bf16.xpose.msra.mxu0 0
  %1811 = vmatprep.subr.bf16.mxu0 0
  %1812 = vmatpush1.bf16.xpose.msra.mxu0 0
  %1813 = vmatprep.subr.bf16.mxu0 0
  %1814 = vmatpush1.bf16.xpose.msra.mxu0 0
  %1815 = vmatprep.subr.bf16.mxu0 0
  %1816 = vmatpush1.bf16.xpose.msra.mxu0 0
  %1817 = vmatprep.mubr.bf16.mxu0 0
  %1818 = vmatmul.mubr.bf16.gmra.mrb[0].mxu0 %v1774
  %v1819 = vpop.f32.mrb[0].mxu0
  %v1820 = vadd.f32 0.0, %v1819
  %v1821 = vpop.f32.mrb[0].mxu0
  %v1822 = vpop.f32.mrb[0].mxu0
  %v1823 = vadd.f32 0.0, %v1822
  %v1824 = vpop.f32.mrb[0].mxu0
  %1825 = vmatprep.mubr.bf16.mxu0 0
  %1826 = vmatmul.mubr.bf16.gmra.mrb[0].mxu0 %v1777
  %v1827 = vpop.f32.mrb[0].mxu0
  %v1828 = vadd.f32 0.0, %v1827
  %v1829 = vpop.f32.mrb[0].mxu0
  %v1830 = vpop.f32.mrb[0].mxu0
  %v1831 = vadd.f32 0.0, %v1830
  %v1832 = vpop.f32.mrb[0].mxu0
  %1833 = vdwg.mxu0
  %1836 = vrot.lane.b32.xlu0 %v778, 112
  %v1837 = vpop.permute.xlu0 %1836
  %1838 = vrot.lane.b32.xlu0 %v779, 112
  %v1839 = vpop.permute.xlu0 %1838
  %v1841 = vsel %vm834, %v778, 0
  %v1844 = vsel %vm834, %v779, 0
  %v1847 = vsel %vm834, %v1837, 0
  %v1850 = vsel %vm834, %v1839, 0
  %1852 = vmatprep.subr.bf16.mxu0 0
  %1853 = vmatpush1.bf16.xpose.msra.mxu0 %v1847
  %1854 = vmatprep.subr.bf16.mxu0 0
  %1855 = vmatpush1.bf16.xpose.msra.mxu0 %v1850
  %1856 = vmatprep.subr.bf16.mxu0 0
  %1857 = vmatpush1.bf16.xpose.msra.mxu0 0
  %1858 = vmatprep.subr.bf16.mxu0 0
  %1859 = vmatpush1.bf16.xpose.msra.mxu0 0
  %1860 = vmatprep.subr.bf16.mxu0 0
  %1861 = vmatpush1.bf16.xpose.msra.mxu0 0
  %1862 = vmatprep.subr.bf16.mxu0 0
  %1863 = vmatpush1.bf16.xpose.msra.mxu0 0
  %1864 = vmatprep.subr.bf16.mxu0 0
  %1865 = vmatpush1.bf16.xpose.msra.mxu0 0
  %1866 = vmatprep.subr.bf16.mxu0 0
  %1867 = vmatpush1.bf16.xpose.msra.mxu0 0
  %1868 = vmatprep.subr.bf16.mxu0 0
  %1869 = vmatpush1.bf16.xpose.msra.mxu0 0
  %1870 = vmatprep.subr.bf16.mxu0 0
  %1871 = vmatpush1.bf16.xpose.msra.mxu0 0
  %1872 = vmatprep.subr.bf16.mxu0 0
  %1873 = vmatpush1.bf16.xpose.msra.mxu0 0
  %1874 = vmatprep.subr.bf16.mxu0 0
  %1875 = vmatpush1.bf16.xpose.msra.mxu0 0
  %1876 = vmatprep.subr.bf16.mxu0 0
  %1877 = vmatpush1.bf16.xpose.msra.mxu0 0
  %1878 = vmatprep.subr.bf16.mxu0 0
  %1879 = vmatpush1.bf16.xpose.msra.mxu0 0
  %1880 = vmatprep.subr.bf16.mxu0 0
  %1881 = vmatpush1.bf16.xpose.msra.mxu0 0
  %1882 = vmatprep.subr.bf16.mxu0 0
  %1883 = vmatpush1.bf16.xpose.msra.mxu0 0
  %1884 = vmatprep.mubr.bf16.mxu0 0
  %1885 = vmatmul.mubr.bf16.gmra.mrb[0].mxu0 %v1841
  %v1886 = vpop.f32.mrb[0].mxu0
  %v1887 = vadd.f32 0.0, %v1886
  %v1888 = vpop.f32.mrb[0].mxu0
  %v1889 = vpop.f32.mrb[0].mxu0
  %v1890 = vadd.f32 0.0, %v1889
  %v1891 = vpop.f32.mrb[0].mxu0
  %1892 = vmatprep.mubr.bf16.mxu0 0
  %1893 = vmatmul.mubr.bf16.gmra.mrb[0].mxu0 %v1844
  %v1894 = vpop.f32.mrb[0].mxu0
  %v1895 = vadd.f32 0.0, %v1894
  %v1896 = vpop.f32.mrb[0].mxu0
  %v1897 = vpop.f32.mrb[0].mxu0
  %v1898 = vadd.f32 0.0, %v1897
  %v1899 = vpop.f32.mrb[0].mxu0
  %1900 = vdwg.mxu0
  %1903 = vrot.lane.b32.xlu0 %v780, 112
  %v1904 = vpop.permute.xlu0 %1903
  %1905 = vrot.lane.b32.xlu0 %v781, 112
  %v1906 = vpop.permute.xlu0 %1905
  %v1908 = vsel %vm834, %v780, 0
  %v1911 = vsel %vm834, %v781, 0
  %v1914 = vsel %vm834, %v1904, 0
  %v1917 = vsel %vm834, %v1906, 0
  %1919 = vmatprep.subr.bf16.mxu0 0
  %1920 = vmatpush1.bf16.xpose.msra.mxu0 %v1914
  %1921 = vmatprep.subr.bf16.mxu0 0
  %1922 = vmatpush1.bf16.xpose.msra.mxu0 %v1917
  %1923 = vmatprep.subr.bf16.mxu0 0
  %1924 = vmatpush1.bf16.xpose.msra.mxu0 0
  %1925 = vmatprep.subr.bf16.mxu0 0
  %1926 = vmatpush1.bf16.xpose.msra.mxu0 0
  %1927 = vmatprep.subr.bf16.mxu0 0
  %1928 = vmatpush1.bf16.xpose.msra.mxu0 0
  %1929 = vmatprep.subr.bf16.mxu0 0
  %1930 = vmatpush1.bf16.xpose.msra.mxu0 0
  %1931 = vmatprep.subr.bf16.mxu0 0
  %1932 = vmatpush1.bf16.xpose.msra.mxu0 0
  %1933 = vmatprep.subr.bf16.mxu0 0
  %1934 = vmatpush1.bf16.xpose.msra.mxu0 0
  %1935 = vmatprep.subr.bf16.mxu0 0
  %1936 = vmatpush1.bf16.xpose.msra.mxu0 0
  %1937 = vmatprep.subr.bf16.mxu0 0
  %1938 = vmatpush1.bf16.xpose.msra.mxu0 0
  %1939 = vmatprep.subr.bf16.mxu0 0
  %1940 = vmatpush1.bf16.xpose.msra.mxu0 0
  %1941 = vmatprep.subr.bf16.mxu0 0
  %1942 = vmatpush1.bf16.xpose.msra.mxu0 0
  %1943 = vmatprep.subr.bf16.mxu0 0
  %1944 = vmatpush1.bf16.xpose.msra.mxu0 0
  %1945 = vmatprep.subr.bf16.mxu0 0
  %1946 = vmatpush1.bf16.xpose.msra.mxu0 0
  %1947 = vmatprep.subr.bf16.mxu0 0
  %1948 = vmatpush1.bf16.xpose.msra.mxu0 0
  %1949 = vmatprep.subr.bf16.mxu0 0
  %1950 = vmatpush1.bf16.xpose.msra.mxu0 0
  %1951 = vmatprep.mubr.bf16.mxu0 0
  %1952 = vmatmul.mubr.bf16.gmra.mrb[0].mxu0 %v1908
  %v1953 = vpop.f32.mrb[0].mxu0
  %v1954 = vadd.f32 0.0, %v1953
  %v1955 = vpop.f32.mrb[0].mxu0
  %v1956 = vpop.f32.mrb[0].mxu0
  %v1957 = vadd.f32 0.0, %v1956
  %v1958 = vpop.f32.mrb[0].mxu0
  %1959 = vmatprep.mubr.bf16.mxu0 0
  %1960 = vmatmul.mubr.bf16.gmra.mrb[0].mxu0 %v1911
  %v1961 = vpop.f32.mrb[0].mxu0
  %v1962 = vadd.f32 0.0, %v1961
  %v1963 = vpop.f32.mrb[0].mxu0
  %v1964 = vpop.f32.mrb[0].mxu0
  %v1965 = vadd.f32 0.0, %v1964
  %v1966 = vpop.f32.mrb[0].mxu0
  %1967 = vdwg.mxu0
  %1970 = vrot.lane.b32.xlu0 %v782, 112
  %v1971 = vpop.permute.xlu0 %1970
  %1972 = vrot.lane.b32.xlu0 %v783, 112
  %v1973 = vpop.permute.xlu0 %1972
  %v1975 = vsel %vm834, %v782, 0
  %v1978 = vsel %vm834, %v783, 0
  %v1981 = vsel %vm834, %v1971, 0
  %v1984 = vsel %vm834, %v1973, 0
  %1986 = vmatprep.subr.bf16.mxu0 0
  %1987 = vmatpush1.bf16.xpose.msra.mxu0 %v1981
  %1988 = vmatprep.subr.bf16.mxu0 0
  %1989 = vmatpush1.bf16.xpose.msra.mxu0 %v1984
  %1990 = vmatprep.subr.bf16.mxu0 0
  %1991 = vmatpush1.bf16.xpose.msra.mxu0 0
  %1992 = vmatprep.subr.bf16.mxu0 0
  %1993 = vmatpush1.bf16.xpose.msra.mxu0 0
  %1994 = vmatprep.subr.bf16.mxu0 0
  %1995 = vmatpush1.bf16.xpose.msra.mxu0 0
  %1996 = vmatprep.subr.bf16.mxu0 0
  %1997 = vmatpush1.bf16.xpose.msra.mxu0 0
  %1998 = vmatprep.subr.bf16.mxu0 0
  %1999 = vmatpush1.bf16.xpose.msra.mxu0 0
  %2000 = vmatprep.subr.bf16.mxu0 0
  %2001 = vmatpush1.bf16.xpose.msra.mxu0 0
  %2002 = vmatprep.subr.bf16.mxu0 0
  %2003 = vmatpush1.bf16.xpose.msra.mxu0 0
  %2004 = vmatprep.subr.bf16.mxu0 0
  %2005 = vmatpush1.bf16.xpose.msra.mxu0 0
  %2006 = vmatprep.subr.bf16.mxu0 0
  %2007 = vmatpush1.bf16.xpose.msra.mxu0 0
  %2008 = vmatprep.subr.bf16.mxu0 0
  %2009 = vmatpush1.bf16.xpose.msra.mxu0 0
  %2010 = vmatprep.subr.bf16.mxu0 0
  %2011 = vmatpush1.bf16.xpose.msra.mxu0 0
  %2012 = vmatprep.subr.bf16.mxu0 0
  %2013 = vmatpush1.bf16.xpose.msra.mxu0 0
  %2014 = vmatprep.subr.bf16.mxu0 0
  %2015 = vmatpush1.bf16.xpose.msra.mxu0 0
  %2016 = vmatprep.subr.bf16.mxu0 0
  %2017 = vmatpush1.bf16.xpose.msra.mxu0 0
  %2018 = vmatprep.mubr.bf16.mxu0 0
  %2019 = vmatmul.mubr.bf16.gmra.mrb[0].mxu0 %v1975
  %v2020 = vpop.f32.mrb[0].mxu0
  %v2021 = vadd.f32 0.0, %v2020
  %v2022 = vpop.f32.mrb[0].mxu0
  %v2023 = vpop.f32.mrb[0].mxu0
  %v2024 = vadd.f32 0.0, %v2023
  %v2025 = vpop.f32.mrb[0].mxu0
  %2026 = vmatprep.mubr.bf16.mxu0 0
  %2027 = vmatmul.mubr.bf16.gmra.mrb[0].mxu0 %v1978
  %v2028 = vpop.f32.mrb[0].mxu0
  %v2029 = vadd.f32 0.0, %v2028
  %v2030 = vpop.f32.mrb[0].mxu0
  %v2031 = vpop.f32.mrb[0].mxu0
  %v2032 = vadd.f32 0.0, %v2031
  %v2033 = vpop.f32.mrb[0].mxu0
  %2034 = vdwg.mxu0
  %2037 = vrot.lane.b32.xlu0 %v784, 112
  %v2038 = vpop.permute.xlu0 %2037
  %2039 = vrot.lane.b32.xlu0 %v785, 112
  %v2040 = vpop.permute.xlu0 %2039
  %v2042 = vsel %vm834, %v784, 0
  %v2045 = vsel %vm834, %v785, 0
  %v2048 = vsel %vm834, %v2038, 0
  %v2051 = vsel %vm834, %v2040, 0
  %2053 = vmatprep.subr.bf16.mxu0 0
  %2054 = vmatpush1.bf16.xpose.msra.mxu0 %v2048
  %2055 = vmatprep.subr.bf16.mxu0 0
  %2056 = vmatpush1.bf16.xpose.msra.mxu0 %v2051
  %2057 = vmatprep.subr.bf16.mxu0 0
  %2058 = vmatpush1.bf16.xpose.msra.mxu0 0
  %2059 = vmatprep.subr.bf16.mxu0 0
  %2060 = vmatpush1.bf16.xpose.msra.mxu0 0
  %2061 = vmatprep.subr.bf16.mxu0 0
  %2062 = vmatpush1.bf16.xpose.msra.mxu0 0
  %2063 = vmatprep.subr.bf16.mxu0 0
  %2064 = vmatpush1.bf16.xpose.msra.mxu0 0
  %2065 = vmatprep.subr.bf16.mxu0 0
  %2066 = vmatpush1.bf16.xpose.msra.mxu0 0
  %2067 = vmatprep.subr.bf16.mxu0 0
  %2068 = vmatpush1.bf16.xpose.msra.mxu0 0
  %2069 = vmatprep.subr.bf16.mxu0 0
  %2070 = vmatpush1.bf16.xpose.msra.mxu0 0
  %2071 = vmatprep.subr.bf16.mxu0 0
  %2072 = vmatpush1.bf16.xpose.msra.mxu0 0
  %2073 = vmatprep.subr.bf16.mxu0 0
  %2074 = vmatpush1.bf16.xpose.msra.mxu0 0
  %2075 = vmatprep.subr.bf16.mxu0 0
  %2076 = vmatpush1.bf16.xpose.msra.mxu0 0
  %2077 = vmatprep.subr.bf16.mxu0 0
  %2078 = vmatpush1.bf16.xpose.msra.mxu0 0
  %2079 = vmatprep.subr.bf16.mxu0 0
  %2080 = vmatpush1.bf16.xpose.msra.mxu0 0
  %2081 = vmatprep.subr.bf16.mxu0 0
  %2082 = vmatpush1.bf16.xpose.msra.mxu0 0
  %2083 = vmatprep.subr.bf16.mxu0 0
  %2084 = vmatpush1.bf16.xpose.msra.mxu0 0
  %2085 = vmatprep.mubr.bf16.mxu0 0
  %2086 = vmatmul.mubr.bf16.gmra.mrb[0].mxu0 %v2042
  %v2087 = vpop.f32.mrb[0].mxu0
  %v2088 = vadd.f32 0.0, %v2087
  %v2089 = vpop.f32.mrb[0].mxu0
  %v2090 = vpop.f32.mrb[0].mxu0
  %v2091 = vadd.f32 0.0, %v2090
  %v2092 = vpop.f32.mrb[0].mxu0
  %2093 = vmatprep.mubr.bf16.mxu0 0
  %2094 = vmatmul.mubr.bf16.gmra.mrb[0].mxu0 %v2045
  %v2095 = vpop.f32.mrb[0].mxu0
  %v2096 = vadd.f32 0.0, %v2095
  %v2097 = vpop.f32.mrb[0].mxu0
  %v2098 = vpop.f32.mrb[0].mxu0
  %v2099 = vadd.f32 0.0, %v2098
  %v2100 = vpop.f32.mrb[0].mxu0
  %2101 = vdwg.mxu0
  %2104 = vrot.lane.b32.xlu0 %v786, 112
  %v2105 = vpop.permute.xlu0 %2104
  %2106 = vrot.lane.b32.xlu0 %v787, 112
  %v2107 = vpop.permute.xlu0 %2106
  %v2109 = vsel %vm834, %v786, 0
  %v2112 = vsel %vm834, %v787, 0
  %v2115 = vsel %vm834, %v2105, 0
  %v2118 = vsel %vm834, %v2107, 0
  %2120 = vmatprep.subr.bf16.mxu0 0
  %2121 = vmatpush1.bf16.xpose.msra.mxu0 %v2115
  %2122 = vmatprep.subr.bf16.mxu0 0
  %2123 = vmatpush1.bf16.xpose.msra.mxu0 %v2118
  %2124 = vmatprep.subr.bf16.mxu0 0
  %2125 = vmatpush1.bf16.xpose.msra.mxu0 0
  %2126 = vmatprep.subr.bf16.mxu0 0
  %2127 = vmatpush1.bf16.xpose.msra.mxu0 0
  %2128 = vmatprep.subr.bf16.mxu0 0
  %2129 = vmatpush1.bf16.xpose.msra.mxu0 0
  %2130 = vmatprep.subr.bf16.mxu0 0
  %2131 = vmatpush1.bf16.xpose.msra.mxu0 0
  %2132 = vmatprep.subr.bf16.mxu0 0
  %2133 = vmatpush1.bf16.xpose.msra.mxu0 0
  %2134 = vmatprep.subr.bf16.mxu0 0
  %2135 = vmatpush1.bf16.xpose.msra.mxu0 0
  %2136 = vmatprep.subr.bf16.mxu0 0
  %2137 = vmatpush1.bf16.xpose.msra.mxu0 0
  %2138 = vmatprep.subr.bf16.mxu0 0
  %2139 = vmatpush1.bf16.xpose.msra.mxu0 0
  %2140 = vmatprep.subr.bf16.mxu0 0
  %2141 = vmatpush1.bf16.xpose.msra.mxu0 0
  %2142 = vmatprep.subr.bf16.mxu0 0
  %2143 = vmatpush1.bf16.xpose.msra.mxu0 0
  %2144 = vmatprep.subr.bf16.mxu0 0
  %2145 = vmatpush1.bf16.xpose.msra.mxu0 0
  %2146 = vmatprep.subr.bf16.mxu0 0
  %2147 = vmatpush1.bf16.xpose.msra.mxu0 0
  %2148 = vmatprep.subr.bf16.mxu0 0
  %2149 = vmatpush1.bf16.xpose.msra.mxu0 0
  %2150 = vmatprep.subr.bf16.mxu0 0
  %2151 = vmatpush1.bf16.xpose.msra.mxu0 0
  %2152 = vmatprep.mubr.bf16.mxu0 0
  %2153 = vmatmul.mubr.bf16.gmra.mrb[0].mxu0 %v2109
  %v2154 = vpop.f32.mrb[0].mxu0
  %v2155 = vadd.f32 0.0, %v2154
  %v2156 = vpop.f32.mrb[0].mxu0
  %v2157 = vpop.f32.mrb[0].mxu0
  %v2158 = vadd.f32 0.0, %v2157
  %v2159 = vpop.f32.mrb[0].mxu0
  %2160 = vmatprep.mubr.bf16.mxu0 0
  %2161 = vmatmul.mubr.bf16.gmra.mrb[0].mxu0 %v2112
  %v2162 = vpop.f32.mrb[0].mxu0
  %v2163 = vadd.f32 0.0, %v2162
  %v2164 = vpop.f32.mrb[0].mxu0
  %v2165 = vpop.f32.mrb[0].mxu0
  %v2166 = vadd.f32 0.0, %v2165
  %v2167 = vpop.f32.mrb[0].mxu0
  %2168 = vdwg.mxu0
  %2171 = vrot.lane.b32.xlu0 %v788, 112
  %v2172 = vpop.permute.xlu0 %2171
  %2173 = vrot.lane.b32.xlu0 %v789, 112
  %v2174 = vpop.permute.xlu0 %2173
  %v2176 = vsel %vm834, %v788, 0
  %v2179 = vsel %vm834, %v789, 0
  %v2182 = vsel %vm834, %v2172, 0
  %v2185 = vsel %vm834, %v2174, 0
  %2187 = vmatprep.subr.bf16.mxu0 0
  %2188 = vmatpush1.bf16.xpose.msra.mxu0 %v2182
  %2189 = vmatprep.subr.bf16.mxu0 0
  %2190 = vmatpush1.bf16.xpose.msra.mxu0 %v2185
  %2191 = vmatprep.subr.bf16.mxu0 0
  %2192 = vmatpush1.bf16.xpose.msra.mxu0 0
  %2193 = vmatprep.subr.bf16.mxu0 0
  %2194 = vmatpush1.bf16.xpose.msra.mxu0 0
  %2195 = vmatprep.subr.bf16.mxu0 0
  %2196 = vmatpush1.bf16.xpose.msra.mxu0 0
  %2197 = vmatprep.subr.bf16.mxu0 0
  %2198 = vmatpush1.bf16.xpose.msra.mxu0 0
  %2199 = vmatprep.subr.bf16.mxu0 0
  %2200 = vmatpush1.bf16.xpose.msra.mxu0 0
  %2201 = vmatprep.subr.bf16.mxu0 0
  %2202 = vmatpush1.bf16.xpose.msra.mxu0 0
  %2203 = vmatprep.subr.bf16.mxu0 0
  %2204 = vmatpush1.bf16.xpose.msra.mxu0 0
  %2205 = vmatprep.subr.bf16.mxu0 0
  %2206 = vmatpush1.bf16.xpose.msra.mxu0 0
  %2207 = vmatprep.subr.bf16.mxu0 0
  %2208 = vmatpush1.bf16.xpose.msra.mxu0 0
  %2209 = vmatprep.subr.bf16.mxu0 0
  %2210 = vmatpush1.bf16.xpose.msra.mxu0 0
  %2211 = vmatprep.subr.bf16.mxu0 0
  %2212 = vmatpush1.bf16.xpose.msra.mxu0 0
  %2213 = vmatprep.subr.bf16.mxu0 0
  %2214 = vmatpush1.bf16.xpose.msra.mxu0 0
  %2215 = vmatprep.subr.bf16.mxu0 0
  %2216 = vmatpush1.bf16.xpose.msra.mxu0 0
  %2217 = vmatprep.subr.bf16.mxu0 0
  %2218 = vmatpush1.bf16.xpose.msra.mxu0 0
  %2219 = vmatprep.mubr.bf16.mxu0 0
  %2220 = vmatmul.mubr.bf16.gmra.mrb[0].mxu0 %v2176
  %v2221 = vpop.f32.mrb[0].mxu0
  %v2222 = vadd.f32 0.0, %v2221
  %v2223 = vpop.f32.mrb[0].mxu0
  %v2224 = vpop.f32.mrb[0].mxu0
  %v2225 = vadd.f32 0.0, %v2224
  %v2226 = vpop.f32.mrb[0].mxu0
  %2227 = vmatprep.mubr.bf16.mxu0 0
  %2228 = vmatmul.mubr.bf16.gmra.mrb[0].mxu0 %v2179
  %v2229 = vpop.f32.mrb[0].mxu0
  %v2230 = vadd.f32 0.0, %v2229
  %v2231 = vpop.f32.mrb[0].mxu0
  %v2232 = vpop.f32.mrb[0].mxu0
  %v2233 = vadd.f32 0.0, %v2232
  %v2234 = vpop.f32.mrb[0].mxu0
  %2235 = vdwg.mxu0
  %2238 = vrot.lane.b32.xlu0 %v790, 112
  %v2239 = vpop.permute.xlu0 %2238
  %2240 = vrot.lane.b32.xlu0 %v791, 112
  %v2241 = vpop.permute.xlu0 %2240
  %v2243 = vsel %vm834, %v790, 0
  %v2246 = vsel %vm834, %v791, 0
  %v2249 = vsel %vm834, %v2239, 0
  %v2252 = vsel %vm834, %v2241, 0
  %2254 = vmatprep.subr.bf16.mxu0 0
  %2255 = vmatpush1.bf16.xpose.msra.mxu0 %v2249
  %2256 = vmatprep.subr.bf16.mxu0 0
  %2257 = vmatpush1.bf16.xpose.msra.mxu0 %v2252
  %2258 = vmatprep.subr.bf16.mxu0 0
  %2259 = vmatpush1.bf16.xpose.msra.mxu0 0
  %2260 = vmatprep.subr.bf16.mxu0 0
  %2261 = vmatpush1.bf16.xpose.msra.mxu0 0
  %2262 = vmatprep.subr.bf16.mxu0 0
  %2263 = vmatpush1.bf16.xpose.msra.mxu0 0
  %2264 = vmatprep.subr.bf16.mxu0 0
  %2265 = vmatpush1.bf16.xpose.msra.mxu0 0
  %2266 = vmatprep.subr.bf16.mxu0 0
  %2267 = vmatpush1.bf16.xpose.msra.mxu0 0
  %2268 = vmatprep.subr.bf16.mxu0 0
  %2269 = vmatpush1.bf16.xpose.msra.mxu0 0
  %2270 = vmatprep.subr.bf16.mxu0 0
  %2271 = vmatpush1.bf16.xpose.msra.mxu0 0
  %2272 = vmatprep.subr.bf16.mxu0 0
  %2273 = vmatpush1.bf16.xpose.msra.mxu0 0
  %2274 = vmatprep.subr.bf16.mxu0 0
  %2275 = vmatpush1.bf16.xpose.msra.mxu0 0
  %2276 = vmatprep.subr.bf16.mxu0 0
  %2277 = vmatpush1.bf16.xpose.msra.mxu0 0
  %2278 = vmatprep.subr.bf16.mxu0 0
  %2279 = vmatpush1.bf16.xpose.msra.mxu0 0
  %2280 = vmatprep.subr.bf16.mxu0 0
  %2281 = vmatpush1.bf16.xpose.msra.mxu0 0
  %2282 = vmatprep.subr.bf16.mxu0 0
  %2283 = vmatpush1.bf16.xpose.msra.mxu0 0
  %2284 = vmatprep.subr.bf16.mxu0 0
  %2285 = vmatpush1.bf16.xpose.msra.mxu0 0
  %2286 = vmatprep.mubr.bf16.mxu0 0
  %2287 = vmatmul.mubr.bf16.gmra.mrb[0].mxu0 %v2243
  %v2288 = vpop.f32.mrb[0].mxu0
  %v2289 = vadd.f32 0.0, %v2288
  %v2290 = vpop.f32.mrb[0].mxu0
  %v2291 = vpop.f32.mrb[0].mxu0
  %v2292 = vadd.f32 0.0, %v2291
  %v2293 = vpop.f32.mrb[0].mxu0
  %2294 = vmatprep.mubr.bf16.mxu0 0
  %2295 = vmatmul.mubr.bf16.gmra.mrb[0].mxu0 %v2246
  %v2296 = vpop.f32.mrb[0].mxu0
  %v2297 = vadd.f32 0.0, %v2296
  %v2298 = vpop.f32.mrb[0].mxu0
  %v2299 = vpop.f32.mrb[0].mxu0
  %v2300 = vadd.f32 0.0, %v2299
  %v2301 = vpop.f32.mrb[0].mxu0
  %2302 = vdwg.mxu0
  %2305 = vrot.lane.b32.xlu0 %v792, 112
  %v2306 = vpop.permute.xlu0 %2305
  %2307 = vrot.lane.b32.xlu0 %v793, 112
  %v2308 = vpop.permute.xlu0 %2307
  %v2310 = vsel %vm834, %v792, 0
  %v2313 = vsel %vm834, %v793, 0
  %v2316 = vsel %vm834, %v2306, 0
  %v2319 = vsel %vm834, %v2308, 0
  %2321 = vmatprep.subr.bf16.mxu0 0
  %2322 = vmatpush1.bf16.xpose.msra.mxu0 %v2316
  %2323 = vmatprep.subr.bf16.mxu0 0
  %2324 = vmatpush1.bf16.xpose.msra.mxu0 %v2319
  %2325 = vmatprep.subr.bf16.mxu0 0
  %2326 = vmatpush1.bf16.xpose.msra.mxu0 0
  %2327 = vmatprep.subr.bf16.mxu0 0
  %2328 = vmatpush1.bf16.xpose.msra.mxu0 0
  %2329 = vmatprep.subr.bf16.mxu0 0
  %2330 = vmatpush1.bf16.xpose.msra.mxu0 0
  %2331 = vmatprep.subr.bf16.mxu0 0
  %2332 = vmatpush1.bf16.xpose.msra.mxu0 0
  %2333 = vmatprep.subr.bf16.mxu0 0
  %2334 = vmatpush1.bf16.xpose.msra.mxu0 0
  %2335 = vmatprep.subr.bf16.mxu0 0
  %2336 = vmatpush1.bf16.xpose.msra.mxu0 0
  %2337 = vmatprep.subr.bf16.mxu0 0
  %2338 = vmatpush1.bf16.xpose.msra.mxu0 0
  %2339 = vmatprep.subr.bf16.mxu0 0
  %2340 = vmatpush1.bf16.xpose.msra.mxu0 0
  %2341 = vmatprep.subr.bf16.mxu0 0
  %2342 = vmatpush1.bf16.xpose.msra.mxu0 0
  %2343 = vmatprep.subr.bf16.mxu0 0
  %2344 = vmatpush1.bf16.xpose.msra.mxu0 0
  %2345 = vmatprep.subr.bf16.mxu0 0
  %2346 = vmatpush1.bf16.xpose.msra.mxu0 0
  %2347 = vmatprep.subr.bf16.mxu0 0
  %2348 = vmatpush1.bf16.xpose.msra.mxu0 0
  %2349 = vmatprep.subr.bf16.mxu0 0
  %2350 = vmatpush1.bf16.xpose.msra.mxu0 0
  %2351 = vmatprep.subr.bf16.mxu0 0
  %2352 = vmatpush1.bf16.xpose.msra.mxu0 0
  %2353 = vmatprep.mubr.bf16.mxu0 0
  %2354 = vmatmul.mubr.bf16.gmra.mrb[0].mxu0 %v2310
  %v2355 = vpop.f32.mrb[0].mxu0
  %v2356 = vadd.f32 0.0, %v2355
  %v2357 = vpop.f32.mrb[0].mxu0
  %v2358 = vpop.f32.mrb[0].mxu0
  %v2359 = vadd.f32 0.0, %v2358
  %v2360 = vpop.f32.mrb[0].mxu0
  %2361 = vmatprep.mubr.bf16.mxu0 0
  %2362 = vmatmul.mubr.bf16.gmra.mrb[0].mxu0 %v2313
  %v2363 = vpop.f32.mrb[0].mxu0
  %v2364 = vadd.f32 0.0, %v2363
  %v2365 = vpop.f32.mrb[0].mxu0
  %v2366 = vpop.f32.mrb[0].mxu0
  %v2367 = vadd.f32 0.0, %v2366
  %v2368 = vpop.f32.mrb[0].mxu0
  %2369 = vdwg.mxu0
  %2372 = vrot.lane.b32.xlu0 %v794, 112
  %v2373 = vpop.permute.xlu0 %2372
  %2374 = vrot.lane.b32.xlu0 %v795, 112
  %v2375 = vpop.permute.xlu0 %2374
  %v2377 = vsel %vm834, %v794, 0
  %v2380 = vsel %vm834, %v795, 0
  %v2383 = vsel %vm834, %v2373, 0
  %v2386 = vsel %vm834, %v2375, 0
  %2388 = vmatprep.subr.bf16.mxu0 0
  %2389 = vmatpush1.bf16.xpose.msra.mxu0 %v2383
  %2390 = vmatprep.subr.bf16.mxu0 0
  %2391 = vmatpush1.bf16.xpose.msra.mxu0 %v2386
  %2392 = vmatprep.subr.bf16.mxu0 0
  %2393 = vmatpush1.bf16.xpose.msra.mxu0 0
  %2394 = vmatprep.subr.bf16.mxu0 0
  %2395 = vmatpush1.bf16.xpose.msra.mxu0 0
  %2396 = vmatprep.subr.bf16.mxu0 0
  %2397 = vmatpush1.bf16.xpose.msra.mxu0 0
  %2398 = vmatprep.subr.bf16.mxu0 0
  %2399 = vmatpush1.bf16.xpose.msra.mxu0 0
  %2400 = vmatprep.subr.bf16.mxu0 0
  %2401 = vmatpush1.bf16.xpose.msra.mxu0 0
  %2402 = vmatprep.subr.bf16.mxu0 0
  %2403 = vmatpush1.bf16.xpose.msra.mxu0 0
  %2404 = vmatprep.subr.bf16.mxu0 0
  %2405 = vmatpush1.bf16.xpose.msra.mxu0 0
  %2406 = vmatprep.subr.bf16.mxu0 0
  %2407 = vmatpush1.bf16.xpose.msra.mxu0 0
  %2408 = vmatprep.subr.bf16.mxu0 0
  %2409 = vmatpush1.bf16.xpose.msra.mxu0 0
  %2410 = vmatprep.subr.bf16.mxu0 0
  %2411 = vmatpush1.bf16.xpose.msra.mxu0 0
  %2412 = vmatprep.subr.bf16.mxu0 0
  %2413 = vmatpush1.bf16.xpose.msra.mxu0 0
  %2414 = vmatprep.subr.bf16.mxu0 0
  %2415 = vmatpush1.bf16.xpose.msra.mxu0 0
  %2416 = vmatprep.subr.bf16.mxu0 0
  %2417 = vmatpush1.bf16.xpose.msra.mxu0 0
  %2418 = vmatprep.subr.bf16.mxu0 0
  %2419 = vmatpush1.bf16.xpose.msra.mxu0 0
  %2420 = vmatprep.mubr.bf16.mxu0 0
  %2421 = vmatmul.mubr.bf16.gmra.mrb[0].mxu0 %v2377
  %v2422 = vpop.f32.mrb[0].mxu0
  %v2423 = vadd.f32 0.0, %v2422
  %v2424 = vpop.f32.mrb[0].mxu0
  %v2425 = vpop.f32.mrb[0].mxu0
  %v2426 = vadd.f32 0.0, %v2425
  %v2427 = vpop.f32.mrb[0].mxu0
  %2428 = vmatprep.mubr.bf16.mxu0 0
  %2429 = vmatmul.mubr.bf16.gmra.mrb[0].mxu0 %v2380
  %v2430 = vpop.f32.mrb[0].mxu0
  %v2431 = vadd.f32 0.0, %v2430
  %v2432 = vpop.f32.mrb[0].mxu0
  %v2433 = vpop.f32.mrb[0].mxu0
  %v2434 = vadd.f32 0.0, %v2433
  %v2435 = vpop.f32.mrb[0].mxu0
  %2436 = vdwg.mxu0
  %2439 = vrot.lane.b32.xlu0 %v796, 112
  %v2440 = vpop.permute.xlu0 %2439
  %2441 = vrot.lane.b32.xlu0 %v797, 112
  %v2442 = vpop.permute.xlu0 %2441
  %v2444 = vsel %vm834, %v796, 0
  %v2447 = vsel %vm834, %v797, 0
  %v2450 = vsel %vm834, %v2440, 0
  %v2453 = vsel %vm834, %v2442, 0
  %2455 = vmatprep.subr.bf16.mxu0 0
  %2456 = vmatpush1.bf16.xpose.msra.mxu0 %v2450
  %2457 = vmatprep.subr.bf16.mxu0 0
  %2458 = vmatpush1.bf16.xpose.msra.mxu0 %v2453
  %2459 = vmatprep.subr.bf16.mxu0 0
  %2460 = vmatpush1.bf16.xpose.msra.mxu0 0
  %2461 = vmatprep.subr.bf16.mxu0 0
  %2462 = vmatpush1.bf16.xpose.msra.mxu0 0
  %2463 = vmatprep.subr.bf16.mxu0 0
  %2464 = vmatpush1.bf16.xpose.msra.mxu0 0
  %2465 = vmatprep.subr.bf16.mxu0 0
  %2466 = vmatpush1.bf16.xpose.msra.mxu0 0
  %2467 = vmatprep.subr.bf16.mxu0 0
  %2468 = vmatpush1.bf16.xpose.msra.mxu0 0
  %2469 = vmatprep.subr.bf16.mxu0 0
  %2470 = vmatpush1.bf16.xpose.msra.mxu0 0
  %2471 = vmatprep.subr.bf16.mxu0 0
  %2472 = vmatpush1.bf16.xpose.msra.mxu0 0
  %2473 = vmatprep.subr.bf16.mxu0 0
  %2474 = vmatpush1.bf16.xpose.msra.mxu0 0
  %2475 = vmatprep.subr.bf16.mxu0 0
  %2476 = vmatpush1.bf16.xpose.msra.mxu0 0
  %2477 = vmatprep.subr.bf16.mxu0 0
  %2478 = vmatpush1.bf16.xpose.msra.mxu0 0
  %2479 = vmatprep.subr.bf16.mxu0 0
  %2480 = vmatpush1.bf16.xpose.msra.mxu0 0
  %2481 = vmatprep.subr.bf16.mxu0 0
  %2482 = vmatpush1.bf16.xpose.msra.mxu0 0
  %2483 = vmatprep.subr.bf16.mxu0 0
  %2484 = vmatpush1.bf16.xpose.msra.mxu0 0
  %2485 = vmatprep.subr.bf16.mxu0 0
  %2486 = vmatpush1.bf16.xpose.msra.mxu0 0
  %2487 = vmatprep.mubr.bf16.mxu0 0
  %2488 = vmatmul.mubr.bf16.gmra.mrb[0].mxu0 %v2444
  %v2489 = vpop.f32.mrb[0].mxu0
  %v2490 = vadd.f32 0.0, %v2489
  %v2491 = vpop.f32.mrb[0].mxu0
  %v2492 = vpop.f32.mrb[0].mxu0
  %v2493 = vadd.f32 0.0, %v2492
  %v2494 = vpop.f32.mrb[0].mxu0
  %2495 = vmatprep.mubr.bf16.mxu0 0
  %2496 = vmatmul.mubr.bf16.gmra.mrb[0].mxu0 %v2447
  %v2497 = vpop.f32.mrb[0].mxu0
  %v2498 = vadd.f32 0.0, %v2497
  %v2499 = vpop.f32.mrb[0].mxu0
  %v2500 = vpop.f32.mrb[0].mxu0
  %v2501 = vadd.f32 0.0, %v2500
  %v2502 = vpop.f32.mrb[0].mxu0
  %2503 = vdwg.mxu0
  %2506 = vrot.lane.b32.xlu0 %v798, 112
  %v2507 = vpop.permute.xlu0 %2506
  %2508 = vrot.lane.b32.xlu0 %v799, 112
  %v2509 = vpop.permute.xlu0 %2508
  %v2511 = vsel %vm834, %v798, 0
  %v2514 = vsel %vm834, %v799, 0
  %v2517 = vsel %vm834, %v2507, 0
  %v2520 = vsel %vm834, %v2509, 0
  %2522 = vmatprep.subr.bf16.mxu0 0
  %2523 = vmatpush1.bf16.xpose.msra.mxu0 %v2517
  %2524 = vmatprep.subr.bf16.mxu0 0
  %2525 = vmatpush1.bf16.xpose.msra.mxu0 %v2520
  %2526 = vmatprep.subr.bf16.mxu0 0
  %2527 = vmatpush1.bf16.xpose.msra.mxu0 0
  %2528 = vmatprep.subr.bf16.mxu0 0
  %2529 = vmatpush1.bf16.xpose.msra.mxu0 0
  %2530 = vmatprep.subr.bf16.mxu0 0
  %2531 = vmatpush1.bf16.xpose.msra.mxu0 0
  %2532 = vmatprep.subr.bf16.mxu0 0
  %2533 = vmatpush1.bf16.xpose.msra.mxu0 0
  %2534 = vmatprep.subr.bf16.mxu0 0
  %2535 = vmatpush1.bf16.xpose.msra.mxu0 0
  %2536 = vmatprep.subr.bf16.mxu0 0
  %2537 = vmatpush1.bf16.xpose.msra.mxu0 0
  %2538 = vmatprep.subr.bf16.mxu0 0
  %2539 = vmatpush1.bf16.xpose.msra.mxu0 0
  %2540 = vmatprep.subr.bf16.mxu0 0
  %2541 = vmatpush1.bf16.xpose.msra.mxu0 0
  %2542 = vmatprep.subr.bf16.mxu0 0
  %2543 = vmatpush1.bf16.xpose.msra.mxu0 0
  %2544 = vmatprep.subr.bf16.mxu0 0
  %2545 = vmatpush1.bf16.xpose.msra.mxu0 0
  %2546 = vmatprep.subr.bf16.mxu0 0
  %2547 = vmatpush1.bf16.xpose.msra.mxu0 0
  %2548 = vmatprep.subr.bf16.mxu0 0
  %2549 = vmatpush1.bf16.xpose.msra.mxu0 0
  %2550 = vmatprep.subr.bf16.mxu0 0
  %2551 = vmatpush1.bf16.xpose.msra.mxu0 0
  %2552 = vmatprep.subr.bf16.mxu0 0
  %2553 = vmatpush1.bf16.xpose.msra.mxu0 0
  %2554 = vmatprep.mubr.bf16.mxu0 0
  %2555 = vmatmul.mubr.bf16.gmra.mrb[0].mxu0 %v2511
  %v2556 = vpop.f32.mrb[0].mxu0
  %v2557 = vadd.f32 0.0, %v2556
  %v2558 = vpop.f32.mrb[0].mxu0
  %v2559 = vpop.f32.mrb[0].mxu0
  %v2560 = vadd.f32 0.0, %v2559
  %v2561 = vpop.f32.mrb[0].mxu0
  %2562 = vmatprep.mubr.bf16.mxu0 0
  %2563 = vmatmul.mubr.bf16.gmra.mrb[0].mxu0 %v2514
  %v2564 = vpop.f32.mrb[0].mxu0
  %v2565 = vadd.f32 0.0, %v2564
  %v2566 = vpop.f32.mrb[0].mxu0
  %v2567 = vpop.f32.mrb[0].mxu0
  %v2568 = vadd.f32 0.0, %v2567
  %v2569 = vpop.f32.mrb[0].mxu0
  %2570 = vdwg.mxu0
  %2573 = vrot.lane.b32.xlu0 %v800, 112
  %v2574 = vpop.permute.xlu0 %2573
  %2575 = vrot.lane.b32.xlu0 %v801, 112
  %v2576 = vpop.permute.xlu0 %2575
  %v2578 = vsel %vm834, %v800, 0
  %v2581 = vsel %vm834, %v801, 0
  %v2584 = vsel %vm834, %v2574, 0
  %v2587 = vsel %vm834, %v2576, 0
  %2589 = vmatprep.subr.bf16.mxu0 0
  %2590 = vmatpush1.bf16.xpose.msra.mxu0 %v2584
  %2591 = vmatprep.subr.bf16.mxu0 0
  %2592 = vmatpush1.bf16.xpose.msra.mxu0 %v2587
  %2593 = vmatprep.subr.bf16.mxu0 0
  %2594 = vmatpush1.bf16.xpose.msra.mxu0 0
  %2595 = vmatprep.subr.bf16.mxu0 0
  %2596 = vmatpush1.bf16.xpose.msra.mxu0 0
  %2597 = vmatprep.subr.bf16.mxu0 0
  %2598 = vmatpush1.bf16.xpose.msra.mxu0 0
  %2599 = vmatprep.subr.bf16.mxu0 0
  %2600 = vmatpush1.bf16.xpose.msra.mxu0 0
  %2601 = vmatprep.subr.bf16.mxu0 0
  %2602 = vmatpush1.bf16.xpose.msra.mxu0 0
  %2603 = vmatprep.subr.bf16.mxu0 0
  %2604 = vmatpush1.bf16.xpose.msra.mxu0 0
  %2605 = vmatprep.subr.bf16.mxu0 0
  %2606 = vmatpush1.bf16.xpose.msra.mxu0 0
  %2607 = vmatprep.subr.bf16.mxu0 0
  %2608 = vmatpush1.bf16.xpose.msra.mxu0 0
  %2609 = vmatprep.subr.bf16.mxu0 0
  %2610 = vmatpush1.bf16.xpose.msra.mxu0 0
  %2611 = vmatprep.subr.bf16.mxu0 0
  %2612 = vmatpush1.bf16.xpose.msra.mxu0 0
  %2613 = vmatprep.subr.bf16.mxu0 0
  %2614 = vmatpush1.bf16.xpose.msra.mxu0 0
  %2615 = vmatprep.subr.bf16.mxu0 0
  %2616 = vmatpush1.bf16.xpose.msra.mxu0 0
  %2617 = vmatprep.subr.bf16.mxu0 0
  %2618 = vmatpush1.bf16.xpose.msra.mxu0 0
  %2619 = vmatprep.subr.bf16.mxu0 0
  %2620 = vmatpush1.bf16.xpose.msra.mxu0 0
  %2621 = vmatprep.mubr.bf16.mxu0 0
  %2622 = vmatmul.mubr.bf16.gmra.mrb[0].mxu0 %v2578
  %v2623 = vpop.f32.mrb[0].mxu0
  %v2624 = vadd.f32 0.0, %v2623
  %v2625 = vpop.f32.mrb[0].mxu0
  %v2626 = vpop.f32.mrb[0].mxu0
  %v2627 = vadd.f32 0.0, %v2626
  %v2628 = vpop.f32.mrb[0].mxu0
  %2629 = vmatprep.mubr.bf16.mxu0 0
  %2630 = vmatmul.mubr.bf16.gmra.mrb[0].mxu0 %v2581
  %v2631 = vpop.f32.mrb[0].mxu0
  %v2632 = vadd.f32 0.0, %v2631
  %v2633 = vpop.f32.mrb[0].mxu0
  %v2634 = vpop.f32.mrb[0].mxu0
  %v2635 = vadd.f32 0.0, %v2634
  %v2636 = vpop.f32.mrb[0].mxu0
  %2637 = vdwg.mxu0
  %2640 = vrot.lane.b32.xlu0 %v802, 112
  %v2641 = vpop.permute.xlu0 %2640
  %2642 = vrot.lane.b32.xlu0 %v803, 112
  %v2643 = vpop.permute.xlu0 %2642
  %v2645 = vsel %vm834, %v802, 0
  %v2648 = vsel %vm834, %v803, 0
  %v2651 = vsel %vm834, %v2641, 0
  %v2654 = vsel %vm834, %v2643, 0
  %2656 = vmatprep.subr.bf16.mxu0 0
  %2657 = vmatpush1.bf16.xpose.msra.mxu0 %v2651
  %2658 = vmatprep.subr.bf16.mxu0 0
  %2659 = vmatpush1.bf16.xpose.msra.mxu0 %v2654
  %2660 = vmatprep.subr.bf16.mxu0 0
  %2661 = vmatpush1.bf16.xpose.msra.mxu0 0
  %2662 = vmatprep.subr.bf16.mxu0 0
  %2663 = vmatpush1.bf16.xpose.msra.mxu0 0
  %2664 = vmatprep.subr.bf16.mxu0 0
  %2665 = vmatpush1.bf16.xpose.msra.mxu0 0
  %2666 = vmatprep.subr.bf16.mxu0 0
  %2667 = vmatpush1.bf16.xpose.msra.mxu0 0
  %2668 = vmatprep.subr.bf16.mxu0 0
  %2669 = vmatpush1.bf16.xpose.msra.mxu0 0
  %2670 = vmatprep.subr.bf16.mxu0 0
  %2671 = vmatpush1.bf16.xpose.msra.mxu0 0
  %2672 = vmatprep.subr.bf16.mxu0 0
  %2673 = vmatpush1.bf16.xpose.msra.mxu0 0
  %2674 = vmatprep.subr.bf16.mxu0 0
  %2675 = vmatpush1.bf16.xpose.msra.mxu0 0
  %2676 = vmatprep.subr.bf16.mxu0 0
  %2677 = vmatpush1.bf16.xpose.msra.mxu0 0
  %2678 = vmatprep.subr.bf16.mxu0 0
  %2679 = vmatpush1.bf16.xpose.msra.mxu0 0
  %2680 = vmatprep.subr.bf16.mxu0 0
  %2681 = vmatpush1.bf16.xpose.msra.mxu0 0
  %2682 = vmatprep.subr.bf16.mxu0 0
  %2683 = vmatpush1.bf16.xpose.msra.mxu0 0
  %2684 = vmatprep.subr.bf16.mxu0 0
  %2685 = vmatpush1.bf16.xpose.msra.mxu0 0
  %2686 = vmatprep.subr.bf16.mxu0 0
  %2687 = vmatpush1.bf16.xpose.msra.mxu0 0
  %2688 = vmatprep.mubr.bf16.mxu0 0
  %2689 = vmatmul.mubr.bf16.gmra.mrb[0].mxu0 %v2645
  %v2690 = vpop.f32.mrb[0].mxu0
  %v2691 = vadd.f32 0.0, %v2690
  %v2692 = vpop.f32.mrb[0].mxu0
  %v2693 = vpop.f32.mrb[0].mxu0
  %v2694 = vadd.f32 0.0, %v2693
  %v2695 = vpop.f32.mrb[0].mxu0
  %2696 = vmatprep.mubr.bf16.mxu0 0
  %2697 = vmatmul.mubr.bf16.gmra.mrb[0].mxu0 %v2648
  %v2698 = vpop.f32.mrb[0].mxu0
  %v2699 = vadd.f32 0.0, %v2698
  %v2700 = vpop.f32.mrb[0].mxu0
  %v2701 = vpop.f32.mrb[0].mxu0
  %v2702 = vadd.f32 0.0, %v2701
  %v2703 = vpop.f32.mrb[0].mxu0
  %2704 = vdwg.mxu0
  %2707 = vrot.lane.b32.xlu0 %v804, 112
  %v2708 = vpop.permute.xlu0 %2707
  %2709 = vrot.lane.b32.xlu0 %v805, 112
  %v2710 = vpop.permute.xlu0 %2709
  %v2712 = vsel %vm834, %v804, 0
  %v2715 = vsel %vm834, %v805, 0
  %v2718 = vsel %vm834, %v2708, 0
  %v2721 = vsel %vm834, %v2710, 0
  %2723 = vmatprep.subr.bf16.mxu0 0
  %2724 = vmatpush1.bf16.xpose.msra.mxu0 %v2718
  %2725 = vmatprep.subr.bf16.mxu0 0
  %2726 = vmatpush1.bf16.xpose.msra.mxu0 %v2721
  %2727 = vmatprep.subr.bf16.mxu0 0
  %2728 = vmatpush1.bf16.xpose.msra.mxu0 0
  %2729 = vmatprep.subr.bf16.mxu0 0
  %2730 = vmatpush1.bf16.xpose.msra.mxu0 0
  %2731 = vmatprep.subr.bf16.mxu0 0
  %2732 = vmatpush1.bf16.xpose.msra.mxu0 0
  %2733 = vmatprep.subr.bf16.mxu0 0
  %2734 = vmatpush1.bf16.xpose.msra.mxu0 0
  %2735 = vmatprep.subr.bf16.mxu0 0
  %2736 = vmatpush1.bf16.xpose.msra.mxu0 0
  %2737 = vmatprep.subr.bf16.mxu0 0
  %2738 = vmatpush1.bf16.xpose.msra.mxu0 0
  %2739 = vmatprep.subr.bf16.mxu0 0
  %2740 = vmatpush1.bf16.xpose.msra.mxu0 0
  %2741 = vmatprep.subr.bf16.mxu0 0
  %2742 = vmatpush1.bf16.xpose.msra.mxu0 0
  %2743 = vmatprep.subr.bf16.mxu0 0
  %2744 = vmatpush1.bf16.xpose.msra.mxu0 0
  %2745 = vmatprep.subr.bf16.mxu0 0
  %2746 = vmatpush1.bf16.xpose.msra.mxu0 0
  %2747 = vmatprep.subr.bf16.mxu0 0
  %2748 = vmatpush1.bf16.xpose.msra.mxu0 0
  %2749 = vmatprep.subr.bf16.mxu0 0
  %2750 = vmatpush1.bf16.xpose.msra.mxu0 0
  %2751 = vmatprep.subr.bf16.mxu0 0
  %2752 = vmatpush1.bf16.xpose.msra.mxu0 0
  %2753 = vmatprep.subr.bf16.mxu0 0
  %2754 = vmatpush1.bf16.xpose.msra.mxu0 0
  %2755 = vmatprep.mubr.bf16.mxu0 0
  %2756 = vmatmul.mubr.bf16.gmra.mrb[0].mxu0 %v2712
  %v2757 = vpop.f32.mrb[0].mxu0
  %v2758 = vadd.f32 0.0, %v2757
  %v2759 = vpop.f32.mrb[0].mxu0
  %v2760 = vpop.f32.mrb[0].mxu0
  %v2761 = vadd.f32 0.0, %v2760
  %v2762 = vpop.f32.mrb[0].mxu0
  %2763 = vmatprep.mubr.bf16.mxu0 0
  %2764 = vmatmul.mubr.bf16.gmra.mrb[0].mxu0 %v2715
  %v2765 = vpop.f32.mrb[0].mxu0
  %v2766 = vadd.f32 0.0, %v2765
  %v2767 = vpop.f32.mrb[0].mxu0
  %v2768 = vpop.f32.mrb[0].mxu0
  %v2769 = vadd.f32 0.0, %v2768
  %v2770 = vpop.f32.mrb[0].mxu0
  %2771 = vdwg.mxu0
  %2774 = vrot.lane.b32.xlu0 %v806, 112
  %v2775 = vpop.permute.xlu0 %2774
  %2776 = vrot.lane.b32.xlu0 %v807, 112
  %v2777 = vpop.permute.xlu0 %2776
  %v2779 = vsel %vm834, %v806, 0
  %v2782 = vsel %vm834, %v807, 0
  %v2785 = vsel %vm834, %v2775, 0
  %v2788 = vsel %vm834, %v2777, 0
  %2790 = vmatprep.subr.bf16.mxu0 0
  %2791 = vmatpush1.bf16.xpose.msra.mxu0 %v2785
  %2792 = vmatprep.subr.bf16.mxu0 0
  %2793 = vmatpush1.bf16.xpose.msra.mxu0 %v2788
  %2794 = vmatprep.subr.bf16.mxu0 0
  %2795 = vmatpush1.bf16.xpose.msra.mxu0 0
  %2796 = vmatprep.subr.bf16.mxu0 0
  %2797 = vmatpush1.bf16.xpose.msra.mxu0 0
  %2798 = vmatprep.subr.bf16.mxu0 0
  %2799 = vmatpush1.bf16.xpose.msra.mxu0 0
  %2800 = vmatprep.subr.bf16.mxu0 0
  %2801 = vmatpush1.bf16.xpose.msra.mxu0 0
  %2802 = vmatprep.subr.bf16.mxu0 0
  %2803 = vmatpush1.bf16.xpose.msra.mxu0 0
  %2804 = vmatprep.subr.bf16.mxu0 0
  %2805 = vmatpush1.bf16.xpose.msra.mxu0 0
  %2806 = vmatprep.subr.bf16.mxu0 0
  %2807 = vmatpush1.bf16.xpose.msra.mxu0 0
  %2808 = vmatprep.subr.bf16.mxu0 0
  %2809 = vmatpush1.bf16.xpose.msra.mxu0 0
  %2810 = vmatprep.subr.bf16.mxu0 0
  %2811 = vmatpush1.bf16.xpose.msra.mxu0 0
  %2812 = vmatprep.subr.bf16.mxu0 0
  %2813 = vmatpush1.bf16.xpose.msra.mxu0 0
  %2814 = vmatprep.subr.bf16.mxu0 0
  %2815 = vmatpush1.bf16.xpose.msra.mxu0 0
  %2816 = vmatprep.subr.bf16.mxu0 0
  %2817 = vmatpush1.bf16.xpose.msra.mxu0 0
  %2818 = vmatprep.subr.bf16.mxu0 0
  %2819 = vmatpush1.bf16.xpose.msra.mxu0 0
  %2820 = vmatprep.subr.bf16.mxu0 0
  %2821 = vmatpush1.bf16.xpose.msra.mxu0 0
  %2822 = vmatprep.mubr.bf16.mxu0 0
  %2823 = vmatmul.mubr.bf16.gmra.mrb[0].mxu0 %v2779
  %v2824 = vpop.f32.mrb[0].mxu0
  %v2825 = vadd.f32 0.0, %v2824
  %v2826 = vpop.f32.mrb[0].mxu0
  %v2827 = vpop.f32.mrb[0].mxu0
  %v2828 = vadd.f32 0.0, %v2827
  %v2829 = vpop.f32.mrb[0].mxu0
  %2830 = vmatprep.mubr.bf16.mxu0 0
  %2831 = vmatmul.mubr.bf16.gmra.mrb[0].mxu0 %v2782
  %v2832 = vpop.f32.mrb[0].mxu0
  %v2833 = vadd.f32 0.0, %v2832
  %v2834 = vpop.f32.mrb[0].mxu0
  %v2835 = vpop.f32.mrb[0].mxu0
  %v2836 = vadd.f32 0.0, %v2835
  %v2837 = vpop.f32.mrb[0].mxu0
  %2838 = vdwg.mxu0
  %2841 = vrot.lane.b32.xlu0 %v808, 112
  %v2842 = vpop.permute.xlu0 %2841
  %2843 = vrot.lane.b32.xlu0 %v809, 112
  %v2844 = vpop.permute.xlu0 %2843
  %v2846 = vsel %vm834, %v808, 0
  %v2849 = vsel %vm834, %v809, 0
  %v2852 = vsel %vm834, %v2842, 0
  %v2855 = vsel %vm834, %v2844, 0
  %2857 = vmatprep.subr.bf16.mxu0 0
  %2858 = vmatpush1.bf16.xpose.msra.mxu0 %v2852
  %2859 = vmatprep.subr.bf16.mxu0 0
  %2860 = vmatpush1.bf16.xpose.msra.mxu0 %v2855
  %2861 = vmatprep.subr.bf16.mxu0 0
  %2862 = vmatpush1.bf16.xpose.msra.mxu0 0
  %2863 = vmatprep.subr.bf16.mxu0 0
  %2864 = vmatpush1.bf16.xpose.msra.mxu0 0
  %2865 = vmatprep.subr.bf16.mxu0 0
  %2866 = vmatpush1.bf16.xpose.msra.mxu0 0
  %2867 = vmatprep.subr.bf16.mxu0 0
  %2868 = vmatpush1.bf16.xpose.msra.mxu0 0
  %2869 = vmatprep.subr.bf16.mxu0 0
  %2870 = vmatpush1.bf16.xpose.msra.mxu0 0
  %2871 = vmatprep.subr.bf16.mxu0 0
  %2872 = vmatpush1.bf16.xpose.msra.mxu0 0
  %2873 = vmatprep.subr.bf16.mxu0 0
  %2874 = vmatpush1.bf16.xpose.msra.mxu0 0
  %2875 = vmatprep.subr.bf16.mxu0 0
  %2876 = vmatpush1.bf16.xpose.msra.mxu0 0
  %2877 = vmatprep.subr.bf16.mxu0 0
  %2878 = vmatpush1.bf16.xpose.msra.mxu0 0
  %2879 = vmatprep.subr.bf16.mxu0 0
  %2880 = vmatpush1.bf16.xpose.msra.mxu0 0
  %2881 = vmatprep.subr.bf16.mxu0 0
  %2882 = vmatpush1.bf16.xpose.msra.mxu0 0
  %2883 = vmatprep.subr.bf16.mxu0 0
  %2884 = vmatpush1.bf16.xpose.msra.mxu0 0
  %2885 = vmatprep.subr.bf16.mxu0 0
  %2886 = vmatpush1.bf16.xpose.msra.mxu0 0
  %2887 = vmatprep.subr.bf16.mxu0 0
  %2888 = vmatpush1.bf16.xpose.msra.mxu0 0
  %2889 = vmatprep.mubr.bf16.mxu0 0
  %2890 = vmatmul.mubr.bf16.gmra.mrb[0].mxu0 %v2846
  %v2891 = vpop.f32.mrb[0].mxu0
  %v2892 = vadd.f32 0.0, %v2891
  %v2893 = vpop.f32.mrb[0].mxu0
  %v2894 = vpop.f32.mrb[0].mxu0
  %v2895 = vadd.f32 0.0, %v2894
  %v2896 = vpop.f32.mrb[0].mxu0
  %2897 = vmatprep.mubr.bf16.mxu0 0
  %2898 = vmatmul.mubr.bf16.gmra.mrb[0].mxu0 %v2849
  %v2899 = vpop.f32.mrb[0].mxu0
  %v2900 = vadd.f32 0.0, %v2899
  %v2901 = vpop.f32.mrb[0].mxu0
  %v2902 = vpop.f32.mrb[0].mxu0
  %v2903 = vadd.f32 0.0, %v2902
  %v2904 = vpop.f32.mrb[0].mxu0
  %2905 = vdwg.mxu0
  %2908 = vrot.lane.b32.xlu0 %v810, 112
  %v2909 = vpop.permute.xlu0 %2908
  %2910 = vrot.lane.b32.xlu0 %v811, 112
  %v2911 = vpop.permute.xlu0 %2910
  %v2913 = vsel %vm834, %v810, 0
  %v2916 = vsel %vm834, %v811, 0
  %v2919 = vsel %vm834, %v2909, 0
  %v2922 = vsel %vm834, %v2911, 0
  %2924 = vmatprep.subr.bf16.mxu0 0
  %2925 = vmatpush1.bf16.xpose.msra.mxu0 %v2919
  %2926 = vmatprep.subr.bf16.mxu0 0
  %2927 = vmatpush1.bf16.xpose.msra.mxu0 %v2922
  %2928 = vmatprep.subr.bf16.mxu0 0
  %2929 = vmatpush1.bf16.xpose.msra.mxu0 0
  %2930 = vmatprep.subr.bf16.mxu0 0
  %2931 = vmatpush1.bf16.xpose.msra.mxu0 0
  %2932 = vmatprep.subr.bf16.mxu0 0
  %2933 = vmatpush1.bf16.xpose.msra.mxu0 0
  %2934 = vmatprep.subr.bf16.mxu0 0
  %2935 = vmatpush1.bf16.xpose.msra.mxu0 0
  %2936 = vmatprep.subr.bf16.mxu0 0
  %2937 = vmatpush1.bf16.xpose.msra.mxu0 0
  %2938 = vmatprep.subr.bf16.mxu0 0
  %2939 = vmatpush1.bf16.xpose.msra.mxu0 0
  %2940 = vmatprep.subr.bf16.mxu0 0
  %2941 = vmatpush1.bf16.xpose.msra.mxu0 0
  %2942 = vmatprep.subr.bf16.mxu0 0
  %2943 = vmatpush1.bf16.xpose.msra.mxu0 0
  %2944 = vmatprep.subr.bf16.mxu0 0
  %2945 = vmatpush1.bf16.xpose.msra.mxu0 0
  %2946 = vmatprep.subr.bf16.mxu0 0
  %2947 = vmatpush1.bf16.xpose.msra.mxu0 0
  %2948 = vmatprep.subr.bf16.mxu0 0
  %2949 = vmatpush1.bf16.xpose.msra.mxu0 0
  %2950 = vmatprep.subr.bf16.mxu0 0
  %2951 = vmatpush1.bf16.xpose.msra.mxu0 0
  %2952 = vmatprep.subr.bf16.mxu0 0
  %2953 = vmatpush1.bf16.xpose.msra.mxu0 0
  %2954 = vmatprep.subr.bf16.mxu0 0
  %2955 = vmatpush1.bf16.xpose.msra.mxu0 0
  %2956 = vmatprep.mubr.bf16.mxu0 0
  %2957 = vmatmul.mubr.bf16.gmra.mrb[0].mxu0 %v2913
  %v2958 = vpop.f32.mrb[0].mxu0
  %v2959 = vadd.f32 0.0, %v2958
  %v2960 = vpop.f32.mrb[0].mxu0
  %v2961 = vpop.f32.mrb[0].mxu0
  %v2962 = vadd.f32 0.0, %v2961
  %v2963 = vpop.f32.mrb[0].mxu0
  %2964 = vmatprep.mubr.bf16.mxu0 0
  %2965 = vmatmul.mubr.bf16.gmra.mrb[0].mxu0 %v2916
  %v2966 = vpop.f32.mrb[0].mxu0
  %v2967 = vadd.f32 0.0, %v2966
  %v2968 = vpop.f32.mrb[0].mxu0
  %v2969 = vpop.f32.mrb[0].mxu0
  %v2970 = vadd.f32 0.0, %v2969
  %v2971 = vpop.f32.mrb[0].mxu0
  %2972 = vdwg.mxu0
  %2975 = vrot.lane.b32.xlu0 %v812, 112
  %v2976 = vpop.permute.xlu0 %2975
  %2977 = vrot.lane.b32.xlu0 %v813, 112
  %v2978 = vpop.permute.xlu0 %2977
  %v2980 = vsel %vm834, %v812, 0
  %v2983 = vsel %vm834, %v813, 0
  %v2986 = vsel %vm834, %v2976, 0
  %v2989 = vsel %vm834, %v2978, 0
  %2991 = vmatprep.subr.bf16.mxu0 0
  %2992 = vmatpush1.bf16.xpose.msra.mxu0 %v2986
  %2993 = vmatprep.subr.bf16.mxu0 0
  %2994 = vmatpush1.bf16.xpose.msra.mxu0 %v2989
  %2995 = vmatprep.subr.bf16.mxu0 0
  %2996 = vmatpush1.bf16.xpose.msra.mxu0 0
  %2997 = vmatprep.subr.bf16.mxu0 0
  %2998 = vmatpush1.bf16.xpose.msra.mxu0 0
  %2999 = vmatprep.subr.bf16.mxu0 0
  %3000 = vmatpush1.bf16.xpose.msra.mxu0 0
  %3001 = vmatprep.subr.bf16.mxu0 0
  %3002 = vmatpush1.bf16.xpose.msra.mxu0 0
  %3003 = vmatprep.subr.bf16.mxu0 0
  %3004 = vmatpush1.bf16.xpose.msra.mxu0 0
  %3005 = vmatprep.subr.bf16.mxu0 0
  %3006 = vmatpush1.bf16.xpose.msra.mxu0 0
  %3007 = vmatprep.subr.bf16.mxu0 0
  %3008 = vmatpush1.bf16.xpose.msra.mxu0 0
  %3009 = vmatprep.subr.bf16.mxu0 0
  %3010 = vmatpush1.bf16.xpose.msra.mxu0 0
  %3011 = vmatprep.subr.bf16.mxu0 0
  %3012 = vmatpush1.bf16.xpose.msra.mxu0 0
  %3013 = vmatprep.subr.bf16.mxu0 0
  %3014 = vmatpush1.bf16.xpose.msra.mxu0 0
  %3015 = vmatprep.subr.bf16.mxu0 0
  %3016 = vmatpush1.bf16.xpose.msra.mxu0 0
  %3017 = vmatprep.subr.bf16.mxu0 0
  %3018 = vmatpush1.bf16.xpose.msra.mxu0 0
  %3019 = vmatprep.subr.bf16.mxu0 0
  %3020 = vmatpush1.bf16.xpose.msra.mxu0 0
  %3021 = vmatprep.subr.bf16.mxu0 0
  %3022 = vmatpush1.bf16.xpose.msra.mxu0 0
  %3023 = vmatprep.mubr.bf16.mxu0 0
  %3024 = vmatmul.mubr.bf16.gmra.mrb[0].mxu0 %v2980
  %v3025 = vpop.f32.mrb[0].mxu0
  %v3026 = vadd.f32 0.0, %v3025
  %v3027 = vpop.f32.mrb[0].mxu0
  %v3028 = vpop.f32.mrb[0].mxu0
  %v3029 = vadd.f32 0.0, %v3028
  %v3030 = vpop.f32.mrb[0].mxu0
  %3031 = vmatprep.mubr.bf16.mxu0 0
  %3032 = vmatmul.mubr.bf16.gmra.mrb[0].mxu0 %v2983
  %v3033 = vpop.f32.mrb[0].mxu0
  %v3034 = vadd.f32 0.0, %v3033
  %v3035 = vpop.f32.mrb[0].mxu0
  %v3036 = vpop.f32.mrb[0].mxu0
  %v3037 = vadd.f32 0.0, %v3036
  %v3038 = vpop.f32.mrb[0].mxu0
  %3039 = vdwg.mxu0
  %3042 = vrot.lane.b32.xlu0 %v814, 112
  %v3043 = vpop.permute.xlu0 %3042
  %3044 = vrot.lane.b32.xlu0 %v815, 112
  %v3045 = vpop.permute.xlu0 %3044
  %v3047 = vsel %vm834, %v814, 0
  %v3050 = vsel %vm834, %v815, 0
  %v3053 = vsel %vm834, %v3043, 0
  %v3056 = vsel %vm834, %v3045, 0
  %3058 = vmatprep.subr.bf16.mxu0 0
  %3059 = vmatpush1.bf16.xpose.msra.mxu0 %v3053
  %3060 = vmatprep.subr.bf16.mxu0 0
  %3061 = vmatpush1.bf16.xpose.msra.mxu0 %v3056
  %3062 = vmatprep.subr.bf16.mxu0 0
  %3063 = vmatpush1.bf16.xpose.msra.mxu0 0
  %3064 = vmatprep.subr.bf16.mxu0 0
  %3065 = vmatpush1.bf16.xpose.msra.mxu0 0
  %3066 = vmatprep.subr.bf16.mxu0 0
  %3067 = vmatpush1.bf16.xpose.msra.mxu0 0
  %3068 = vmatprep.subr.bf16.mxu0 0
  %3069 = vmatpush1.bf16.xpose.msra.mxu0 0
  %3070 = vmatprep.subr.bf16.mxu0 0
  %3071 = vmatpush1.bf16.xpose.msra.mxu0 0
  %3072 = vmatprep.subr.bf16.mxu0 0
  %3073 = vmatpush1.bf16.xpose.msra.mxu0 0
  %3074 = vmatprep.subr.bf16.mxu0 0
  %3075 = vmatpush1.bf16.xpose.msra.mxu0 0
  %3076 = vmatprep.subr.bf16.mxu0 0
  %3077 = vmatpush1.bf16.xpose.msra.mxu0 0
  %3078 = vmatprep.subr.bf16.mxu0 0
  %3079 = vmatpush1.bf16.xpose.msra.mxu0 0
  %3080 = vmatprep.subr.bf16.mxu0 0
  %3081 = vmatpush1.bf16.xpose.msra.mxu0 0
  %3082 = vmatprep.subr.bf16.mxu0 0
  %3083 = vmatpush1.bf16.xpose.msra.mxu0 0
  %3084 = vmatprep.subr.bf16.mxu0 0
  %3085 = vmatpush1.bf16.xpose.msra.mxu0 0
  %3086 = vmatprep.subr.bf16.mxu0 0
  %3087 = vmatpush1.bf16.xpose.msra.mxu0 0
  %3088 = vmatprep.subr.bf16.mxu0 0
  %3089 = vmatpush1.bf16.xpose.msra.mxu0 0
  %3090 = vmatprep.mubr.bf16.mxu0 0
  %3091 = vmatmul.mubr.bf16.gmra.mrb[0].mxu0 %v3047
  %v3092 = vpop.f32.mrb[0].mxu0
  %v3093 = vadd.f32 0.0, %v3092
  %v3094 = vpop.f32.mrb[0].mxu0
  %v3095 = vpop.f32.mrb[0].mxu0
  %v3096 = vadd.f32 0.0, %v3095
  %v3097 = vpop.f32.mrb[0].mxu0
  %3098 = vmatprep.mubr.bf16.mxu0 0
  %3099 = vmatmul.mubr.bf16.gmra.mrb[0].mxu0 %v3050
  %v3100 = vpop.f32.mrb[0].mxu0
  %v3101 = vadd.f32 0.0, %v3100
  %v3102 = vpop.f32.mrb[0].mxu0
  %v3103 = vpop.f32.mrb[0].mxu0
  %v3104 = vadd.f32 0.0, %v3103
  %v3105 = vpop.f32.mrb[0].mxu0
  %3106 = vdwg.mxu0
  %3109 = vrot.lane.b32.xlu0 %v816, 112
  %v3110 = vpop.permute.xlu0 %3109
  %3111 = vrot.lane.b32.xlu0 %v817, 112
  %v3112 = vpop.permute.xlu0 %3111
  %v3114 = vsel %vm834, %v816, 0
  %v3117 = vsel %vm834, %v817, 0
  %v3120 = vsel %vm834, %v3110, 0
  %v3123 = vsel %vm834, %v3112, 0
  %3125 = vmatprep.subr.bf16.mxu0 0
  %3126 = vmatpush1.bf16.xpose.msra.mxu0 %v3120
  %3127 = vmatprep.subr.bf16.mxu0 0
  %3128 = vmatpush1.bf16.xpose.msra.mxu0 %v3123
  %3129 = vmatprep.subr.bf16.mxu0 0
  %3130 = vmatpush1.bf16.xpose.msra.mxu0 0
  %3131 = vmatprep.subr.bf16.mxu0 0
  %3132 = vmatpush1.bf16.xpose.msra.mxu0 0
  %3133 = vmatprep.subr.bf16.mxu0 0
  %3134 = vmatpush1.bf16.xpose.msra.mxu0 0
  %3135 = vmatprep.subr.bf16.mxu0 0
  %3136 = vmatpush1.bf16.xpose.msra.mxu0 0
  %3137 = vmatprep.subr.bf16.mxu0 0
  %3138 = vmatpush1.bf16.xpose.msra.mxu0 0
  %3139 = vmatprep.subr.bf16.mxu0 0
  %3140 = vmatpush1.bf16.xpose.msra.mxu0 0
  %3141 = vmatprep.subr.bf16.mxu0 0
  %3142 = vmatpush1.bf16.xpose.msra.mxu0 0
  %3143 = vmatprep.subr.bf16.mxu0 0
  %3144 = vmatpush1.bf16.xpose.msra.mxu0 0
  %3145 = vmatprep.subr.bf16.mxu0 0
  %3146 = vmatpush1.bf16.xpose.msra.mxu0 0
  %3147 = vmatprep.subr.bf16.mxu0 0
  %3148 = vmatpush1.bf16.xpose.msra.mxu0 0
  %3149 = vmatprep.subr.bf16.mxu0 0
  %3150 = vmatpush1.bf16.xpose.msra.mxu0 0
  %3151 = vmatprep.subr.bf16.mxu0 0
  %3152 = vmatpush1.bf16.xpose.msra.mxu0 0
  %3153 = vmatprep.subr.bf16.mxu0 0
  %3154 = vmatpush1.bf16.xpose.msra.mxu0 0
  %3155 = vmatprep.subr.bf16.mxu0 0
  %3156 = vmatpush1.bf16.xpose.msra.mxu0 0
  %3157 = vmatprep.mubr.bf16.mxu0 0
  %3158 = vmatmul.mubr.bf16.gmra.mrb[0].mxu0 %v3114
  %v3159 = vpop.f32.mrb[0].mxu0
  %v3160 = vadd.f32 0.0, %v3159
  %v3161 = vpop.f32.mrb[0].mxu0
  %v3162 = vpop.f32.mrb[0].mxu0
  %v3163 = vadd.f32 0.0, %v3162
  %v3164 = vpop.f32.mrb[0].mxu0
  %3165 = vmatprep.mubr.bf16.mxu0 0
  %3166 = vmatmul.mubr.bf16.gmra.mrb[0].mxu0 %v3117
  %v3167 = vpop.f32.mrb[0].mxu0
  %v3168 = vadd.f32 0.0, %v3167
  %v3169 = vpop.f32.mrb[0].mxu0
  %v3170 = vpop.f32.mrb[0].mxu0
  %v3171 = vadd.f32 0.0, %v3170
  %v3172 = vpop.f32.mrb[0].mxu0
  %3173 = vdwg.mxu0
  %3176 = vrot.lane.b32.xlu0 %v818, 112
  %v3177 = vpop.permute.xlu0 %3176
  %3178 = vrot.lane.b32.xlu0 %v819, 112
  %v3179 = vpop.permute.xlu0 %3178
  %v3181 = vsel %vm834, %v818, 0
  %v3184 = vsel %vm834, %v819, 0
  %v3187 = vsel %vm834, %v3177, 0
  %v3190 = vsel %vm834, %v3179, 0
  %3192 = vmatprep.subr.bf16.mxu0 0
  %3193 = vmatpush1.bf16.xpose.msra.mxu0 %v3187
  %3194 = vmatprep.subr.bf16.mxu0 0
  %3195 = vmatpush1.bf16.xpose.msra.mxu0 %v3190
  %3196 = vmatprep.subr.bf16.mxu0 0
  %3197 = vmatpush1.bf16.xpose.msra.mxu0 0
  %3198 = vmatprep.subr.bf16.mxu0 0
  %3199 = vmatpush1.bf16.xpose.msra.mxu0 0
  %3200 = vmatprep.subr.bf16.mxu0 0
  %3201 = vmatpush1.bf16.xpose.msra.mxu0 0
  %3202 = vmatprep.subr.bf16.mxu0 0
  %3203 = vmatpush1.bf16.xpose.msra.mxu0 0
  %3204 = vmatprep.subr.bf16.mxu0 0
  %3205 = vmatpush1.bf16.xpose.msra.mxu0 0
  %3206 = vmatprep.subr.bf16.mxu0 0
  %3207 = vmatpush1.bf16.xpose.msra.mxu0 0
  %3208 = vmatprep.subr.bf16.mxu0 0
  %3209 = vmatpush1.bf16.xpose.msra.mxu0 0
  %3210 = vmatprep.subr.bf16.mxu0 0
  %3211 = vmatpush1.bf16.xpose.msra.mxu0 0
  %3212 = vmatprep.subr.bf16.mxu0 0
  %3213 = vmatpush1.bf16.xpose.msra.mxu0 0
  %3214 = vmatprep.subr.bf16.mxu0 0
  %3215 = vmatpush1.bf16.xpose.msra.mxu0 0
  %3216 = vmatprep.subr.bf16.mxu0 0
  %3217 = vmatpush1.bf16.xpose.msra.mxu0 0
  %3218 = vmatprep.subr.bf16.mxu0 0
  %3219 = vmatpush1.bf16.xpose.msra.mxu0 0
  %3220 = vmatprep.subr.bf16.mxu0 0
  %3221 = vmatpush1.bf16.xpose.msra.mxu0 0
  %3222 = vmatprep.subr.bf16.mxu0 0
  %3223 = vmatpush1.bf16.xpose.msra.mxu0 0
  %3224 = vmatprep.mubr.bf16.mxu0 0
  %3225 = vmatmul.mubr.bf16.gmra.mrb[0].mxu0 %v3181
  %v3226 = vpop.f32.mrb[0].mxu0
  %v3227 = vadd.f32 0.0, %v3226
  %v3228 = vpop.f32.mrb[0].mxu0
  %v3229 = vpop.f32.mrb[0].mxu0
  %v3230 = vadd.f32 0.0, %v3229
  %v3231 = vpop.f32.mrb[0].mxu0
  %3232 = vmatprep.mubr.bf16.mxu0 0
  %3233 = vmatmul.mubr.bf16.gmra.mrb[0].mxu0 %v3184
  %v3234 = vpop.f32.mrb[0].mxu0
  %v3235 = vadd.f32 0.0, %v3234
  %v3236 = vpop.f32.mrb[0].mxu0
  %v3237 = vpop.f32.mrb[0].mxu0
  %v3238 = vadd.f32 0.0, %v3237
  %v3239 = vpop.f32.mrb[0].mxu0
  %3240 = vdwg.mxu0
  %3243 = vrot.lane.b32.xlu0 %v820, 112
  %v3244 = vpop.permute.xlu0 %3243
  %3245 = vrot.lane.b32.xlu0 %v821, 112
  %v3246 = vpop.permute.xlu0 %3245
  %v3248 = vsel %vm834, %v820, 0
  %v3251 = vsel %vm834, %v821, 0
  %v3254 = vsel %vm834, %v3244, 0
  %v3257 = vsel %vm834, %v3246, 0
  %3259 = vmatprep.subr.bf16.mxu0 0
  %3260 = vmatpush1.bf16.xpose.msra.mxu0 %v3254
  %3261 = vmatprep.subr.bf16.mxu0 0
  %3262 = vmatpush1.bf16.xpose.msra.mxu0 %v3257
  %3263 = vmatprep.subr.bf16.mxu0 0
  %3264 = vmatpush1.bf16.xpose.msra.mxu0 0
  %3265 = vmatprep.subr.bf16.mxu0 0
  %3266 = vmatpush1.bf16.xpose.msra.mxu0 0
  %3267 = vmatprep.subr.bf16.mxu0 0
  %3268 = vmatpush1.bf16.xpose.msra.mxu0 0
  %3269 = vmatprep.subr.bf16.mxu0 0
  %3270 = vmatpush1.bf16.xpose.msra.mxu0 0
  %3271 = vmatprep.subr.bf16.mxu0 0
  %3272 = vmatpush1.bf16.xpose.msra.mxu0 0
  %3273 = vmatprep.subr.bf16.mxu0 0
  %3274 = vmatpush1.bf16.xpose.msra.mxu0 0
  %3275 = vmatprep.subr.bf16.mxu0 0
  %3276 = vmatpush1.bf16.xpose.msra.mxu0 0
  %3277 = vmatprep.subr.bf16.mxu0 0
  %3278 = vmatpush1.bf16.xpose.msra.mxu0 0
  %3279 = vmatprep.subr.bf16.mxu0 0
  %3280 = vmatpush1.bf16.xpose.msra.mxu0 0
  %3281 = vmatprep.subr.bf16.mxu0 0
  %3282 = vmatpush1.bf16.xpose.msra.mxu0 0
  %3283 = vmatprep.subr.bf16.mxu0 0
  %3284 = vmatpush1.bf16.xpose.msra.mxu0 0
  %3285 = vmatprep.subr.bf16.mxu0 0
  %3286 = vmatpush1.bf16.xpose.msra.mxu0 0
  %3287 = vmatprep.subr.bf16.mxu0 0
  %3288 = vmatpush1.bf16.xpose.msra.mxu0 0
  %3289 = vmatprep.subr.bf16.mxu0 0
  %3290 = vmatpush1.bf16.xpose.msra.mxu0 0
  %3291 = vmatprep.mubr.bf16.mxu0 0
  %3292 = vmatmul.mubr.bf16.gmra.mrb[0].mxu0 %v3248
  %v3293 = vpop.f32.mrb[0].mxu0
  %v3294 = vadd.f32 0.0, %v3293
  %v3295 = vpop.f32.mrb[0].mxu0
  %v3296 = vpop.f32.mrb[0].mxu0
  %v3297 = vadd.f32 0.0, %v3296
  %v3298 = vpop.f32.mrb[0].mxu0
  %3299 = vmatprep.mubr.bf16.mxu0 0
  %3300 = vmatmul.mubr.bf16.gmra.mrb[0].mxu0 %v3251
  %v3301 = vpop.f32.mrb[0].mxu0
  %v3302 = vadd.f32 0.0, %v3301
  %v3303 = vpop.f32.mrb[0].mxu0
  %v3304 = vpop.f32.mrb[0].mxu0
  %v3305 = vadd.f32 0.0, %v3304
  %v3306 = vpop.f32.mrb[0].mxu0
  %3307 = vdwg.mxu0
  %3310 = vrot.lane.b32.xlu0 %v822, 112
  %v3311 = vpop.permute.xlu0 %3310
  %3312 = vrot.lane.b32.xlu0 %v823, 112
  %v3313 = vpop.permute.xlu0 %3312
  %v3315 = vsel %vm834, %v822, 0
  %v3318 = vsel %vm834, %v823, 0
  %v3321 = vsel %vm834, %v3311, 0
  %v3324 = vsel %vm834, %v3313, 0
  %3326 = vmatprep.subr.bf16.mxu0 0
  %3327 = vmatpush1.bf16.xpose.msra.mxu0 %v3321
  %3328 = vmatprep.subr.bf16.mxu0 0
  %3329 = vmatpush1.bf16.xpose.msra.mxu0 %v3324
  %3330 = vmatprep.subr.bf16.mxu0 0
  %3331 = vmatpush1.bf16.xpose.msra.mxu0 0
  %3332 = vmatprep.subr.bf16.mxu0 0
  %3333 = vmatpush1.bf16.xpose.msra.mxu0 0
  %3334 = vmatprep.subr.bf16.mxu0 0
  %3335 = vmatpush1.bf16.xpose.msra.mxu0 0
  %3336 = vmatprep.subr.bf16.mxu0 0
  %3337 = vmatpush1.bf16.xpose.msra.mxu0 0
  %3338 = vmatprep.subr.bf16.mxu0 0
  %3339 = vmatpush1.bf16.xpose.msra.mxu0 0
  %3340 = vmatprep.subr.bf16.mxu0 0
  %3341 = vmatpush1.bf16.xpose.msra.mxu0 0
  %3342 = vmatprep.subr.bf16.mxu0 0
  %3343 = vmatpush1.bf16.xpose.msra.mxu0 0
  %3344 = vmatprep.subr.bf16.mxu0 0
  %3345 = vmatpush1.bf16.xpose.msra.mxu0 0
  %3346 = vmatprep.subr.bf16.mxu0 0
  %3347 = vmatpush1.bf16.xpose.msra.mxu0 0
  %3348 = vmatprep.subr.bf16.mxu0 0
  %3349 = vmatpush1.bf16.xpose.msra.mxu0 0
  %3350 = vmatprep.subr.bf16.mxu0 0
  %3351 = vmatpush1.bf16.xpose.msra.mxu0 0
  %3352 = vmatprep.subr.bf16.mxu0 0
  %3353 = vmatpush1.bf16.xpose.msra.mxu0 0
  %3354 = vmatprep.subr.bf16.mxu0 0
  %3355 = vmatpush1.bf16.xpose.msra.mxu0 0
  %3356 = vmatprep.subr.bf16.mxu0 0
  %3357 = vmatpush1.bf16.xpose.msra.mxu0 0
  %3358 = vmatprep.mubr.bf16.mxu0 0
  %3359 = vmatmul.mubr.bf16.gmra.mrb[0].mxu0 %v3315
  %v3360 = vpop.f32.mrb[0].mxu0
  %v3361 = vadd.f32 0.0, %v3360
  %v3362 = vpop.f32.mrb[0].mxu0
  %v3363 = vpop.f32.mrb[0].mxu0
  %v3364 = vadd.f32 0.0, %v3363
  %v3365 = vpop.f32.mrb[0].mxu0
  %3366 = vmatprep.mubr.bf16.mxu0 0
  %3367 = vmatmul.mubr.bf16.gmra.mrb[0].mxu0 %v3318
  %v3368 = vpop.f32.mrb[0].mxu0
  %v3369 = vadd.f32 0.0, %v3368
  %v3370 = vpop.f32.mrb[0].mxu0
  %v3371 = vpop.f32.mrb[0].mxu0
  %v3372 = vadd.f32 0.0, %v3371
  %v3373 = vpop.f32.mrb[0].mxu0
  %3374 = vdwg.mxu0
  %3377 = vrot.lane.b32.xlu0 %v824, 112
  %v3378 = vpop.permute.xlu0 %3377
  %3379 = vrot.lane.b32.xlu0 %v825, 112
  %v3380 = vpop.permute.xlu0 %3379
  %v3382 = vsel %vm834, %v824, 0
  %v3385 = vsel %vm834, %v825, 0
  %v3388 = vsel %vm834, %v3378, 0
  %v3391 = vsel %vm834, %v3380, 0
  %3393 = vmatprep.subr.bf16.mxu0 0
  %3394 = vmatpush1.bf16.xpose.msra.mxu0 %v3388
  %3395 = vmatprep.subr.bf16.mxu0 0
  %3396 = vmatpush1.bf16.xpose.msra.mxu0 %v3391
  %3397 = vmatprep.subr.bf16.mxu0 0
  %3398 = vmatpush1.bf16.xpose.msra.mxu0 0
  %3399 = vmatprep.subr.bf16.mxu0 0
  %3400 = vmatpush1.bf16.xpose.msra.mxu0 0
  %3401 = vmatprep.subr.bf16.mxu0 0
  %3402 = vmatpush1.bf16.xpose.msra.mxu0 0
  %3403 = vmatprep.subr.bf16.mxu0 0
  %3404 = vmatpush1.bf16.xpose.msra.mxu0 0
  %3405 = vmatprep.subr.bf16.mxu0 0
  %3406 = vmatpush1.bf16.xpose.msra.mxu0 0
  %3407 = vmatprep.subr.bf16.mxu0 0
  %3408 = vmatpush1.bf16.xpose.msra.mxu0 0
  %3409 = vmatprep.subr.bf16.mxu0 0
  %3410 = vmatpush1.bf16.xpose.msra.mxu0 0
  %3411 = vmatprep.subr.bf16.mxu0 0
  %3412 = vmatpush1.bf16.xpose.msra.mxu0 0
  %3413 = vmatprep.subr.bf16.mxu0 0
  %3414 = vmatpush1.bf16.xpose.msra.mxu0 0
  %3415 = vmatprep.subr.bf16.mxu0 0
  %3416 = vmatpush1.bf16.xpose.msra.mxu0 0
  %3417 = vmatprep.subr.bf16.mxu0 0
  %3418 = vmatpush1.bf16.xpose.msra.mxu0 0
  %3419 = vmatprep.subr.bf16.mxu0 0
  %3420 = vmatpush1.bf16.xpose.msra.mxu0 0
  %3421 = vmatprep.subr.bf16.mxu0 0
  %3422 = vmatpush1.bf16.xpose.msra.mxu0 0
  %3423 = vmatprep.subr.bf16.mxu0 0
  %3424 = vmatpush1.bf16.xpose.msra.mxu0 0
  %3425 = vmatprep.mubr.bf16.mxu0 0
  %3426 = vmatmul.mubr.bf16.gmra.mrb[0].mxu0 %v3382
  %v3427 = vpop.f32.mrb[0].mxu0
  %v3428 = vadd.f32 0.0, %v3427
  %v3429 = vpop.f32.mrb[0].mxu0
  %v3430 = vpop.f32.mrb[0].mxu0
  %v3431 = vadd.f32 0.0, %v3430
  %v3432 = vpop.f32.mrb[0].mxu0
  %3433 = vmatprep.mubr.bf16.mxu0 0
  %3434 = vmatmul.mubr.bf16.gmra.mrb[0].mxu0 %v3385
  %v3435 = vpop.f32.mrb[0].mxu0
  %v3436 = vadd.f32 0.0, %v3435
  %v3437 = vpop.f32.mrb[0].mxu0
  %v3438 = vpop.f32.mrb[0].mxu0
  %v3439 = vadd.f32 0.0, %v3438
  %v3440 = vpop.f32.mrb[0].mxu0
  %3441 = vdwg.mxu0
  %3444 = vrot.lane.b32.xlu0 %v826, 112
  %v3445 = vpop.permute.xlu0 %3444
  %3446 = vrot.lane.b32.xlu0 %v827, 112
  %v3447 = vpop.permute.xlu0 %3446
  %v3449 = vsel %vm834, %v826, 0
  %v3452 = vsel %vm834, %v827, 0
  %v3455 = vsel %vm834, %v3445, 0
  %v3458 = vsel %vm834, %v3447, 0
  %3460 = vmatprep.subr.bf16.mxu0 0
  %3461 = vmatpush1.bf16.xpose.msra.mxu0 %v3455
  %3462 = vmatprep.subr.bf16.mxu0 0
  %3463 = vmatpush1.bf16.xpose.msra.mxu0 %v3458
  %3464 = vmatprep.subr.bf16.mxu0 0
  %3465 = vmatpush1.bf16.xpose.msra.mxu0 0
  %3466 = vmatprep.subr.bf16.mxu0 0
  %3467 = vmatpush1.bf16.xpose.msra.mxu0 0
  %3468 = vmatprep.subr.bf16.mxu0 0
  %3469 = vmatpush1.bf16.xpose.msra.mxu0 0
  %3470 = vmatprep.subr.bf16.mxu0 0
  %3471 = vmatpush1.bf16.xpose.msra.mxu0 0
  %3472 = vmatprep.subr.bf16.mxu0 0
  %3473 = vmatpush1.bf16.xpose.msra.mxu0 0
  %3474 = vmatprep.subr.bf16.mxu0 0
  %3475 = vmatpush1.bf16.xpose.msra.mxu0 0
  %3476 = vmatprep.subr.bf16.mxu0 0
  %3477 = vmatpush1.bf16.xpose.msra.mxu0 0
  %3478 = vmatprep.subr.bf16.mxu0 0
  %3479 = vmatpush1.bf16.xpose.msra.mxu0 0
  %3480 = vmatprep.subr.bf16.mxu0 0
  %3481 = vmatpush1.bf16.xpose.msra.mxu0 0
  %3482 = vmatprep.subr.bf16.mxu0 0
  %3483 = vmatpush1.bf16.xpose.msra.mxu0 0
  %3484 = vmatprep.subr.bf16.mxu0 0
  %3485 = vmatpush1.bf16.xpose.msra.mxu0 0
  %3486 = vmatprep.subr.bf16.mxu0 0
  %3487 = vmatpush1.bf16.xpose.msra.mxu0 0
  %3488 = vmatprep.subr.bf16.mxu0 0
  %3489 = vmatpush1.bf16.xpose.msra.mxu0 0
  %3490 = vmatprep.subr.bf16.mxu0 0
  %3491 = vmatpush1.bf16.xpose.msra.mxu0 0
  %3492 = vmatprep.mubr.bf16.mxu0 0
  %3493 = vmatmul.mubr.bf16.gmra.mrb[0].mxu0 %v3449
  %v3494 = vpop.f32.mrb[0].mxu0
  %v3495 = vadd.f32 0.0, %v3494
  %v3496 = vpop.f32.mrb[0].mxu0
  %v3497 = vpop.f32.mrb[0].mxu0
  %v3498 = vadd.f32 0.0, %v3497
  %v3499 = vpop.f32.mrb[0].mxu0
  %3500 = vmatprep.mubr.bf16.mxu0 0
  %3501 = vmatmul.mubr.bf16.gmra.mrb[0].mxu0 %v3452
  %v3502 = vpop.f32.mrb[0].mxu0
  %v3503 = vadd.f32 0.0, %v3502
  %v3504 = vpop.f32.mrb[0].mxu0
  %v3505 = vpop.f32.mrb[0].mxu0
  %v3506 = vadd.f32 0.0, %v3505
  %v3507 = vpop.f32.mrb[0].mxu0
  %3508 = vdwg.mxu0
  %v3509 = vld [vmem:[%s5] sm:$0xff]
  %v3510 = vld [vmem:[%s5 + $0x8] sm:$0xff]
  %v3511 = vld [vmem:[%s5 + $0x10] sm:$0xff]
  %v3512 = vld [vmem:[%s5 + $0x18] sm:$0xff]
  %v3513 = vld [vmem:[%s5 + $0x20] sm:$0xff]
  %v3514 = vld [vmem:[%s5 + $0x28] sm:$0xff]
  %v3515 = vld [vmem:[%s5 + $0x30] sm:$0xff]
  %v3516 = vld [vmem:[%s5 + $0x38] sm:$0xff]
  %v3517 = vld [vmem:[%s5 + $0x40] sm:$0xff]
  %v3518 = vld [vmem:[%s5 + $0x48] sm:$0xff]
  %v3519 = vld [vmem:[%s5 + $0x50] sm:$0xff]
  %v3520 = vld [vmem:[%s5 + $0x58] sm:$0xff]
  %v3521 = vld [vmem:[%s5 + $0x60] sm:$0xff]
  %v3522 = vld [vmem:[%s5 + $0x68] sm:$0xff]
  %v3523 = vld [vmem:[%s5 + $0x70] sm:$0xff]
  %v3524 = vld [vmem:[%s5 + $0x78] sm:$0xff]
  %v3525 = vadd.f32 %v882, %v3509
  %v3526 = vadd.f32 %v885, %v3510
  %v3527 = vadd.f32 %v890, %v3511
  %v3528 = vadd.f32 %v893, %v3512
  %v3529 = vadd.f32 %v949, %v3509
  %v3530 = vadd.f32 %v952, %v3510
  %v3531 = vadd.f32 %v957, %v3511
  %v3532 = vadd.f32 %v960, %v3512
  %v3533 = vadd.f32 %v1016, %v3509
  %v3534 = vadd.f32 %v1019, %v3510
  %v3535 = vadd.f32 %v1024, %v3511
  %v3536 = vadd.f32 %v1027, %v3512
  %v3537 = vadd.f32 %v1083, %v3509
  %v3538 = vadd.f32 %v1086, %v3510
  %v3539 = vadd.f32 %v1091, %v3511
  %v3540 = vadd.f32 %v1094, %v3512
  %v3541 = vadd.f32 %v1150, %v3509
  %v3542 = vadd.f32 %v1153, %v3510
  %v3543 = vadd.f32 %v1158, %v3511
  %v3544 = vadd.f32 %v1161, %v3512
  %v3545 = vadd.f32 %v1217, %v3509
  %v3546 = vadd.f32 %v1220, %v3510
  %v3547 = vadd.f32 %v1225, %v3511
  %v3548 = vadd.f32 %v1228, %v3512
  %v3549 = vadd.f32 %v1284, %v3509
  %v3550 = vadd.f32 %v1287, %v3510
  %v3551 = vadd.f32 %v1292, %v3511
  %v3552 = vadd.f32 %v1295, %v3512
  %v3553 = vadd.f32 %v1351, %v3509
  %v3554 = vadd.f32 %v1354, %v3510
  %v3555 = vadd.f32 %v1359, %v3511
  %v3556 = vadd.f32 %v1362, %v3512
  %v3557 = vadd.f32 %v1418, %v3509
  %v3558 = vadd.f32 %v1421, %v3510
  %v3559 = vadd.f32 %v1426, %v3511
  %v3560 = vadd.f32 %v1429, %v3512
  %v3561 = vadd.f32 %v1485, %v3509
  %v3562 = vadd.f32 %v1488, %v3510
  %v3563 = vadd.f32 %v1493, %v3511
  %v3564 = vadd.f32 %v1496, %v3512
  %v3565 = vadd.f32 %v1552, %v3513
  %v3566 = vadd.f32 %v1555, %v3514
  %v3567 = vadd.f32 %v1560, %v3515
  %v3568 = vadd.f32 %v1563, %v3516
  %v3569 = vadd.f32 %v1619, %v3513
  %v3570 = vadd.f32 %v1622, %v3514
  %v3571 = vadd.f32 %v1627, %v3515
  %v3572 = vadd.f32 %v1630, %v3516
  %v3573 = vadd.f32 %v1686, %v3513
  %v3574 = vadd.f32 %v1689, %v3514
  %v3575 = vadd.f32 %v1694, %v3515
  %v3576 = vadd.f32 %v1697, %v3516
  %v3577 = vadd.f32 %v1753, %v3513
  %v3578 = vadd.f32 %v1756, %v3514
  %v3579 = vadd.f32 %v1761, %v3515
  %v3580 = vadd.f32 %v1764, %v3516
  %v3581 = vadd.f32 %v1820, %v3513
  %v3582 = vadd.f32 %v1823, %v3514
  %v3583 = vadd.f32 %v1828, %v3515
  %v3584 = vadd.f32 %v1831, %v3516
  %v3585 = vadd.f32 %v1887, %v3513
  %v3586 = vadd.f32 %v1890, %v3514
  %v3587 = vadd.f32 %v1895, %v3515
  %v3588 = vadd.f32 %v1898, %v3516
  %v3589 = vadd.f32 %v1954, %v3513
  %v3590 = vadd.f32 %v1957, %v3514
  %v3591 = vadd.f32 %v1962, %v3515
  %v3592 = vadd.f32 %v1965, %v3516
  %v3593 = vadd.f32 %v2021, %v3513
  %v3594 = vadd.f32 %v2024, %v3514
  %v3595 = vadd.f32 %v2029, %v3515
  %v3596 = vadd.f32 %v2032, %v3516
  %v3597 = vadd.f32 %v2088, %v3513
  %v3598 = vadd.f32 %v2091, %v3514
  %v3599 = vadd.f32 %v2096, %v3515
  %v3600 = vadd.f32 %v2099, %v3516
  %v3601 = vadd.f32 %v2155, %v3513
  %v3602 = vadd.f32 %v2158, %v3514
  %v3603 = vadd.f32 %v2163, %v3515
  %v3604 = vadd.f32 %v2166, %v3516
  %v3605 = vadd.f32 %v2222, %v3517
  %v3606 = vadd.f32 %v2225, %v3518
  %v3607 = vadd.f32 %v2230, %v3519
  %v3608 = vadd.f32 %v2233, %v3520
  %v3609 = vadd.f32 %v2289, %v3517
  %v3610 = vadd.f32 %v2292, %v3518
  %v3611 = vadd.f32 %v2297, %v3519
  %v3612 = vadd.f32 %v2300, %v3520
  %v3613 = vadd.f32 %v2356, %v3517
  %v3614 = vadd.f32 %v2359, %v3518
  %v3615 = vadd.f32 %v2364, %v3519
  %v3616 = vadd.f32 %v2367, %v3520
  %v3617 = vadd.f32 %v2423, %v3517
  %v3618 = vadd.f32 %v2426, %v3518
  %v3619 = vadd.f32 %v2431, %v3519
  %v3620 = vadd.f32 %v2434, %v3520
  %v3621 = vadd.f32 %v2490, %v3517
  %v3622 = vadd.f32 %v2493, %v3518
  %v3623 = vadd.f32 %v2498, %v3519
  %v3624 = vadd.f32 %v2501, %v3520
  %v3625 = vadd.f32 %v2557, %v3517
  %v3626 = vadd.f32 %v2560, %v3518
  %v3627 = vadd.f32 %v2565, %v3519
  %v3628 = vadd.f32 %v2568, %v3520
  %v3629 = vadd.f32 %v2624, %v3517
  %v3630 = vadd.f32 %v2627, %v3518
  %v3631 = vadd.f32 %v2632, %v3519
  %v3632 = vadd.f32 %v2635, %v3520
  %v3633 = vadd.f32 %v2691, %v3517
  %v3634 = vadd.f32 %v2694, %v3518
  %v3635 = vadd.f32 %v2699, %v3519
  %v3636 = vadd.f32 %v2702, %v3520
  %v3637 = vadd.f32 %v2758, %v3517
  %v3638 = vadd.f32 %v2761, %v3518
  %v3639 = vadd.f32 %v2766, %v3519
  %v3640 = vadd.f32 %v2769, %v3520
  %v3641 = vadd.f32 %v2825, %v3517
  %v3642 = vadd.f32 %v2828, %v3518
  %v3643 = vadd.f32 %v2833, %v3519
  %v3644 = vadd.f32 %v2836, %v3520
  %v3645 = vadd.f32 %v2892, %v3521
  %v3646 = vadd.f32 %v2895, %v3522
  %v3647 = vadd.f32 %v2900, %v3523
  %v3648 = vadd.f32 %v2903, %v3524
  %v3649 = vadd.f32 %v2959, %v3521
  %v3650 = vadd.f32 %v2962, %v3522
  %v3651 = vadd.f32 %v2967, %v3523
  %v3652 = vadd.f32 %v2970, %v3524
  %v3653 = vadd.f32 %v3026, %v3521
  %v3654 = vadd.f32 %v3029, %v3522
  %v3655 = vadd.f32 %v3034, %v3523
  %v3656 = vadd.f32 %v3037, %v3524
  %v3657 = vadd.f32 %v3093, %v3521
  %v3658 = vadd.f32 %v3096, %v3522
  %v3659 = vadd.f32 %v3101, %v3523
  %v3660 = vadd.f32 %v3104, %v3524
  %v3661 = vadd.f32 %v3160, %v3521
  %v3662 = vadd.f32 %v3163, %v3522
  %v3663 = vadd.f32 %v3168, %v3523
  %v3664 = vadd.f32 %v3171, %v3524
  %v3665 = vadd.f32 %v3227, %v3521
  %v3666 = vadd.f32 %v3230, %v3522
  %v3667 = vadd.f32 %v3235, %v3523
  %v3668 = vadd.f32 %v3238, %v3524
  %v3669 = vadd.f32 %v3294, %v3521
  %v3670 = vadd.f32 %v3297, %v3522
  %v3671 = vadd.f32 %v3302, %v3523
  %v3672 = vadd.f32 %v3305, %v3524
  %v3673 = vadd.f32 %v3361, %v3521
  %v3674 = vadd.f32 %v3364, %v3522
  %v3675 = vadd.f32 %v3369, %v3523
  %v3676 = vadd.f32 %v3372, %v3524
  %v3677 = vadd.f32 %v3428, %v3521
  %v3678 = vadd.f32 %v3431, %v3522
  %v3679 = vadd.f32 %v3436, %v3523
  %v3680 = vadd.f32 %v3439, %v3524
  %v3681 = vadd.f32 %v3495, %v3521
  %v3682 = vadd.f32 %v3498, %v3522
  %v3683 = vadd.f32 %v3503, %v3523
  %v3684 = vadd.f32 %v3506, %v3524
  %vm3685 = vcmask 261120
  %v3686 = vsel %vm3685, %v3525, -inf
  %3687 = vmax.xlane.f32.xlu0 %v3686
  %v3688 = vpop.xlane.xlu0 %3687
  %v3689 = vsel %vm3685, %v3526, -inf
  %3690 = vmax.xlane.f32.xlu0 %v3689
  %v3691 = vpop.xlane.xlu0 %3690
  %v3692 = vsel %vm3685, %v3527, -inf
  %3693 = vmax.xlane.f32.xlu0 %v3692
  %v3694 = vpop.xlane.xlu0 %3693
  %v3695 = vsel %vm3685, %v3528, -inf
  %3696 = vmax.xlane.f32.xlu0 %v3695
  %v3697 = vpop.xlane.xlu0 %3696
  %v3698 = vsel %vm3685, %v3529, -inf
  %3699 = vmax.xlane.f32.xlu0 %v3698
  %v3700 = vpop.xlane.xlu0 %3699
  %v3701 = vsel %vm3685, %v3530, -inf
  %3702 = vmax.xlane.f32.xlu0 %v3701
  %v3703 = vpop.xlane.xlu0 %3702
  %v3704 = vsel %vm3685, %v3531, -inf
  %3705 = vmax.xlane.f32.xlu0 %v3704
  %v3706 = vpop.xlane.xlu0 %3705
  %v3707 = vsel %vm3685, %v3532, -inf
  %3708 = vmax.xlane.f32.xlu0 %v3707
  %v3709 = vpop.xlane.xlu0 %3708
  %v3710 = vsel %vm3685, %v3533, -inf
  %3711 = vmax.xlane.f32.xlu0 %v3710
  %v3712 = vpop.xlane.xlu0 %3711
  %v3713 = vsel %vm3685, %v3534, -inf
  %3714 = vmax.xlane.f32.xlu0 %v3713
  %v3715 = vpop.xlane.xlu0 %3714
  %v3716 = vsel %vm3685, %v3535, -inf
  %3717 = vmax.xlane.f32.xlu0 %v3716
  %v3718 = vpop.xlane.xlu0 %3717
  %v3719 = vsel %vm3685, %v3536, -inf
  %3720 = vmax.xlane.f32.xlu0 %v3719
  %v3721 = vpop.xlane.xlu0 %3720
  %v3722 = vsel %vm3685, %v3537, -inf
  %3723 = vmax.xlane.f32.xlu0 %v3722
  %v3724 = vpop.xlane.xlu0 %3723
  %v3725 = vsel %vm3685, %v3538, -inf
  %3726 = vmax.xlane.f32.xlu0 %v3725
  %v3727 = vpop.xlane.xlu0 %3726
  %v3728 = vsel %vm3685, %v3539, -inf
  %3729 = vmax.xlane.f32.xlu0 %v3728
  %v3730 = vpop.xlane.xlu0 %3729
  %v3731 = vsel %vm3685, %v3540, -inf
  %3732 = vmax.xlane.f32.xlu0 %v3731
  %v3733 = vpop.xlane.xlu0 %3732
  %v3734 = vsel %vm3685, %v3541, -inf
  %3735 = vmax.xlane.f32.xlu0 %v3734
  %v3736 = vpop.xlane.xlu0 %3735
  %v3737 = vsel %vm3685, %v3542, -inf
  %3738 = vmax.xlane.f32.xlu0 %v3737
  %v3739 = vpop.xlane.xlu0 %3738
  %v3740 = vsel %vm3685, %v3543, -inf
  %3741 = vmax.xlane.f32.xlu0 %v3740
  %v3742 = vpop.xlane.xlu0 %3741
  %v3743 = vsel %vm3685, %v3544, -inf
  %3744 = vmax.xlane.f32.xlu0 %v3743
  %v3745 = vpop.xlane.xlu0 %3744
  %v3746 = vsel %vm3685, %v3545, -inf
  %3747 = vmax.xlane.f32.xlu0 %v3746
  %v3748 = vpop.xlane.xlu0 %3747
  %v3749 = vsel %vm3685, %v3546, -inf
  %3750 = vmax.xlane.f32.xlu0 %v3749
  %v3751 = vpop.xlane.xlu0 %3750
  %v3752 = vsel %vm3685, %v3547, -inf
  %3753 = vmax.xlane.f32.xlu0 %v3752
  %v3754 = vpop.xlane.xlu0 %3753
  %v3755 = vsel %vm3685, %v3548, -inf
  %3756 = vmax.xlane.f32.xlu0 %v3755
  %v3757 = vpop.xlane.xlu0 %3756
  %v3758 = vsel %vm3685, %v3549, -inf
  %3759 = vmax.xlane.f32.xlu0 %v3758
  %v3760 = vpop.xlane.xlu0 %3759
  %v3761 = vsel %vm3685, %v3550, -inf
  %3762 = vmax.xlane.f32.xlu0 %v3761
  %v3763 = vpop.xlane.xlu0 %3762
  %v3764 = vsel %vm3685, %v3551, -inf
  %3765 = vmax.xlane.f32.xlu0 %v3764
  %v3766 = vpop.xlane.xlu0 %3765
  %v3767 = vsel %vm3685, %v3552, -inf
  %3768 = vmax.xlane.f32.xlu0 %v3767
  %v3769 = vpop.xlane.xlu0 %3768
  %v3770 = vsel %vm3685, %v3553, -inf
  %3771 = vmax.xlane.f32.xlu0 %v3770
  %v3772 = vpop.xlane.xlu0 %3771
  %v3773 = vsel %vm3685, %v3554, -inf
  %3774 = vmax.xlane.f32.xlu0 %v3773
  %v3775 = vpop.xlane.xlu0 %3774
  %v3776 = vsel %vm3685, %v3555, -inf
  %3777 = vmax.xlane.f32.xlu0 %v3776
  %v3778 = vpop.xlane.xlu0 %3777
  %v3779 = vsel %vm3685, %v3556, -inf
  %3780 = vmax.xlane.f32.xlu0 %v3779
  %v3781 = vpop.xlane.xlu0 %3780
  %v3782 = vsel %vm3685, %v3557, -inf
  %3783 = vmax.xlane.f32.xlu0 %v3782
  %v3784 = vpop.xlane.xlu0 %3783
  %v3785 = vsel %vm3685, %v3558, -inf
  %3786 = vmax.xlane.f32.xlu0 %v3785
  %v3787 = vpop.xlane.xlu0 %3786
  %v3788 = vsel %vm3685, %v3559, -inf
  %3789 = vmax.xlane.f32.xlu0 %v3788
  %v3790 = vpop.xlane.xlu0 %3789
  %v3791 = vsel %vm3685, %v3560, -inf
  %3792 = vmax.xlane.f32.xlu0 %v3791
  %v3793 = vpop.xlane.xlu0 %3792
  %v3794 = vsel %vm3685, %v3561, -inf
  %3795 = vmax.xlane.f32.xlu0 %v3794
  %v3796 = vpop.xlane.xlu0 %3795
  %v3797 = vsel %vm3685, %v3562, -inf
  %3798 = vmax.xlane.f32.xlu0 %v3797
  %v3799 = vpop.xlane.xlu0 %3798
  %v3800 = vsel %vm3685, %v3563, -inf
  %3801 = vmax.xlane.f32.xlu0 %v3800
  %v3802 = vpop.xlane.xlu0 %3801
  %v3803 = vsel %vm3685, %v3564, -inf
  %3804 = vmax.xlane.f32.xlu0 %v3803
  %v3805 = vpop.xlane.xlu0 %3804
  %v3806 = vsel %vm3685, %v3565, -inf
  %3807 = vmax.xlane.f32.xlu0 %v3806
  %v3808 = vpop.xlane.xlu0 %3807
  %v3809 = vsel %vm3685, %v3566, -inf
  %3810 = vmax.xlane.f32.xlu0 %v3809
  %v3811 = vpop.xlane.xlu0 %3810
  %v3812 = vsel %vm3685, %v3567, -inf
  %3813 = vmax.xlane.f32.xlu0 %v3812
  %v3814 = vpop.xlane.xlu0 %3813
  %v3815 = vsel %vm3685, %v3568, -inf
  %3816 = vmax.xlane.f32.xlu0 %v3815
  %v3817 = vpop.xlane.xlu0 %3816
  %v3818 = vsel %vm3685, %v3569, -inf
  %3819 = vmax.xlane.f32.xlu0 %v3818
  %v3820 = vpop.xlane.xlu0 %3819
  %v3821 = vsel %vm3685, %v3570, -inf
  %3822 = vmax.xlane.f32.xlu0 %v3821
  %v3823 = vpop.xlane.xlu0 %3822
  %v3824 = vsel %vm3685, %v3571, -inf
  %3825 = vmax.xlane.f32.xlu0 %v3824
  %v3826 = vpop.xlane.xlu0 %3825
  %v3827 = vsel %vm3685, %v3572, -inf
  %3828 = vmax.xlane.f32.xlu0 %v3827
  %v3829 = vpop.xlane.xlu0 %3828
  %v3830 = vsel %vm3685, %v3573, -inf
  %3831 = vmax.xlane.f32.xlu0 %v3830
  %v3832 = vpop.xlane.xlu0 %3831
  %v3833 = vsel %vm3685, %v3574, -inf
  %3834 = vmax.xlane.f32.xlu0 %v3833
  %v3835 = vpop.xlane.xlu0 %3834
  %v3836 = vsel %vm3685, %v3575, -inf
  %3837 = vmax.xlane.f32.xlu0 %v3836
  %v3838 = vpop.xlane.xlu0 %3837
  %v3839 = vsel %vm3685, %v3576, -inf
  %3840 = vmax.xlane.f32.xlu0 %v3839
  %v3841 = vpop.xlane.xlu0 %3840
  %v3842 = vsel %vm3685, %v3577, -inf
  %3843 = vmax.xlane.f32.xlu0 %v3842
  %v3844 = vpop.xlane.xlu0 %3843
  %v3845 = vsel %vm3685, %v3578, -inf
  %3846 = vmax.xlane.f32.xlu0 %v3845
  %v3847 = vpop.xlane.xlu0 %3846
  %v3848 = vsel %vm3685, %v3579, -inf
  %3849 = vmax.xlane.f32.xlu0 %v3848
  %v3850 = vpop.xlane.xlu0 %3849
  %v3851 = vsel %vm3685, %v3580, -inf
  %3852 = vmax.xlane.f32.xlu0 %v3851
  %v3853 = vpop.xlane.xlu0 %3852
  %v3854 = vsel %vm3685, %v3581, -inf
  %3855 = vmax.xlane.f32.xlu0 %v3854
  %v3856 = vpop.xlane.xlu0 %3855
  %v3857 = vsel %vm3685, %v3582, -inf
  %3858 = vmax.xlane.f32.xlu0 %v3857
  %v3859 = vpop.xlane.xlu0 %3858
  %v3860 = vsel %vm3685, %v3583, -inf
  %3861 = vmax.xlane.f32.xlu0 %v3860
  %v3862 = vpop.xlane.xlu0 %3861
  %v3863 = vsel %vm3685, %v3584, -inf
  %3864 = vmax.xlane.f32.xlu0 %v3863
  %v3865 = vpop.xlane.xlu0 %3864
  %v3866 = vsel %vm3685, %v3585, -inf
  %3867 = vmax.xlane.f32.xlu0 %v3866
  %v3868 = vpop.xlane.xlu0 %3867
  %v3869 = vsel %vm3685, %v3586, -inf
  %3870 = vmax.xlane.f32.xlu0 %v3869
  %v3871 = vpop.xlane.xlu0 %3870
  %v3872 = vsel %vm3685, %v3587, -inf
  %3873 = vmax.xlane.f32.xlu0 %v3872
  %v3874 = vpop.xlane.xlu0 %3873
  %v3875 = vsel %vm3685, %v3588, -inf
  %3876 = vmax.xlane.f32.xlu0 %v3875
  %v3877 = vpop.xlane.xlu0 %3876
  %v3878 = vsel %vm3685, %v3589, -inf
  %3879 = vmax.xlane.f32.xlu0 %v3878
  %v3880 = vpop.xlane.xlu0 %3879
  %v3881 = vsel %vm3685, %v3590, -inf
  %3882 = vmax.xlane.f32.xlu0 %v3881
  %v3883 = vpop.xlane.xlu0 %3882
  %v3884 = vsel %vm3685, %v3591, -inf
  %3885 = vmax.xlane.f32.xlu0 %v3884
  %v3886 = vpop.xlane.xlu0 %3885
  %v3887 = vsel %vm3685, %v3592, -inf
  %3888 = vmax.xlane.f32.xlu0 %v3887
  %v3889 = vpop.xlane.xlu0 %3888
  %v3890 = vsel %vm3685, %v3593, -inf
  %3891 = vmax.xlane.f32.xlu0 %v3890
  %v3892 = vpop.xlane.xlu0 %3891
  %v3893 = vsel %vm3685, %v3594, -inf
  %3894 = vmax.xlane.f32.xlu0 %v3893
  %v3895 = vpop.xlane.xlu0 %3894
  %v3896 = vsel %vm3685, %v3595, -inf
  %3897 = vmax.xlane.f32.xlu0 %v3896
  %v3898 = vpop.xlane.xlu0 %3897
  %v3899 = vsel %vm3685, %v3596, -inf
  %3900 = vmax.xlane.f32.xlu0 %v3899
  %v3901 = vpop.xlane.xlu0 %3900
  %v3902 = vsel %vm3685, %v3597, -inf
  %3903 = vmax.xlane.f32.xlu0 %v3902
  %v3904 = vpop.xlane.xlu0 %3903
  %v3905 = vsel %vm3685, %v3598, -inf
  %3906 = vmax.xlane.f32.xlu0 %v3905
  %v3907 = vpop.xlane.xlu0 %3906
  %v3908 = vsel %vm3685, %v3599, -inf
  %3909 = vmax.xlane.f32.xlu0 %v3908
  %v3910 = vpop.xlane.xlu0 %3909
  %v3911 = vsel %vm3685, %v3600, -inf
  %3912 = vmax.xlane.f32.xlu0 %v3911
  %v3913 = vpop.xlane.xlu0 %3912
  %v3914 = vsel %vm3685, %v3601, -inf
  %3915 = vmax.xlane.f32.xlu0 %v3914
  %v3916 = vpop.xlane.xlu0 %3915
  %v3917 = vsel %vm3685, %v3602, -inf
  %3918 = vmax.xlane.f32.xlu0 %v3917
  %v3919 = vpop.xlane.xlu0 %3918
  %v3920 = vsel %vm3685, %v3603, -inf
  %3921 = vmax.xlane.f32.xlu0 %v3920
  %v3922 = vpop.xlane.xlu0 %3921
  %v3923 = vsel %vm3685, %v3604, -inf
  %3924 = vmax.xlane.f32.xlu0 %v3923
  %v3925 = vpop.xlane.xlu0 %3924
  %v3926 = vsel %vm3685, %v3605, -inf
  %3927 = vmax.xlane.f32.xlu0 %v3926
  %v3928 = vpop.xlane.xlu0 %3927
  %v3929 = vsel %vm3685, %v3606, -inf
  %3930 = vmax.xlane.f32.xlu0 %v3929
  %v3931 = vpop.xlane.xlu0 %3930
  %v3932 = vsel %vm3685, %v3607, -inf
  %3933 = vmax.xlane.f32.xlu0 %v3932
  %v3934 = vpop.xlane.xlu0 %3933
  %v3935 = vsel %vm3685, %v3608, -inf
  %3936 = vmax.xlane.f32.xlu0 %v3935
  %v3937 = vpop.xlane.xlu0 %3936
  %v3938 = vsel %vm3685, %v3609, -inf
  %3939 = vmax.xlane.f32.xlu0 %v3938
  %v3940 = vpop.xlane.xlu0 %3939
  %v3941 = vsel %vm3685, %v3610, -inf
  %3942 = vmax.xlane.f32.xlu0 %v3941
  %v3943 = vpop.xlane.xlu0 %3942
  %v3944 = vsel %vm3685, %v3611, -inf
  %3945 = vmax.xlane.f32.xlu0 %v3944
  %v3946 = vpop.xlane.xlu0 %3945
  %v3947 = vsel %vm3685, %v3612, -inf
  %3948 = vmax.xlane.f32.xlu0 %v3947
  %v3949 = vpop.xlane.xlu0 %3948
  %v3950 = vsel %vm3685, %v3613, -inf
  %3951 = vmax.xlane.f32.xlu0 %v3950
  %v3952 = vpop.xlane.xlu0 %3951
  %v3953 = vsel %vm3685, %v3614, -inf
  %3954 = vmax.xlane.f32.xlu0 %v3953
  %v3955 = vpop.xlane.xlu0 %3954
  %v3956 = vsel %vm3685, %v3615, -inf
  %3957 = vmax.xlane.f32.xlu0 %v3956
  %v3958 = vpop.xlane.xlu0 %3957
  %v3959 = vsel %vm3685, %v3616, -inf
  %3960 = vmax.xlane.f32.xlu0 %v3959
  %v3961 = vpop.xlane.xlu0 %3960
  %v3962 = vsel %vm3685, %v3617, -inf
  %3963 = vmax.xlane.f32.xlu0 %v3962
  %v3964 = vpop.xlane.xlu0 %3963
  %v3965 = vsel %vm3685, %v3618, -inf
  %3966 = vmax.xlane.f32.xlu0 %v3965
  %v3967 = vpop.xlane.xlu0 %3966
  %v3968 = vsel %vm3685, %v3619, -inf
  %3969 = vmax.xlane.f32.xlu0 %v3968
  %v3970 = vpop.xlane.xlu0 %3969
  %v3971 = vsel %vm3685, %v3620, -inf
  %3972 = vmax.xlane.f32.xlu0 %v3971
  %v3973 = vpop.xlane.xlu0 %3972
  %v3974 = vsel %vm3685, %v3621, -inf
  %3975 = vmax.xlane.f32.xlu0 %v3974
  %v3976 = vpop.xlane.xlu0 %3975
  %v3977 = vsel %vm3685, %v3622, -inf
  %3978 = vmax.xlane.f32.xlu0 %v3977
  %v3979 = vpop.xlane.xlu0 %3978
  %v3980 = vsel %vm3685, %v3623, -inf
  %3981 = vmax.xlane.f32.xlu0 %v3980
  %v3982 = vpop.xlane.xlu0 %3981
  %v3983 = vsel %vm3685, %v3624, -inf
  %3984 = vmax.xlane.f32.xlu0 %v3983
  %v3985 = vpop.xlane.xlu0 %3984
  %v3986 = vsel %vm3685, %v3625, -inf
  %3987 = vmax.xlane.f32.xlu0 %v3986
  %v3988 = vpop.xlane.xlu0 %3987
  %v3989 = vsel %vm3685, %v3626, -inf
  %3990 = vmax.xlane.f32.xlu0 %v3989
  %v3991 = vpop.xlane.xlu0 %3990
  %v3992 = vsel %vm3685, %v3627, -inf
  %3993 = vmax.xlane.f32.xlu0 %v3992
  %v3994 = vpop.xlane.xlu0 %3993
  %v3995 = vsel %vm3685, %v3628, -inf
  %3996 = vmax.xlane.f32.xlu0 %v3995
  %v3997 = vpop.xlane.xlu0 %3996
  %v3998 = vsel %vm3685, %v3629, -inf
  %3999 = vmax.xlane.f32.xlu0 %v3998
  %v4000 = vpop.xlane.xlu0 %3999
  %v4001 = vsel %vm3685, %v3630, -inf
  %4002 = vmax.xlane.f32.xlu0 %v4001
  %v4003 = vpop.xlane.xlu0 %4002
  %v4004 = vsel %vm3685, %v3631, -inf
  %4005 = vmax.xlane.f32.xlu0 %v4004
  %v4006 = vpop.xlane.xlu0 %4005
  %v4007 = vsel %vm3685, %v3632, -inf
  %4008 = vmax.xlane.f32.xlu0 %v4007
  %v4009 = vpop.xlane.xlu0 %4008
  %v4010 = vsel %vm3685, %v3633, -inf
  %4011 = vmax.xlane.f32.xlu0 %v4010
  %v4012 = vpop.xlane.xlu0 %4011
  %v4013 = vsel %vm3685, %v3634, -inf
  %4014 = vmax.xlane.f32.xlu0 %v4013
  %v4015 = vpop.xlane.xlu0 %4014
  %v4016 = vsel %vm3685, %v3635, -inf
  %4017 = vmax.xlane.f32.xlu0 %v4016
  %v4018 = vpop.xlane.xlu0 %4017
  %v4019 = vsel %vm3685, %v3636, -inf
  %4020 = vmax.xlane.f32.xlu0 %v4019
  %v4021 = vpop.xlane.xlu0 %4020
  %v4022 = vsel %vm3685, %v3637, -inf
  %4023 = vmax.xlane.f32.xlu0 %v4022
  %v4024 = vpop.xlane.xlu0 %4023
  %v4025 = vsel %vm3685, %v3638, -inf
  %4026 = vmax.xlane.f32.xlu0 %v4025
  %v4027 = vpop.xlane.xlu0 %4026
  %v4028 = vsel %vm3685, %v3639, -inf
  %4029 = vmax.xlane.f32.xlu0 %v4028
  %v4030 = vpop.xlane.xlu0 %4029
  %v4031 = vsel %vm3685, %v3640, -inf
  %4032 = vmax.xlane.f32.xlu0 %v4031
  %v4033 = vpop.xlane.xlu0 %4032
  %v4034 = vsel %vm3685, %v3641, -inf
  %4035 = vmax.xlane.f32.xlu0 %v4034
  %v4036 = vpop.xlane.xlu0 %4035
  %v4037 = vsel %vm3685, %v3642, -inf
  %4038 = vmax.xlane.f32.xlu0 %v4037
  %v4039 = vpop.xlane.xlu0 %4038
  %v4040 = vsel %vm3685, %v3643, -inf
  %4041 = vmax.xlane.f32.xlu0 %v4040
  %v4042 = vpop.xlane.xlu0 %4041
  %v4043 = vsel %vm3685, %v3644, -inf
  %4044 = vmax.xlane.f32.xlu0 %v4043
  %v4045 = vpop.xlane.xlu0 %4044
  %v4046 = vsel %vm3685, %v3645, -inf
  %4047 = vmax.xlane.f32.xlu0 %v4046
  %v4048 = vpop.xlane.xlu0 %4047
  %v4049 = vsel %vm3685, %v3646, -inf
  %4050 = vmax.xlane.f32.xlu0 %v4049
  %v4051 = vpop.xlane.xlu0 %4050
  %v4052 = vsel %vm3685, %v3647, -inf
  %4053 = vmax.xlane.f32.xlu0 %v4052
  %v4054 = vpop.xlane.xlu0 %4053
  %v4055 = vsel %vm3685, %v3648, -inf
  %4056 = vmax.xlane.f32.xlu0 %v4055
  %v4057 = vpop.xlane.xlu0 %4056
  %v4058 = vsel %vm3685, %v3649, -inf
  %4059 = vmax.xlane.f32.xlu0 %v4058
  %v4060 = vpop.xlane.xlu0 %4059
  %v4061 = vsel %vm3685, %v3650, -inf
  %4062 = vmax.xlane.f32.xlu0 %v4061
  %v4063 = vpop.xlane.xlu0 %4062
  %v4064 = vsel %vm3685, %v3651, -inf
  %4065 = vmax.xlane.f32.xlu0 %v4064
  %v4066 = vpop.xlane.xlu0 %4065
  %v4067 = vsel %vm3685, %v3652, -inf
  %4068 = vmax.xlane.f32.xlu0 %v4067
  %v4069 = vpop.xlane.xlu0 %4068
  %v4070 = vsel %vm3685, %v3653, -inf
  %4071 = vmax.xlane.f32.xlu0 %v4070
  %v4072 = vpop.xlane.xlu0 %4071
  %v4073 = vsel %vm3685, %v3654, -inf
  %4074 = vmax.xlane.f32.xlu0 %v4073
  %v4075 = vpop.xlane.xlu0 %4074
  %v4076 = vsel %vm3685, %v3655, -inf
  %4077 = vmax.xlane.f32.xlu0 %v4076
  %v4078 = vpop.xlane.xlu0 %4077
  %v4079 = vsel %vm3685, %v3656, -inf
  %4080 = vmax.xlane.f32.xlu0 %v4079
  %v4081 = vpop.xlane.xlu0 %4080
  %v4082 = vsel %vm3685, %v3657, -inf
  %4083 = vmax.xlane.f32.xlu0 %v4082
  %v4084 = vpop.xlane.xlu0 %4083
  %v4085 = vsel %vm3685, %v3658, -inf
  %4086 = vmax.xlane.f32.xlu0 %v4085
  %v4087 = vpop.xlane.xlu0 %4086
  %v4088 = vsel %vm3685, %v3659, -inf
  %4089 = vmax.xlane.f32.xlu0 %v4088
  %v4090 = vpop.xlane.xlu0 %4089
  %v4091 = vsel %vm3685, %v3660, -inf
  %4092 = vmax.xlane.f32.xlu0 %v4091
  %v4093 = vpop.xlane.xlu0 %4092
  %v4094 = vsel %vm3685, %v3661, -inf
  %4095 = vmax.xlane.f32.xlu0 %v4094
  %v4096 = vpop.xlane.xlu0 %4095
  %v4097 = vsel %vm3685, %v3662, -inf
  %4098 = vmax.xlane.f32.xlu0 %v4097
  %v4099 = vpop.xlane.xlu0 %4098
  %v4100 = vsel %vm3685, %v3663, -inf
  %4101 = vmax.xlane.f32.xlu0 %v4100
  %v4102 = vpop.xlane.xlu0 %4101
  %v4103 = vsel %vm3685, %v3664, -inf
  %4104 = vmax.xlane.f32.xlu0 %v4103
  %v4105 = vpop.xlane.xlu0 %4104
  %v4106 = vsel %vm3685, %v3665, -inf
  %4107 = vmax.xlane.f32.xlu0 %v4106
  %v4108 = vpop.xlane.xlu0 %4107
  %v4109 = vsel %vm3685, %v3666, -inf
  %4110 = vmax.xlane.f32.xlu0 %v4109
  %v4111 = vpop.xlane.xlu0 %4110
  %v4112 = vsel %vm3685, %v3667, -inf
  %4113 = vmax.xlane.f32.xlu0 %v4112
  %v4114 = vpop.xlane.xlu0 %4113
  %v4115 = vsel %vm3685, %v3668, -inf
  %4116 = vmax.xlane.f32.xlu0 %v4115
  %v4117 = vpop.xlane.xlu0 %4116
  %v4118 = vsel %vm3685, %v3669, -inf
  %4119 = vmax.xlane.f32.xlu0 %v4118
  %v4120 = vpop.xlane.xlu0 %4119
  %v4121 = vsel %vm3685, %v3670, -inf
  %4122 = vmax.xlane.f32.xlu0 %v4121
  %v4123 = vpop.xlane.xlu0 %4122
  %v4124 = vsel %vm3685, %v3671, -inf
  %4125 = vmax.xlane.f32.xlu0 %v4124
  %v4126 = vpop.xlane.xlu0 %4125
  %v4127 = vsel %vm3685, %v3672, -inf
  %4128 = vmax.xlane.f32.xlu0 %v4127
  %v4129 = vpop.xlane.xlu0 %4128
  %v4130 = vsel %vm3685, %v3673, -inf
  %4131 = vmax.xlane.f32.xlu0 %v4130
  %v4132 = vpop.xlane.xlu0 %4131
  %v4133 = vsel %vm3685, %v3674, -inf
  %4134 = vmax.xlane.f32.xlu0 %v4133
  %v4135 = vpop.xlane.xlu0 %4134
  %v4136 = vsel %vm3685, %v3675, -inf
  %4137 = vmax.xlane.f32.xlu0 %v4136
  %v4138 = vpop.xlane.xlu0 %4137
  %v4139 = vsel %vm3685, %v3676, -inf
  %4140 = vmax.xlane.f32.xlu0 %v4139
  %v4141 = vpop.xlane.xlu0 %4140
  %v4142 = vsel %vm3685, %v3677, -inf
  %4143 = vmax.xlane.f32.xlu0 %v4142
  %v4144 = vpop.xlane.xlu0 %4143
  %v4145 = vsel %vm3685, %v3678, -inf
  %4146 = vmax.xlane.f32.xlu0 %v4145
  %v4147 = vpop.xlane.xlu0 %4146
  %v4148 = vsel %vm3685, %v3679, -inf
  %4149 = vmax.xlane.f32.xlu0 %v4148
  %v4150 = vpop.xlane.xlu0 %4149
  %v4151 = vsel %vm3685, %v3680, -inf
  %4152 = vmax.xlane.f32.xlu0 %v4151
  %v4153 = vpop.xlane.xlu0 %4152
  %v4154 = vsel %vm3685, %v3681, -inf
  %4155 = vmax.xlane.f32.xlu0 %v4154
  %v4156 = vpop.xlane.xlu0 %4155
  %v4157 = vsel %vm3685, %v3682, -inf
  %4158 = vmax.xlane.f32.xlu0 %v4157
  %v4159 = vpop.xlane.xlu0 %4158
  %v4160 = vsel %vm3685, %v3683, -inf
  %4161 = vmax.xlane.f32.xlu0 %v4160
  %v4162 = vpop.xlane.xlu0 %4161
  %v4163 = vsel %vm3685, %v3684, -inf
  %4164 = vmax.xlane.f32.xlu0 %v4163
  %v4165 = vpop.xlane.xlu0 %4164
  %v4166 = vsub.f32 %v3525, %v3688
  %v4167 = vsub.f32 %v3526, %v3691
  %v4168 = vsub.f32 %v3527, %v3694
  %v4169 = vsub.f32 %v3528, %v3697
  %v4170 = vsub.f32 %v3529, %v3700
  %v4171 = vsub.f32 %v3530, %v3703
  %v4172 = vsub.f32 %v3531, %v3706
  %v4173 = vsub.f32 %v3532, %v3709
  %v4174 = vsub.f32 %v3533, %v3712
  %v4175 = vsub.f32 %v3534, %v3715
  %v4176 = vsub.f32 %v3535, %v3718
  %v4177 = vsub.f32 %v3536, %v3721
  %v4178 = vsub.f32 %v3537, %v3724
  %v4179 = vsub.f32 %v3538, %v3727
  %v4180 = vsub.f32 %v3539, %v3730
  %v4181 = vsub.f32 %v3540, %v3733
  %v4182 = vsub.f32 %v3541, %v3736
  %v4183 = vsub.f32 %v3542, %v3739
  %v4184 = vsub.f32 %v3543, %v3742
  %v4185 = vsub.f32 %v3544, %v3745
  %v4186 = vsub.f32 %v3545, %v3748
  %v4187 = vsub.f32 %v3546, %v3751
  %v4188 = vsub.f32 %v3547, %v3754
  %v4189 = vsub.f32 %v3548, %v3757
  %v4190 = vsub.f32 %v3549, %v3760
  %v4191 = vsub.f32 %v3550, %v3763
  %v4192 = vsub.f32 %v3551, %v3766
  %v4193 = vsub.f32 %v3552, %v3769
  %v4194 = vsub.f32 %v3553, %v3772
  %v4195 = vsub.f32 %v3554, %v3775
  %v4196 = vsub.f32 %v3555, %v3778
  %v4197 = vsub.f32 %v3556, %v3781
  %v4198 = vsub.f32 %v3557, %v3784
  %v4199 = vsub.f32 %v3558, %v3787
  %v4200 = vsub.f32 %v3559, %v3790
  %v4201 = vsub.f32 %v3560, %v3793
  %v4202 = vsub.f32 %v3561, %v3796
  %v4203 = vsub.f32 %v3562, %v3799
  %v4204 = vsub.f32 %v3563, %v3802
  %v4205 = vsub.f32 %v3564, %v3805
  %v4206 = vsub.f32 %v3565, %v3808
  %v4207 = vsub.f32 %v3566, %v3811
  %v4208 = vsub.f32 %v3567, %v3814
  %v4209 = vsub.f32 %v3568, %v3817
  %v4210 = vsub.f32 %v3569, %v3820
  %v4211 = vsub.f32 %v3570, %v3823
  %v4212 = vsub.f32 %v3571, %v3826
  %v4213 = vsub.f32 %v3572, %v3829
  %v4214 = vsub.f32 %v3573, %v3832
  %v4215 = vsub.f32 %v3574, %v3835
  %v4216 = vsub.f32 %v3575, %v3838
  %v4217 = vsub.f32 %v3576, %v3841
  %v4218 = vsub.f32 %v3577, %v3844
  %v4219 = vsub.f32 %v3578, %v3847
  %v4220 = vsub.f32 %v3579, %v3850
  %v4221 = vsub.f32 %v3580, %v3853
  %v4222 = vsub.f32 %v3581, %v3856
  %v4223 = vsub.f32 %v3582, %v3859
  %v4224 = vsub.f32 %v3583, %v3862
  %v4225 = vsub.f32 %v3584, %v3865
  %v4226 = vsub.f32 %v3585, %v3868
  %v4227 = vsub.f32 %v3586, %v3871
  %v4228 = vsub.f32 %v3587, %v3874
  %v4229 = vsub.f32 %v3588, %v3877
  %v4230 = vsub.f32 %v3589, %v3880
  %v4231 = vsub.f32 %v3590, %v3883
  %v4232 = vsub.f32 %v3591, %v3886
  %v4233 = vsub.f32 %v3592, %v3889
  %v4234 = vsub.f32 %v3593, %v3892
  %v4235 = vsub.f32 %v3594, %v3895
  %v4236 = vsub.f32 %v3595, %v3898
  %v4237 = vsub.f32 %v3596, %v3901
  %v4238 = vsub.f32 %v3597, %v3904
  %v4239 = vsub.f32 %v3598, %v3907
  %v4240 = vsub.f32 %v3599, %v3910
  %v4241 = vsub.f32 %v3600, %v3913
  %v4242 = vsub.f32 %v3601, %v3916
  %v4243 = vsub.f32 %v3602, %v3919
  %v4244 = vsub.f32 %v3603, %v3922
  %v4245 = vsub.f32 %v3604, %v3925
  %v4246 = vsub.f32 %v3605, %v3928
  %v4247 = vsub.f32 %v3606, %v3931
  %v4248 = vsub.f32 %v3607, %v3934
  %v4249 = vsub.f32 %v3608, %v3937
  %v4250 = vsub.f32 %v3609, %v3940
  %v4251 = vsub.f32 %v3610, %v3943
  %v4252 = vsub.f32 %v3611, %v3946
  %v4253 = vsub.f32 %v3612, %v3949
  %v4254 = vsub.f32 %v3613, %v3952
  %v4255 = vsub.f32 %v3614, %v3955
  %v4256 = vsub.f32 %v3615, %v3958
  %v4257 = vsub.f32 %v3616, %v3961
  %v4258 = vsub.f32 %v3617, %v3964
  %v4259 = vsub.f32 %v3618, %v3967
  %v4260 = vsub.f32 %v3619, %v3970
  %v4261 = vsub.f32 %v3620, %v3973
  %v4262 = vsub.f32 %v3621, %v3976
  %v4263 = vsub.f32 %v3622, %v3979
  %v4264 = vsub.f32 %v3623, %v3982
  %v4265 = vsub.f32 %v3624, %v3985
  %v4266 = vsub.f32 %v3625, %v3988
  %v4267 = vsub.f32 %v3626, %v3991
  %v4268 = vsub.f32 %v3627, %v3994
  %v4269 = vsub.f32 %v3628, %v3997
  %v4270 = vsub.f32 %v3629, %v4000
  %v4271 = vsub.f32 %v3630, %v4003
  %v4272 = vsub.f32 %v3631, %v4006
  %v4273 = vsub.f32 %v3632, %v4009
  %v4274 = vsub.f32 %v3633, %v4012
  %v4275 = vsub.f32 %v3634, %v4015
  %v4276 = vsub.f32 %v3635, %v4018
  %v4277 = vsub.f32 %v3636, %v4021
  %v4278 = vsub.f32 %v3637, %v4024
  %v4279 = vsub.f32 %v3638, %v4027
  %v4280 = vsub.f32 %v3639, %v4030
  %v4281 = vsub.f32 %v3640, %v4033
  %v4282 = vsub.f32 %v3641, %v4036
  %v4283 = vsub.f32 %v3642, %v4039
  %v4284 = vsub.f32 %v3643, %v4042
  %v4285 = vsub.f32 %v3644, %v4045
  %v4286 = vsub.f32 %v3645, %v4048
  %v4287 = vsub.f32 %v3646, %v4051
  %v4288 = vsub.f32 %v3647, %v4054
  %v4289 = vsub.f32 %v3648, %v4057
  %v4290 = vsub.f32 %v3649, %v4060
  %v4291 = vsub.f32 %v3650, %v4063
  %v4292 = vsub.f32 %v3651, %v4066
  %v4293 = vsub.f32 %v3652, %v4069
  %v4294 = vsub.f32 %v3653, %v4072
  %v4295 = vsub.f32 %v3654, %v4075
  %v4296 = vsub.f32 %v3655, %v4078
  %v4297 = vsub.f32 %v3656, %v4081
  %v4298 = vsub.f32 %v3657, %v4084
  %v4299 = vsub.f32 %v3658, %v4087
  %v4300 = vsub.f32 %v3659, %v4090
  %v4301 = vsub.f32 %v3660, %v4093
  %v4302 = vsub.f32 %v3661, %v4096
  %v4303 = vsub.f32 %v3662, %v4099
  %v4304 = vsub.f32 %v3663, %v4102
  %v4305 = vsub.f32 %v3664, %v4105
  %v4306 = vsub.f32 %v3665, %v4108
  %v4307 = vsub.f32 %v3666, %v4111
  %v4308 = vsub.f32 %v3667, %v4114
  %v4309 = vsub.f32 %v3668, %v4117
  %v4310 = vsub.f32 %v3669, %v4120
  %v4311 = vsub.f32 %v3670, %v4123
  %v4312 = vsub.f32 %v3671, %v4126
  %v4313 = vsub.f32 %v3672, %v4129
  %v4314 = vsub.f32 %v3673, %v4132
  %v4315 = vsub.f32 %v3674, %v4135
  %v4316 = vsub.f32 %v3675, %v4138
  %v4317 = vsub.f32 %v3676, %v4141
  %v4318 = vsub.f32 %v3677, %v4144
  %v4319 = vsub.f32 %v3678, %v4147
  %v4320 = vsub.f32 %v3679, %v4150
  %v4321 = vsub.f32 %v3680, %v4153
  %v4322 = vsub.f32 %v3681, %v4156
  %v4323 = vsub.f32 %v3682, %v4159
  %v4324 = vsub.f32 %v3683, %v4162
  %v4325 = vsub.f32 %v3684, %v4165
  %v4326 = vmul.f32 %v4166, 1.442695
  %v4327 = vpow.pop %v4326
  %v4328 = vmul.f32 %v4167, 1.442695
  %v4329 = vpow.pop %v4328
  %v4330 = vmul.f32 %v4168, 1.442695
  %v4331 = vpow.pop %v4330
  %v4332 = vmul.f32 %v4169, 1.442695
  %v4333 = vpow.pop %v4332
  %v4334 = vmul.f32 %v4170, 1.442695
  %v4335 = vpow.pop %v4334
  %v4336 = vmul.f32 %v4171, 1.442695
  %v4337 = vpow.pop %v4336
  %v4338 = vmul.f32 %v4172, 1.442695
  %v4339 = vpow.pop %v4338
  %v4340 = vmul.f32 %v4173, 1.442695
  %v4341 = vpow.pop %v4340
  %v4342 = vmul.f32 %v4174, 1.442695
  %v4343 = vpow.pop %v4342
  %v4344 = vmul.f32 %v4175, 1.442695
  %v4345 = vpow.pop %v4344
  %v4346 = vmul.f32 %v4176, 1.442695
  %v4347 = vpow.pop %v4346
  %v4348 = vmul.f32 %v4177, 1.442695
  %v4349 = vpow.pop %v4348
  %v4350 = vmul.f32 %v4178, 1.442695
  %v4351 = vpow.pop %v4350
  %v4352 = vmul.f32 %v4179, 1.442695
  %v4353 = vpow.pop %v4352
  %v4354 = vmul.f32 %v4180, 1.442695
  %v4355 = vpow.pop %v4354
  %v4356 = vmul.f32 %v4181, 1.442695
  %v4357 = vpow.pop %v4356
  %v4358 = vmul.f32 %v4182, 1.442695
  %v4359 = vpow.pop %v4358
  %v4360 = vmul.f32 %v4183, 1.442695
  %v4361 = vpow.pop %v4360
  %v4362 = vmul.f32 %v4184, 1.442695
  %v4363 = vpow.pop %v4362
  %v4364 = vmul.f32 %v4185, 1.442695
  %v4365 = vpow.pop %v4364
  %v4366 = vmul.f32 %v4186, 1.442695
  %v4367 = vpow.pop %v4366
  %v4368 = vmul.f32 %v4187, 1.442695
  %v4369 = vpow.pop %v4368
  %v4370 = vmul.f32 %v4188, 1.442695
  %v4371 = vpow.pop %v4370
  %v4372 = vmul.f32 %v4189, 1.442695
  %v4373 = vpow.pop %v4372
  %v4374 = vmul.f32 %v4190, 1.442695
  %v4375 = vpow.pop %v4374
  %v4376 = vmul.f32 %v4191, 1.442695
  %v4377 = vpow.pop %v4376
  %v4378 = vmul.f32 %v4192, 1.442695
  %v4379 = vpow.pop %v4378
  %v4380 = vmul.f32 %v4193, 1.442695
  %v4381 = vpow.pop %v4380
  %v4382 = vmul.f32 %v4194, 1.442695
  %v4383 = vpow.pop %v4382
  %v4384 = vmul.f32 %v4195, 1.442695
  %v4385 = vpow.pop %v4384
  %v4386 = vmul.f32 %v4196, 1.442695
  %v4387 = vpow.pop %v4386
  %v4388 = vmul.f32 %v4197, 1.442695
  %v4389 = vpow.pop %v4388
  %v4390 = vmul.f32 %v4198, 1.442695
  %v4391 = vpow.pop %v4390
  %v4392 = vmul.f32 %v4199, 1.442695
  %v4393 = vpow.pop %v4392
  %v4394 = vmul.f32 %v4200, 1.442695
  %v4395 = vpow.pop %v4394
  %v4396 = vmul.f32 %v4201, 1.442695
  %v4397 = vpow.pop %v4396
  %v4398 = vmul.f32 %v4202, 1.442695
  %v4399 = vpow.pop %v4398
  %v4400 = vmul.f32 %v4203, 1.442695
  %v4401 = vpow.pop %v4400
  %v4402 = vmul.f32 %v4204, 1.442695
  %v4403 = vpow.pop %v4402
  %v4404 = vmul.f32 %v4205, 1.442695
  %v4405 = vpow.pop %v4404
  %v4406 = vmul.f32 %v4206, 1.442695
  %v4407 = vpow.pop %v4406
  %v4408 = vmul.f32 %v4207, 1.442695
  %v4409 = vpow.pop %v4408
  %v4410 = vmul.f32 %v4208, 1.442695
  %v4411 = vpow.pop %v4410
  %v4412 = vmul.f32 %v4209, 1.442695
  %v4413 = vpow.pop %v4412
  %v4414 = vmul.f32 %v4210, 1.442695
  %v4415 = vpow.pop %v4414
  %v4416 = vmul.f32 %v4211, 1.442695
  %v4417 = vpow.pop %v4416
  %v4418 = vmul.f32 %v4212, 1.442695
  %v4419 = vpow.pop %v4418
  %v4420 = vmul.f32 %v4213, 1.442695
  %v4421 = vpow.pop %v4420
  %v4422 = vmul.f32 %v4214, 1.442695
  %v4423 = vpow.pop %v4422
  %v4424 = vmul.f32 %v4215, 1.442695
  %v4425 = vpow.pop %v4424
  %v4426 = vmul.f32 %v4216, 1.442695
  %v4427 = vpow.pop %v4426
  %v4428 = vmul.f32 %v4217, 1.442695
  %v4429 = vpow.pop %v4428
  %v4430 = vmul.f32 %v4218, 1.442695
  %v4431 = vpow.pop %v4430
  %v4432 = vmul.f32 %v4219, 1.442695
  %v4433 = vpow.pop %v4432
  %v4434 = vmul.f32 %v4220, 1.442695
  %v4435 = vpow.pop %v4434
  %v4436 = vmul.f32 %v4221, 1.442695
  %v4437 = vpow.pop %v4436
  %v4438 = vmul.f32 %v4222, 1.442695
  %v4439 = vpow.pop %v4438
  %v4440 = vmul.f32 %v4223, 1.442695
  %v4441 = vpow.pop %v4440
  %v4442 = vmul.f32 %v4224, 1.442695
  %v4443 = vpow.pop %v4442
  %v4444 = vmul.f32 %v4225, 1.442695
  %v4445 = vpow.pop %v4444
  %v4446 = vmul.f32 %v4226, 1.442695
  %v4447 = vpow.pop %v4446
  %v4448 = vmul.f32 %v4227, 1.442695
  %v4449 = vpow.pop %v4448
  %v4450 = vmul.f32 %v4228, 1.442695
  %v4451 = vpow.pop %v4450
  %v4452 = vmul.f32 %v4229, 1.442695
  %v4453 = vpow.pop %v4452
  %v4454 = vmul.f32 %v4230, 1.442695
  %v4455 = vpow.pop %v4454
  %v4456 = vmul.f32 %v4231, 1.442695
  %v4457 = vpow.pop %v4456
  %v4458 = vmul.f32 %v4232, 1.442695
  %v4459 = vpow.pop %v4458
  %v4460 = vmul.f32 %v4233, 1.442695
  %v4461 = vpow.pop %v4460
  %v4462 = vmul.f32 %v4234, 1.442695
  %v4463 = vpow.pop %v4462
  %v4464 = vmul.f32 %v4235, 1.442695
  %v4465 = vpow.pop %v4464
  %v4466 = vmul.f32 %v4236, 1.442695
  %v4467 = vpow.pop %v4466
  %v4468 = vmul.f32 %v4237, 1.442695
  %v4469 = vpow.pop %v4468
  %v4470 = vmul.f32 %v4238, 1.442695
  %v4471 = vpow.pop %v4470
  %v4472 = vmul.f32 %v4239, 1.442695
  %v4473 = vpow.pop %v4472
  %v4474 = vmul.f32 %v4240, 1.442695
  %v4475 = vpow.pop %v4474
  %v4476 = vmul.f32 %v4241, 1.442695
  %v4477 = vpow.pop %v4476
  %v4478 = vmul.f32 %v4242, 1.442695
  %v4479 = vpow.pop %v4478
  %v4480 = vmul.f32 %v4243, 1.442695
  %v4481 = vpow.pop %v4480
  %v4482 = vmul.f32 %v4244, 1.442695
  %v4483 = vpow.pop %v4482
  %v4484 = vmul.f32 %v4245, 1.442695
  %v4485 = vpow.pop %v4484
  %v4486 = vmul.f32 %v4246, 1.442695
  %v4487 = vpow.pop %v4486
  %v4488 = vmul.f32 %v4247, 1.442695
  %v4489 = vpow.pop %v4488
  %v4490 = vmul.f32 %v4248, 1.442695
  %v4491 = vpow.pop %v4490
  %v4492 = vmul.f32 %v4249, 1.442695
  %v4493 = vpow.pop %v4492
  %v4494 = vmul.f32 %v4250, 1.442695
  %v4495 = vpow.pop %v4494
  %v4496 = vmul.f32 %v4251, 1.442695
  %v4497 = vpow.pop %v4496
  %v4498 = vmul.f32 %v4252, 1.442695
  %v4499 = vpow.pop %v4498
  %v4500 = vmul.f32 %v4253, 1.442695
  %v4501 = vpow.pop %v4500
  %v4502 = vmul.f32 %v4254, 1.442695
  %v4503 = vpow.pop %v4502
  %v4504 = vmul.f32 %v4255, 1.442695
  %v4505 = vpow.pop %v4504
  %v4506 = vmul.f32 %v4256, 1.442695
  %v4507 = vpow.pop %v4506
  %v4508 = vmul.f32 %v4257, 1.442695
  %v4509 = vpow.pop %v4508
  %v4510 = vmul.f32 %v4258, 1.442695
  %v4511 = vpow.pop %v4510
  %v4512 = vmul.f32 %v4259, 1.442695
  %v4513 = vpow.pop %v4512
  %v4514 = vmul.f32 %v4260, 1.442695
  %v4515 = vpow.pop %v4514
  %v4516 = vmul.f32 %v4261, 1.442695
  %v4517 = vpow.pop %v4516
  %v4518 = vmul.f32 %v4262, 1.442695
  %v4519 = vpow.pop %v4518
  %v4520 = vmul.f32 %v4263, 1.442695
  %v4521 = vpow.pop %v4520
  %v4522 = vmul.f32 %v4264, 1.442695
  %v4523 = vpow.pop %v4522
  %v4524 = vmul.f32 %v4265, 1.442695
  %v4525 = vpow.pop %v4524
  %v4526 = vmul.f32 %v4266, 1.442695
  %v4527 = vpow.pop %v4526
  %v4528 = vmul.f32 %v4267, 1.442695
  %v4529 = vpow.pop %v4528
  %v4530 = vmul.f32 %v4268, 1.442695
  %v4531 = vpow.pop %v4530
  %v4532 = vmul.f32 %v4269, 1.442695
  %v4533 = vpow.pop %v4532
  %v4534 = vmul.f32 %v4270, 1.442695
  %v4535 = vpow.pop %v4534
  %v4536 = vmul.f32 %v4271, 1.442695
  %v4537 = vpow.pop %v4536
  %v4538 = vmul.f32 %v4272, 1.442695
  %v4539 = vpow.pop %v4538
  %v4540 = vmul.f32 %v4273, 1.442695
  %v4541 = vpow.pop %v4540
  %v4542 = vmul.f32 %v4274, 1.442695
  %v4543 = vpow.pop %v4542
  %v4544 = vmul.f32 %v4275, 1.442695
  %v4545 = vpow.pop %v4544
  %v4546 = vmul.f32 %v4276, 1.442695
  %v4547 = vpow.pop %v4546
  %v4548 = vmul.f32 %v4277, 1.442695
  %v4549 = vpow.pop %v4548
  %v4550 = vmul.f32 %v4278, 1.442695
  %v4551 = vpow.pop %v4550
  %v4552 = vmul.f32 %v4279, 1.442695
  %v4553 = vpow.pop %v4552
  %v4554 = vmul.f32 %v4280, 1.442695
  %v4555 = vpow.pop %v4554
  %v4556 = vmul.f32 %v4281, 1.442695
  %v4557 = vpow.pop %v4556
  %v4558 = vmul.f32 %v4282, 1.442695
  %v4559 = vpow.pop %v4558
  %v4560 = vmul.f32 %v4283, 1.442695
  %v4561 = vpow.pop %v4560
  %v4562 = vmul.f32 %v4284, 1.442695
  %v4563 = vpow.pop %v4562
  %v4564 = vmul.f32 %v4285, 1.442695
  %v4565 = vpow.pop %v4564
  %v4566 = vmul.f32 %v4286, 1.442695
  %v4567 = vpow.pop %v4566
  %v4568 = vmul.f32 %v4287, 1.442695
  %v4569 = vpow.pop %v4568
  %v4570 = vmul.f32 %v4288, 1.442695
  %v4571 = vpow.pop %v4570
  %v4572 = vmul.f32 %v4289, 1.442695
  %v4573 = vpow.pop %v4572
  %v4574 = vmul.f32 %v4290, 1.442695
  %v4575 = vpow.pop %v4574
  %v4576 = vmul.f32 %v4291, 1.442695
  %v4577 = vpow.pop %v4576
  %v4578 = vmul.f32 %v4292, 1.442695
  %v4579 = vpow.pop %v4578
  %v4580 = vmul.f32 %v4293, 1.442695
  %v4581 = vpow.pop %v4580
  %v4582 = vmul.f32 %v4294, 1.442695
  %v4583 = vpow.pop %v4582
  %v4584 = vmul.f32 %v4295, 1.442695
  %v4585 = vpow.pop %v4584
  %v4586 = vmul.f32 %v4296, 1.442695
  %v4587 = vpow.pop %v4586
  %v4588 = vmul.f32 %v4297, 1.442695
  %v4589 = vpow.pop %v4588
  %v4590 = vmul.f32 %v4298, 1.442695
  %v4591 = vpow.pop %v4590
  %v4592 = vmul.f32 %v4299, 1.442695
  %v4593 = vpow.pop %v4592
  %v4594 = vmul.f32 %v4300, 1.442695
  %v4595 = vpow.pop %v4594
  %v4596 = vmul.f32 %v4301, 1.442695
  %v4597 = vpow.pop %v4596
  %v4598 = vmul.f32 %v4302, 1.442695
  %v4599 = vpow.pop %v4598
  %v4600 = vmul.f32 %v4303, 1.442695
  %v4601 = vpow.pop %v4600
  %v4602 = vmul.f32 %v4304, 1.442695
  %v4603 = vpow.pop %v4602
  %v4604 = vmul.f32 %v4305, 1.442695
  %v4605 = vpow.pop %v4604
  %v4606 = vmul.f32 %v4306, 1.442695
  %v4607 = vpow.pop %v4606
  %v4608 = vmul.f32 %v4307, 1.442695
  %v4609 = vpow.pop %v4608
  %v4610 = vmul.f32 %v4308, 1.442695
  %v4611 = vpow.pop %v4610
  %v4612 = vmul.f32 %v4309, 1.442695
  %v4613 = vpow.pop %v4612
  %v4614 = vmul.f32 %v4310, 1.442695
  %v4615 = vpow.pop %v4614
  %v4616 = vmul.f32 %v4311, 1.442695
  %v4617 = vpow.pop %v4616
  %v4618 = vmul.f32 %v4312, 1.442695
  %v4619 = vpow.pop %v4618
  %v4620 = vmul.f32 %v4313, 1.442695
  %v4621 = vpow.pop %v4620
  %v4622 = vmul.f32 %v4314, 1.442695
  %v4623 = vpow.pop %v4622
  %v4624 = vmul.f32 %v4315, 1.442695
  %v4625 = vpow.pop %v4624
  %v4626 = vmul.f32 %v4316, 1.442695
  %v4627 = vpow.pop %v4626
  %v4628 = vmul.f32 %v4317, 1.442695
  %v4629 = vpow.pop %v4628
  %v4630 = vmul.f32 %v4318, 1.442695
  %v4631 = vpow.pop %v4630
  %v4632 = vmul.f32 %v4319, 1.442695
  %v4633 = vpow.pop %v4632
  %v4634 = vmul.f32 %v4320, 1.442695
  %v4635 = vpow.pop %v4634
  %v4636 = vmul.f32 %v4321, 1.442695
  %v4637 = vpow.pop %v4636
  %v4638 = vmul.f32 %v4322, 1.442695
  %v4639 = vpow.pop %v4638
  %v4640 = vmul.f32 %v4323, 1.442695
  %v4641 = vpow.pop %v4640
  %v4642 = vmul.f32 %v4324, 1.442695
  %v4643 = vpow.pop %v4642
  %v4644 = vmul.f32 %v4325, 1.442695
  %v4645 = vpow.pop %v4644
  %v4646 = vsel %vm3685, %v4327, 0.0
  %4647 = vadd.xlane.f32.xlu0 %v4646
  %v4648 = vpop.xlane.xlu0 %4647
  %v4649 = vsel %vm3685, %v4329, 0.0
  %4650 = vadd.xlane.f32.xlu0 %v4649
  %v4651 = vpop.xlane.xlu0 %4650
  %v4652 = vsel %vm3685, %v4331, 0.0
  %4653 = vadd.xlane.f32.xlu0 %v4652
  %v4654 = vpop.xlane.xlu0 %4653
  %v4655 = vsel %vm3685, %v4333, 0.0
  %4656 = vadd.xlane.f32.xlu0 %v4655
  %v4657 = vpop.xlane.xlu0 %4656
  %v4658 = vsel %vm3685, %v4335, 0.0
  %4659 = vadd.xlane.f32.xlu0 %v4658
  %v4660 = vpop.xlane.xlu0 %4659
  %v4661 = vsel %vm3685, %v4337, 0.0
  %4662 = vadd.xlane.f32.xlu0 %v4661
  %v4663 = vpop.xlane.xlu0 %4662
  %v4664 = vsel %vm3685, %v4339, 0.0
  %4665 = vadd.xlane.f32.xlu0 %v4664
  %v4666 = vpop.xlane.xlu0 %4665
  %v4667 = vsel %vm3685, %v4341, 0.0
  %4668 = vadd.xlane.f32.xlu0 %v4667
  %v4669 = vpop.xlane.xlu0 %4668
  %v4670 = vsel %vm3685, %v4343, 0.0
  %4671 = vadd.xlane.f32.xlu0 %v4670
  %v4672 = vpop.xlane.xlu0 %4671
  %v4673 = vsel %vm3685, %v4345, 0.0
  %4674 = vadd.xlane.f32.xlu0 %v4673
  %v4675 = vpop.xlane.xlu0 %4674
  %v4676 = vsel %vm3685, %v4347, 0.0
  %4677 = vadd.xlane.f32.xlu0 %v4676
  %v4678 = vpop.xlane.xlu0 %4677
  %v4679 = vsel %vm3685, %v4349, 0.0
  %4680 = vadd.xlane.f32.xlu0 %v4679
  %v4681 = vpop.xlane.xlu0 %4680
  %v4682 = vsel %vm3685, %v4351, 0.0
  %4683 = vadd.xlane.f32.xlu0 %v4682
  %v4684 = vpop.xlane.xlu0 %4683
  %v4685 = vsel %vm3685, %v4353, 0.0
  %4686 = vadd.xlane.f32.xlu0 %v4685
  %v4687 = vpop.xlane.xlu0 %4686
  %v4688 = vsel %vm3685, %v4355, 0.0
  %4689 = vadd.xlane.f32.xlu0 %v4688
  %v4690 = vpop.xlane.xlu0 %4689
  %v4691 = vsel %vm3685, %v4357, 0.0
  %4692 = vadd.xlane.f32.xlu0 %v4691
  %v4693 = vpop.xlane.xlu0 %4692
  %v4694 = vsel %vm3685, %v4359, 0.0
  %4695 = vadd.xlane.f32.xlu0 %v4694
  %v4696 = vpop.xlane.xlu0 %4695
  %v4697 = vsel %vm3685, %v4361, 0.0
  %4698 = vadd.xlane.f32.xlu0 %v4697
  %v4699 = vpop.xlane.xlu0 %4698
  %v4700 = vsel %vm3685, %v4363, 0.0
  %4701 = vadd.xlane.f32.xlu0 %v4700
  %v4702 = vpop.xlane.xlu0 %4701
  %v4703 = vsel %vm3685, %v4365, 0.0
  %4704 = vadd.xlane.f32.xlu0 %v4703
  %v4705 = vpop.xlane.xlu0 %4704
  %v4706 = vsel %vm3685, %v4367, 0.0
  %4707 = vadd.xlane.f32.xlu0 %v4706
  %v4708 = vpop.xlane.xlu0 %4707
  %v4709 = vsel %vm3685, %v4369, 0.0
  %4710 = vadd.xlane.f32.xlu0 %v4709
  %v4711 = vpop.xlane.xlu0 %4710
  %v4712 = vsel %vm3685, %v4371, 0.0
  %4713 = vadd.xlane.f32.xlu0 %v4712
  %v4714 = vpop.xlane.xlu0 %4713
  %v4715 = vsel %vm3685, %v4373, 0.0
  %4716 = vadd.xlane.f32.xlu0 %v4715
  %v4717 = vpop.xlane.xlu0 %4716
  %v4718 = vsel %vm3685, %v4375, 0.0
  %4719 = vadd.xlane.f32.xlu0 %v4718
  %v4720 = vpop.xlane.xlu0 %4719
  %v4721 = vsel %vm3685, %v4377, 0.0
  %4722 = vadd.xlane.f32.xlu0 %v4721
  %v4723 = vpop.xlane.xlu0 %4722
  %v4724 = vsel %vm3685, %v4379, 0.0
  %4725 = vadd.xlane.f32.xlu0 %v4724
  %v4726 = vpop.xlane.xlu0 %4725
  %v4727 = vsel %vm3685, %v4381, 0.0
  %4728 = vadd.xlane.f32.xlu0 %v4727
  %v4729 = vpop.xlane.xlu0 %4728
  %v4730 = vsel %vm3685, %v4383, 0.0
  %4731 = vadd.xlane.f32.xlu0 %v4730
  %v4732 = vpop.xlane.xlu0 %4731
  %v4733 = vsel %vm3685, %v4385, 0.0
  %4734 = vadd.xlane.f32.xlu0 %v4733
  %v4735 = vpop.xlane.xlu0 %4734
  %v4736 = vsel %vm3685, %v4387, 0.0
  %4737 = vadd.xlane.f32.xlu0 %v4736
  %v4738 = vpop.xlane.xlu0 %4737
  %v4739 = vsel %vm3685, %v4389, 0.0
  %4740 = vadd.xlane.f32.xlu0 %v4739
  %v4741 = vpop.xlane.xlu0 %4740
  %v4742 = vsel %vm3685, %v4391, 0.0
  %4743 = vadd.xlane.f32.xlu0 %v4742
  %v4744 = vpop.xlane.xlu0 %4743
  %v4745 = vsel %vm3685, %v4393, 0.0
  %4746 = vadd.xlane.f32.xlu0 %v4745
  %v4747 = vpop.xlane.xlu0 %4746
  %v4748 = vsel %vm3685, %v4395, 0.0
  %4749 = vadd.xlane.f32.xlu0 %v4748
  %v4750 = vpop.xlane.xlu0 %4749
  %v4751 = vsel %vm3685, %v4397, 0.0
  %4752 = vadd.xlane.f32.xlu0 %v4751
  %v4753 = vpop.xlane.xlu0 %4752
  %v4754 = vsel %vm3685, %v4399, 0.0
  %4755 = vadd.xlane.f32.xlu0 %v4754
  %v4756 = vpop.xlane.xlu0 %4755
  %v4757 = vsel %vm3685, %v4401, 0.0
  %4758 = vadd.xlane.f32.xlu0 %v4757
  %v4759 = vpop.xlane.xlu0 %4758
  %v4760 = vsel %vm3685, %v4403, 0.0
  %4761 = vadd.xlane.f32.xlu0 %v4760
  %v4762 = vpop.xlane.xlu0 %4761
  %v4763 = vsel %vm3685, %v4405, 0.0
  %4764 = vadd.xlane.f32.xlu0 %v4763
  %v4765 = vpop.xlane.xlu0 %4764
  %v4766 = vsel %vm3685, %v4407, 0.0
  %4767 = vadd.xlane.f32.xlu0 %v4766
  %v4768 = vpop.xlane.xlu0 %4767
  %v4769 = vsel %vm3685, %v4409, 0.0
  %4770 = vadd.xlane.f32.xlu0 %v4769
  %v4771 = vpop.xlane.xlu0 %4770
  %v4772 = vsel %vm3685, %v4411, 0.0
  %4773 = vadd.xlane.f32.xlu0 %v4772
  %v4774 = vpop.xlane.xlu0 %4773
  %v4775 = vsel %vm3685, %v4413, 0.0
  %4776 = vadd.xlane.f32.xlu0 %v4775
  %v4777 = vpop.xlane.xlu0 %4776
  %v4778 = vsel %vm3685, %v4415, 0.0
  %4779 = vadd.xlane.f32.xlu0 %v4778
  %v4780 = vpop.xlane.xlu0 %4779
  %v4781 = vsel %vm3685, %v4417, 0.0
  %4782 = vadd.xlane.f32.xlu0 %v4781
  %v4783 = vpop.xlane.xlu0 %4782
  %v4784 = vsel %vm3685, %v4419, 0.0
  %4785 = vadd.xlane.f32.xlu0 %v4784
  %v4786 = vpop.xlane.xlu0 %4785
  %v4787 = vsel %vm3685, %v4421, 0.0
  %4788 = vadd.xlane.f32.xlu0 %v4787
  %v4789 = vpop.xlane.xlu0 %4788
  %v4790 = vsel %vm3685, %v4423, 0.0
  %4791 = vadd.xlane.f32.xlu0 %v4790
  %v4792 = vpop.xlane.xlu0 %4791
  %v4793 = vsel %vm3685, %v4425, 0.0
  %4794 = vadd.xlane.f32.xlu0 %v4793
  %v4795 = vpop.xlane.xlu0 %4794
  %v4796 = vsel %vm3685, %v4427, 0.0
  %4797 = vadd.xlane.f32.xlu0 %v4796
  %v4798 = vpop.xlane.xlu0 %4797
  %v4799 = vsel %vm3685, %v4429, 0.0
  %4800 = vadd.xlane.f32.xlu0 %v4799
  %v4801 = vpop.xlane.xlu0 %4800
  %v4802 = vsel %vm3685, %v4431, 0.0
  %4803 = vadd.xlane.f32.xlu0 %v4802
  %v4804 = vpop.xlane.xlu0 %4803
  %v4805 = vsel %vm3685, %v4433, 0.0
  %4806 = vadd.xlane.f32.xlu0 %v4805
  %v4807 = vpop.xlane.xlu0 %4806
  %v4808 = vsel %vm3685, %v4435, 0.0
  %4809 = vadd.xlane.f32.xlu0 %v4808
  %v4810 = vpop.xlane.xlu0 %4809
  %v4811 = vsel %vm3685, %v4437, 0.0
  %4812 = vadd.xlane.f32.xlu0 %v4811
  %v4813 = vpop.xlane.xlu0 %4812
  %v4814 = vsel %vm3685, %v4439, 0.0
  %4815 = vadd.xlane.f32.xlu0 %v4814
  %v4816 = vpop.xlane.xlu0 %4815
  %v4817 = vsel %vm3685, %v4441, 0.0
  %4818 = vadd.xlane.f32.xlu0 %v4817
  %v4819 = vpop.xlane.xlu0 %4818
  %v4820 = vsel %vm3685, %v4443, 0.0
  %4821 = vadd.xlane.f32.xlu0 %v4820
  %v4822 = vpop.xlane.xlu0 %4821
  %v4823 = vsel %vm3685, %v4445, 0.0
  %4824 = vadd.xlane.f32.xlu0 %v4823
  %v4825 = vpop.xlane.xlu0 %4824
  %v4826 = vsel %vm3685, %v4447, 0.0
  %4827 = vadd.xlane.f32.xlu0 %v4826
  %v4828 = vpop.xlane.xlu0 %4827
  %v4829 = vsel %vm3685, %v4449, 0.0
  %4830 = vadd.xlane.f32.xlu0 %v4829
  %v4831 = vpop.xlane.xlu0 %4830
  %v4832 = vsel %vm3685, %v4451, 0.0
  %4833 = vadd.xlane.f32.xlu0 %v4832
  %v4834 = vpop.xlane.xlu0 %4833
  %v4835 = vsel %vm3685, %v4453, 0.0
  %4836 = vadd.xlane.f32.xlu0 %v4835
  %v4837 = vpop.xlane.xlu0 %4836
  %v4838 = vsel %vm3685, %v4455, 0.0
  %4839 = vadd.xlane.f32.xlu0 %v4838
  %v4840 = vpop.xlane.xlu0 %4839
  %v4841 = vsel %vm3685, %v4457, 0.0
  %4842 = vadd.xlane.f32.xlu0 %v4841
  %v4843 = vpop.xlane.xlu0 %4842
  %v4844 = vsel %vm3685, %v4459, 0.0
  %4845 = vadd.xlane.f32.xlu0 %v4844
  %v4846 = vpop.xlane.xlu0 %4845
  %v4847 = vsel %vm3685, %v4461, 0.0
  %4848 = vadd.xlane.f32.xlu0 %v4847
  %v4849 = vpop.xlane.xlu0 %4848
  %v4850 = vsel %vm3685, %v4463, 0.0
  %4851 = vadd.xlane.f32.xlu0 %v4850
  %v4852 = vpop.xlane.xlu0 %4851
  %v4853 = vsel %vm3685, %v4465, 0.0
  %4854 = vadd.xlane.f32.xlu0 %v4853
  %v4855 = vpop.xlane.xlu0 %4854
  %v4856 = vsel %vm3685, %v4467, 0.0
  %4857 = vadd.xlane.f32.xlu0 %v4856
  %v4858 = vpop.xlane.xlu0 %4857
  %v4859 = vsel %vm3685, %v4469, 0.0
  %4860 = vadd.xlane.f32.xlu0 %v4859
  %v4861 = vpop.xlane.xlu0 %4860
  %v4862 = vsel %vm3685, %v4471, 0.0
  %4863 = vadd.xlane.f32.xlu0 %v4862
  %v4864 = vpop.xlane.xlu0 %4863
  %v4865 = vsel %vm3685, %v4473, 0.0
  %4866 = vadd.xlane.f32.xlu0 %v4865
  %v4867 = vpop.xlane.xlu0 %4866
  %v4868 = vsel %vm3685, %v4475, 0.0
  %4869 = vadd.xlane.f32.xlu0 %v4868
  %v4870 = vpop.xlane.xlu0 %4869
  %v4871 = vsel %vm3685, %v4477, 0.0
  %4872 = vadd.xlane.f32.xlu0 %v4871
  %v4873 = vpop.xlane.xlu0 %4872
  %v4874 = vsel %vm3685, %v4479, 0.0
  %4875 = vadd.xlane.f32.xlu0 %v4874
  %v4876 = vpop.xlane.xlu0 %4875
  %v4877 = vsel %vm3685, %v4481, 0.0
  %4878 = vadd.xlane.f32.xlu0 %v4877
  %v4879 = vpop.xlane.xlu0 %4878
  %v4880 = vsel %vm3685, %v4483, 0.0
  %4881 = vadd.xlane.f32.xlu0 %v4880
  %v4882 = vpop.xlane.xlu0 %4881
  %v4883 = vsel %vm3685, %v4485, 0.0
  %4884 = vadd.xlane.f32.xlu0 %v4883
  %v4885 = vpop.xlane.xlu0 %4884
  %v4886 = vsel %vm3685, %v4487, 0.0
  %4887 = vadd.xlane.f32.xlu0 %v4886
  %v4888 = vpop.xlane.xlu0 %4887
  %v4889 = vsel %vm3685, %v4489, 0.0
  %4890 = vadd.xlane.f32.xlu0 %v4889
  %v4891 = vpop.xlane.xlu0 %4890
  %v4892 = vsel %vm3685, %v4491, 0.0
  %4893 = vadd.xlane.f32.xlu0 %v4892
  %v4894 = vpop.xlane.xlu0 %4893
  %v4895 = vsel %vm3685, %v4493, 0.0
  %4896 = vadd.xlane.f32.xlu0 %v4895
  %v4897 = vpop.xlane.xlu0 %4896
  %v4898 = vsel %vm3685, %v4495, 0.0
  %4899 = vadd.xlane.f32.xlu0 %v4898
  %v4900 = vpop.xlane.xlu0 %4899
  %v4901 = vsel %vm3685, %v4497, 0.0
  %4902 = vadd.xlane.f32.xlu0 %v4901
  %v4903 = vpop.xlane.xlu0 %4902
  %v4904 = vsel %vm3685, %v4499, 0.0
  %4905 = vadd.xlane.f32.xlu0 %v4904
  %v4906 = vpop.xlane.xlu0 %4905
  %v4907 = vsel %vm3685, %v4501, 0.0
  %4908 = vadd.xlane.f32.xlu0 %v4907
  %v4909 = vpop.xlane.xlu0 %4908
  %v4910 = vsel %vm3685, %v4503, 0.0
  %4911 = vadd.xlane.f32.xlu0 %v4910
  %v4912 = vpop.xlane.xlu0 %4911
  %v4913 = vsel %vm3685, %v4505, 0.0
  %4914 = vadd.xlane.f32.xlu0 %v4913
  %v4915 = vpop.xlane.xlu0 %4914
  %v4916 = vsel %vm3685, %v4507, 0.0
  %4917 = vadd.xlane.f32.xlu0 %v4916
  %v4918 = vpop.xlane.xlu0 %4917
  %v4919 = vsel %vm3685, %v4509, 0.0
  %4920 = vadd.xlane.f32.xlu0 %v4919
  %v4921 = vpop.xlane.xlu0 %4920
  %v4922 = vsel %vm3685, %v4511, 0.0
  %4923 = vadd.xlane.f32.xlu0 %v4922
  %v4924 = vpop.xlane.xlu0 %4923
  %v4925 = vsel %vm3685, %v4513, 0.0
  %4926 = vadd.xlane.f32.xlu0 %v4925
  %v4927 = vpop.xlane.xlu0 %4926
  %v4928 = vsel %vm3685, %v4515, 0.0
  %4929 = vadd.xlane.f32.xlu0 %v4928
  %v4930 = vpop.xlane.xlu0 %4929
  %v4931 = vsel %vm3685, %v4517, 0.0
  %4932 = vadd.xlane.f32.xlu0 %v4931
  %v4933 = vpop.xlane.xlu0 %4932
  %v4934 = vsel %vm3685, %v4519, 0.0
  %4935 = vadd.xlane.f32.xlu0 %v4934
  %v4936 = vpop.xlane.xlu0 %4935
  %v4937 = vsel %vm3685, %v4521, 0.0
  %4938 = vadd.xlane.f32.xlu0 %v4937
  %v4939 = vpop.xlane.xlu0 %4938
  %v4940 = vsel %vm3685, %v4523, 0.0
  %4941 = vadd.xlane.f32.xlu0 %v4940
  %v4942 = vpop.xlane.xlu0 %4941
  %v4943 = vsel %vm3685, %v4525, 0.0
  %4944 = vadd.xlane.f32.xlu0 %v4943
  %v4945 = vpop.xlane.xlu0 %4944
  %v4946 = vsel %vm3685, %v4527, 0.0
  %4947 = vadd.xlane.f32.xlu0 %v4946
  %v4948 = vpop.xlane.xlu0 %4947
  %v4949 = vsel %vm3685, %v4529, 0.0
  %4950 = vadd.xlane.f32.xlu0 %v4949
  %v4951 = vpop.xlane.xlu0 %4950
  %v4952 = vsel %vm3685, %v4531, 0.0
  %4953 = vadd.xlane.f32.xlu0 %v4952
  %v4954 = vpop.xlane.xlu0 %4953
  %v4955 = vsel %vm3685, %v4533, 0.0
  %4956 = vadd.xlane.f32.xlu0 %v4955
  %v4957 = vpop.xlane.xlu0 %4956
  %v4958 = vsel %vm3685, %v4535, 0.0
  %4959 = vadd.xlane.f32.xlu0 %v4958
  %v4960 = vpop.xlane.xlu0 %4959
  %v4961 = vsel %vm3685, %v4537, 0.0
  %4962 = vadd.xlane.f32.xlu0 %v4961
  %v4963 = vpop.xlane.xlu0 %4962
  %v4964 = vsel %vm3685, %v4539, 0.0
  %4965 = vadd.xlane.f32.xlu0 %v4964
  %v4966 = vpop.xlane.xlu0 %4965
  %v4967 = vsel %vm3685, %v4541, 0.0
  %4968 = vadd.xlane.f32.xlu0 %v4967
  %v4969 = vpop.xlane.xlu0 %4968
  %v4970 = vsel %vm3685, %v4543, 0.0
  %4971 = vadd.xlane.f32.xlu0 %v4970
  %v4972 = vpop.xlane.xlu0 %4971
  %v4973 = vsel %vm3685, %v4545, 0.0
  %4974 = vadd.xlane.f32.xlu0 %v4973
  %v4975 = vpop.xlane.xlu0 %4974
  %v4976 = vsel %vm3685, %v4547, 0.0
  %4977 = vadd.xlane.f32.xlu0 %v4976
  %v4978 = vpop.xlane.xlu0 %4977
  %v4979 = vsel %vm3685, %v4549, 0.0
  %4980 = vadd.xlane.f32.xlu0 %v4979
  %v4981 = vpop.xlane.xlu0 %4980
  %v4982 = vsel %vm3685, %v4551, 0.0
  %4983 = vadd.xlane.f32.xlu0 %v4982
  %v4984 = vpop.xlane.xlu0 %4983
  %v4985 = vsel %vm3685, %v4553, 0.0
  %4986 = vadd.xlane.f32.xlu0 %v4985
  %v4987 = vpop.xlane.xlu0 %4986
  %v4988 = vsel %vm3685, %v4555, 0.0
  %4989 = vadd.xlane.f32.xlu0 %v4988
  %v4990 = vpop.xlane.xlu0 %4989
  %v4991 = vsel %vm3685, %v4557, 0.0
  %4992 = vadd.xlane.f32.xlu0 %v4991
  %v4993 = vpop.xlane.xlu0 %4992
  %v4994 = vsel %vm3685, %v4559, 0.0
  %4995 = vadd.xlane.f32.xlu0 %v4994
  %v4996 = vpop.xlane.xlu0 %4995
  %v4997 = vsel %vm3685, %v4561, 0.0
  %4998 = vadd.xlane.f32.xlu0 %v4997
  %v4999 = vpop.xlane.xlu0 %4998
  %v5000 = vsel %vm3685, %v4563, 0.0
  %5001 = vadd.xlane.f32.xlu0 %v5000
  %v5002 = vpop.xlane.xlu0 %5001
  %v5003 = vsel %vm3685, %v4565, 0.0
  %5004 = vadd.xlane.f32.xlu0 %v5003
  %v5005 = vpop.xlane.xlu0 %5004
  %v5006 = vsel %vm3685, %v4567, 0.0
  %5007 = vadd.xlane.f32.xlu0 %v5006
  %v5008 = vpop.xlane.xlu0 %5007
  %v5009 = vsel %vm3685, %v4569, 0.0
  %5010 = vadd.xlane.f32.xlu0 %v5009
  %v5011 = vpop.xlane.xlu0 %5010
  %v5012 = vsel %vm3685, %v4571, 0.0
  %5013 = vadd.xlane.f32.xlu0 %v5012
  %v5014 = vpop.xlane.xlu0 %5013
  %v5015 = vsel %vm3685, %v4573, 0.0
  %5016 = vadd.xlane.f32.xlu0 %v5015
  %v5017 = vpop.xlane.xlu0 %5016
  %v5018 = vsel %vm3685, %v4575, 0.0
  %5019 = vadd.xlane.f32.xlu0 %v5018
  %v5020 = vpop.xlane.xlu0 %5019
  %v5021 = vsel %vm3685, %v4577, 0.0
  %5022 = vadd.xlane.f32.xlu0 %v5021
  %v5023 = vpop.xlane.xlu0 %5022
  %v5024 = vsel %vm3685, %v4579, 0.0
  %5025 = vadd.xlane.f32.xlu0 %v5024
  %v5026 = vpop.xlane.xlu0 %5025
  %v5027 = vsel %vm3685, %v4581, 0.0
  %5028 = vadd.xlane.f32.xlu0 %v5027
  %v5029 = vpop.xlane.xlu0 %5028
  %v5030 = vsel %vm3685, %v4583, 0.0
  %5031 = vadd.xlane.f32.xlu0 %v5030
  %v5032 = vpop.xlane.xlu0 %5031
  %v5033 = vsel %vm3685, %v4585, 0.0
  %5034 = vadd.xlane.f32.xlu0 %v5033
  %v5035 = vpop.xlane.xlu0 %5034
  %v5036 = vsel %vm3685, %v4587, 0.0
  %5037 = vadd.xlane.f32.xlu0 %v5036
  %v5038 = vpop.xlane.xlu0 %5037
  %v5039 = vsel %vm3685, %v4589, 0.0
  %5040 = vadd.xlane.f32.xlu0 %v5039
  %v5041 = vpop.xlane.xlu0 %5040
  %v5042 = vsel %vm3685, %v4591, 0.0
  %5043 = vadd.xlane.f32.xlu0 %v5042
  %v5044 = vpop.xlane.xlu0 %5043
  %v5045 = vsel %vm3685, %v4593, 0.0
  %5046 = vadd.xlane.f32.xlu0 %v5045
  %v5047 = vpop.xlane.xlu0 %5046
  %v5048 = vsel %vm3685, %v4595, 0.0
  %5049 = vadd.xlane.f32.xlu0 %v5048
  %v5050 = vpop.xlane.xlu0 %5049
  %v5051 = vsel %vm3685, %v4597, 0.0
  %5052 = vadd.xlane.f32.xlu0 %v5051
  %v5053 = vpop.xlane.xlu0 %5052
  %v5054 = vsel %vm3685, %v4599, 0.0
  %5055 = vadd.xlane.f32.xlu0 %v5054
  %v5056 = vpop.xlane.xlu0 %5055
  %v5057 = vsel %vm3685, %v4601, 0.0
  %5058 = vadd.xlane.f32.xlu0 %v5057
  %v5059 = vpop.xlane.xlu0 %5058
  %v5060 = vsel %vm3685, %v4603, 0.0
  %5061 = vadd.xlane.f32.xlu0 %v5060
  %v5062 = vpop.xlane.xlu0 %5061
  %v5063 = vsel %vm3685, %v4605, 0.0
  %5064 = vadd.xlane.f32.xlu0 %v5063
  %v5065 = vpop.xlane.xlu0 %5064
  %v5066 = vsel %vm3685, %v4607, 0.0
  %5067 = vadd.xlane.f32.xlu0 %v5066
  %v5068 = vpop.xlane.xlu0 %5067
  %v5069 = vsel %vm3685, %v4609, 0.0
  %5070 = vadd.xlane.f32.xlu0 %v5069
  %v5071 = vpop.xlane.xlu0 %5070
  %v5072 = vsel %vm3685, %v4611, 0.0
  %5073 = vadd.xlane.f32.xlu0 %v5072
  %v5074 = vpop.xlane.xlu0 %5073
  %v5075 = vsel %vm3685, %v4613, 0.0
  %5076 = vadd.xlane.f32.xlu0 %v5075
  %v5077 = vpop.xlane.xlu0 %5076
  %v5078 = vsel %vm3685, %v4615, 0.0
  %5079 = vadd.xlane.f32.xlu0 %v5078
  %v5080 = vpop.xlane.xlu0 %5079
  %v5081 = vsel %vm3685, %v4617, 0.0
  %5082 = vadd.xlane.f32.xlu0 %v5081
  %v5083 = vpop.xlane.xlu0 %5082
  %v5084 = vsel %vm3685, %v4619, 0.0
  %5085 = vadd.xlane.f32.xlu0 %v5084
  %v5086 = vpop.xlane.xlu0 %5085
  %v5087 = vsel %vm3685, %v4621, 0.0
  %5088 = vadd.xlane.f32.xlu0 %v5087
  %v5089 = vpop.xlane.xlu0 %5088
  %v5090 = vsel %vm3685, %v4623, 0.0
  %5091 = vadd.xlane.f32.xlu0 %v5090
  %v5092 = vpop.xlane.xlu0 %5091
  %v5093 = vsel %vm3685, %v4625, 0.0
  %5094 = vadd.xlane.f32.xlu0 %v5093
  %v5095 = vpop.xlane.xlu0 %5094
  %v5096 = vsel %vm3685, %v4627, 0.0
  %5097 = vadd.xlane.f32.xlu0 %v5096
  %v5098 = vpop.xlane.xlu0 %5097
  %v5099 = vsel %vm3685, %v4629, 0.0
  %5100 = vadd.xlane.f32.xlu0 %v5099
  %v5101 = vpop.xlane.xlu0 %5100
  %v5102 = vsel %vm3685, %v4631, 0.0
  %5103 = vadd.xlane.f32.xlu0 %v5102
  %v5104 = vpop.xlane.xlu0 %5103
  %v5105 = vsel %vm3685, %v4633, 0.0
  %5106 = vadd.xlane.f32.xlu0 %v5105
  %v5107 = vpop.xlane.xlu0 %5106
  %v5108 = vsel %vm3685, %v4635, 0.0
  %5109 = vadd.xlane.f32.xlu0 %v5108
  %v5110 = vpop.xlane.xlu0 %5109
  %v5111 = vsel %vm3685, %v4637, 0.0
  %5112 = vadd.xlane.f32.xlu0 %v5111
  %v5113 = vpop.xlane.xlu0 %5112
  %v5114 = vsel %vm3685, %v4639, 0.0
  %5115 = vadd.xlane.f32.xlu0 %v5114
  %v5116 = vpop.xlane.xlu0 %5115
  %v5117 = vsel %vm3685, %v4641, 0.0
  %5118 = vadd.xlane.f32.xlu0 %v5117
  %v5119 = vpop.xlane.xlu0 %5118
  %v5120 = vsel %vm3685, %v4643, 0.0
  %5121 = vadd.xlane.f32.xlu0 %v5120
  %v5122 = vpop.xlane.xlu0 %5121
  %v5123 = vsel %vm3685, %v4645, 0.0
  %5124 = vadd.xlane.f32.xlu0 %v5123
  %v5125 = vpop.xlane.xlu0 %5124
  %v5126 = vrcp.pop %v4648
  %v5127 = vrcp.pop %v4651
  %v5128 = vrcp.pop %v4654
  %v5129 = vrcp.pop %v4657
  %v5130 = vrcp.pop %v4660
  %v5131 = vrcp.pop %v4663
  %v5132 = vrcp.pop %v4666
  %v5133 = vrcp.pop %v4669
  %v5134 = vrcp.pop %v4672
  %v5135 = vrcp.pop %v4675
  %v5136 = vrcp.pop %v4678
  %v5137 = vrcp.pop %v4681
  %v5138 = vrcp.pop %v4684
  %v5139 = vrcp.pop %v4687
  %v5140 = vrcp.pop %v4690
  %v5141 = vrcp.pop %v4693
  %v5142 = vrcp.pop %v4696
  %v5143 = vrcp.pop %v4699
  %v5144 = vrcp.pop %v4702
  %v5145 = vrcp.pop %v4705
  %v5146 = vrcp.pop %v4708
  %v5147 = vrcp.pop %v4711
  %v5148 = vrcp.pop %v4714
  %v5149 = vrcp.pop %v4717
  %v5150 = vrcp.pop %v4720
  %v5151 = vrcp.pop %v4723
  %v5152 = vrcp.pop %v4726
  %v5153 = vrcp.pop %v4729
  %v5154 = vrcp.pop %v4732
  %v5155 = vrcp.pop %v4735
  %v5156 = vrcp.pop %v4738
  %v5157 = vrcp.pop %v4741
  %v5158 = vrcp.pop %v4744
  %v5159 = vrcp.pop %v4747
  %v5160 = vrcp.pop %v4750
  %v5161 = vrcp.pop %v4753
  %v5162 = vrcp.pop %v4756
  %v5163 = vrcp.pop %v4759
  %v5164 = vrcp.pop %v4762
  %v5165 = vrcp.pop %v4765
  %v5166 = vrcp.pop %v4768
  %v5167 = vrcp.pop %v4771
  %v5168 = vrcp.pop %v4774
  %v5169 = vrcp.pop %v4777
  %v5170 = vrcp.pop %v4780
  %v5171 = vrcp.pop %v4783
  %v5172 = vrcp.pop %v4786
  %v5173 = vrcp.pop %v4789
  %v5174 = vrcp.pop %v4792
  %v5175 = vrcp.pop %v4795
  %v5176 = vrcp.pop %v4798
  %v5177 = vrcp.pop %v4801
  %v5178 = vrcp.pop %v4804
  %v5179 = vrcp.pop %v4807
  %v5180 = vrcp.pop %v4810
  %v5181 = vrcp.pop %v4813
  %v5182 = vrcp.pop %v4816
  %v5183 = vrcp.pop %v4819
  %v5184 = vrcp.pop %v4822
  %v5185 = vrcp.pop %v4825
  %v5186 = vrcp.pop %v4828
  %v5187 = vrcp.pop %v4831
  %v5188 = vrcp.pop %v4834
  %v5189 = vrcp.pop %v4837
  %v5190 = vrcp.pop %v4840
  %v5191 = vrcp.pop %v4843
  %v5192 = vrcp.pop %v4846
  %v5193 = vrcp.pop %v4849
  %v5194 = vrcp.pop %v4852
  %v5195 = vrcp.pop %v4855
  %v5196 = vrcp.pop %v4858
  %v5197 = vrcp.pop %v4861
  %v5198 = vrcp.pop %v4864
  %v5199 = vrcp.pop %v4867
  %v5200 = vrcp.pop %v4870
  %v5201 = vrcp.pop %v4873
  %v5202 = vrcp.pop %v4876
  %v5203 = vrcp.pop %v4879
  %v5204 = vrcp.pop %v4882
  %v5205 = vrcp.pop %v4885
  %v5206 = vrcp.pop %v4888
  %v5207 = vrcp.pop %v4891
  %v5208 = vrcp.pop %v4894
  %v5209 = vrcp.pop %v4897
  %v5210 = vrcp.pop %v4900
  %v5211 = vrcp.pop %v4903
  %v5212 = vrcp.pop %v4906
  %v5213 = vrcp.pop %v4909
  %v5214 = vrcp.pop %v4912
  %v5215 = vrcp.pop %v4915
  %v5216 = vrcp.pop %v4918
  %v5217 = vrcp.pop %v4921
  %v5218 = vrcp.pop %v4924
  %v5219 = vrcp.pop %v4927
  %v5220 = vrcp.pop %v4930
  %v5221 = vrcp.pop %v4933
  %v5222 = vrcp.pop %v4936
  %v5223 = vrcp.pop %v4939
  %v5224 = vrcp.pop %v4942
  %v5225 = vrcp.pop %v4945
  %v5226 = vrcp.pop %v4948
  %v5227 = vrcp.pop %v4951
  %v5228 = vrcp.pop %v4954
  %v5229 = vrcp.pop %v4957
  %v5230 = vrcp.pop %v4960
  %v5231 = vrcp.pop %v4963
  %v5232 = vrcp.pop %v4966
  %v5233 = vrcp.pop %v4969
  %v5234 = vrcp.pop %v4972
  %v5235 = vrcp.pop %v4975
  %v5236 = vrcp.pop %v4978
  %v5237 = vrcp.pop %v4981
  %v5238 = vrcp.pop %v4984
  %v5239 = vrcp.pop %v4987
  %v5240 = vrcp.pop %v4990
  %v5241 = vrcp.pop %v4993
  %v5242 = vrcp.pop %v4996
  %v5243 = vrcp.pop %v4999
  %v5244 = vrcp.pop %v5002
  %v5245 = vrcp.pop %v5005
  %v5246 = vrcp.pop %v5008
  %v5247 = vrcp.pop %v5011
  %v5248 = vrcp.pop %v5014
  %v5249 = vrcp.pop %v5017
  %v5250 = vrcp.pop %v5020
  %v5251 = vrcp.pop %v5023
  %v5252 = vrcp.pop %v5026
  %v5253 = vrcp.pop %v5029
  %v5254 = vrcp.pop %v5032
  %v5255 = vrcp.pop %v5035
  %v5256 = vrcp.pop %v5038
  %v5257 = vrcp.pop %v5041
  %v5258 = vrcp.pop %v5044
  %v5259 = vrcp.pop %v5047
  %v5260 = vrcp.pop %v5050
  %v5261 = vrcp.pop %v5053
  %v5262 = vrcp.pop %v5056
  %v5263 = vrcp.pop %v5059
  %v5264 = vrcp.pop %v5062
  %v5265 = vrcp.pop %v5065
  %v5266 = vrcp.pop %v5068
  %v5267 = vrcp.pop %v5071
  %v5268 = vrcp.pop %v5074
  %v5269 = vrcp.pop %v5077
  %v5270 = vrcp.pop %v5080
  %v5271 = vrcp.pop %v5083
  %v5272 = vrcp.pop %v5086
  %v5273 = vrcp.pop %v5089
  %v5274 = vrcp.pop %v5092
  %v5275 = vrcp.pop %v5095
  %v5276 = vrcp.pop %v5098
  %v5277 = vrcp.pop %v5101
  %v5278 = vrcp.pop %v5104
  %v5279 = vrcp.pop %v5107
  %v5280 = vrcp.pop %v5110
  %v5281 = vrcp.pop %v5113
  %v5282 = vrcp.pop %v5116
  %v5283 = vrcp.pop %v5119
  %v5284 = vrcp.pop %v5122
  %v5285 = vrcp.pop %v5125
  %v5286 = vmul.f32 %v4327, %v5126
  %v5287 = vmul.f32 %v4329, %v5127
  %v5288 = vmul.f32 %v4331, %v5128
  %v5289 = vmul.f32 %v4333, %v5129
  %v5290 = vmul.f32 %v4335, %v5130
  %v5291 = vmul.f32 %v4337, %v5131
  %v5292 = vmul.f32 %v4339, %v5132
  %v5293 = vmul.f32 %v4341, %v5133
  %v5294 = vmul.f32 %v4343, %v5134
  %v5295 = vmul.f32 %v4345, %v5135
  %v5296 = vmul.f32 %v4347, %v5136
  %v5297 = vmul.f32 %v4349, %v5137
  %v5298 = vmul.f32 %v4351, %v5138
  %v5299 = vmul.f32 %v4353, %v5139
  %v5300 = vmul.f32 %v4355, %v5140
  %v5301 = vmul.f32 %v4357, %v5141
  %v5302 = vmul.f32 %v4359, %v5142
  %v5303 = vmul.f32 %v4361, %v5143
  %v5304 = vmul.f32 %v4363, %v5144
  %v5305 = vmul.f32 %v4365, %v5145
  %v5306 = vmul.f32 %v4367, %v5146
  %v5307 = vmul.f32 %v4369, %v5147
  %v5308 = vmul.f32 %v4371, %v5148
  %v5309 = vmul.f32 %v4373, %v5149
  %v5310 = vmul.f32 %v4375, %v5150
  %v5311 = vmul.f32 %v4377, %v5151
  %v5312 = vmul.f32 %v4379, %v5152
  %v5313 = vmul.f32 %v4381, %v5153
  %v5314 = vmul.f32 %v4383, %v5154
  %v5315 = vmul.f32 %v4385, %v5155
  %v5316 = vmul.f32 %v4387, %v5156
  %v5317 = vmul.f32 %v4389, %v5157
  %v5318 = vmul.f32 %v4391, %v5158
  %v5319 = vmul.f32 %v4393, %v5159
  %v5320 = vmul.f32 %v4395, %v5160
  %v5321 = vmul.f32 %v4397, %v5161
  %v5322 = vmul.f32 %v4399, %v5162
  %v5323 = vmul.f32 %v4401, %v5163
  %v5324 = vmul.f32 %v4403, %v5164
  %v5325 = vmul.f32 %v4405, %v5165
  %v5326 = vmul.f32 %v4407, %v5166
  %v5327 = vmul.f32 %v4409, %v5167
  %v5328 = vmul.f32 %v4411, %v5168
  %v5329 = vmul.f32 %v4413, %v5169
  %v5330 = vmul.f32 %v4415, %v5170
  %v5331 = vmul.f32 %v4417, %v5171
  %v5332 = vmul.f32 %v4419, %v5172
  %v5333 = vmul.f32 %v4421, %v5173
  %v5334 = vmul.f32 %v4423, %v5174
  %v5335 = vmul.f32 %v4425, %v5175
  %v5336 = vmul.f32 %v4427, %v5176
  %v5337 = vmul.f32 %v4429, %v5177
  %v5338 = vmul.f32 %v4431, %v5178
  %v5339 = vmul.f32 %v4433, %v5179
  %v5340 = vmul.f32 %v4435, %v5180
  %v5341 = vmul.f32 %v4437, %v5181
  %v5342 = vmul.f32 %v4439, %v5182
  %v5343 = vmul.f32 %v4441, %v5183
  %v5344 = vmul.f32 %v4443, %v5184
  %v5345 = vmul.f32 %v4445, %v5185
  %v5346 = vmul.f32 %v4447, %v5186
  %v5347 = vmul.f32 %v4449, %v5187
  %v5348 = vmul.f32 %v4451, %v5188
  %v5349 = vmul.f32 %v4453, %v5189
  %v5350 = vmul.f32 %v4455, %v5190
  %v5351 = vmul.f32 %v4457, %v5191
  %v5352 = vmul.f32 %v4459, %v5192
  %v5353 = vmul.f32 %v4461, %v5193
  %v5354 = vmul.f32 %v4463, %v5194
  %v5355 = vmul.f32 %v4465, %v5195
  %v5356 = vmul.f32 %v4467, %v5196
  %v5357 = vmul.f32 %v4469, %v5197
  %v5358 = vmul.f32 %v4471, %v5198
  %v5359 = vmul.f32 %v4473, %v5199
  %v5360 = vmul.f32 %v4475, %v5200
  %v5361 = vmul.f32 %v4477, %v5201
  %v5362 = vmul.f32 %v4479, %v5202
  %v5363 = vmul.f32 %v4481, %v5203
  %v5364 = vmul.f32 %v4483, %v5204
  %v5365 = vmul.f32 %v4485, %v5205
  %v5366 = vmul.f32 %v4487, %v5206
  %v5367 = vmul.f32 %v4489, %v5207
  %v5368 = vmul.f32 %v4491, %v5208
  %v5369 = vmul.f32 %v4493, %v5209
  %v5370 = vmul.f32 %v4495, %v5210
  %v5371 = vmul.f32 %v4497, %v5211
  %v5372 = vmul.f32 %v4499, %v5212
  %v5373 = vmul.f32 %v4501, %v5213
  %v5374 = vmul.f32 %v4503, %v5214
  %v5375 = vmul.f32 %v4505, %v5215
  %v5376 = vmul.f32 %v4507, %v5216
  %v5377 = vmul.f32 %v4509, %v5217
  %v5378 = vmul.f32 %v4511, %v5218
  %v5379 = vmul.f32 %v4513, %v5219
  %v5380 = vmul.f32 %v4515, %v5220
  %v5381 = vmul.f32 %v4517, %v5221
  %v5382 = vmul.f32 %v4519, %v5222
  %v5383 = vmul.f32 %v4521, %v5223
  %v5384 = vmul.f32 %v4523, %v5224
  %v5385 = vmul.f32 %v4525, %v5225
  %v5386 = vmul.f32 %v4527, %v5226
  %v5387 = vmul.f32 %v4529, %v5227
  %v5388 = vmul.f32 %v4531, %v5228
  %v5389 = vmul.f32 %v4533, %v5229
  %v5390 = vmul.f32 %v4535, %v5230
  %v5391 = vmul.f32 %v4537, %v5231
  %v5392 = vmul.f32 %v4539, %v5232
  %v5393 = vmul.f32 %v4541, %v5233
  %v5394 = vmul.f32 %v4543, %v5234
  %v5395 = vmul.f32 %v4545, %v5235
  %v5396 = vmul.f32 %v4547, %v5236
  %v5397 = vmul.f32 %v4549, %v5237
  %v5398 = vmul.f32 %v4551, %v5238
  %v5399 = vmul.f32 %v4553, %v5239
  %v5400 = vmul.f32 %v4555, %v5240
  %v5401 = vmul.f32 %v4557, %v5241
  %v5402 = vmul.f32 %v4559, %v5242
  %v5403 = vmul.f32 %v4561, %v5243
  %v5404 = vmul.f32 %v4563, %v5244
  %v5405 = vmul.f32 %v4565, %v5245
  %v5406 = vmul.f32 %v4567, %v5246
  %v5407 = vmul.f32 %v4569, %v5247
  %v5408 = vmul.f32 %v4571, %v5248
  %v5409 = vmul.f32 %v4573, %v5249
  %v5410 = vmul.f32 %v4575, %v5250
  %v5411 = vmul.f32 %v4577, %v5251
  %v5412 = vmul.f32 %v4579, %v5252
  %v5413 = vmul.f32 %v4581, %v5253
  %v5414 = vmul.f32 %v4583, %v5254
  %v5415 = vmul.f32 %v4585, %v5255
  %v5416 = vmul.f32 %v4587, %v5256
  %v5417 = vmul.f32 %v4589, %v5257
  %v5418 = vmul.f32 %v4591, %v5258
  %v5419 = vmul.f32 %v4593, %v5259
  %v5420 = vmul.f32 %v4595, %v5260
  %v5421 = vmul.f32 %v4597, %v5261
  %v5422 = vmul.f32 %v4599, %v5262
  %v5423 = vmul.f32 %v4601, %v5263
  %v5424 = vmul.f32 %v4603, %v5264
  %v5425 = vmul.f32 %v4605, %v5265
  %v5426 = vmul.f32 %v4607, %v5266
  %v5427 = vmul.f32 %v4609, %v5267
  %v5428 = vmul.f32 %v4611, %v5268
  %v5429 = vmul.f32 %v4613, %v5269
  %v5430 = vmul.f32 %v4615, %v5270
  %v5431 = vmul.f32 %v4617, %v5271
  %v5432 = vmul.f32 %v4619, %v5272
  %v5433 = vmul.f32 %v4621, %v5273
  %v5434 = vmul.f32 %v4623, %v5274
  %v5435 = vmul.f32 %v4625, %v5275
  %v5436 = vmul.f32 %v4627, %v5276
  %v5437 = vmul.f32 %v4629, %v5277
  %v5438 = vmul.f32 %v4631, %v5278
  %v5439 = vmul.f32 %v4633, %v5279
  %v5440 = vmul.f32 %v4635, %v5280
  %v5441 = vmul.f32 %v4637, %v5281
  %v5442 = vmul.f32 %v4639, %v5282
  %v5443 = vmul.f32 %v4641, %v5283
  %v5444 = vmul.f32 %v4643, %v5284
  %v5445 = vmul.f32 %v4645, %v5285
  %v5446 = vpack.c.bf16 %v5287, %v5286
  %v5447 = vpack.c.bf16 %v5289, %v5288
  %v5448 = vpack.c.bf16 %v5291, %v5290
  %v5449 = vpack.c.bf16 %v5293, %v5292
  %v5450 = vpack.c.bf16 %v5295, %v5294
  %v5451 = vpack.c.bf16 %v5297, %v5296
  %v5452 = vpack.c.bf16 %v5299, %v5298
  %v5453 = vpack.c.bf16 %v5301, %v5300
  %v5454 = vpack.c.bf16 %v5303, %v5302
  %v5455 = vpack.c.bf16 %v5305, %v5304
  %v5456 = vpack.c.bf16 %v5307, %v5306
  %v5457 = vpack.c.bf16 %v5309, %v5308
  %v5458 = vpack.c.bf16 %v5311, %v5310
  %v5459 = vpack.c.bf16 %v5313, %v5312
  %v5460 = vpack.c.bf16 %v5315, %v5314
  %v5461 = vpack.c.bf16 %v5317, %v5316
  %v5462 = vpack.c.bf16 %v5319, %v5318
  %v5463 = vpack.c.bf16 %v5321, %v5320
  %v5464 = vpack.c.bf16 %v5323, %v5322
  %v5465 = vpack.c.bf16 %v5325, %v5324
  %v5466 = vpack.c.bf16 %v5327, %v5326
  %v5467 = vpack.c.bf16 %v5329, %v5328
  %v5468 = vpack.c.bf16 %v5331, %v5330
  %v5469 = vpack.c.bf16 %v5333, %v5332
  %v5470 = vpack.c.bf16 %v5335, %v5334
  %v5471 = vpack.c.bf16 %v5337, %v5336
  %v5472 = vpack.c.bf16 %v5339, %v5338
  %v5473 = vpack.c.bf16 %v5341, %v5340
  %v5474 = vpack.c.bf16 %v5343, %v5342
  %v5475 = vpack.c.bf16 %v5345, %v5344
  %v5476 = vpack.c.bf16 %v5347, %v5346
  %v5477 = vpack.c.bf16 %v5349, %v5348
  %v5478 = vpack.c.bf16 %v5351, %v5350
  %v5479 = vpack.c.bf16 %v5353, %v5352
  %v5480 = vpack.c.bf16 %v5355, %v5354
  %v5481 = vpack.c.bf16 %v5357, %v5356
  %v5482 = vpack.c.bf16 %v5359, %v5358
  %v5483 = vpack.c.bf16 %v5361, %v5360
  %v5484 = vpack.c.bf16 %v5363, %v5362
  %v5485 = vpack.c.bf16 %v5365, %v5364
  %v5486 = vpack.c.bf16 %v5367, %v5366
  %v5487 = vpack.c.bf16 %v5369, %v5368
  %v5488 = vpack.c.bf16 %v5371, %v5370
  %v5489 = vpack.c.bf16 %v5373, %v5372
  %v5490 = vpack.c.bf16 %v5375, %v5374
  %v5491 = vpack.c.bf16 %v5377, %v5376
  %v5492 = vpack.c.bf16 %v5379, %v5378
  %v5493 = vpack.c.bf16 %v5381, %v5380
  %v5494 = vpack.c.bf16 %v5383, %v5382
  %v5495 = vpack.c.bf16 %v5385, %v5384
  %v5496 = vpack.c.bf16 %v5387, %v5386
  %v5497 = vpack.c.bf16 %v5389, %v5388
  %v5498 = vpack.c.bf16 %v5391, %v5390
  %v5499 = vpack.c.bf16 %v5393, %v5392
  %v5500 = vpack.c.bf16 %v5395, %v5394
  %v5501 = vpack.c.bf16 %v5397, %v5396
  %v5502 = vpack.c.bf16 %v5399, %v5398
  %v5503 = vpack.c.bf16 %v5401, %v5400
  %v5504 = vpack.c.bf16 %v5403, %v5402
  %v5505 = vpack.c.bf16 %v5405, %v5404
  %v5506 = vpack.c.bf16 %v5407, %v5406
  %v5507 = vpack.c.bf16 %v5409, %v5408
  %v5508 = vpack.c.bf16 %v5411, %v5410
  %v5509 = vpack.c.bf16 %v5413, %v5412
  %v5510 = vpack.c.bf16 %v5415, %v5414
  %v5511 = vpack.c.bf16 %v5417, %v5416
  %v5512 = vpack.c.bf16 %v5419, %v5418
  %v5513 = vpack.c.bf16 %v5421, %v5420
  %v5514 = vpack.c.bf16 %v5423, %v5422
  %v5515 = vpack.c.bf16 %v5425, %v5424
  %v5516 = vpack.c.bf16 %v5427, %v5426
  %v5517 = vpack.c.bf16 %v5429, %v5428
  %v5518 = vpack.c.bf16 %v5431, %v5430
  %v5519 = vpack.c.bf16 %v5433, %v5432
  %v5520 = vpack.c.bf16 %v5435, %v5434
  %v5521 = vpack.c.bf16 %v5437, %v5436
  %v5522 = vpack.c.bf16 %v5439, %v5438
  %v5523 = vpack.c.bf16 %v5441, %v5440
  %v5524 = vpack.c.bf16 %v5443, %v5442
  %v5525 = vpack.c.bf16 %v5445, %v5444
  %5526 = vrot.lane.b32.xlu0 %v748, 96
  %v5527 = vpop.permute.xlu0 %5526
  %5528 = vrot.lane.b32.xlu0 %v749, 96
  %v5529 = vpop.permute.xlu0 %5528
  %v5533 = vsel %vm3685, %v5446, 0
  %v5536 = vsel %vm3685, %v5447, 0
  %5538 = vmatprep.subr.bf16.mxu0 0
  %5539 = vmatpush1.bf16.msra.mxu0 %v5527
  %5540 = vmatprep.subr.bf16.mxu0 0
  %5541 = vmatpush1.bf16.msra.mxu0 %v5529
  %5542 = vmatprep.subr.bf16.mxu0 0
  %5543 = vmatpush1.bf16.msra.mxu0 0
  %5544 = vmatprep.subr.bf16.mxu0 0
  %5545 = vmatpush1.bf16.msra.mxu0 0
  %5546 = vmatprep.subr.bf16.mxu0 0
  %5547 = vmatpush1.bf16.msra.mxu0 0
  %5548 = vmatprep.subr.bf16.mxu0 0
  %5549 = vmatpush1.bf16.msra.mxu0 0
  %5550 = vmatprep.subr.bf16.mxu0 0
  %5551 = vmatpush1.bf16.msra.mxu0 0
  %5552 = vmatprep.subr.bf16.mxu0 0
  %5553 = vmatpush1.bf16.msra.mxu0 0
  %5554 = vmatprep.subr.bf16.mxu0 0
  %5555 = vmatpush1.bf16.msra.mxu0 0
  %5556 = vmatprep.subr.bf16.mxu0 0
  %5557 = vmatpush1.bf16.msra.mxu0 0
  %5558 = vmatprep.subr.bf16.mxu0 0
  %5559 = vmatpush1.bf16.msra.mxu0 0
  %5560 = vmatprep.subr.bf16.mxu0 0
  %5561 = vmatpush1.bf16.msra.mxu0 0
  %5562 = vmatprep.subr.bf16.mxu0 0
  %5563 = vmatpush1.bf16.msra.mxu0 0
  %5564 = vmatprep.subr.bf16.mxu0 0
  %5565 = vmatpush1.bf16.msra.mxu0 0
  %5566 = vmatprep.subr.bf16.mxu0 0
  %5567 = vmatpush1.bf16.msra.mxu0 0
  %5568 = vmatprep.subr.bf16.mxu0 0
  %5569 = vmatpush1.bf16.msra.mxu0 0
  %5570 = vmatprep.mubr.bf16.mxu0 0
  %5571 = vmatmul.mubr.bf16.gmra.mrb[0].mxu0 %v5533
  %v5572 = vpop.f32.mrb[0].mxu0
  %v5573 = vadd.f32 0.0, %v5572
  %v5574 = vpop.f32.mrb[0].mxu0
  %v5575 = vpop.f32.mrb[0].mxu0
  %v5576 = vadd.f32 0.0, %v5575
  %v5577 = vpop.f32.mrb[0].mxu0
  %5578 = vmatprep.mubr.bf16.mxu0 0
  %5579 = vmatmul.mubr.bf16.gmra.mrb[0].mxu0 %v5536
  %v5580 = vpop.f32.mrb[0].mxu0
  %v5581 = vadd.f32 0.0, %v5580
  %v5582 = vpop.f32.mrb[0].mxu0
  %v5583 = vpop.f32.mrb[0].mxu0
  %v5584 = vadd.f32 0.0, %v5583
  %v5585 = vpop.f32.mrb[0].mxu0
  %5586 = vdwg.mxu0
  %5587 = vrot.lane.b32.xlu0 %v750, 96
  %v5588 = vpop.permute.xlu0 %5587
  %5589 = vrot.lane.b32.xlu0 %v751, 96
  %v5590 = vpop.permute.xlu0 %5589
  %v5594 = vsel %vm3685, %v5448, 0
  %v5597 = vsel %vm3685, %v5449, 0
  %5599 = vmatprep.subr.bf16.mxu0 0
  %5600 = vmatpush1.bf16.msra.mxu0 %v5588
  %5601 = vmatprep.subr.bf16.mxu0 0
  %5602 = vmatpush1.bf16.msra.mxu0 %v5590
  %5603 = vmatprep.subr.bf16.mxu0 0
  %5604 = vmatpush1.bf16.msra.mxu0 0
  %5605 = vmatprep.subr.bf16.mxu0 0
  %5606 = vmatpush1.bf16.msra.mxu0 0
  %5607 = vmatprep.subr.bf16.mxu0 0
  %5608 = vmatpush1.bf16.msra.mxu0 0
  %5609 = vmatprep.subr.bf16.mxu0 0
  %5610 = vmatpush1.bf16.msra.mxu0 0
  %5611 = vmatprep.subr.bf16.mxu0 0
  %5612 = vmatpush1.bf16.msra.mxu0 0
  %5613 = vmatprep.subr.bf16.mxu0 0
  %5614 = vmatpush1.bf16.msra.mxu0 0
  %5615 = vmatprep.subr.bf16.mxu0 0
  %5616 = vmatpush1.bf16.msra.mxu0 0
  %5617 = vmatprep.subr.bf16.mxu0 0
  %5618 = vmatpush1.bf16.msra.mxu0 0
  %5619 = vmatprep.subr.bf16.mxu0 0
  %5620 = vmatpush1.bf16.msra.mxu0 0
  %5621 = vmatprep.subr.bf16.mxu0 0
  %5622 = vmatpush1.bf16.msra.mxu0 0
  %5623 = vmatprep.subr.bf16.mxu0 0
  %5624 = vmatpush1.bf16.msra.mxu0 0
  %5625 = vmatprep.subr.bf16.mxu0 0
  %5626 = vmatpush1.bf16.msra.mxu0 0
  %5627 = vmatprep.subr.bf16.mxu0 0
  %5628 = vmatpush1.bf16.msra.mxu0 0
  %5629 = vmatprep.subr.bf16.mxu0 0
  %5630 = vmatpush1.bf16.msra.mxu0 0
  %5631 = vmatprep.mubr.bf16.mxu0 0
  %5632 = vmatmul.mubr.bf16.gmra.mrb[0].mxu0 %v5594
  %v5633 = vpop.f32.mrb[0].mxu0
  %v5634 = vadd.f32 0.0, %v5633
  %v5635 = vpop.f32.mrb[0].mxu0
  %v5636 = vpop.f32.mrb[0].mxu0
  %v5637 = vadd.f32 0.0, %v5636
  %v5638 = vpop.f32.mrb[0].mxu0
  %5639 = vmatprep.mubr.bf16.mxu0 0
  %5640 = vmatmul.mubr.bf16.gmra.mrb[0].mxu0 %v5597
  %v5641 = vpop.f32.mrb[0].mxu0
  %v5642 = vadd.f32 0.0, %v5641
  %v5643 = vpop.f32.mrb[0].mxu0
  %v5644 = vpop.f32.mrb[0].mxu0
  %v5645 = vadd.f32 0.0, %v5644
  %v5646 = vpop.f32.mrb[0].mxu0
  %5647 = vdwg.mxu0
  %5648 = vrot.lane.b32.xlu0 %v752, 96
  %v5649 = vpop.permute.xlu0 %5648
  %5650 = vrot.lane.b32.xlu0 %v753, 96
  %v5651 = vpop.permute.xlu0 %5650
  %v5655 = vsel %vm3685, %v5450, 0
  %v5658 = vsel %vm3685, %v5451, 0
  %5660 = vmatprep.subr.bf16.mxu0 0
  %5661 = vmatpush1.bf16.msra.mxu0 %v5649
  %5662 = vmatprep.subr.bf16.mxu0 0
  %5663 = vmatpush1.bf16.msra.mxu0 %v5651
  %5664 = vmatprep.subr.bf16.mxu0 0
  %5665 = vmatpush1.bf16.msra.mxu0 0
  %5666 = vmatprep.subr.bf16.mxu0 0
  %5667 = vmatpush1.bf16.msra.mxu0 0
  %5668 = vmatprep.subr.bf16.mxu0 0
  %5669 = vmatpush1.bf16.msra.mxu0 0
  %5670 = vmatprep.subr.bf16.mxu0 0
  %5671 = vmatpush1.bf16.msra.mxu0 0
  %5672 = vmatprep.subr.bf16.mxu0 0
  %5673 = vmatpush1.bf16.msra.mxu0 0
  %5674 = vmatprep.subr.bf16.mxu0 0
  %5675 = vmatpush1.bf16.msra.mxu0 0
  %5676 = vmatprep.subr.bf16.mxu0 0
  %5677 = vmatpush1.bf16.msra.mxu0 0
  %5678 = vmatprep.subr.bf16.mxu0 0
  %5679 = vmatpush1.bf16.msra.mxu0 0
  %5680 = vmatprep.subr.bf16.mxu0 0
  %5681 = vmatpush1.bf16.msra.mxu0 0
  %5682 = vmatprep.subr.bf16.mxu0 0
  %5683 = vmatpush1.bf16.msra.mxu0 0
  %5684 = vmatprep.subr.bf16.mxu0 0
  %5685 = vmatpush1.bf16.msra.mxu0 0
  %5686 = vmatprep.subr.bf16.mxu0 0
  %5687 = vmatpush1.bf16.msra.mxu0 0
  %5688 = vmatprep.subr.bf16.mxu0 0
  %5689 = vmatpush1.bf16.msra.mxu0 0
  %5690 = vmatprep.subr.bf16.mxu0 0
  %5691 = vmatpush1.bf16.msra.mxu0 0
  %5692 = vmatprep.mubr.bf16.mxu0 0
  %5693 = vmatmul.mubr.bf16.gmra.mrb[0].mxu0 %v5655
  %v5694 = vpop.f32.mrb[0].mxu0
  %v5695 = vadd.f32 0.0, %v5694
  %v5696 = vpop.f32.mrb[0].mxu0
  %v5697 = vpop.f32.mrb[0].mxu0
  %v5698 = vadd.f32 0.0, %v5697
  %v5699 = vpop.f32.mrb[0].mxu0
  %5700 = vmatprep.mubr.bf16.mxu0 0
  %5701 = vmatmul.mubr.bf16.gmra.mrb[0].mxu0 %v5658
  %v5702 = vpop.f32.mrb[0].mxu0
  %v5703 = vadd.f32 0.0, %v5702
  %v5704 = vpop.f32.mrb[0].mxu0
  %v5705 = vpop.f32.mrb[0].mxu0
  %v5706 = vadd.f32 0.0, %v5705
  %v5707 = vpop.f32.mrb[0].mxu0
  %5708 = vdwg.mxu0
  %5709 = vrot.lane.b32.xlu0 %v754, 96
  %v5710 = vpop.permute.xlu0 %5709
  %5711 = vrot.lane.b32.xlu0 %v755, 96
  %v5712 = vpop.permute.xlu0 %5711
  %v5716 = vsel %vm3685, %v5452, 0
  %v5719 = vsel %vm3685, %v5453, 0
  %5721 = vmatprep.subr.bf16.mxu0 0
  %5722 = vmatpush1.bf16.msra.mxu0 %v5710
  %5723 = vmatprep.subr.bf16.mxu0 0
  %5724 = vmatpush1.bf16.msra.mxu0 %v5712
  %5725 = vmatprep.subr.bf16.mxu0 0
  %5726 = vmatpush1.bf16.msra.mxu0 0
  %5727 = vmatprep.subr.bf16.mxu0 0
  %5728 = vmatpush1.bf16.msra.mxu0 0
  %5729 = vmatprep.subr.bf16.mxu0 0
  %5730 = vmatpush1.bf16.msra.mxu0 0
  %5731 = vmatprep.subr.bf16.mxu0 0
  %5732 = vmatpush1.bf16.msra.mxu0 0
  %5733 = vmatprep.subr.bf16.mxu0 0
  %5734 = vmatpush1.bf16.msra.mxu0 0
  %5735 = vmatprep.subr.bf16.mxu0 0
  %5736 = vmatpush1.bf16.msra.mxu0 0
  %5737 = vmatprep.subr.bf16.mxu0 0
  %5738 = vmatpush1.bf16.msra.mxu0 0
  %5739 = vmatprep.subr.bf16.mxu0 0
  %5740 = vmatpush1.bf16.msra.mxu0 0
  %5741 = vmatprep.subr.bf16.mxu0 0
  %5742 = vmatpush1.bf16.msra.mxu0 0
  %5743 = vmatprep.subr.bf16.mxu0 0
  %5744 = vmatpush1.bf16.msra.mxu0 0
  %5745 = vmatprep.subr.bf16.mxu0 0
  %5746 = vmatpush1.bf16.msra.mxu0 0
  %5747 = vmatprep.subr.bf16.mxu0 0
  %5748 = vmatpush1.bf16.msra.mxu0 0
  %5749 = vmatprep.subr.bf16.mxu0 0
  %5750 = vmatpush1.bf16.msra.mxu0 0
  %5751 = vmatprep.subr.bf16.mxu0 0
  %5752 = vmatpush1.bf16.msra.mxu0 0
  %5753 = vmatprep.mubr.bf16.mxu0 0
  %5754 = vmatmul.mubr.bf16.gmra.mrb[0].mxu0 %v5716
  %v5755 = vpop.f32.mrb[0].mxu0
  %v5756 = vadd.f32 0.0, %v5755
  %v5757 = vpop.f32.mrb[0].mxu0
  %v5758 = vpop.f32.mrb[0].mxu0
  %v5759 = vadd.f32 0.0, %v5758
  %v5760 = vpop.f32.mrb[0].mxu0
  %5761 = vmatprep.mubr.bf16.mxu0 0
  %5762 = vmatmul.mubr.bf16.gmra.mrb[0].mxu0 %v5719
  %v5763 = vpop.f32.mrb[0].mxu0
  %v5764 = vadd.f32 0.0, %v5763
  %v5765 = vpop.f32.mrb[0].mxu0
  %v5766 = vpop.f32.mrb[0].mxu0
  %v5767 = vadd.f32 0.0, %v5766
  %v5768 = vpop.f32.mrb[0].mxu0
  %5769 = vdwg.mxu0
  %5770 = vrot.lane.b32.xlu0 %v756, 96
  %v5771 = vpop.permute.xlu0 %5770
  %5772 = vrot.lane.b32.xlu0 %v757, 96
  %v5773 = vpop.permute.xlu0 %5772
  %v5777 = vsel %vm3685, %v5454, 0
  %v5780 = vsel %vm3685, %v5455, 0
  %5782 = vmatprep.subr.bf16.mxu0 0
  %5783 = vmatpush1.bf16.msra.mxu0 %v5771
  %5784 = vmatprep.subr.bf16.mxu0 0
  %5785 = vmatpush1.bf16.msra.mxu0 %v5773
  %5786 = vmatprep.subr.bf16.mxu0 0
  %5787 = vmatpush1.bf16.msra.mxu0 0
  %5788 = vmatprep.subr.bf16.mxu0 0
  %5789 = vmatpush1.bf16.msra.mxu0 0
  %5790 = vmatprep.subr.bf16.mxu0 0
  %5791 = vmatpush1.bf16.msra.mxu0 0
  %5792 = vmatprep.subr.bf16.mxu0 0
  %5793 = vmatpush1.bf16.msra.mxu0 0
  %5794 = vmatprep.subr.bf16.mxu0 0
  %5795 = vmatpush1.bf16.msra.mxu0 0
  %5796 = vmatprep.subr.bf16.mxu0 0
  %5797 = vmatpush1.bf16.msra.mxu0 0
  %5798 = vmatprep.subr.bf16.mxu0 0
  %5799 = vmatpush1.bf16.msra.mxu0 0
  %5800 = vmatprep.subr.bf16.mxu0 0
  %5801 = vmatpush1.bf16.msra.mxu0 0
  %5802 = vmatprep.subr.bf16.mxu0 0
  %5803 = vmatpush1.bf16.msra.mxu0 0
  %5804 = vmatprep.subr.bf16.mxu0 0
  %5805 = vmatpush1.bf16.msra.mxu0 0
  %5806 = vmatprep.subr.bf16.mxu0 0
  %5807 = vmatpush1.bf16.msra.mxu0 0
  %5808 = vmatprep.subr.bf16.mxu0 0
  %5809 = vmatpush1.bf16.msra.mxu0 0
  %5810 = vmatprep.subr.bf16.mxu0 0
  %5811 = vmatpush1.bf16.msra.mxu0 0
  %5812 = vmatprep.subr.bf16.mxu0 0
  %5813 = vmatpush1.bf16.msra.mxu0 0
  %5814 = vmatprep.mubr.bf16.mxu0 0
  %5815 = vmatmul.mubr.bf16.gmra.mrb[0].mxu0 %v5777
  %v5816 = vpop.f32.mrb[0].mxu0
  %v5817 = vadd.f32 0.0, %v5816
  %v5818 = vpop.f32.mrb[0].mxu0
  %v5819 = vpop.f32.mrb[0].mxu0
  %v5820 = vadd.f32 0.0, %v5819
  %v5821 = vpop.f32.mrb[0].mxu0
  %5822 = vmatprep.mubr.bf16.mxu0 0
  %5823 = vmatmul.mubr.bf16.gmra.mrb[0].mxu0 %v5780
  %v5824 = vpop.f32.mrb[0].mxu0
  %v5825 = vadd.f32 0.0, %v5824
  %v5826 = vpop.f32.mrb[0].mxu0
  %v5827 = vpop.f32.mrb[0].mxu0
  %v5828 = vadd.f32 0.0, %v5827
  %v5829 = vpop.f32.mrb[0].mxu0
  %5830 = vdwg.mxu0
  %5831 = vrot.lane.b32.xlu0 %v758, 96
  %v5832 = vpop.permute.xlu0 %5831
  %5833 = vrot.lane.b32.xlu0 %v759, 96
  %v5834 = vpop.permute.xlu0 %5833
  %v5838 = vsel %vm3685, %v5456, 0
  %v5841 = vsel %vm3685, %v5457, 0
  %5843 = vmatprep.subr.bf16.mxu0 0
  %5844 = vmatpush1.bf16.msra.mxu0 %v5832
  %5845 = vmatprep.subr.bf16.mxu0 0
  %5846 = vmatpush1.bf16.msra.mxu0 %v5834
  %5847 = vmatprep.subr.bf16.mxu0 0
  %5848 = vmatpush1.bf16.msra.mxu0 0
  %5849 = vmatprep.subr.bf16.mxu0 0
  %5850 = vmatpush1.bf16.msra.mxu0 0
  %5851 = vmatprep.subr.bf16.mxu0 0
  %5852 = vmatpush1.bf16.msra.mxu0 0
  %5853 = vmatprep.subr.bf16.mxu0 0
  %5854 = vmatpush1.bf16.msra.mxu0 0
  %5855 = vmatprep.subr.bf16.mxu0 0
  %5856 = vmatpush1.bf16.msra.mxu0 0
  %5857 = vmatprep.subr.bf16.mxu0 0
  %5858 = vmatpush1.bf16.msra.mxu0 0
  %5859 = vmatprep.subr.bf16.mxu0 0
  %5860 = vmatpush1.bf16.msra.mxu0 0
  %5861 = vmatprep.subr.bf16.mxu0 0
  %5862 = vmatpush1.bf16.msra.mxu0 0
  %5863 = vmatprep.subr.bf16.mxu0 0
  %5864 = vmatpush1.bf16.msra.mxu0 0
  %5865 = vmatprep.subr.bf16.mxu0 0
  %5866 = vmatpush1.bf16.msra.mxu0 0
  %5867 = vmatprep.subr.bf16.mxu0 0
  %5868 = vmatpush1.bf16.msra.mxu0 0
  %5869 = vmatprep.subr.bf16.mxu0 0
  %5870 = vmatpush1.bf16.msra.mxu0 0
  %5871 = vmatprep.subr.bf16.mxu0 0
  %5872 = vmatpush1.bf16.msra.mxu0 0
  %5873 = vmatprep.subr.bf16.mxu0 0
  %5874 = vmatpush1.bf16.msra.mxu0 0
  %5875 = vmatprep.mubr.bf16.mxu0 0
  %5876 = vmatmul.mubr.bf16.gmra.mrb[0].mxu0 %v5838
  %v5877 = vpop.f32.mrb[0].mxu0
  %v5878 = vadd.f32 0.0, %v5877
  %v5879 = vpop.f32.mrb[0].mxu0
  %v5880 = vpop.f32.mrb[0].mxu0
  %v5881 = vadd.f32 0.0, %v5880
  %v5882 = vpop.f32.mrb[0].mxu0
  %5883 = vmatprep.mubr.bf16.mxu0 0
  %5884 = vmatmul.mubr.bf16.gmra.mrb[0].mxu0 %v5841
  %v5885 = vpop.f32.mrb[0].mxu0
  %v5886 = vadd.f32 0.0, %v5885
  %v5887 = vpop.f32.mrb[0].mxu0
  %v5888 = vpop.f32.mrb[0].mxu0
  %v5889 = vadd.f32 0.0, %v5888
  %v5890 = vpop.f32.mrb[0].mxu0
  %5891 = vdwg.mxu0
  %5892 = vrot.lane.b32.xlu0 %v760, 96
  %v5893 = vpop.permute.xlu0 %5892
  %5894 = vrot.lane.b32.xlu0 %v761, 96
  %v5895 = vpop.permute.xlu0 %5894
  %v5899 = vsel %vm3685, %v5458, 0
  %v5902 = vsel %vm3685, %v5459, 0
  %5904 = vmatprep.subr.bf16.mxu0 0
  %5905 = vmatpush1.bf16.msra.mxu0 %v5893
  %5906 = vmatprep.subr.bf16.mxu0 0
  %5907 = vmatpush1.bf16.msra.mxu0 %v5895
  %5908 = vmatprep.subr.bf16.mxu0 0
  %5909 = vmatpush1.bf16.msra.mxu0 0
  %5910 = vmatprep.subr.bf16.mxu0 0
  %5911 = vmatpush1.bf16.msra.mxu0 0
  %5912 = vmatprep.subr.bf16.mxu0 0
  %5913 = vmatpush1.bf16.msra.mxu0 0
  %5914 = vmatprep.subr.bf16.mxu0 0
  %5915 = vmatpush1.bf16.msra.mxu0 0
  %5916 = vmatprep.subr.bf16.mxu0 0
  %5917 = vmatpush1.bf16.msra.mxu0 0
  %5918 = vmatprep.subr.bf16.mxu0 0
  %5919 = vmatpush1.bf16.msra.mxu0 0
  %5920 = vmatprep.subr.bf16.mxu0 0
  %5921 = vmatpush1.bf16.msra.mxu0 0
  %5922 = vmatprep.subr.bf16.mxu0 0
  %5923 = vmatpush1.bf16.msra.mxu0 0
  %5924 = vmatprep.subr.bf16.mxu0 0
  %5925 = vmatpush1.bf16.msra.mxu0 0
  %5926 = vmatprep.subr.bf16.mxu0 0
  %5927 = vmatpush1.bf16.msra.mxu0 0
  %5928 = vmatprep.subr.bf16.mxu0 0
  %5929 = vmatpush1.bf16.msra.mxu0 0
  %5930 = vmatprep.subr.bf16.mxu0 0
  %5931 = vmatpush1.bf16.msra.mxu0 0
  %5932 = vmatprep.subr.bf16.mxu0 0
  %5933 = vmatpush1.bf16.msra.mxu0 0
  %5934 = vmatprep.subr.bf16.mxu0 0
  %5935 = vmatpush1.bf16.msra.mxu0 0
  %5936 = vmatprep.mubr.bf16.mxu0 0
  %5937 = vmatmul.mubr.bf16.gmra.mrb[0].mxu0 %v5899
  %v5938 = vpop.f32.mrb[0].mxu0
  %v5939 = vadd.f32 0.0, %v5938
  %v5940 = vpop.f32.mrb[0].mxu0
  %v5941 = vpop.f32.mrb[0].mxu0
  %v5942 = vadd.f32 0.0, %v5941
  %v5943 = vpop.f32.mrb[0].mxu0
  %5944 = vmatprep.mubr.bf16.mxu0 0
  %5945 = vmatmul.mubr.bf16.gmra.mrb[0].mxu0 %v5902
  %v5946 = vpop.f32.mrb[0].mxu0
  %v5947 = vadd.f32 0.0, %v5946
  %v5948 = vpop.f32.mrb[0].mxu0
  %v5949 = vpop.f32.mrb[0].mxu0
  %v5950 = vadd.f32 0.0, %v5949
  %v5951 = vpop.f32.mrb[0].mxu0
  %5952 = vdwg.mxu0
  %5953 = vrot.lane.b32.xlu0 %v762, 96
  %v5954 = vpop.permute.xlu0 %5953
  %5955 = vrot.lane.b32.xlu0 %v763, 96
  %v5956 = vpop.permute.xlu0 %5955
  %v5960 = vsel %vm3685, %v5460, 0
  %v5963 = vsel %vm3685, %v5461, 0
  %5965 = vmatprep.subr.bf16.mxu0 0
  %5966 = vmatpush1.bf16.msra.mxu0 %v5954
  %5967 = vmatprep.subr.bf16.mxu0 0
  %5968 = vmatpush1.bf16.msra.mxu0 %v5956
  %5969 = vmatprep.subr.bf16.mxu0 0
  %5970 = vmatpush1.bf16.msra.mxu0 0
  %5971 = vmatprep.subr.bf16.mxu0 0
  %5972 = vmatpush1.bf16.msra.mxu0 0
  %5973 = vmatprep.subr.bf16.mxu0 0
  %5974 = vmatpush1.bf16.msra.mxu0 0
  %5975 = vmatprep.subr.bf16.mxu0 0
  %5976 = vmatpush1.bf16.msra.mxu0 0
  %5977 = vmatprep.subr.bf16.mxu0 0
  %5978 = vmatpush1.bf16.msra.mxu0 0
  %5979 = vmatprep.subr.bf16.mxu0 0
  %5980 = vmatpush1.bf16.msra.mxu0 0
  %5981 = vmatprep.subr.bf16.mxu0 0
  %5982 = vmatpush1.bf16.msra.mxu0 0
  %5983 = vmatprep.subr.bf16.mxu0 0
  %5984 = vmatpush1.bf16.msra.mxu0 0
  %5985 = vmatprep.subr.bf16.mxu0 0
  %5986 = vmatpush1.bf16.msra.mxu0 0
  %5987 = vmatprep.subr.bf16.mxu0 0
  %5988 = vmatpush1.bf16.msra.mxu0 0
  %5989 = vmatprep.subr.bf16.mxu0 0
  %5990 = vmatpush1.bf16.msra.mxu0 0
  %5991 = vmatprep.subr.bf16.mxu0 0
  %5992 = vmatpush1.bf16.msra.mxu0 0
  %5993 = vmatprep.subr.bf16.mxu0 0
  %5994 = vmatpush1.bf16.msra.mxu0 0
  %5995 = vmatprep.subr.bf16.mxu0 0
  %5996 = vmatpush1.bf16.msra.mxu0 0
  %5997 = vmatprep.mubr.bf16.mxu0 0
  %5998 = vmatmul.mubr.bf16.gmra.mrb[0].mxu0 %v5960
  %v5999 = vpop.f32.mrb[0].mxu0
  %v6000 = vadd.f32 0.0, %v5999
  %v6001 = vpop.f32.mrb[0].mxu0
  %v6002 = vpop.f32.mrb[0].mxu0
  %v6003 = vadd.f32 0.0, %v6002
  %v6004 = vpop.f32.mrb[0].mxu0
  %6005 = vmatprep.mubr.bf16.mxu0 0
  %6006 = vmatmul.mubr.bf16.gmra.mrb[0].mxu0 %v5963
  %v6007 = vpop.f32.mrb[0].mxu0
  %v6008 = vadd.f32 0.0, %v6007
  %v6009 = vpop.f32.mrb[0].mxu0
  %v6010 = vpop.f32.mrb[0].mxu0
  %v6011 = vadd.f32 0.0, %v6010
  %v6012 = vpop.f32.mrb[0].mxu0
  %6013 = vdwg.mxu0
  %6014 = vrot.lane.b32.xlu0 %v764, 96
  %v6015 = vpop.permute.xlu0 %6014
  %6016 = vrot.lane.b32.xlu0 %v765, 96
  %v6017 = vpop.permute.xlu0 %6016
  %v6021 = vsel %vm3685, %v5462, 0
  %v6024 = vsel %vm3685, %v5463, 0
  %6026 = vmatprep.subr.bf16.mxu0 0
  %6027 = vmatpush1.bf16.msra.mxu0 %v6015
  %6028 = vmatprep.subr.bf16.mxu0 0
  %6029 = vmatpush1.bf16.msra.mxu0 %v6017
  %6030 = vmatprep.subr.bf16.mxu0 0
  %6031 = vmatpush1.bf16.msra.mxu0 0
  %6032 = vmatprep.subr.bf16.mxu0 0
  %6033 = vmatpush1.bf16.msra.mxu0 0
  %6034 = vmatprep.subr.bf16.mxu0 0
  %6035 = vmatpush1.bf16.msra.mxu0 0
  %6036 = vmatprep.subr.bf16.mxu0 0
  %6037 = vmatpush1.bf16.msra.mxu0 0
  %6038 = vmatprep.subr.bf16.mxu0 0
  %6039 = vmatpush1.bf16.msra.mxu0 0
  %6040 = vmatprep.subr.bf16.mxu0 0
  %6041 = vmatpush1.bf16.msra.mxu0 0
  %6042 = vmatprep.subr.bf16.mxu0 0
  %6043 = vmatpush1.bf16.msra.mxu0 0
  %6044 = vmatprep.subr.bf16.mxu0 0
  %6045 = vmatpush1.bf16.msra.mxu0 0
  %6046 = vmatprep.subr.bf16.mxu0 0
  %6047 = vmatpush1.bf16.msra.mxu0 0
  %6048 = vmatprep.subr.bf16.mxu0 0
  %6049 = vmatpush1.bf16.msra.mxu0 0
  %6050 = vmatprep.subr.bf16.mxu0 0
  %6051 = vmatpush1.bf16.msra.mxu0 0
  %6052 = vmatprep.subr.bf16.mxu0 0
  %6053 = vmatpush1.bf16.msra.mxu0 0
  %6054 = vmatprep.subr.bf16.mxu0 0
  %6055 = vmatpush1.bf16.msra.mxu0 0
  %6056 = vmatprep.subr.bf16.mxu0 0
  %6057 = vmatpush1.bf16.msra.mxu0 0
  %6058 = vmatprep.mubr.bf16.mxu0 0
  %6059 = vmatmul.mubr.bf16.gmra.mrb[0].mxu0 %v6021
  %v6060 = vpop.f32.mrb[0].mxu0
  %v6061 = vadd.f32 0.0, %v6060
  %v6062 = vpop.f32.mrb[0].mxu0
  %v6063 = vpop.f32.mrb[0].mxu0
  %v6064 = vadd.f32 0.0, %v6063
  %v6065 = vpop.f32.mrb[0].mxu0
  %6066 = vmatprep.mubr.bf16.mxu0 0
  %6067 = vmatmul.mubr.bf16.gmra.mrb[0].mxu0 %v6024
  %v6068 = vpop.f32.mrb[0].mxu0
  %v6069 = vadd.f32 0.0, %v6068
  %v6070 = vpop.f32.mrb[0].mxu0
  %v6071 = vpop.f32.mrb[0].mxu0
  %v6072 = vadd.f32 0.0, %v6071
  %v6073 = vpop.f32.mrb[0].mxu0
  %6074 = vdwg.mxu0
  %6075 = vrot.lane.b32.xlu0 %v766, 96
  %v6076 = vpop.permute.xlu0 %6075
  %6077 = vrot.lane.b32.xlu0 %v767, 96
  %v6078 = vpop.permute.xlu0 %6077
  %v6082 = vsel %vm3685, %v5464, 0
  %v6085 = vsel %vm3685, %v5465, 0
  %6087 = vmatprep.subr.bf16.mxu0 0
  %6088 = vmatpush1.bf16.msra.mxu0 %v6076
  %6089 = vmatprep.subr.bf16.mxu0 0
  %6090 = vmatpush1.bf16.msra.mxu0 %v6078
  %6091 = vmatprep.subr.bf16.mxu0 0
  %6092 = vmatpush1.bf16.msra.mxu0 0
  %6093 = vmatprep.subr.bf16.mxu0 0
  %6094 = vmatpush1.bf16.msra.mxu0 0
  %6095 = vmatprep.subr.bf16.mxu0 0
  %6096 = vmatpush1.bf16.msra.mxu0 0
  %6097 = vmatprep.subr.bf16.mxu0 0
  %6098 = vmatpush1.bf16.msra.mxu0 0
  %6099 = vmatprep.subr.bf16.mxu0 0
  %6100 = vmatpush1.bf16.msra.mxu0 0
  %6101 = vmatprep.subr.bf16.mxu0 0
  %6102 = vmatpush1.bf16.msra.mxu0 0
  %6103 = vmatprep.subr.bf16.mxu0 0
  %6104 = vmatpush1.bf16.msra.mxu0 0
  %6105 = vmatprep.subr.bf16.mxu0 0
  %6106 = vmatpush1.bf16.msra.mxu0 0
  %6107 = vmatprep.subr.bf16.mxu0 0
  %6108 = vmatpush1.bf16.msra.mxu0 0
  %6109 = vmatprep.subr.bf16.mxu0 0
  %6110 = vmatpush1.bf16.msra.mxu0 0
  %6111 = vmatprep.subr.bf16.mxu0 0
  %6112 = vmatpush1.bf16.msra.mxu0 0
  %6113 = vmatprep.subr.bf16.mxu0 0
  %6114 = vmatpush1.bf16.msra.mxu0 0
  %6115 = vmatprep.subr.bf16.mxu0 0
  %6116 = vmatpush1.bf16.msra.mxu0 0
  %6117 = vmatprep.subr.bf16.mxu0 0
  %6118 = vmatpush1.bf16.msra.mxu0 0
  %6119 = vmatprep.mubr.bf16.mxu0 0
  %6120 = vmatmul.mubr.bf16.gmra.mrb[0].mxu0 %v6082
  %v6121 = vpop.f32.mrb[0].mxu0
  %v6122 = vadd.f32 0.0, %v6121
  %v6123 = vpop.f32.mrb[0].mxu0
  %v6124 = vpop.f32.mrb[0].mxu0
  %v6125 = vadd.f32 0.0, %v6124
  %v6126 = vpop.f32.mrb[0].mxu0
  %6127 = vmatprep.mubr.bf16.mxu0 0
  %6128 = vmatmul.mubr.bf16.gmra.mrb[0].mxu0 %v6085
  %v6129 = vpop.f32.mrb[0].mxu0
  %v6130 = vadd.f32 0.0, %v6129
  %v6131 = vpop.f32.mrb[0].mxu0
  %v6132 = vpop.f32.mrb[0].mxu0
  %v6133 = vadd.f32 0.0, %v6132
  %v6134 = vpop.f32.mrb[0].mxu0
  %6135 = vdwg.mxu0
  %6136 = vrot.lane.b32.xlu0 %v768, 96
  %v6137 = vpop.permute.xlu0 %6136
  %6138 = vrot.lane.b32.xlu0 %v769, 96
  %v6139 = vpop.permute.xlu0 %6138
  %v6143 = vsel %vm3685, %v5466, 0
  %v6146 = vsel %vm3685, %v5467, 0
  %6148 = vmatprep.subr.bf16.mxu0 0
  %6149 = vmatpush1.bf16.msra.mxu0 %v6137
  %6150 = vmatprep.subr.bf16.mxu0 0
  %6151 = vmatpush1.bf16.msra.mxu0 %v6139
  %6152 = vmatprep.subr.bf16.mxu0 0
  %6153 = vmatpush1.bf16.msra.mxu0 0
  %6154 = vmatprep.subr.bf16.mxu0 0
  %6155 = vmatpush1.bf16.msra.mxu0 0
  %6156 = vmatprep.subr.bf16.mxu0 0
  %6157 = vmatpush1.bf16.msra.mxu0 0
  %6158 = vmatprep.subr.bf16.mxu0 0
  %6159 = vmatpush1.bf16.msra.mxu0 0
  %6160 = vmatprep.subr.bf16.mxu0 0
  %6161 = vmatpush1.bf16.msra.mxu0 0
  %6162 = vmatprep.subr.bf16.mxu0 0
  %6163 = vmatpush1.bf16.msra.mxu0 0
  %6164 = vmatprep.subr.bf16.mxu0 0
  %6165 = vmatpush1.bf16.msra.mxu0 0
  %6166 = vmatprep.subr.bf16.mxu0 0
  %6167 = vmatpush1.bf16.msra.mxu0 0
  %6168 = vmatprep.subr.bf16.mxu0 0
  %6169 = vmatpush1.bf16.msra.mxu0 0
  %6170 = vmatprep.subr.bf16.mxu0 0
  %6171 = vmatpush1.bf16.msra.mxu0 0
  %6172 = vmatprep.subr.bf16.mxu0 0
  %6173 = vmatpush1.bf16.msra.mxu0 0
  %6174 = vmatprep.subr.bf16.mxu0 0
  %6175 = vmatpush1.bf16.msra.mxu0 0
  %6176 = vmatprep.subr.bf16.mxu0 0
  %6177 = vmatpush1.bf16.msra.mxu0 0
  %6178 = vmatprep.subr.bf16.mxu0 0
  %6179 = vmatpush1.bf16.msra.mxu0 0
  %6180 = vmatprep.mubr.bf16.mxu0 0
  %6181 = vmatmul.mubr.bf16.gmra.mrb[0].mxu0 %v6143
  %v6182 = vpop.f32.mrb[0].mxu0
  %v6183 = vadd.f32 0.0, %v6182
  %v6184 = vpop.f32.mrb[0].mxu0
  %v6185 = vpop.f32.mrb[0].mxu0
  %v6186 = vadd.f32 0.0, %v6185
  %v6187 = vpop.f32.mrb[0].mxu0
  %6188 = vmatprep.mubr.bf16.mxu0 0
  %6189 = vmatmul.mubr.bf16.gmra.mrb[0].mxu0 %v6146
  %v6190 = vpop.f32.mrb[0].mxu0
  %v6191 = vadd.f32 0.0, %v6190
  %v6192 = vpop.f32.mrb[0].mxu0
  %v6193 = vpop.f32.mrb[0].mxu0
  %v6194 = vadd.f32 0.0, %v6193
  %v6195 = vpop.f32.mrb[0].mxu0
  %6196 = vdwg.mxu0
  %6197 = vrot.lane.b32.xlu0 %v770, 96
  %v6198 = vpop.permute.xlu0 %6197
  %6199 = vrot.lane.b32.xlu0 %v771, 96
  %v6200 = vpop.permute.xlu0 %6199
  %v6204 = vsel %vm3685, %v5468, 0
  %v6207 = vsel %vm3685, %v5469, 0
  %6209 = vmatprep.subr.bf16.mxu0 0
  %6210 = vmatpush1.bf16.msra.mxu0 %v6198
  %6211 = vmatprep.subr.bf16.mxu0 0
  %6212 = vmatpush1.bf16.msra.mxu0 %v6200
  %6213 = vmatprep.subr.bf16.mxu0 0
  %6214 = vmatpush1.bf16.msra.mxu0 0
  %6215 = vmatprep.subr.bf16.mxu0 0
  %6216 = vmatpush1.bf16.msra.mxu0 0
  %6217 = vmatprep.subr.bf16.mxu0 0
  %6218 = vmatpush1.bf16.msra.mxu0 0
  %6219 = vmatprep.subr.bf16.mxu0 0
  %6220 = vmatpush1.bf16.msra.mxu0 0
  %6221 = vmatprep.subr.bf16.mxu0 0
  %6222 = vmatpush1.bf16.msra.mxu0 0
  %6223 = vmatprep.subr.bf16.mxu0 0
  %6224 = vmatpush1.bf16.msra.mxu0 0
  %6225 = vmatprep.subr.bf16.mxu0 0
  %6226 = vmatpush1.bf16.msra.mxu0 0
  %6227 = vmatprep.subr.bf16.mxu0 0
  %6228 = vmatpush1.bf16.msra.mxu0 0
  %6229 = vmatprep.subr.bf16.mxu0 0
  %6230 = vmatpush1.bf16.msra.mxu0 0
  %6231 = vmatprep.subr.bf16.mxu0 0
  %6232 = vmatpush1.bf16.msra.mxu0 0
  %6233 = vmatprep.subr.bf16.mxu0 0
  %6234 = vmatpush1.bf16.msra.mxu0 0
  %6235 = vmatprep.subr.bf16.mxu0 0
  %6236 = vmatpush1.bf16.msra.mxu0 0
  %6237 = vmatprep.subr.bf16.mxu0 0
  %6238 = vmatpush1.bf16.msra.mxu0 0
  %6239 = vmatprep.subr.bf16.mxu0 0
  %6240 = vmatpush1.bf16.msra.mxu0 0
  %6241 = vmatprep.mubr.bf16.mxu0 0
  %6242 = vmatmul.mubr.bf16.gmra.mrb[0].mxu0 %v6204
  %v6243 = vpop.f32.mrb[0].mxu0
  %v6244 = vadd.f32 0.0, %v6243
  %v6245 = vpop.f32.mrb[0].mxu0
  %v6246 = vpop.f32.mrb[0].mxu0
  %v6247 = vadd.f32 0.0, %v6246
  %v6248 = vpop.f32.mrb[0].mxu0
  %6249 = vmatprep.mubr.bf16.mxu0 0
  %6250 = vmatmul.mubr.bf16.gmra.mrb[0].mxu0 %v6207
  %v6251 = vpop.f32.mrb[0].mxu0
  %v6252 = vadd.f32 0.0, %v6251
  %v6253 = vpop.f32.mrb[0].mxu0
  %v6254 = vpop.f32.mrb[0].mxu0
  %v6255 = vadd.f32 0.0, %v6254
  %v6256 = vpop.f32.mrb[0].mxu0
  %6257 = vdwg.mxu0
  %6258 = vrot.lane.b32.xlu0 %v772, 96
  %v6259 = vpop.permute.xlu0 %6258
  %6260 = vrot.lane.b32.xlu0 %v773, 96
  %v6261 = vpop.permute.xlu0 %6260
  %v6265 = vsel %vm3685, %v5470, 0
  %v6268 = vsel %vm3685, %v5471, 0
  %6270 = vmatprep.subr.bf16.mxu0 0
  %6271 = vmatpush1.bf16.msra.mxu0 %v6259
  %6272 = vmatprep.subr.bf16.mxu0 0
  %6273 = vmatpush1.bf16.msra.mxu0 %v6261
  %6274 = vmatprep.subr.bf16.mxu0 0
  %6275 = vmatpush1.bf16.msra.mxu0 0
  %6276 = vmatprep.subr.bf16.mxu0 0
  %6277 = vmatpush1.bf16.msra.mxu0 0
  %6278 = vmatprep.subr.bf16.mxu0 0
  %6279 = vmatpush1.bf16.msra.mxu0 0
  %6280 = vmatprep.subr.bf16.mxu0 0
  %6281 = vmatpush1.bf16.msra.mxu0 0
  %6282 = vmatprep.subr.bf16.mxu0 0
  %6283 = vmatpush1.bf16.msra.mxu0 0
  %6284 = vmatprep.subr.bf16.mxu0 0
  %6285 = vmatpush1.bf16.msra.mxu0 0
  %6286 = vmatprep.subr.bf16.mxu0 0
  %6287 = vmatpush1.bf16.msra.mxu0 0
  %6288 = vmatprep.subr.bf16.mxu0 0
  %6289 = vmatpush1.bf16.msra.mxu0 0
  %6290 = vmatprep.subr.bf16.mxu0 0
  %6291 = vmatpush1.bf16.msra.mxu0 0
  %6292 = vmatprep.subr.bf16.mxu0 0
  %6293 = vmatpush1.bf16.msra.mxu0 0
  %6294 = vmatprep.subr.bf16.mxu0 0
  %6295 = vmatpush1.bf16.msra.mxu0 0
  %6296 = vmatprep.subr.bf16.mxu0 0
  %6297 = vmatpush1.bf16.msra.mxu0 0
  %6298 = vmatprep.subr.bf16.mxu0 0
  %6299 = vmatpush1.bf16.msra.mxu0 0
  %6300 = vmatprep.subr.bf16.mxu0 0
  %6301 = vmatpush1.bf16.msra.mxu0 0
  %6302 = vmatprep.mubr.bf16.mxu0 0
  %6303 = vmatmul.mubr.bf16.gmra.mrb[0].mxu0 %v6265
  %v6304 = vpop.f32.mrb[0].mxu0
  %v6305 = vadd.f32 0.0, %v6304
  %v6306 = vpop.f32.mrb[0].mxu0
  %v6307 = vpop.f32.mrb[0].mxu0
  %v6308 = vadd.f32 0.0, %v6307
  %v6309 = vpop.f32.mrb[0].mxu0
  %6310 = vmatprep.mubr.bf16.mxu0 0
  %6311 = vmatmul.mubr.bf16.gmra.mrb[0].mxu0 %v6268
  %v6312 = vpop.f32.mrb[0].mxu0
  %v6313 = vadd.f32 0.0, %v6312
  %v6314 = vpop.f32.mrb[0].mxu0
  %v6315 = vpop.f32.mrb[0].mxu0
  %v6316 = vadd.f32 0.0, %v6315
  %v6317 = vpop.f32.mrb[0].mxu0
  %6318 = vdwg.mxu0
  %6319 = vrot.lane.b32.xlu0 %v774, 96
  %v6320 = vpop.permute.xlu0 %6319
  %6321 = vrot.lane.b32.xlu0 %v775, 96
  %v6322 = vpop.permute.xlu0 %6321
  %v6326 = vsel %vm3685, %v5472, 0
  %v6329 = vsel %vm3685, %v5473, 0
  %6331 = vmatprep.subr.bf16.mxu0 0
  %6332 = vmatpush1.bf16.msra.mxu0 %v6320
  %6333 = vmatprep.subr.bf16.mxu0 0
  %6334 = vmatpush1.bf16.msra.mxu0 %v6322
  %6335 = vmatprep.subr.bf16.mxu0 0
  %6336 = vmatpush1.bf16.msra.mxu0 0
  %6337 = vmatprep.subr.bf16.mxu0 0
  %6338 = vmatpush1.bf16.msra.mxu0 0
  %6339 = vmatprep.subr.bf16.mxu0 0
  %6340 = vmatpush1.bf16.msra.mxu0 0
  %6341 = vmatprep.subr.bf16.mxu0 0
  %6342 = vmatpush1.bf16.msra.mxu0 0
  %6343 = vmatprep.subr.bf16.mxu0 0
  %6344 = vmatpush1.bf16.msra.mxu0 0
  %6345 = vmatprep.subr.bf16.mxu0 0
  %6346 = vmatpush1.bf16.msra.mxu0 0
  %6347 = vmatprep.subr.bf16.mxu0 0
  %6348 = vmatpush1.bf16.msra.mxu0 0
  %6349 = vmatprep.subr.bf16.mxu0 0
  %6350 = vmatpush1.bf16.msra.mxu0 0
  %6351 = vmatprep.subr.bf16.mxu0 0
  %6352 = vmatpush1.bf16.msra.mxu0 0
  %6353 = vmatprep.subr.bf16.mxu0 0
  %6354 = vmatpush1.bf16.msra.mxu0 0
  %6355 = vmatprep.subr.bf16.mxu0 0
  %6356 = vmatpush1.bf16.msra.mxu0 0
  %6357 = vmatprep.subr.bf16.mxu0 0
  %6358 = vmatpush1.bf16.msra.mxu0 0
  %6359 = vmatprep.subr.bf16.mxu0 0
  %6360 = vmatpush1.bf16.msra.mxu0 0
  %6361 = vmatprep.subr.bf16.mxu0 0
  %6362 = vmatpush1.bf16.msra.mxu0 0
  %6363 = vmatprep.mubr.bf16.mxu0 0
  %6364 = vmatmul.mubr.bf16.gmra.mrb[0].mxu0 %v6326
  %v6365 = vpop.f32.mrb[0].mxu0
  %v6366 = vadd.f32 0.0, %v6365
  %v6367 = vpop.f32.mrb[0].mxu0
  %v6368 = vpop.f32.mrb[0].mxu0
  %v6369 = vadd.f32 0.0, %v6368
  %v6370 = vpop.f32.mrb[0].mxu0
  %6371 = vmatprep.mubr.bf16.mxu0 0
  %6372 = vmatmul.mubr.bf16.gmra.mrb[0].mxu0 %v6329
  %v6373 = vpop.f32.mrb[0].mxu0
  %v6374 = vadd.f32 0.0, %v6373
  %v6375 = vpop.f32.mrb[0].mxu0
  %v6376 = vpop.f32.mrb[0].mxu0
  %v6377 = vadd.f32 0.0, %v6376
  %v6378 = vpop.f32.mrb[0].mxu0
  %6379 = vdwg.mxu0
  %6380 = vrot.lane.b32.xlu0 %v776, 96
  %v6381 = vpop.permute.xlu0 %6380
  %6382 = vrot.lane.b32.xlu0 %v777, 96
  %v6383 = vpop.permute.xlu0 %6382
  %v6387 = vsel %vm3685, %v5474, 0
  %v6390 = vsel %vm3685, %v5475, 0
  %6392 = vmatprep.subr.bf16.mxu0 0
  %6393 = vmatpush1.bf16.msra.mxu0 %v6381
  %6394 = vmatprep.subr.bf16.mxu0 0
  %6395 = vmatpush1.bf16.msra.mxu0 %v6383
  %6396 = vmatprep.subr.bf16.mxu0 0
  %6397 = vmatpush1.bf16.msra.mxu0 0
  %6398 = vmatprep.subr.bf16.mxu0 0
  %6399 = vmatpush1.bf16.msra.mxu0 0
  %6400 = vmatprep.subr.bf16.mxu0 0
  %6401 = vmatpush1.bf16.msra.mxu0 0
  %6402 = vmatprep.subr.bf16.mxu0 0
  %6403 = vmatpush1.bf16.msra.mxu0 0
  %6404 = vmatprep.subr.bf16.mxu0 0
  %6405 = vmatpush1.bf16.msra.mxu0 0
  %6406 = vmatprep.subr.bf16.mxu0 0
  %6407 = vmatpush1.bf16.msra.mxu0 0
  %6408 = vmatprep.subr.bf16.mxu0 0
  %6409 = vmatpush1.bf16.msra.mxu0 0
  %6410 = vmatprep.subr.bf16.mxu0 0
  %6411 = vmatpush1.bf16.msra.mxu0 0
  %6412 = vmatprep.subr.bf16.mxu0 0
  %6413 = vmatpush1.bf16.msra.mxu0 0
  %6414 = vmatprep.subr.bf16.mxu0 0
  %6415 = vmatpush1.bf16.msra.mxu0 0
  %6416 = vmatprep.subr.bf16.mxu0 0
  %6417 = vmatpush1.bf16.msra.mxu0 0
  %6418 = vmatprep.subr.bf16.mxu0 0
  %6419 = vmatpush1.bf16.msra.mxu0 0
  %6420 = vmatprep.subr.bf16.mxu0 0
  %6421 = vmatpush1.bf16.msra.mxu0 0
  %6422 = vmatprep.subr.bf16.mxu0 0
  %6423 = vmatpush1.bf16.msra.mxu0 0
  %6424 = vmatprep.mubr.bf16.mxu0 0
  %6425 = vmatmul.mubr.bf16.gmra.mrb[0].mxu0 %v6387
  %v6426 = vpop.f32.mrb[0].mxu0
  %v6427 = vadd.f32 0.0, %v6426
  %v6428 = vpop.f32.mrb[0].mxu0
  %v6429 = vpop.f32.mrb[0].mxu0
  %v6430 = vadd.f32 0.0, %v6429
  %v6431 = vpop.f32.mrb[0].mxu0
  %6432 = vmatprep.mubr.bf16.mxu0 0
  %6433 = vmatmul.mubr.bf16.gmra.mrb[0].mxu0 %v6390
  %v6434 = vpop.f32.mrb[0].mxu0
  %v6435 = vadd.f32 0.0, %v6434
  %v6436 = vpop.f32.mrb[0].mxu0
  %v6437 = vpop.f32.mrb[0].mxu0
  %v6438 = vadd.f32 0.0, %v6437
  %v6439 = vpop.f32.mrb[0].mxu0
  %6440 = vdwg.mxu0
  %6441 = vrot.lane.b32.xlu0 %v778, 96
  %v6442 = vpop.permute.xlu0 %6441
  %6443 = vrot.lane.b32.xlu0 %v779, 96
  %v6444 = vpop.permute.xlu0 %6443
  %v6448 = vsel %vm3685, %v5476, 0
  %v6451 = vsel %vm3685, %v5477, 0
  %6453 = vmatprep.subr.bf16.mxu0 0
  %6454 = vmatpush1.bf16.msra.mxu0 %v6442
  %6455 = vmatprep.subr.bf16.mxu0 0
  %6456 = vmatpush1.bf16.msra.mxu0 %v6444
  %6457 = vmatprep.subr.bf16.mxu0 0
  %6458 = vmatpush1.bf16.msra.mxu0 0
  %6459 = vmatprep.subr.bf16.mxu0 0
  %6460 = vmatpush1.bf16.msra.mxu0 0
  %6461 = vmatprep.subr.bf16.mxu0 0
  %6462 = vmatpush1.bf16.msra.mxu0 0
  %6463 = vmatprep.subr.bf16.mxu0 0
  %6464 = vmatpush1.bf16.msra.mxu0 0
  %6465 = vmatprep.subr.bf16.mxu0 0
  %6466 = vmatpush1.bf16.msra.mxu0 0
  %6467 = vmatprep.subr.bf16.mxu0 0
  %6468 = vmatpush1.bf16.msra.mxu0 0
  %6469 = vmatprep.subr.bf16.mxu0 0
  %6470 = vmatpush1.bf16.msra.mxu0 0
  %6471 = vmatprep.subr.bf16.mxu0 0
  %6472 = vmatpush1.bf16.msra.mxu0 0
  %6473 = vmatprep.subr.bf16.mxu0 0
  %6474 = vmatpush1.bf16.msra.mxu0 0
  %6475 = vmatprep.subr.bf16.mxu0 0
  %6476 = vmatpush1.bf16.msra.mxu0 0
  %6477 = vmatprep.subr.bf16.mxu0 0
  %6478 = vmatpush1.bf16.msra.mxu0 0
  %6479 = vmatprep.subr.bf16.mxu0 0
  %6480 = vmatpush1.bf16.msra.mxu0 0
  %6481 = vmatprep.subr.bf16.mxu0 0
  %6482 = vmatpush1.bf16.msra.mxu0 0
  %6483 = vmatprep.subr.bf16.mxu0 0
  %6484 = vmatpush1.bf16.msra.mxu0 0
  %6485 = vmatprep.mubr.bf16.mxu0 0
  %6486 = vmatmul.mubr.bf16.gmra.mrb[0].mxu0 %v6448
  %v6487 = vpop.f32.mrb[0].mxu0
  %v6488 = vadd.f32 0.0, %v6487
  %v6489 = vpop.f32.mrb[0].mxu0
  %v6490 = vpop.f32.mrb[0].mxu0
  %v6491 = vadd.f32 0.0, %v6490
  %v6492 = vpop.f32.mrb[0].mxu0
  %6493 = vmatprep.mubr.bf16.mxu0 0
  %6494 = vmatmul.mubr.bf16.gmra.mrb[0].mxu0 %v6451
  %v6495 = vpop.f32.mrb[0].mxu0
  %v6496 = vadd.f32 0.0, %v6495
  %v6497 = vpop.f32.mrb[0].mxu0
  %v6498 = vpop.f32.mrb[0].mxu0
  %v6499 = vadd.f32 0.0, %v6498
  %v6500 = vpop.f32.mrb[0].mxu0
  %6501 = vdwg.mxu0
  %6502 = vrot.lane.b32.xlu0 %v780, 96
  %v6503 = vpop.permute.xlu0 %6502
  %6504 = vrot.lane.b32.xlu0 %v781, 96
  %v6505 = vpop.permute.xlu0 %6504
  %v6509 = vsel %vm3685, %v5478, 0
  %v6512 = vsel %vm3685, %v5479, 0
  %6514 = vmatprep.subr.bf16.mxu0 0
  %6515 = vmatpush1.bf16.msra.mxu0 %v6503
  %6516 = vmatprep.subr.bf16.mxu0 0
  %6517 = vmatpush1.bf16.msra.mxu0 %v6505
  %6518 = vmatprep.subr.bf16.mxu0 0
  %6519 = vmatpush1.bf16.msra.mxu0 0
  %6520 = vmatprep.subr.bf16.mxu0 0
  %6521 = vmatpush1.bf16.msra.mxu0 0
  %6522 = vmatprep.subr.bf16.mxu0 0
  %6523 = vmatpush1.bf16.msra.mxu0 0
  %6524 = vmatprep.subr.bf16.mxu0 0
  %6525 = vmatpush1.bf16.msra.mxu0 0
  %6526 = vmatprep.subr.bf16.mxu0 0
  %6527 = vmatpush1.bf16.msra.mxu0 0
  %6528 = vmatprep.subr.bf16.mxu0 0
  %6529 = vmatpush1.bf16.msra.mxu0 0
  %6530 = vmatprep.subr.bf16.mxu0 0
  %6531 = vmatpush1.bf16.msra.mxu0 0
  %6532 = vmatprep.subr.bf16.mxu0 0
  %6533 = vmatpush1.bf16.msra.mxu0 0
  %6534 = vmatprep.subr.bf16.mxu0 0
  %6535 = vmatpush1.bf16.msra.mxu0 0
  %6536 = vmatprep.subr.bf16.mxu0 0
  %6537 = vmatpush1.bf16.msra.mxu0 0
  %6538 = vmatprep.subr.bf16.mxu0 0
  %6539 = vmatpush1.bf16.msra.mxu0 0
  %6540 = vmatprep.subr.bf16.mxu0 0
  %6541 = vmatpush1.bf16.msra.mxu0 0
  %6542 = vmatprep.subr.bf16.mxu0 0
  %6543 = vmatpush1.bf16.msra.mxu0 0
  %6544 = vmatprep.subr.bf16.mxu0 0
  %6545 = vmatpush1.bf16.msra.mxu0 0
  %6546 = vmatprep.mubr.bf16.mxu0 0
  %6547 = vmatmul.mubr.bf16.gmra.mrb[0].mxu0 %v6509
  %v6548 = vpop.f32.mrb[0].mxu0
  %v6549 = vadd.f32 0.0, %v6548
  %v6550 = vpop.f32.mrb[0].mxu0
  %v6551 = vpop.f32.mrb[0].mxu0
  %v6552 = vadd.f32 0.0, %v6551
  %v6553 = vpop.f32.mrb[0].mxu0
  %6554 = vmatprep.mubr.bf16.mxu0 0
  %6555 = vmatmul.mubr.bf16.gmra.mrb[0].mxu0 %v6512
  %v6556 = vpop.f32.mrb[0].mxu0
  %v6557 = vadd.f32 0.0, %v6556
  %v6558 = vpop.f32.mrb[0].mxu0
  %v6559 = vpop.f32.mrb[0].mxu0
  %v6560 = vadd.f32 0.0, %v6559
  %v6561 = vpop.f32.mrb[0].mxu0
  %6562 = vdwg.mxu0
  %6563 = vrot.lane.b32.xlu0 %v782, 96
  %v6564 = vpop.permute.xlu0 %6563
  %6565 = vrot.lane.b32.xlu0 %v783, 96
  %v6566 = vpop.permute.xlu0 %6565
  %v6570 = vsel %vm3685, %v5480, 0
  %v6573 = vsel %vm3685, %v5481, 0
  %6575 = vmatprep.subr.bf16.mxu0 0
  %6576 = vmatpush1.bf16.msra.mxu0 %v6564
  %6577 = vmatprep.subr.bf16.mxu0 0
  %6578 = vmatpush1.bf16.msra.mxu0 %v6566
  %6579 = vmatprep.subr.bf16.mxu0 0
  %6580 = vmatpush1.bf16.msra.mxu0 0
  %6581 = vmatprep.subr.bf16.mxu0 0
  %6582 = vmatpush1.bf16.msra.mxu0 0
  %6583 = vmatprep.subr.bf16.mxu0 0
  %6584 = vmatpush1.bf16.msra.mxu0 0
  %6585 = vmatprep.subr.bf16.mxu0 0
  %6586 = vmatpush1.bf16.msra.mxu0 0
  %6587 = vmatprep.subr.bf16.mxu0 0
  %6588 = vmatpush1.bf16.msra.mxu0 0
  %6589 = vmatprep.subr.bf16.mxu0 0
  %6590 = vmatpush1.bf16.msra.mxu0 0
  %6591 = vmatprep.subr.bf16.mxu0 0
  %6592 = vmatpush1.bf16.msra.mxu0 0
  %6593 = vmatprep.subr.bf16.mxu0 0
  %6594 = vmatpush1.bf16.msra.mxu0 0
  %6595 = vmatprep.subr.bf16.mxu0 0
  %6596 = vmatpush1.bf16.msra.mxu0 0
  %6597 = vmatprep.subr.bf16.mxu0 0
  %6598 = vmatpush1.bf16.msra.mxu0 0
  %6599 = vmatprep.subr.bf16.mxu0 0
  %6600 = vmatpush1.bf16.msra.mxu0 0
  %6601 = vmatprep.subr.bf16.mxu0 0
  %6602 = vmatpush1.bf16.msra.mxu0 0
  %6603 = vmatprep.subr.bf16.mxu0 0
  %6604 = vmatpush1.bf16.msra.mxu0 0
  %6605 = vmatprep.subr.bf16.mxu0 0
  %6606 = vmatpush1.bf16.msra.mxu0 0
  %6607 = vmatprep.mubr.bf16.mxu0 0
  %6608 = vmatmul.mubr.bf16.gmra.mrb[0].mxu0 %v6570
  %v6609 = vpop.f32.mrb[0].mxu0
  %v6610 = vadd.f32 0.0, %v6609
  %v6611 = vpop.f32.mrb[0].mxu0
  %v6612 = vpop.f32.mrb[0].mxu0
  %v6613 = vadd.f32 0.0, %v6612
  %v6614 = vpop.f32.mrb[0].mxu0
  %6615 = vmatprep.mubr.bf16.mxu0 0
  %6616 = vmatmul.mubr.bf16.gmra.mrb[0].mxu0 %v6573
  %v6617 = vpop.f32.mrb[0].mxu0
  %v6618 = vadd.f32 0.0, %v6617
  %v6619 = vpop.f32.mrb[0].mxu0
  %v6620 = vpop.f32.mrb[0].mxu0
  %v6621 = vadd.f32 0.0, %v6620
  %v6622 = vpop.f32.mrb[0].mxu0
  %6623 = vdwg.mxu0
  %6624 = vrot.lane.b32.xlu0 %v784, 96
  %v6625 = vpop.permute.xlu0 %6624
  %6626 = vrot.lane.b32.xlu0 %v785, 96
  %v6627 = vpop.permute.xlu0 %6626
  %v6631 = vsel %vm3685, %v5482, 0
  %v6634 = vsel %vm3685, %v5483, 0
  %6636 = vmatprep.subr.bf16.mxu0 0
  %6637 = vmatpush1.bf16.msra.mxu0 %v6625
  %6638 = vmatprep.subr.bf16.mxu0 0
  %6639 = vmatpush1.bf16.msra.mxu0 %v6627
  %6640 = vmatprep.subr.bf16.mxu0 0
  %6641 = vmatpush1.bf16.msra.mxu0 0
  %6642 = vmatprep.subr.bf16.mxu0 0
  %6643 = vmatpush1.bf16.msra.mxu0 0
  %6644 = vmatprep.subr.bf16.mxu0 0
  %6645 = vmatpush1.bf16.msra.mxu0 0
  %6646 = vmatprep.subr.bf16.mxu0 0
  %6647 = vmatpush1.bf16.msra.mxu0 0
  %6648 = vmatprep.subr.bf16.mxu0 0
  %6649 = vmatpush1.bf16.msra.mxu0 0
  %6650 = vmatprep.subr.bf16.mxu0 0
  %6651 = vmatpush1.bf16.msra.mxu0 0
  %6652 = vmatprep.subr.bf16.mxu0 0
  %6653 = vmatpush1.bf16.msra.mxu0 0
  %6654 = vmatprep.subr.bf16.mxu0 0
  %6655 = vmatpush1.bf16.msra.mxu0 0
  %6656 = vmatprep.subr.bf16.mxu0 0
  %6657 = vmatpush1.bf16.msra.mxu0 0
  %6658 = vmatprep.subr.bf16.mxu0 0
  %6659 = vmatpush1.bf16.msra.mxu0 0
  %6660 = vmatprep.subr.bf16.mxu0 0
  %6661 = vmatpush1.bf16.msra.mxu0 0
  %6662 = vmatprep.subr.bf16.mxu0 0
  %6663 = vmatpush1.bf16.msra.mxu0 0
  %6664 = vmatprep.subr.bf16.mxu0 0
  %6665 = vmatpush1.bf16.msra.mxu0 0
  %6666 = vmatprep.subr.bf16.mxu0 0
  %6667 = vmatpush1.bf16.msra.mxu0 0
  %6668 = vmatprep.mubr.bf16.mxu0 0
  %6669 = vmatmul.mubr.bf16.gmra.mrb[0].mxu0 %v6631
  %v6670 = vpop.f32.mrb[0].mxu0
  %v6671 = vadd.f32 0.0, %v6670
  %v6672 = vpop.f32.mrb[0].mxu0
  %v6673 = vpop.f32.mrb[0].mxu0
  %v6674 = vadd.f32 0.0, %v6673
  %v6675 = vpop.f32.mrb[0].mxu0
  %6676 = vmatprep.mubr.bf16.mxu0 0
  %6677 = vmatmul.mubr.bf16.gmra.mrb[0].mxu0 %v6634
  %v6678 = vpop.f32.mrb[0].mxu0
  %v6679 = vadd.f32 0.0, %v6678
  %v6680 = vpop.f32.mrb[0].mxu0
  %v6681 = vpop.f32.mrb[0].mxu0
  %v6682 = vadd.f32 0.0, %v6681
  %v6683 = vpop.f32.mrb[0].mxu0
  %6684 = vdwg.mxu0
  %6685 = vrot.lane.b32.xlu0 %v786, 96
  %v6686 = vpop.permute.xlu0 %6685
  %6687 = vrot.lane.b32.xlu0 %v787, 96
  %v6688 = vpop.permute.xlu0 %6687
  %v6692 = vsel %vm3685, %v5484, 0
  %v6695 = vsel %vm3685, %v5485, 0
  %6697 = vmatprep.subr.bf16.mxu0 0
  %6698 = vmatpush1.bf16.msra.mxu0 %v6686
  %6699 = vmatprep.subr.bf16.mxu0 0
  %6700 = vmatpush1.bf16.msra.mxu0 %v6688
  %6701 = vmatprep.subr.bf16.mxu0 0
  %6702 = vmatpush1.bf16.msra.mxu0 0
  %6703 = vmatprep.subr.bf16.mxu0 0
  %6704 = vmatpush1.bf16.msra.mxu0 0
  %6705 = vmatprep.subr.bf16.mxu0 0
  %6706 = vmatpush1.bf16.msra.mxu0 0
  %6707 = vmatprep.subr.bf16.mxu0 0
  %6708 = vmatpush1.bf16.msra.mxu0 0
  %6709 = vmatprep.subr.bf16.mxu0 0
  %6710 = vmatpush1.bf16.msra.mxu0 0
  %6711 = vmatprep.subr.bf16.mxu0 0
  %6712 = vmatpush1.bf16.msra.mxu0 0
  %6713 = vmatprep.subr.bf16.mxu0 0
  %6714 = vmatpush1.bf16.msra.mxu0 0
  %6715 = vmatprep.subr.bf16.mxu0 0
  %6716 = vmatpush1.bf16.msra.mxu0 0
  %6717 = vmatprep.subr.bf16.mxu0 0
  %6718 = vmatpush1.bf16.msra.mxu0 0
  %6719 = vmatprep.subr.bf16.mxu0 0
  %6720 = vmatpush1.bf16.msra.mxu0 0
  %6721 = vmatprep.subr.bf16.mxu0 0
  %6722 = vmatpush1.bf16.msra.mxu0 0
  %6723 = vmatprep.subr.bf16.mxu0 0
  %6724 = vmatpush1.bf16.msra.mxu0 0
  %6725 = vmatprep.subr.bf16.mxu0 0
  %6726 = vmatpush1.bf16.msra.mxu0 0
  %6727 = vmatprep.subr.bf16.mxu0 0
  %6728 = vmatpush1.bf16.msra.mxu0 0
  %6729 = vmatprep.mubr.bf16.mxu0 0
  %6730 = vmatmul.mubr.bf16.gmra.mrb[0].mxu0 %v6692
  %v6731 = vpop.f32.mrb[0].mxu0
  %v6732 = vadd.f32 0.0, %v6731
  %v6733 = vpop.f32.mrb[0].mxu0
  %v6734 = vpop.f32.mrb[0].mxu0
  %v6735 = vadd.f32 0.0, %v6734
  %v6736 = vpop.f32.mrb[0].mxu0
  %6737 = vmatprep.mubr.bf16.mxu0 0
  %6738 = vmatmul.mubr.bf16.gmra.mrb[0].mxu0 %v6695
  %v6739 = vpop.f32.mrb[0].mxu0
  %v6740 = vadd.f32 0.0, %v6739
  %v6741 = vpop.f32.mrb[0].mxu0
  %v6742 = vpop.f32.mrb[0].mxu0
  %v6743 = vadd.f32 0.0, %v6742
  %v6744 = vpop.f32.mrb[0].mxu0
  %6745 = vdwg.mxu0
  %6746 = vrot.lane.b32.xlu0 %v788, 96
  %v6747 = vpop.permute.xlu0 %6746
  %6748 = vrot.lane.b32.xlu0 %v789, 96
  %v6749 = vpop.permute.xlu0 %6748
  %v6753 = vsel %vm3685, %v5486, 0
  %v6756 = vsel %vm3685, %v5487, 0
  %6758 = vmatprep.subr.bf16.mxu0 0
  %6759 = vmatpush1.bf16.msra.mxu0 %v6747
  %6760 = vmatprep.subr.bf16.mxu0 0
  %6761 = vmatpush1.bf16.msra.mxu0 %v6749
  %6762 = vmatprep.subr.bf16.mxu0 0
  %6763 = vmatpush1.bf16.msra.mxu0 0
  %6764 = vmatprep.subr.bf16.mxu0 0
  %6765 = vmatpush1.bf16.msra.mxu0 0
  %6766 = vmatprep.subr.bf16.mxu0 0
  %6767 = vmatpush1.bf16.msra.mxu0 0
  %6768 = vmatprep.subr.bf16.mxu0 0
  %6769 = vmatpush1.bf16.msra.mxu0 0
  %6770 = vmatprep.subr.bf16.mxu0 0
  %6771 = vmatpush1.bf16.msra.mxu0 0
  %6772 = vmatprep.subr.bf16.mxu0 0
  %6773 = vmatpush1.bf16.msra.mxu0 0
  %6774 = vmatprep.subr.bf16.mxu0 0
  %6775 = vmatpush1.bf16.msra.mxu0 0
  %6776 = vmatprep.subr.bf16.mxu0 0
  %6777 = vmatpush1.bf16.msra.mxu0 0
  %6778 = vmatprep.subr.bf16.mxu0 0
  %6779 = vmatpush1.bf16.msra.mxu0 0
  %6780 = vmatprep.subr.bf16.mxu0 0
  %6781 = vmatpush1.bf16.msra.mxu0 0
  %6782 = vmatprep.subr.bf16.mxu0 0
  %6783 = vmatpush1.bf16.msra.mxu0 0
  %6784 = vmatprep.subr.bf16.mxu0 0
  %6785 = vmatpush1.bf16.msra.mxu0 0
  %6786 = vmatprep.subr.bf16.mxu0 0
  %6787 = vmatpush1.bf16.msra.mxu0 0
  %6788 = vmatprep.subr.bf16.mxu0 0
  %6789 = vmatpush1.bf16.msra.mxu0 0
  %6790 = vmatprep.mubr.bf16.mxu0 0
  %6791 = vmatmul.mubr.bf16.gmra.mrb[0].mxu0 %v6753
  %v6792 = vpop.f32.mrb[0].mxu0
  %v6793 = vadd.f32 0.0, %v6792
  %v6794 = vpop.f32.mrb[0].mxu0
  %v6795 = vpop.f32.mrb[0].mxu0
  %v6796 = vadd.f32 0.0, %v6795
  %v6797 = vpop.f32.mrb[0].mxu0
  %6798 = vmatprep.mubr.bf16.mxu0 0
  %6799 = vmatmul.mubr.bf16.gmra.mrb[0].mxu0 %v6756
  %v6800 = vpop.f32.mrb[0].mxu0
  %v6801 = vadd.f32 0.0, %v6800
  %v6802 = vpop.f32.mrb[0].mxu0
  %v6803 = vpop.f32.mrb[0].mxu0
  %v6804 = vadd.f32 0.0, %v6803
  %v6805 = vpop.f32.mrb[0].mxu0
  %6806 = vdwg.mxu0
  %6807 = vrot.lane.b32.xlu0 %v790, 96
  %v6808 = vpop.permute.xlu0 %6807
  %6809 = vrot.lane.b32.xlu0 %v791, 96
  %v6810 = vpop.permute.xlu0 %6809
  %v6814 = vsel %vm3685, %v5488, 0
  %v6817 = vsel %vm3685, %v5489, 0
  %6819 = vmatprep.subr.bf16.mxu0 0
  %6820 = vmatpush1.bf16.msra.mxu0 %v6808
  %6821 = vmatprep.subr.bf16.mxu0 0
  %6822 = vmatpush1.bf16.msra.mxu0 %v6810
  %6823 = vmatprep.subr.bf16.mxu0 0
  %6824 = vmatpush1.bf16.msra.mxu0 0
  %6825 = vmatprep.subr.bf16.mxu0 0
  %6826 = vmatpush1.bf16.msra.mxu0 0
  %6827 = vmatprep.subr.bf16.mxu0 0
  %6828 = vmatpush1.bf16.msra.mxu0 0
  %6829 = vmatprep.subr.bf16.mxu0 0
  %6830 = vmatpush1.bf16.msra.mxu0 0
  %6831 = vmatprep.subr.bf16.mxu0 0
  %6832 = vmatpush1.bf16.msra.mxu0 0
  %6833 = vmatprep.subr.bf16.mxu0 0
  %6834 = vmatpush1.bf16.msra.mxu0 0
  %6835 = vmatprep.subr.bf16.mxu0 0
  %6836 = vmatpush1.bf16.msra.mxu0 0
  %6837 = vmatprep.subr.bf16.mxu0 0
  %6838 = vmatpush1.bf16.msra.mxu0 0
  %6839 = vmatprep.subr.bf16.mxu0 0
  %6840 = vmatpush1.bf16.msra.mxu0 0
  %6841 = vmatprep.subr.bf16.mxu0 0
  %6842 = vmatpush1.bf16.msra.mxu0 0
  %6843 = vmatprep.subr.bf16.mxu0 0
  %6844 = vmatpush1.bf16.msra.mxu0 0
  %6845 = vmatprep.subr.bf16.mxu0 0
  %6846 = vmatpush1.bf16.msra.mxu0 0
  %6847 = vmatprep.subr.bf16.mxu0 0
  %6848 = vmatpush1.bf16.msra.mxu0 0
  %6849 = vmatprep.subr.bf16.mxu0 0
  %6850 = vmatpush1.bf16.msra.mxu0 0
  %6851 = vmatprep.mubr.bf16.mxu0 0
  %6852 = vmatmul.mubr.bf16.gmra.mrb[0].mxu0 %v6814
  %v6853 = vpop.f32.mrb[0].mxu0
  %v6854 = vadd.f32 0.0, %v6853
  %v6855 = vpop.f32.mrb[0].mxu0
  %v6856 = vpop.f32.mrb[0].mxu0
  %v6857 = vadd.f32 0.0, %v6856
  %v6858 = vpop.f32.mrb[0].mxu0
  %6859 = vmatprep.mubr.bf16.mxu0 0
  %6860 = vmatmul.mubr.bf16.gmra.mrb[0].mxu0 %v6817
  %v6861 = vpop.f32.mrb[0].mxu0
  %v6862 = vadd.f32 0.0, %v6861
  %v6863 = vpop.f32.mrb[0].mxu0
  %v6864 = vpop.f32.mrb[0].mxu0
  %v6865 = vadd.f32 0.0, %v6864
  %v6866 = vpop.f32.mrb[0].mxu0
  %6867 = vdwg.mxu0
  %6868 = vrot.lane.b32.xlu0 %v792, 96
  %v6869 = vpop.permute.xlu0 %6868
  %6870 = vrot.lane.b32.xlu0 %v793, 96
  %v6871 = vpop.permute.xlu0 %6870
  %v6875 = vsel %vm3685, %v5490, 0
  %v6878 = vsel %vm3685, %v5491, 0
  %6880 = vmatprep.subr.bf16.mxu0 0
  %6881 = vmatpush1.bf16.msra.mxu0 %v6869
  %6882 = vmatprep.subr.bf16.mxu0 0
  %6883 = vmatpush1.bf16.msra.mxu0 %v6871
  %6884 = vmatprep.subr.bf16.mxu0 0
  %6885 = vmatpush1.bf16.msra.mxu0 0
  %6886 = vmatprep.subr.bf16.mxu0 0
  %6887 = vmatpush1.bf16.msra.mxu0 0
  %6888 = vmatprep.subr.bf16.mxu0 0
  %6889 = vmatpush1.bf16.msra.mxu0 0
  %6890 = vmatprep.subr.bf16.mxu0 0
  %6891 = vmatpush1.bf16.msra.mxu0 0
  %6892 = vmatprep.subr.bf16.mxu0 0
  %6893 = vmatpush1.bf16.msra.mxu0 0
  %6894 = vmatprep.subr.bf16.mxu0 0
  %6895 = vmatpush1.bf16.msra.mxu0 0
  %6896 = vmatprep.subr.bf16.mxu0 0
  %6897 = vmatpush1.bf16.msra.mxu0 0
  %6898 = vmatprep.subr.bf16.mxu0 0
  %6899 = vmatpush1.bf16.msra.mxu0 0
  %6900 = vmatprep.subr.bf16.mxu0 0
  %6901 = vmatpush1.bf16.msra.mxu0 0
  %6902 = vmatprep.subr.bf16.mxu0 0
  %6903 = vmatpush1.bf16.msra.mxu0 0
  %6904 = vmatprep.subr.bf16.mxu0 0
  %6905 = vmatpush1.bf16.msra.mxu0 0
  %6906 = vmatprep.subr.bf16.mxu0 0
  %6907 = vmatpush1.bf16.msra.mxu0 0
  %6908 = vmatprep.subr.bf16.mxu0 0
  %6909 = vmatpush1.bf16.msra.mxu0 0
  %6910 = vmatprep.subr.bf16.mxu0 0
  %6911 = vmatpush1.bf16.msra.mxu0 0
  %6912 = vmatprep.mubr.bf16.mxu0 0
  %6913 = vmatmul.mubr.bf16.gmra.mrb[0].mxu0 %v6875
  %v6914 = vpop.f32.mrb[0].mxu0
  %v6915 = vadd.f32 0.0, %v6914
  %v6916 = vpop.f32.mrb[0].mxu0
  %v6917 = vpop.f32.mrb[0].mxu0
  %v6918 = vadd.f32 0.0, %v6917
  %v6919 = vpop.f32.mrb[0].mxu0
  %6920 = vmatprep.mubr.bf16.mxu0 0
  %6921 = vmatmul.mubr.bf16.gmra.mrb[0].mxu0 %v6878
  %v6922 = vpop.f32.mrb[0].mxu0
  %v6923 = vadd.f32 0.0, %v6922
  %v6924 = vpop.f32.mrb[0].mxu0
  %v6925 = vpop.f32.mrb[0].mxu0
  %v6926 = vadd.f32 0.0, %v6925
  %v6927 = vpop.f32.mrb[0].mxu0
  %6928 = vdwg.mxu0
  %6929 = vrot.lane.b32.xlu0 %v794, 96
  %v6930 = vpop.permute.xlu0 %6929
  %6931 = vrot.lane.b32.xlu0 %v795, 96
  %v6932 = vpop.permute.xlu0 %6931
  %v6936 = vsel %vm3685, %v5492, 0
  %v6939 = vsel %vm3685, %v5493, 0
  %6941 = vmatprep.subr.bf16.mxu0 0
  %6942 = vmatpush1.bf16.msra.mxu0 %v6930
  %6943 = vmatprep.subr.bf16.mxu0 0
  %6944 = vmatpush1.bf16.msra.mxu0 %v6932
  %6945 = vmatprep.subr.bf16.mxu0 0
  %6946 = vmatpush1.bf16.msra.mxu0 0
  %6947 = vmatprep.subr.bf16.mxu0 0
  %6948 = vmatpush1.bf16.msra.mxu0 0
  %6949 = vmatprep.subr.bf16.mxu0 0
  %6950 = vmatpush1.bf16.msra.mxu0 0
  %6951 = vmatprep.subr.bf16.mxu0 0
  %6952 = vmatpush1.bf16.msra.mxu0 0
  %6953 = vmatprep.subr.bf16.mxu0 0
  %6954 = vmatpush1.bf16.msra.mxu0 0
  %6955 = vmatprep.subr.bf16.mxu0 0
  %6956 = vmatpush1.bf16.msra.mxu0 0
  %6957 = vmatprep.subr.bf16.mxu0 0
  %6958 = vmatpush1.bf16.msra.mxu0 0
  %6959 = vmatprep.subr.bf16.mxu0 0
  %6960 = vmatpush1.bf16.msra.mxu0 0
  %6961 = vmatprep.subr.bf16.mxu0 0
  %6962 = vmatpush1.bf16.msra.mxu0 0
  %6963 = vmatprep.subr.bf16.mxu0 0
  %6964 = vmatpush1.bf16.msra.mxu0 0
  %6965 = vmatprep.subr.bf16.mxu0 0
  %6966 = vmatpush1.bf16.msra.mxu0 0
  %6967 = vmatprep.subr.bf16.mxu0 0
  %6968 = vmatpush1.bf16.msra.mxu0 0
  %6969 = vmatprep.subr.bf16.mxu0 0
  %6970 = vmatpush1.bf16.msra.mxu0 0
  %6971 = vmatprep.subr.bf16.mxu0 0
  %6972 = vmatpush1.bf16.msra.mxu0 0
  %6973 = vmatprep.mubr.bf16.mxu0 0
  %6974 = vmatmul.mubr.bf16.gmra.mrb[0].mxu0 %v6936
  %v6975 = vpop.f32.mrb[0].mxu0
  %v6976 = vadd.f32 0.0, %v6975
  %v6977 = vpop.f32.mrb[0].mxu0
  %v6978 = vpop.f32.mrb[0].mxu0
  %v6979 = vadd.f32 0.0, %v6978
  %v6980 = vpop.f32.mrb[0].mxu0
  %6981 = vmatprep.mubr.bf16.mxu0 0
  %6982 = vmatmul.mubr.bf16.gmra.mrb[0].mxu0 %v6939
  %v6983 = vpop.f32.mrb[0].mxu0
  %v6984 = vadd.f32 0.0, %v6983
  %v6985 = vpop.f32.mrb[0].mxu0
  %v6986 = vpop.f32.mrb[0].mxu0
  %v6987 = vadd.f32 0.0, %v6986
  %v6988 = vpop.f32.mrb[0].mxu0
  %6989 = vdwg.mxu0
  %6990 = vrot.lane.b32.xlu0 %v796, 96
  %v6991 = vpop.permute.xlu0 %6990
  %6992 = vrot.lane.b32.xlu0 %v797, 96
  %v6993 = vpop.permute.xlu0 %6992
  %v6997 = vsel %vm3685, %v5494, 0
  %v7000 = vsel %vm3685, %v5495, 0
  %7002 = vmatprep.subr.bf16.mxu0 0
  %7003 = vmatpush1.bf16.msra.mxu0 %v6991
  %7004 = vmatprep.subr.bf16.mxu0 0
  %7005 = vmatpush1.bf16.msra.mxu0 %v6993
  %7006 = vmatprep.subr.bf16.mxu0 0
  %7007 = vmatpush1.bf16.msra.mxu0 0
  %7008 = vmatprep.subr.bf16.mxu0 0
  %7009 = vmatpush1.bf16.msra.mxu0 0
  %7010 = vmatprep.subr.bf16.mxu0 0
  %7011 = vmatpush1.bf16.msra.mxu0 0
  %7012 = vmatprep.subr.bf16.mxu0 0
  %7013 = vmatpush1.bf16.msra.mxu0 0
  %7014 = vmatprep.subr.bf16.mxu0 0
  %7015 = vmatpush1.bf16.msra.mxu0 0
  %7016 = vmatprep.subr.bf16.mxu0 0
  %7017 = vmatpush1.bf16.msra.mxu0 0
  %7018 = vmatprep.subr.bf16.mxu0 0
  %7019 = vmatpush1.bf16.msra.mxu0 0
  %7020 = vmatprep.subr.bf16.mxu0 0
  %7021 = vmatpush1.bf16.msra.mxu0 0
  %7022 = vmatprep.subr.bf16.mxu0 0
  %7023 = vmatpush1.bf16.msra.mxu0 0
  %7024 = vmatprep.subr.bf16.mxu0 0
  %7025 = vmatpush1.bf16.msra.mxu0 0
  %7026 = vmatprep.subr.bf16.mxu0 0
  %7027 = vmatpush1.bf16.msra.mxu0 0
  %7028 = vmatprep.subr.bf16.mxu0 0
  %7029 = vmatpush1.bf16.msra.mxu0 0
  %7030 = vmatprep.subr.bf16.mxu0 0
  %7031 = vmatpush1.bf16.msra.mxu0 0
  %7032 = vmatprep.subr.bf16.mxu0 0
  %7033 = vmatpush1.bf16.msra.mxu0 0
  %7034 = vmatprep.mubr.bf16.mxu0 0
  %7035 = vmatmul.mubr.bf16.gmra.mrb[0].mxu0 %v6997
  %v7036 = vpop.f32.mrb[0].mxu0
  %v7037 = vadd.f32 0.0, %v7036
  %v7038 = vpop.f32.mrb[0].mxu0
  %v7039 = vpop.f32.mrb[0].mxu0
  %v7040 = vadd.f32 0.0, %v7039
  %v7041 = vpop.f32.mrb[0].mxu0
  %7042 = vmatprep.mubr.bf16.mxu0 0
  %7043 = vmatmul.mubr.bf16.gmra.mrb[0].mxu0 %v7000
  %v7044 = vpop.f32.mrb[0].mxu0
  %v7045 = vadd.f32 0.0, %v7044
  %v7046 = vpop.f32.mrb[0].mxu0
  %v7047 = vpop.f32.mrb[0].mxu0
  %v7048 = vadd.f32 0.0, %v7047
  %v7049 = vpop.f32.mrb[0].mxu0
  %7050 = vdwg.mxu0
  %7051 = vrot.lane.b32.xlu0 %v798, 96
  %v7052 = vpop.permute.xlu0 %7051
  %7053 = vrot.lane.b32.xlu0 %v799, 96
  %v7054 = vpop.permute.xlu0 %7053
  %v7058 = vsel %vm3685, %v5496, 0
  %v7061 = vsel %vm3685, %v5497, 0
  %7063 = vmatprep.subr.bf16.mxu0 0
  %7064 = vmatpush1.bf16.msra.mxu0 %v7052
  %7065 = vmatprep.subr.bf16.mxu0 0
  %7066 = vmatpush1.bf16.msra.mxu0 %v7054
  %7067 = vmatprep.subr.bf16.mxu0 0
  %7068 = vmatpush1.bf16.msra.mxu0 0
  %7069 = vmatprep.subr.bf16.mxu0 0
  %7070 = vmatpush1.bf16.msra.mxu0 0
  %7071 = vmatprep.subr.bf16.mxu0 0
  %7072 = vmatpush1.bf16.msra.mxu0 0
  %7073 = vmatprep.subr.bf16.mxu0 0
  %7074 = vmatpush1.bf16.msra.mxu0 0
  %7075 = vmatprep.subr.bf16.mxu0 0
  %7076 = vmatpush1.bf16.msra.mxu0 0
  %7077 = vmatprep.subr.bf16.mxu0 0
  %7078 = vmatpush1.bf16.msra.mxu0 0
  %7079 = vmatprep.subr.bf16.mxu0 0
  %7080 = vmatpush1.bf16.msra.mxu0 0
  %7081 = vmatprep.subr.bf16.mxu0 0
  %7082 = vmatpush1.bf16.msra.mxu0 0
  %7083 = vmatprep.subr.bf16.mxu0 0
  %7084 = vmatpush1.bf16.msra.mxu0 0
  %7085 = vmatprep.subr.bf16.mxu0 0
  %7086 = vmatpush1.bf16.msra.mxu0 0
  %7087 = vmatprep.subr.bf16.mxu0 0
  %7088 = vmatpush1.bf16.msra.mxu0 0
  %7089 = vmatprep.subr.bf16.mxu0 0
  %7090 = vmatpush1.bf16.msra.mxu0 0
  %7091 = vmatprep.subr.bf16.mxu0 0
  %7092 = vmatpush1.bf16.msra.mxu0 0
  %7093 = vmatprep.subr.bf16.mxu0 0
  %7094 = vmatpush1.bf16.msra.mxu0 0
  %7095 = vmatprep.mubr.bf16.mxu0 0
  %7096 = vmatmul.mubr.bf16.gmra.mrb[0].mxu0 %v7058
  %v7097 = vpop.f32.mrb[0].mxu0
  %v7098 = vadd.f32 0.0, %v7097
  %v7099 = vpop.f32.mrb[0].mxu0
  %v7100 = vpop.f32.mrb[0].mxu0
  %v7101 = vadd.f32 0.0, %v7100
  %v7102 = vpop.f32.mrb[0].mxu0
  %7103 = vmatprep.mubr.bf16.mxu0 0
  %7104 = vmatmul.mubr.bf16.gmra.mrb[0].mxu0 %v7061
  %v7105 = vpop.f32.mrb[0].mxu0
  %v7106 = vadd.f32 0.0, %v7105
  %v7107 = vpop.f32.mrb[0].mxu0
  %v7108 = vpop.f32.mrb[0].mxu0
  %v7109 = vadd.f32 0.0, %v7108
  %v7110 = vpop.f32.mrb[0].mxu0
  %7111 = vdwg.mxu0
  %7112 = vrot.lane.b32.xlu0 %v800, 96
  %v7113 = vpop.permute.xlu0 %7112
  %7114 = vrot.lane.b32.xlu0 %v801, 96
  %v7115 = vpop.permute.xlu0 %7114
  %v7119 = vsel %vm3685, %v5498, 0
  %v7122 = vsel %vm3685, %v5499, 0
  %7124 = vmatprep.subr.bf16.mxu0 0
  %7125 = vmatpush1.bf16.msra.mxu0 %v7113
  %7126 = vmatprep.subr.bf16.mxu0 0
  %7127 = vmatpush1.bf16.msra.mxu0 %v7115
  %7128 = vmatprep.subr.bf16.mxu0 0
  %7129 = vmatpush1.bf16.msra.mxu0 0
  %7130 = vmatprep.subr.bf16.mxu0 0
  %7131 = vmatpush1.bf16.msra.mxu0 0
  %7132 = vmatprep.subr.bf16.mxu0 0
  %7133 = vmatpush1.bf16.msra.mxu0 0
  %7134 = vmatprep.subr.bf16.mxu0 0
  %7135 = vmatpush1.bf16.msra.mxu0 0
  %7136 = vmatprep.subr.bf16.mxu0 0
  %7137 = vmatpush1.bf16.msra.mxu0 0
  %7138 = vmatprep.subr.bf16.mxu0 0
  %7139 = vmatpush1.bf16.msra.mxu0 0
  %7140 = vmatprep.subr.bf16.mxu0 0
  %7141 = vmatpush1.bf16.msra.mxu0 0
  %7142 = vmatprep.subr.bf16.mxu0 0
  %7143 = vmatpush1.bf16.msra.mxu0 0
  %7144 = vmatprep.subr.bf16.mxu0 0
  %7145 = vmatpush1.bf16.msra.mxu0 0
  %7146 = vmatprep.subr.bf16.mxu0 0
  %7147 = vmatpush1.bf16.msra.mxu0 0
  %7148 = vmatprep.subr.bf16.mxu0 0
  %7149 = vmatpush1.bf16.msra.mxu0 0
  %7150 = vmatprep.subr.bf16.mxu0 0
  %7151 = vmatpush1.bf16.msra.mxu0 0
  %7152 = vmatprep.subr.bf16.mxu0 0
  %7153 = vmatpush1.bf16.msra.mxu0 0
  %7154 = vmatprep.subr.bf16.mxu0 0
  %7155 = vmatpush1.bf16.msra.mxu0 0
  %7156 = vmatprep.mubr.bf16.mxu0 0
  %7157 = vmatmul.mubr.bf16.gmra.mrb[0].mxu0 %v7119
  %v7158 = vpop.f32.mrb[0].mxu0
  %v7159 = vadd.f32 0.0, %v7158
  %v7160 = vpop.f32.mrb[0].mxu0
  %v7161 = vpop.f32.mrb[0].mxu0
  %v7162 = vadd.f32 0.0, %v7161
  %v7163 = vpop.f32.mrb[0].mxu0
  %7164 = vmatprep.mubr.bf16.mxu0 0
  %7165 = vmatmul.mubr.bf16.gmra.mrb[0].mxu0 %v7122
  %v7166 = vpop.f32.mrb[0].mxu0
  %v7167 = vadd.f32 0.0, %v7166
  %v7168 = vpop.f32.mrb[0].mxu0
  %v7169 = vpop.f32.mrb[0].mxu0
  %v7170 = vadd.f32 0.0, %v7169
  %v7171 = vpop.f32.mrb[0].mxu0
  %7172 = vdwg.mxu0
  %7173 = vrot.lane.b32.xlu0 %v802, 96
  %v7174 = vpop.permute.xlu0 %7173
  %7175 = vrot.lane.b32.xlu0 %v803, 96
  %v7176 = vpop.permute.xlu0 %7175
  %v7180 = vsel %vm3685, %v5500, 0
  %v7183 = vsel %vm3685, %v5501, 0
  %7185 = vmatprep.subr.bf16.mxu0 0
  %7186 = vmatpush1.bf16.msra.mxu0 %v7174
  %7187 = vmatprep.subr.bf16.mxu0 0
  %7188 = vmatpush1.bf16.msra.mxu0 %v7176
  %7189 = vmatprep.subr.bf16.mxu0 0
  %7190 = vmatpush1.bf16.msra.mxu0 0
  %7191 = vmatprep.subr.bf16.mxu0 0
  %7192 = vmatpush1.bf16.msra.mxu0 0
  %7193 = vmatprep.subr.bf16.mxu0 0
  %7194 = vmatpush1.bf16.msra.mxu0 0
  %7195 = vmatprep.subr.bf16.mxu0 0
  %7196 = vmatpush1.bf16.msra.mxu0 0
  %7197 = vmatprep.subr.bf16.mxu0 0
  %7198 = vmatpush1.bf16.msra.mxu0 0
  %7199 = vmatprep.subr.bf16.mxu0 0
  %7200 = vmatpush1.bf16.msra.mxu0 0
  %7201 = vmatprep.subr.bf16.mxu0 0
  %7202 = vmatpush1.bf16.msra.mxu0 0
  %7203 = vmatprep.subr.bf16.mxu0 0
  %7204 = vmatpush1.bf16.msra.mxu0 0
  %7205 = vmatprep.subr.bf16.mxu0 0
  %7206 = vmatpush1.bf16.msra.mxu0 0
  %7207 = vmatprep.subr.bf16.mxu0 0
  %7208 = vmatpush1.bf16.msra.mxu0 0
  %7209 = vmatprep.subr.bf16.mxu0 0
  %7210 = vmatpush1.bf16.msra.mxu0 0
  %7211 = vmatprep.subr.bf16.mxu0 0
  %7212 = vmatpush1.bf16.msra.mxu0 0
  %7213 = vmatprep.subr.bf16.mxu0 0
  %7214 = vmatpush1.bf16.msra.mxu0 0
  %7215 = vmatprep.subr.bf16.mxu0 0
  %7216 = vmatpush1.bf16.msra.mxu0 0
  %7217 = vmatprep.mubr.bf16.mxu0 0
  %7218 = vmatmul.mubr.bf16.gmra.mrb[0].mxu0 %v7180
  %v7219 = vpop.f32.mrb[0].mxu0
  %v7220 = vadd.f32 0.0, %v7219
  %v7221 = vpop.f32.mrb[0].mxu0
  %v7222 = vpop.f32.mrb[0].mxu0
  %v7223 = vadd.f32 0.0, %v7222
  %v7224 = vpop.f32.mrb[0].mxu0
  %7225 = vmatprep.mubr.bf16.mxu0 0
  %7226 = vmatmul.mubr.bf16.gmra.mrb[0].mxu0 %v7183
  %v7227 = vpop.f32.mrb[0].mxu0
  %v7228 = vadd.f32 0.0, %v7227
  %v7229 = vpop.f32.mrb[0].mxu0
  %v7230 = vpop.f32.mrb[0].mxu0
  %v7231 = vadd.f32 0.0, %v7230
  %v7232 = vpop.f32.mrb[0].mxu0
  %7233 = vdwg.mxu0
  %7234 = vrot.lane.b32.xlu0 %v804, 96
  %v7235 = vpop.permute.xlu0 %7234
  %7236 = vrot.lane.b32.xlu0 %v805, 96
  %v7237 = vpop.permute.xlu0 %7236
  %v7241 = vsel %vm3685, %v5502, 0
  %v7244 = vsel %vm3685, %v5503, 0
  %7246 = vmatprep.subr.bf16.mxu0 0
  %7247 = vmatpush1.bf16.msra.mxu0 %v7235
  %7248 = vmatprep.subr.bf16.mxu0 0
  %7249 = vmatpush1.bf16.msra.mxu0 %v7237
  %7250 = vmatprep.subr.bf16.mxu0 0
  %7251 = vmatpush1.bf16.msra.mxu0 0
  %7252 = vmatprep.subr.bf16.mxu0 0
  %7253 = vmatpush1.bf16.msra.mxu0 0
  %7254 = vmatprep.subr.bf16.mxu0 0
  %7255 = vmatpush1.bf16.msra.mxu0 0
  %7256 = vmatprep.subr.bf16.mxu0 0
  %7257 = vmatpush1.bf16.msra.mxu0 0
  %7258 = vmatprep.subr.bf16.mxu0 0
  %7259 = vmatpush1.bf16.msra.mxu0 0
  %7260 = vmatprep.subr.bf16.mxu0 0
  %7261 = vmatpush1.bf16.msra.mxu0 0
  %7262 = vmatprep.subr.bf16.mxu0 0
  %7263 = vmatpush1.bf16.msra.mxu0 0
  %7264 = vmatprep.subr.bf16.mxu0 0
  %7265 = vmatpush1.bf16.msra.mxu0 0
  %7266 = vmatprep.subr.bf16.mxu0 0
  %7267 = vmatpush1.bf16.msra.mxu0 0
  %7268 = vmatprep.subr.bf16.mxu0 0
  %7269 = vmatpush1.bf16.msra.mxu0 0
  %7270 = vmatprep.subr.bf16.mxu0 0
  %7271 = vmatpush1.bf16.msra.mxu0 0
  %7272 = vmatprep.subr.bf16.mxu0 0
  %7273 = vmatpush1.bf16.msra.mxu0 0
  %7274 = vmatprep.subr.bf16.mxu0 0
  %7275 = vmatpush1.bf16.msra.mxu0 0
  %7276 = vmatprep.subr.bf16.mxu0 0
  %7277 = vmatpush1.bf16.msra.mxu0 0
  %7278 = vmatprep.mubr.bf16.mxu0 0
  %7279 = vmatmul.mubr.bf16.gmra.mrb[0].mxu0 %v7241
  %v7280 = vpop.f32.mrb[0].mxu0
  %v7281 = vadd.f32 0.0, %v7280
  %v7282 = vpop.f32.mrb[0].mxu0
  %v7283 = vpop.f32.mrb[0].mxu0
  %v7284 = vadd.f32 0.0, %v7283
  %v7285 = vpop.f32.mrb[0].mxu0
  %7286 = vmatprep.mubr.bf16.mxu0 0
  %7287 = vmatmul.mubr.bf16.gmra.mrb[0].mxu0 %v7244
  %v7288 = vpop.f32.mrb[0].mxu0
  %v7289 = vadd.f32 0.0, %v7288
  %v7290 = vpop.f32.mrb[0].mxu0
  %v7291 = vpop.f32.mrb[0].mxu0
  %v7292 = vadd.f32 0.0, %v7291
  %v7293 = vpop.f32.mrb[0].mxu0
  %7294 = vdwg.mxu0
  %7295 = vrot.lane.b32.xlu0 %v806, 96
  %v7296 = vpop.permute.xlu0 %7295
  %7297 = vrot.lane.b32.xlu0 %v807, 96
  %v7298 = vpop.permute.xlu0 %7297
  %v7302 = vsel %vm3685, %v5504, 0
  %v7305 = vsel %vm3685, %v5505, 0
  %7307 = vmatprep.subr.bf16.mxu0 0
  %7308 = vmatpush1.bf16.msra.mxu0 %v7296
  %7309 = vmatprep.subr.bf16.mxu0 0
  %7310 = vmatpush1.bf16.msra.mxu0 %v7298
  %7311 = vmatprep.subr.bf16.mxu0 0
  %7312 = vmatpush1.bf16.msra.mxu0 0
  %7313 = vmatprep.subr.bf16.mxu0 0
  %7314 = vmatpush1.bf16.msra.mxu0 0
  %7315 = vmatprep.subr.bf16.mxu0 0
  %7316 = vmatpush1.bf16.msra.mxu0 0
  %7317 = vmatprep.subr.bf16.mxu0 0
  %7318 = vmatpush1.bf16.msra.mxu0 0
  %7319 = vmatprep.subr.bf16.mxu0 0
  %7320 = vmatpush1.bf16.msra.mxu0 0
  %7321 = vmatprep.subr.bf16.mxu0 0
  %7322 = vmatpush1.bf16.msra.mxu0 0
  %7323 = vmatprep.subr.bf16.mxu0 0
  %7324 = vmatpush1.bf16.msra.mxu0 0
  %7325 = vmatprep.subr.bf16.mxu0 0
  %7326 = vmatpush1.bf16.msra.mxu0 0
  %7327 = vmatprep.subr.bf16.mxu0 0
  %7328 = vmatpush1.bf16.msra.mxu0 0
  %7329 = vmatprep.subr.bf16.mxu0 0
  %7330 = vmatpush1.bf16.msra.mxu0 0
  %7331 = vmatprep.subr.bf16.mxu0 0
  %7332 = vmatpush1.bf16.msra.mxu0 0
  %7333 = vmatprep.subr.bf16.mxu0 0
  %7334 = vmatpush1.bf16.msra.mxu0 0
  %7335 = vmatprep.subr.bf16.mxu0 0
  %7336 = vmatpush1.bf16.msra.mxu0 0
  %7337 = vmatprep.subr.bf16.mxu0 0
  %7338 = vmatpush1.bf16.msra.mxu0 0
  %7339 = vmatprep.mubr.bf16.mxu0 0
  %7340 = vmatmul.mubr.bf16.gmra.mrb[0].mxu0 %v7302
  %v7341 = vpop.f32.mrb[0].mxu0
  %v7342 = vadd.f32 0.0, %v7341
  %v7343 = vpop.f32.mrb[0].mxu0
  %v7344 = vpop.f32.mrb[0].mxu0
  %v7345 = vadd.f32 0.0, %v7344
  %v7346 = vpop.f32.mrb[0].mxu0
  %7347 = vmatprep.mubr.bf16.mxu0 0
  %7348 = vmatmul.mubr.bf16.gmra.mrb[0].mxu0 %v7305
  %v7349 = vpop.f32.mrb[0].mxu0
  %v7350 = vadd.f32 0.0, %v7349
  %v7351 = vpop.f32.mrb[0].mxu0
  %v7352 = vpop.f32.mrb[0].mxu0
  %v7353 = vadd.f32 0.0, %v7352
  %v7354 = vpop.f32.mrb[0].mxu0
  %7355 = vdwg.mxu0
  %7356 = vrot.lane.b32.xlu0 %v808, 96
  %v7357 = vpop.permute.xlu0 %7356
  %7358 = vrot.lane.b32.xlu0 %v809, 96
  %v7359 = vpop.permute.xlu0 %7358
  %v7363 = vsel %vm3685, %v5506, 0
  %v7366 = vsel %vm3685, %v5507, 0
  %7368 = vmatprep.subr.bf16.mxu0 0
  %7369 = vmatpush1.bf16.msra.mxu0 %v7357
  %7370 = vmatprep.subr.bf16.mxu0 0
  %7371 = vmatpush1.bf16.msra.mxu0 %v7359
  %7372 = vmatprep.subr.bf16.mxu0 0
  %7373 = vmatpush1.bf16.msra.mxu0 0
  %7374 = vmatprep.subr.bf16.mxu0 0
  %7375 = vmatpush1.bf16.msra.mxu0 0
  %7376 = vmatprep.subr.bf16.mxu0 0
  %7377 = vmatpush1.bf16.msra.mxu0 0
  %7378 = vmatprep.subr.bf16.mxu0 0
  %7379 = vmatpush1.bf16.msra.mxu0 0
  %7380 = vmatprep.subr.bf16.mxu0 0
  %7381 = vmatpush1.bf16.msra.mxu0 0
  %7382 = vmatprep.subr.bf16.mxu0 0
  %7383 = vmatpush1.bf16.msra.mxu0 0
  %7384 = vmatprep.subr.bf16.mxu0 0
  %7385 = vmatpush1.bf16.msra.mxu0 0
  %7386 = vmatprep.subr.bf16.mxu0 0
  %7387 = vmatpush1.bf16.msra.mxu0 0
  %7388 = vmatprep.subr.bf16.mxu0 0
  %7389 = vmatpush1.bf16.msra.mxu0 0
  %7390 = vmatprep.subr.bf16.mxu0 0
  %7391 = vmatpush1.bf16.msra.mxu0 0
  %7392 = vmatprep.subr.bf16.mxu0 0
  %7393 = vmatpush1.bf16.msra.mxu0 0
  %7394 = vmatprep.subr.bf16.mxu0 0
  %7395 = vmatpush1.bf16.msra.mxu0 0
  %7396 = vmatprep.subr.bf16.mxu0 0
  %7397 = vmatpush1.bf16.msra.mxu0 0
  %7398 = vmatprep.subr.bf16.mxu0 0
  %7399 = vmatpush1.bf16.msra.mxu0 0
  %7400 = vmatprep.mubr.bf16.mxu0 0
  %7401 = vmatmul.mubr.bf16.gmra.mrb[0].mxu0 %v7363
  %v7402 = vpop.f32.mrb[0].mxu0
  %v7403 = vadd.f32 0.0, %v7402
  %v7404 = vpop.f32.mrb[0].mxu0
  %v7405 = vpop.f32.mrb[0].mxu0
  %v7406 = vadd.f32 0.0, %v7405
  %v7407 = vpop.f32.mrb[0].mxu0
  %7408 = vmatprep.mubr.bf16.mxu0 0
  %7409 = vmatmul.mubr.bf16.gmra.mrb[0].mxu0 %v7366
  %v7410 = vpop.f32.mrb[0].mxu0
  %v7411 = vadd.f32 0.0, %v7410
  %v7412 = vpop.f32.mrb[0].mxu0
  %v7413 = vpop.f32.mrb[0].mxu0
  %v7414 = vadd.f32 0.0, %v7413
  %v7415 = vpop.f32.mrb[0].mxu0
  %7416 = vdwg.mxu0
  %7417 = vrot.lane.b32.xlu0 %v810, 96
  %v7418 = vpop.permute.xlu0 %7417
  %7419 = vrot.lane.b32.xlu0 %v811, 96
  %v7420 = vpop.permute.xlu0 %7419
  %v7424 = vsel %vm3685, %v5508, 0
  %v7427 = vsel %vm3685, %v5509, 0
  %7429 = vmatprep.subr.bf16.mxu0 0
  %7430 = vmatpush1.bf16.msra.mxu0 %v7418
  %7431 = vmatprep.subr.bf16.mxu0 0
  %7432 = vmatpush1.bf16.msra.mxu0 %v7420
  %7433 = vmatprep.subr.bf16.mxu0 0
  %7434 = vmatpush1.bf16.msra.mxu0 0
  %7435 = vmatprep.subr.bf16.mxu0 0
  %7436 = vmatpush1.bf16.msra.mxu0 0
  %7437 = vmatprep.subr.bf16.mxu0 0
  %7438 = vmatpush1.bf16.msra.mxu0 0
  %7439 = vmatprep.subr.bf16.mxu0 0
  %7440 = vmatpush1.bf16.msra.mxu0 0
  %7441 = vmatprep.subr.bf16.mxu0 0
  %7442 = vmatpush1.bf16.msra.mxu0 0
  %7443 = vmatprep.subr.bf16.mxu0 0
  %7444 = vmatpush1.bf16.msra.mxu0 0
  %7445 = vmatprep.subr.bf16.mxu0 0
  %7446 = vmatpush1.bf16.msra.mxu0 0
  %7447 = vmatprep.subr.bf16.mxu0 0
  %7448 = vmatpush1.bf16.msra.mxu0 0
  %7449 = vmatprep.subr.bf16.mxu0 0
  %7450 = vmatpush1.bf16.msra.mxu0 0
  %7451 = vmatprep.subr.bf16.mxu0 0
  %7452 = vmatpush1.bf16.msra.mxu0 0
  %7453 = vmatprep.subr.bf16.mxu0 0
  %7454 = vmatpush1.bf16.msra.mxu0 0
  %7455 = vmatprep.subr.bf16.mxu0 0
  %7456 = vmatpush1.bf16.msra.mxu0 0
  %7457 = vmatprep.subr.bf16.mxu0 0
  %7458 = vmatpush1.bf16.msra.mxu0 0
  %7459 = vmatprep.subr.bf16.mxu0 0
  %7460 = vmatpush1.bf16.msra.mxu0 0
  %7461 = vmatprep.mubr.bf16.mxu0 0
  %7462 = vmatmul.mubr.bf16.gmra.mrb[0].mxu0 %v7424
  %v7463 = vpop.f32.mrb[0].mxu0
  %v7464 = vadd.f32 0.0, %v7463
  %v7465 = vpop.f32.mrb[0].mxu0
  %v7466 = vpop.f32.mrb[0].mxu0
  %v7467 = vadd.f32 0.0, %v7466
  %v7468 = vpop.f32.mrb[0].mxu0
  %7469 = vmatprep.mubr.bf16.mxu0 0
  %7470 = vmatmul.mubr.bf16.gmra.mrb[0].mxu0 %v7427
  %v7471 = vpop.f32.mrb[0].mxu0
  %v7472 = vadd.f32 0.0, %v7471
  %v7473 = vpop.f32.mrb[0].mxu0
  %v7474 = vpop.f32.mrb[0].mxu0
  %v7475 = vadd.f32 0.0, %v7474
  %v7476 = vpop.f32.mrb[0].mxu0
  %7477 = vdwg.mxu0
  %7478 = vrot.lane.b32.xlu0 %v812, 96
  %v7479 = vpop.permute.xlu0 %7478
  %7480 = vrot.lane.b32.xlu0 %v813, 96
  %v7481 = vpop.permute.xlu0 %7480
  %v7485 = vsel %vm3685, %v5510, 0
  %v7488 = vsel %vm3685, %v5511, 0
  %7490 = vmatprep.subr.bf16.mxu0 0
  %7491 = vmatpush1.bf16.msra.mxu0 %v7479
  %7492 = vmatprep.subr.bf16.mxu0 0
  %7493 = vmatpush1.bf16.msra.mxu0 %v7481
  %7494 = vmatprep.subr.bf16.mxu0 0
  %7495 = vmatpush1.bf16.msra.mxu0 0
  %7496 = vmatprep.subr.bf16.mxu0 0
  %7497 = vmatpush1.bf16.msra.mxu0 0
  %7498 = vmatprep.subr.bf16.mxu0 0
  %7499 = vmatpush1.bf16.msra.mxu0 0
  %7500 = vmatprep.subr.bf16.mxu0 0
  %7501 = vmatpush1.bf16.msra.mxu0 0
  %7502 = vmatprep.subr.bf16.mxu0 0
  %7503 = vmatpush1.bf16.msra.mxu0 0
  %7504 = vmatprep.subr.bf16.mxu0 0
  %7505 = vmatpush1.bf16.msra.mxu0 0
  %7506 = vmatprep.subr.bf16.mxu0 0
  %7507 = vmatpush1.bf16.msra.mxu0 0
  %7508 = vmatprep.subr.bf16.mxu0 0
  %7509 = vmatpush1.bf16.msra.mxu0 0
  %7510 = vmatprep.subr.bf16.mxu0 0
  %7511 = vmatpush1.bf16.msra.mxu0 0
  %7512 = vmatprep.subr.bf16.mxu0 0
  %7513 = vmatpush1.bf16.msra.mxu0 0
  %7514 = vmatprep.subr.bf16.mxu0 0
  %7515 = vmatpush1.bf16.msra.mxu0 0
  %7516 = vmatprep.subr.bf16.mxu0 0
  %7517 = vmatpush1.bf16.msra.mxu0 0
  %7518 = vmatprep.subr.bf16.mxu0 0
  %7519 = vmatpush1.bf16.msra.mxu0 0
  %7520 = vmatprep.subr.bf16.mxu0 0
  %7521 = vmatpush1.bf16.msra.mxu0 0
  %7522 = vmatprep.mubr.bf16.mxu0 0
  %7523 = vmatmul.mubr.bf16.gmra.mrb[0].mxu0 %v7485
  %v7524 = vpop.f32.mrb[0].mxu0
  %v7525 = vadd.f32 0.0, %v7524
  %v7526 = vpop.f32.mrb[0].mxu0
  %v7527 = vpop.f32.mrb[0].mxu0
  %v7528 = vadd.f32 0.0, %v7527
  %v7529 = vpop.f32.mrb[0].mxu0
  %7530 = vmatprep.mubr.bf16.mxu0 0
  %7531 = vmatmul.mubr.bf16.gmra.mrb[0].mxu0 %v7488
  %v7532 = vpop.f32.mrb[0].mxu0
  %v7533 = vadd.f32 0.0, %v7532
  %v7534 = vpop.f32.mrb[0].mxu0
  %v7535 = vpop.f32.mrb[0].mxu0
  %v7536 = vadd.f32 0.0, %v7535
  %v7537 = vpop.f32.mrb[0].mxu0
  %7538 = vdwg.mxu0
  %7539 = vrot.lane.b32.xlu0 %v814, 96
  %v7540 = vpop.permute.xlu0 %7539
  %7541 = vrot.lane.b32.xlu0 %v815, 96
  %v7542 = vpop.permute.xlu0 %7541
  %v7546 = vsel %vm3685, %v5512, 0
  %v7549 = vsel %vm3685, %v5513, 0
  %7551 = vmatprep.subr.bf16.mxu0 0
  %7552 = vmatpush1.bf16.msra.mxu0 %v7540
  %7553 = vmatprep.subr.bf16.mxu0 0
  %7554 = vmatpush1.bf16.msra.mxu0 %v7542
  %7555 = vmatprep.subr.bf16.mxu0 0
  %7556 = vmatpush1.bf16.msra.mxu0 0
  %7557 = vmatprep.subr.bf16.mxu0 0
  %7558 = vmatpush1.bf16.msra.mxu0 0
  %7559 = vmatprep.subr.bf16.mxu0 0
  %7560 = vmatpush1.bf16.msra.mxu0 0
  %7561 = vmatprep.subr.bf16.mxu0 0
  %7562 = vmatpush1.bf16.msra.mxu0 0
  %7563 = vmatprep.subr.bf16.mxu0 0
  %7564 = vmatpush1.bf16.msra.mxu0 0
  %7565 = vmatprep.subr.bf16.mxu0 0
  %7566 = vmatpush1.bf16.msra.mxu0 0
  %7567 = vmatprep.subr.bf16.mxu0 0
  %7568 = vmatpush1.bf16.msra.mxu0 0
  %7569 = vmatprep.subr.bf16.mxu0 0
  %7570 = vmatpush1.bf16.msra.mxu0 0
  %7571 = vmatprep.subr.bf16.mxu0 0
  %7572 = vmatpush1.bf16.msra.mxu0 0
  %7573 = vmatprep.subr.bf16.mxu0 0
  %7574 = vmatpush1.bf16.msra.mxu0 0
  %7575 = vmatprep.subr.bf16.mxu0 0
  %7576 = vmatpush1.bf16.msra.mxu0 0
  %7577 = vmatprep.subr.bf16.mxu0 0
  %7578 = vmatpush1.bf16.msra.mxu0 0
  %7579 = vmatprep.subr.bf16.mxu0 0
  %7580 = vmatpush1.bf16.msra.mxu0 0
  %7581 = vmatprep.subr.bf16.mxu0 0
  %7582 = vmatpush1.bf16.msra.mxu0 0
  %7583 = vmatprep.mubr.bf16.mxu0 0
  %7584 = vmatmul.mubr.bf16.gmra.mrb[0].mxu0 %v7546
  %v7585 = vpop.f32.mrb[0].mxu0
  %v7586 = vadd.f32 0.0, %v7585
  %v7587 = vpop.f32.mrb[0].mxu0
  %v7588 = vpop.f32.mrb[0].mxu0
  %v7589 = vadd.f32 0.0, %v7588
  %v7590 = vpop.f32.mrb[0].mxu0
  %7591 = vmatprep.mubr.bf16.mxu0 0
  %7592 = vmatmul.mubr.bf16.gmra.mrb[0].mxu0 %v7549
  %v7593 = vpop.f32.mrb[0].mxu0
  %v7594 = vadd.f32 0.0, %v7593
  %v7595 = vpop.f32.mrb[0].mxu0
  %v7596 = vpop.f32.mrb[0].mxu0
  %v7597 = vadd.f32 0.0, %v7596
  %v7598 = vpop.f32.mrb[0].mxu0
  %7599 = vdwg.mxu0
  %7600 = vrot.lane.b32.xlu0 %v816, 96
  %v7601 = vpop.permute.xlu0 %7600
  %7602 = vrot.lane.b32.xlu0 %v817, 96
  %v7603 = vpop.permute.xlu0 %7602
  %v7607 = vsel %vm3685, %v5514, 0
  %v7610 = vsel %vm3685, %v5515, 0
  %7612 = vmatprep.subr.bf16.mxu0 0
  %7613 = vmatpush1.bf16.msra.mxu0 %v7601
  %7614 = vmatprep.subr.bf16.mxu0 0
  %7615 = vmatpush1.bf16.msra.mxu0 %v7603
  %7616 = vmatprep.subr.bf16.mxu0 0
  %7617 = vmatpush1.bf16.msra.mxu0 0
  %7618 = vmatprep.subr.bf16.mxu0 0
  %7619 = vmatpush1.bf16.msra.mxu0 0
  %7620 = vmatprep.subr.bf16.mxu0 0
  %7621 = vmatpush1.bf16.msra.mxu0 0
  %7622 = vmatprep.subr.bf16.mxu0 0
  %7623 = vmatpush1.bf16.msra.mxu0 0
  %7624 = vmatprep.subr.bf16.mxu0 0
  %7625 = vmatpush1.bf16.msra.mxu0 0
  %7626 = vmatprep.subr.bf16.mxu0 0
  %7627 = vmatpush1.bf16.msra.mxu0 0
  %7628 = vmatprep.subr.bf16.mxu0 0
  %7629 = vmatpush1.bf16.msra.mxu0 0
  %7630 = vmatprep.subr.bf16.mxu0 0
  %7631 = vmatpush1.bf16.msra.mxu0 0
  %7632 = vmatprep.subr.bf16.mxu0 0
  %7633 = vmatpush1.bf16.msra.mxu0 0
  %7634 = vmatprep.subr.bf16.mxu0 0
  %7635 = vmatpush1.bf16.msra.mxu0 0
  %7636 = vmatprep.subr.bf16.mxu0 0
  %7637 = vmatpush1.bf16.msra.mxu0 0
  %7638 = vmatprep.subr.bf16.mxu0 0
  %7639 = vmatpush1.bf16.msra.mxu0 0
  %7640 = vmatprep.subr.bf16.mxu0 0
  %7641 = vmatpush1.bf16.msra.mxu0 0
  %7642 = vmatprep.subr.bf16.mxu0 0
  %7643 = vmatpush1.bf16.msra.mxu0 0
  %7644 = vmatprep.mubr.bf16.mxu0 0
  %7645 = vmatmul.mubr.bf16.gmra.mrb[0].mxu0 %v7607
  %v7646 = vpop.f32.mrb[0].mxu0
  %v7647 = vadd.f32 0.0, %v7646
  %v7648 = vpop.f32.mrb[0].mxu0
  %v7649 = vpop.f32.mrb[0].mxu0
  %v7650 = vadd.f32 0.0, %v7649
  %v7651 = vpop.f32.mrb[0].mxu0
  %7652 = vmatprep.mubr.bf16.mxu0 0
  %7653 = vmatmul.mubr.bf16.gmra.mrb[0].mxu0 %v7610
  %v7654 = vpop.f32.mrb[0].mxu0
  %v7655 = vadd.f32 0.0, %v7654
  %v7656 = vpop.f32.mrb[0].mxu0
  %v7657 = vpop.f32.mrb[0].mxu0
  %v7658 = vadd.f32 0.0, %v7657
  %v7659 = vpop.f32.mrb[0].mxu0
  %7660 = vdwg.mxu0
  %7661 = vrot.lane.b32.xlu0 %v818, 96
  %v7662 = vpop.permute.xlu0 %7661
  %7663 = vrot.lane.b32.xlu0 %v819, 96
  %v7664 = vpop.permute.xlu0 %7663
  %v7668 = vsel %vm3685, %v5516, 0
  %v7671 = vsel %vm3685, %v5517, 0
  %7673 = vmatprep.subr.bf16.mxu0 0
  %7674 = vmatpush1.bf16.msra.mxu0 %v7662
  %7675 = vmatprep.subr.bf16.mxu0 0
  %7676 = vmatpush1.bf16.msra.mxu0 %v7664
  %7677 = vmatprep.subr.bf16.mxu0 0
  %7678 = vmatpush1.bf16.msra.mxu0 0
  %7679 = vmatprep.subr.bf16.mxu0 0
  %7680 = vmatpush1.bf16.msra.mxu0 0
  %7681 = vmatprep.subr.bf16.mxu0 0
  %7682 = vmatpush1.bf16.msra.mxu0 0
  %7683 = vmatprep.subr.bf16.mxu0 0
  %7684 = vmatpush1.bf16.msra.mxu0 0
  %7685 = vmatprep.subr.bf16.mxu0 0
  %7686 = vmatpush1.bf16.msra.mxu0 0
  %7687 = vmatprep.subr.bf16.mxu0 0
  %7688 = vmatpush1.bf16.msra.mxu0 0
  %7689 = vmatprep.subr.bf16.mxu0 0
  %7690 = vmatpush1.bf16.msra.mxu0 0
  %7691 = vmatprep.subr.bf16.mxu0 0
  %7692 = vmatpush1.bf16.msra.mxu0 0
  %7693 = vmatprep.subr.bf16.mxu0 0
  %7694 = vmatpush1.bf16.msra.mxu0 0
  %7695 = vmatprep.subr.bf16.mxu0 0
  %7696 = vmatpush1.bf16.msra.mxu0 0
  %7697 = vmatprep.subr.bf16.mxu0 0
  %7698 = vmatpush1.bf16.msra.mxu0 0
  %7699 = vmatprep.subr.bf16.mxu0 0
  %7700 = vmatpush1.bf16.msra.mxu0 0
  %7701 = vmatprep.subr.bf16.mxu0 0
  %7702 = vmatpush1.bf16.msra.mxu0 0
  %7703 = vmatprep.subr.bf16.mxu0 0
  %7704 = vmatpush1.bf16.msra.mxu0 0
  %7705 = vmatprep.mubr.bf16.mxu0 0
  %7706 = vmatmul.mubr.bf16.gmra.mrb[0].mxu0 %v7668
  %v7707 = vpop.f32.mrb[0].mxu0
  %v7708 = vadd.f32 0.0, %v7707
  %v7709 = vpop.f32.mrb[0].mxu0
  %v7710 = vpop.f32.mrb[0].mxu0
  %v7711 = vadd.f32 0.0, %v7710
  %v7712 = vpop.f32.mrb[0].mxu0
  %7713 = vmatprep.mubr.bf16.mxu0 0
  %7714 = vmatmul.mubr.bf16.gmra.mrb[0].mxu0 %v7671
  %v7715 = vpop.f32.mrb[0].mxu0
  %v7716 = vadd.f32 0.0, %v7715
  %v7717 = vpop.f32.mrb[0].mxu0
  %v7718 = vpop.f32.mrb[0].mxu0
  %v7719 = vadd.f32 0.0, %v7718
  %v7720 = vpop.f32.mrb[0].mxu0
  %7721 = vdwg.mxu0
  %7722 = vrot.lane.b32.xlu0 %v820, 96
  %v7723 = vpop.permute.xlu0 %7722
  %7724 = vrot.lane.b32.xlu0 %v821, 96
  %v7725 = vpop.permute.xlu0 %7724
  %v7729 = vsel %vm3685, %v5518, 0
  %v7732 = vsel %vm3685, %v5519, 0
  %7734 = vmatprep.subr.bf16.mxu0 0
  %7735 = vmatpush1.bf16.msra.mxu0 %v7723
  %7736 = vmatprep.subr.bf16.mxu0 0
  %7737 = vmatpush1.bf16.msra.mxu0 %v7725
  %7738 = vmatprep.subr.bf16.mxu0 0
  %7739 = vmatpush1.bf16.msra.mxu0 0
  %7740 = vmatprep.subr.bf16.mxu0 0
  %7741 = vmatpush1.bf16.msra.mxu0 0
  %7742 = vmatprep.subr.bf16.mxu0 0
  %7743 = vmatpush1.bf16.msra.mxu0 0
  %7744 = vmatprep.subr.bf16.mxu0 0
  %7745 = vmatpush1.bf16.msra.mxu0 0
  %7746 = vmatprep.subr.bf16.mxu0 0
  %7747 = vmatpush1.bf16.msra.mxu0 0
  %7748 = vmatprep.subr.bf16.mxu0 0
  %7749 = vmatpush1.bf16.msra.mxu0 0
  %7750 = vmatprep.subr.bf16.mxu0 0
  %7751 = vmatpush1.bf16.msra.mxu0 0
  %7752 = vmatprep.subr.bf16.mxu0 0
  %7753 = vmatpush1.bf16.msra.mxu0 0
  %7754 = vmatprep.subr.bf16.mxu0 0
  %7755 = vmatpush1.bf16.msra.mxu0 0
  %7756 = vmatprep.subr.bf16.mxu0 0
  %7757 = vmatpush1.bf16.msra.mxu0 0
  %7758 = vmatprep.subr.bf16.mxu0 0
  %7759 = vmatpush1.bf16.msra.mxu0 0
  %7760 = vmatprep.subr.bf16.mxu0 0
  %7761 = vmatpush1.bf16.msra.mxu0 0
  %7762 = vmatprep.subr.bf16.mxu0 0
  %7763 = vmatpush1.bf16.msra.mxu0 0
  %7764 = vmatprep.subr.bf16.mxu0 0
  %7765 = vmatpush1.bf16.msra.mxu0 0
  %7766 = vmatprep.mubr.bf16.mxu0 0
  %7767 = vmatmul.mubr.bf16.gmra.mrb[0].mxu0 %v7729
  %v7768 = vpop.f32.mrb[0].mxu0
  %v7769 = vadd.f32 0.0, %v7768
  %v7770 = vpop.f32.mrb[0].mxu0
  %v7771 = vpop.f32.mrb[0].mxu0
  %v7772 = vadd.f32 0.0, %v7771
  %v7773 = vpop.f32.mrb[0].mxu0
  %7774 = vmatprep.mubr.bf16.mxu0 0
  %7775 = vmatmul.mubr.bf16.gmra.mrb[0].mxu0 %v7732
  %v7776 = vpop.f32.mrb[0].mxu0
  %v7777 = vadd.f32 0.0, %v7776
  %v7778 = vpop.f32.mrb[0].mxu0
  %v7779 = vpop.f32.mrb[0].mxu0
  %v7780 = vadd.f32 0.0, %v7779
  %v7781 = vpop.f32.mrb[0].mxu0
  %7782 = vdwg.mxu0
  %7783 = vrot.lane.b32.xlu0 %v822, 96
  %v7784 = vpop.permute.xlu0 %7783
  %7785 = vrot.lane.b32.xlu0 %v823, 96
  %v7786 = vpop.permute.xlu0 %7785
  %v7790 = vsel %vm3685, %v5520, 0
  %v7793 = vsel %vm3685, %v5521, 0
  %7795 = vmatprep.subr.bf16.mxu0 0
  %7796 = vmatpush1.bf16.msra.mxu0 %v7784
  %7797 = vmatprep.subr.bf16.mxu0 0
  %7798 = vmatpush1.bf16.msra.mxu0 %v7786
  %7799 = vmatprep.subr.bf16.mxu0 0
  %7800 = vmatpush1.bf16.msra.mxu0 0
  %7801 = vmatprep.subr.bf16.mxu0 0
  %7802 = vmatpush1.bf16.msra.mxu0 0
  %7803 = vmatprep.subr.bf16.mxu0 0
  %7804 = vmatpush1.bf16.msra.mxu0 0
  %7805 = vmatprep.subr.bf16.mxu0 0
  %7806 = vmatpush1.bf16.msra.mxu0 0
  %7807 = vmatprep.subr.bf16.mxu0 0
  %7808 = vmatpush1.bf16.msra.mxu0 0
  %7809 = vmatprep.subr.bf16.mxu0 0
  %7810 = vmatpush1.bf16.msra.mxu0 0
  %7811 = vmatprep.subr.bf16.mxu0 0
  %7812 = vmatpush1.bf16.msra.mxu0 0
  %7813 = vmatprep.subr.bf16.mxu0 0
  %7814 = vmatpush1.bf16.msra.mxu0 0
  %7815 = vmatprep.subr.bf16.mxu0 0
  %7816 = vmatpush1.bf16.msra.mxu0 0
  %7817 = vmatprep.subr.bf16.mxu0 0
  %7818 = vmatpush1.bf16.msra.mxu0 0
  %7819 = vmatprep.subr.bf16.mxu0 0
  %7820 = vmatpush1.bf16.msra.mxu0 0
  %7821 = vmatprep.subr.bf16.mxu0 0
  %7822 = vmatpush1.bf16.msra.mxu0 0
  %7823 = vmatprep.subr.bf16.mxu0 0
  %7824 = vmatpush1.bf16.msra.mxu0 0
  %7825 = vmatprep.subr.bf16.mxu0 0
  %7826 = vmatpush1.bf16.msra.mxu0 0
  %7827 = vmatprep.mubr.bf16.mxu0 0
  %7828 = vmatmul.mubr.bf16.gmra.mrb[0].mxu0 %v7790
  %v7829 = vpop.f32.mrb[0].mxu0
  %v7830 = vadd.f32 0.0, %v7829
  %v7831 = vpop.f32.mrb[0].mxu0
  %v7832 = vpop.f32.mrb[0].mxu0
  %v7833 = vadd.f32 0.0, %v7832
  %v7834 = vpop.f32.mrb[0].mxu0
  %7835 = vmatprep.mubr.bf16.mxu0 0
  %7836 = vmatmul.mubr.bf16.gmra.mrb[0].mxu0 %v7793
  %v7837 = vpop.f32.mrb[0].mxu0
  %v7838 = vadd.f32 0.0, %v7837
  %v7839 = vpop.f32.mrb[0].mxu0
  %v7840 = vpop.f32.mrb[0].mxu0
  %v7841 = vadd.f32 0.0, %v7840
  %v7842 = vpop.f32.mrb[0].mxu0
  %7843 = vdwg.mxu0
  %7844 = vrot.lane.b32.xlu0 %v824, 96
  %v7845 = vpop.permute.xlu0 %7844
  %7846 = vrot.lane.b32.xlu0 %v825, 96
  %v7847 = vpop.permute.xlu0 %7846
  %v7851 = vsel %vm3685, %v5522, 0
  %v7854 = vsel %vm3685, %v5523, 0
  %7856 = vmatprep.subr.bf16.mxu0 0
  %7857 = vmatpush1.bf16.msra.mxu0 %v7845
  %7858 = vmatprep.subr.bf16.mxu0 0
  %7859 = vmatpush1.bf16.msra.mxu0 %v7847
  %7860 = vmatprep.subr.bf16.mxu0 0
  %7861 = vmatpush1.bf16.msra.mxu0 0
  %7862 = vmatprep.subr.bf16.mxu0 0
  %7863 = vmatpush1.bf16.msra.mxu0 0
  %7864 = vmatprep.subr.bf16.mxu0 0
  %7865 = vmatpush1.bf16.msra.mxu0 0
  %7866 = vmatprep.subr.bf16.mxu0 0
  %7867 = vmatpush1.bf16.msra.mxu0 0
  %7868 = vmatprep.subr.bf16.mxu0 0
  %7869 = vmatpush1.bf16.msra.mxu0 0
  %7870 = vmatprep.subr.bf16.mxu0 0
  %7871 = vmatpush1.bf16.msra.mxu0 0
  %7872 = vmatprep.subr.bf16.mxu0 0
  %7873 = vmatpush1.bf16.msra.mxu0 0
  %7874 = vmatprep.subr.bf16.mxu0 0
  %7875 = vmatpush1.bf16.msra.mxu0 0
  %7876 = vmatprep.subr.bf16.mxu0 0
  %7877 = vmatpush1.bf16.msra.mxu0 0
  %7878 = vmatprep.subr.bf16.mxu0 0
  %7879 = vmatpush1.bf16.msra.mxu0 0
  %7880 = vmatprep.subr.bf16.mxu0 0
  %7881 = vmatpush1.bf16.msra.mxu0 0
  %7882 = vmatprep.subr.bf16.mxu0 0
  %7883 = vmatpush1.bf16.msra.mxu0 0
  %7884 = vmatprep.subr.bf16.mxu0 0
  %7885 = vmatpush1.bf16.msra.mxu0 0
  %7886 = vmatprep.subr.bf16.mxu0 0
  %7887 = vmatpush1.bf16.msra.mxu0 0
  %7888 = vmatprep.mubr.bf16.mxu0 0
  %7889 = vmatmul.mubr.bf16.gmra.mrb[0].mxu0 %v7851
  %v7890 = vpop.f32.mrb[0].mxu0
  %v7891 = vadd.f32 0.0, %v7890
  %v7892 = vpop.f32.mrb[0].mxu0
  %v7893 = vpop.f32.mrb[0].mxu0
  %v7894 = vadd.f32 0.0, %v7893
  %v7895 = vpop.f32.mrb[0].mxu0
  %7896 = vmatprep.mubr.bf16.mxu0 0
  %7897 = vmatmul.mubr.bf16.gmra.mrb[0].mxu0 %v7854
  %v7898 = vpop.f32.mrb[0].mxu0
  %v7899 = vadd.f32 0.0, %v7898
  %v7900 = vpop.f32.mrb[0].mxu0
  %v7901 = vpop.f32.mrb[0].mxu0
  %v7902 = vadd.f32 0.0, %v7901
  %v7903 = vpop.f32.mrb[0].mxu0
  %7904 = vdwg.mxu0
  %7905 = vrot.lane.b32.xlu0 %v826, 96
  %v7906 = vpop.permute.xlu0 %7905
  %7907 = vrot.lane.b32.xlu0 %v827, 96
  %v7908 = vpop.permute.xlu0 %7907
  %v7912 = vsel %vm3685, %v5524, 0
  %v7915 = vsel %vm3685, %v5525, 0
  %7917 = vmatprep.subr.bf16.mxu0 0
  %7918 = vmatpush1.bf16.msra.mxu0 %v7906
  %7919 = vmatprep.subr.bf16.mxu0 0
  %7920 = vmatpush1.bf16.msra.mxu0 %v7908
  %7921 = vmatprep.subr.bf16.mxu0 0
  %7922 = vmatpush1.bf16.msra.mxu0 0
  %7923 = vmatprep.subr.bf16.mxu0 0
  %7924 = vmatpush1.bf16.msra.mxu0 0
  %7925 = vmatprep.subr.bf16.mxu0 0
  %7926 = vmatpush1.bf16.msra.mxu0 0
  %7927 = vmatprep.subr.bf16.mxu0 0
  %7928 = vmatpush1.bf16.msra.mxu0 0
  %7929 = vmatprep.subr.bf16.mxu0 0
  %7930 = vmatpush1.bf16.msra.mxu0 0
  %7931 = vmatprep.subr.bf16.mxu0 0
  %7932 = vmatpush1.bf16.msra.mxu0 0
  %7933 = vmatprep.subr.bf16.mxu0 0
  %7934 = vmatpush1.bf16.msra.mxu0 0
  %7935 = vmatprep.subr.bf16.mxu0 0
  %7936 = vmatpush1.bf16.msra.mxu0 0
  %7937 = vmatprep.subr.bf16.mxu0 0
  %7938 = vmatpush1.bf16.msra.mxu0 0
  %7939 = vmatprep.subr.bf16.mxu0 0
  %7940 = vmatpush1.bf16.msra.mxu0 0
  %7941 = vmatprep.subr.bf16.mxu0 0
  %7942 = vmatpush1.bf16.msra.mxu0 0
  %7943 = vmatprep.subr.bf16.mxu0 0
  %7944 = vmatpush1.bf16.msra.mxu0 0
  %7945 = vmatprep.subr.bf16.mxu0 0
  %7946 = vmatpush1.bf16.msra.mxu0 0
  %7947 = vmatprep.subr.bf16.mxu0 0
  %7948 = vmatpush1.bf16.msra.mxu0 0
  %7949 = vmatprep.mubr.bf16.mxu0 0
  %7950 = vmatmul.mubr.bf16.gmra.mrb[0].mxu0 %v7912
  %v7951 = vpop.f32.mrb[0].mxu0
  %v7952 = vadd.f32 0.0, %v7951
  %v7953 = vpop.f32.mrb[0].mxu0
  %v7954 = vpop.f32.mrb[0].mxu0
  %v7955 = vadd.f32 0.0, %v7954
  %v7956 = vpop.f32.mrb[0].mxu0
  %7957 = vmatprep.mubr.bf16.mxu0 0
  %7958 = vmatmul.mubr.bf16.gmra.mrb[0].mxu0 %v7915
  %v7959 = vpop.f32.mrb[0].mxu0
  %v7960 = vadd.f32 0.0, %v7959
  %v7961 = vpop.f32.mrb[0].mxu0
  %v7962 = vpop.f32.mrb[0].mxu0
  %v7963 = vadd.f32 0.0, %v7962
  %v7964 = vpop.f32.mrb[0].mxu0
  %7965 = vdwg.mxu0
  %v7966 = vld [vmem:[%s3] sm:$0xf]
  %v7967 = vld [vmem:[%s3 + $0x4] sm:$0xf]
  %v7968 = vld [vmem:[%s3 + $0x8] sm:$0xf]
  %v7969 = vld [vmem:[%s3 + $0xc] sm:$0xf]
  %v7970 = vpack.c.bf16 %v5576, %v5573
  %v7971 = vpack.c.bf16 %v5584, %v5581
  %v7972 = vpack.c.bf16 %v5637, %v5634
  %v7973 = vpack.c.bf16 %v5645, %v5642
  %v7974 = vpack.c.bf16 %v5698, %v5695
  %v7975 = vpack.c.bf16 %v5706, %v5703
  %v7976 = vpack.c.bf16 %v5759, %v5756
  %v7977 = vpack.c.bf16 %v5767, %v5764
  %v7978 = vpack.c.bf16 %v5820, %v5817
  %v7979 = vpack.c.bf16 %v5828, %v5825
  %v7980 = vpack.c.bf16 %v5881, %v5878
  %v7981 = vpack.c.bf16 %v5889, %v5886
  %v7982 = vpack.c.bf16 %v5942, %v5939
  %v7983 = vpack.c.bf16 %v5950, %v5947
  %v7984 = vpack.c.bf16 %v6003, %v6000
  %v7985 = vpack.c.bf16 %v6011, %v6008
  %v7986 = vpack.c.bf16 %v6064, %v6061
  %v7987 = vpack.c.bf16 %v6072, %v6069
  %v7988 = vpack.c.bf16 %v6125, %v6122
  %v7989 = vpack.c.bf16 %v6133, %v6130
  %v7990 = vpack.c.bf16 %v7966, %v7966
  %v7991 = vpack.c.bf16 %v6186, %v6183
  %v7992 = vpack.c.bf16 %v6194, %v6191
  %v7993 = vpack.c.bf16 %v6247, %v6244
  %v7994 = vpack.c.bf16 %v6255, %v6252
  %v7995 = vpack.c.bf16 %v6308, %v6305
  %v7996 = vpack.c.bf16 %v6316, %v6313
  %v7997 = vpack.c.bf16 %v6369, %v6366
  %v7998 = vpack.c.bf16 %v6377, %v6374
  %v7999 = vpack.c.bf16 %v6430, %v6427
  %v8000 = vpack.c.bf16 %v6438, %v6435
  %v8001 = vpack.c.bf16 %v6491, %v6488
  %v8002 = vpack.c.bf16 %v6499, %v6496
  %v8003 = vpack.c.bf16 %v6552, %v6549
  %v8004 = vpack.c.bf16 %v6560, %v6557
  %v8005 = vpack.c.bf16 %v6613, %v6610
  %v8006 = vpack.c.bf16 %v6621, %v6618
  %v8007 = vpack.c.bf16 %v6674, %v6671
  %v8008 = vpack.c.bf16 %v6682, %v6679
  %v8009 = vpack.c.bf16 %v6735, %v6732
  %v8010 = vpack.c.bf16 %v6743, %v6740
  %v8011 = vpack.c.bf16 %v7967, %v7967
  %v8013 = vsel %vm834, %v7991, 0
  %v8016 = vsel %vm834, %v7992, 0
  %v8019 = vsel %vm834, %v7993, 0
  %v8022 = vsel %vm834, %v7994, 0
  %v8025 = vsel %vm834, %v7995, 0
  %v8028 = vsel %vm834, %v7996, 0
  %v8031 = vsel %vm834, %v7997, 0
  %v8034 = vsel %vm834, %v7998, 0
  %v8037 = vsel %vm834, %v7999, 0
  %v8040 = vsel %vm834, %v8000, 0
  %v8043 = vsel %vm834, %v8001, 0
  %v8046 = vsel %vm834, %v8002, 0
  %v8049 = vsel %vm834, %v8003, 0
  %v8052 = vsel %vm834, %v8004, 0
  %v8055 = vsel %vm834, %v8005, 0
  %v8058 = vsel %vm834, %v8006, 0
  %v8061 = vsel %vm834, %v8007, 0
  %v8064 = vsel %vm834, %v8008, 0
  %v8067 = vsel %vm834, %v8009, 0
  %v8070 = vsel %vm834, %v8010, 0
  %vm8072 = vcmask 1041408
  %v8074 = vsel %vm8072, %v8011, 0
  %8076 = vmatprep.subr.bf16.mxu0 0
  %8077 = vmatpush1.bf16.msra.mxu0 %v8074
  %8078 = vmatprep.subr.bf16.mxu0 0
  %8079 = vmatpush1.bf16.msra.mxu0 0
  %8080 = vmatprep.subr.bf16.mxu0 0
  %8081 = vmatpush1.bf16.msra.mxu0 0
  %8082 = vmatprep.subr.bf16.mxu0 0
  %8083 = vmatpush1.bf16.msra.mxu0 0
  %8084 = vmatprep.subr.bf16.mxu0 0
  %8085 = vmatpush1.bf16.msra.mxu0 0
  %8086 = vmatprep.subr.bf16.mxu0 0
  %8087 = vmatpush1.bf16.msra.mxu0 0
  %8088 = vmatprep.subr.bf16.mxu0 0
  %8089 = vmatpush1.bf16.msra.mxu0 0
  %8090 = vmatprep.subr.bf16.mxu0 0
  %8091 = vmatpush1.bf16.msra.mxu0 0
  %8092 = vmatprep.subr.bf16.mxu0 0
  %8093 = vmatpush1.bf16.msra.mxu0 0
  %8094 = vmatprep.subr.bf16.mxu0 0
  %8095 = vmatpush1.bf16.msra.mxu0 0
  %8096 = vmatprep.subr.bf16.mxu0 0
  %8097 = vmatpush1.bf16.msra.mxu0 0
  %8098 = vmatprep.subr.bf16.mxu0 0
  %8099 = vmatpush1.bf16.msra.mxu0 0
  %8100 = vmatprep.subr.bf16.mxu0 0
  %8101 = vmatpush1.bf16.msra.mxu0 0
  %8102 = vmatprep.subr.bf16.mxu0 0
  %8103 = vmatpush1.bf16.msra.mxu0 0
  %8104 = vmatprep.subr.bf16.mxu0 0
  %8105 = vmatpush1.bf16.msra.mxu0 0
  %8106 = vmatprep.subr.bf16.mxu0 0
  %8107 = vmatpush1.bf16.msra.mxu0 0
  %8108 = vmatprep.mubr.bf16.mxu0 0
  %8109 = vmatmul.mubr.bf16.gmra.mrb[0].mxu0 %v8013
  %v8110 = vpop.f32.mrb[0].mxu0
  %v8111 = vadd.f32 0.0, %v8110
  %v8112 = vpop.f32.mrb[0].mxu0
  %v8113 = vpop.f32.mrb[0].mxu0
  %v8114 = vadd.f32 0.0, %v8113
  %v8115 = vpop.f32.mrb[0].mxu0
  %8116 = vmatprep.mubr.bf16.mxu0 0
  %8117 = vmatmul.mubr.bf16.gmra.mrb[0].mxu0 %v8016
  %v8118 = vpop.f32.mrb[0].mxu0
  %v8119 = vadd.f32 0.0, %v8118
  %v8120 = vpop.f32.mrb[0].mxu0
  %v8121 = vpop.f32.mrb[0].mxu0
  %v8122 = vadd.f32 0.0, %v8121
  %v8123 = vpop.f32.mrb[0].mxu0
  %8124 = vmatprep.mubr.bf16.mxu0 0
  %8125 = vmatmul.mubr.bf16.gmra.mrb[0].mxu0 %v8019
  %v8126 = vpop.f32.mrb[0].mxu0
  %v8127 = vadd.f32 0.0, %v8126
  %v8128 = vpop.f32.mrb[0].mxu0
  %v8129 = vpop.f32.mrb[0].mxu0
  %v8130 = vadd.f32 0.0, %v8129
  %v8131 = vpop.f32.mrb[0].mxu0
  %8132 = vmatprep.mubr.bf16.mxu0 0
  %8133 = vmatmul.mubr.bf16.gmra.mrb[0].mxu0 %v8022
  %v8134 = vpop.f32.mrb[0].mxu0
  %v8135 = vadd.f32 0.0, %v8134
  %v8136 = vpop.f32.mrb[0].mxu0
  %v8137 = vpop.f32.mrb[0].mxu0
  %v8138 = vadd.f32 0.0, %v8137
  %v8139 = vpop.f32.mrb[0].mxu0
  %8140 = vmatprep.mubr.bf16.mxu0 0
  %8141 = vmatmul.mubr.bf16.gmra.mrb[0].mxu0 %v8025
  %v8142 = vpop.f32.mrb[0].mxu0
  %v8143 = vadd.f32 0.0, %v8142
  %v8144 = vpop.f32.mrb[0].mxu0
  %v8145 = vpop.f32.mrb[0].mxu0
  %v8146 = vadd.f32 0.0, %v8145
  %v8147 = vpop.f32.mrb[0].mxu0
  %8148 = vmatprep.mubr.bf16.mxu0 0
  %8149 = vmatmul.mubr.bf16.gmra.mrb[0].mxu0 %v8028
  %v8150 = vpop.f32.mrb[0].mxu0
  %v8151 = vadd.f32 0.0, %v8150
  %v8152 = vpop.f32.mrb[0].mxu0
  %v8153 = vpop.f32.mrb[0].mxu0
  %v8154 = vadd.f32 0.0, %v8153
  %v8155 = vpop.f32.mrb[0].mxu0
  %8156 = vmatprep.mubr.bf16.mxu0 0
  %8157 = vmatmul.mubr.bf16.gmra.mrb[0].mxu0 %v8031
  %v8158 = vpop.f32.mrb[0].mxu0
  %v8159 = vadd.f32 0.0, %v8158
  %v8160 = vpop.f32.mrb[0].mxu0
  %v8161 = vpop.f32.mrb[0].mxu0
  %v8162 = vadd.f32 0.0, %v8161
  %v8163 = vpop.f32.mrb[0].mxu0
  %8164 = vmatprep.mubr.bf16.mxu0 0
  %8165 = vmatmul.mubr.bf16.gmra.mrb[0].mxu0 %v8034
  %v8166 = vpop.f32.mrb[0].mxu0
  %v8167 = vadd.f32 0.0, %v8166
  %v8168 = vpop.f32.mrb[0].mxu0
  %v8169 = vpop.f32.mrb[0].mxu0
  %v8170 = vadd.f32 0.0, %v8169
  %v8171 = vpop.f32.mrb[0].mxu0
  %8172 = vmatprep.mubr.bf16.mxu0 0
  %8173 = vmatmul.mubr.bf16.gmra.mrb[0].mxu0 %v8037
  %v8174 = vpop.f32.mrb[0].mxu0
  %v8175 = vadd.f32 0.0, %v8174
  %v8176 = vpop.f32.mrb[0].mxu0
  %v8177 = vpop.f32.mrb[0].mxu0
  %v8178 = vadd.f32 0.0, %v8177
  %v8179 = vpop.f32.mrb[0].mxu0
  %8180 = vmatprep.mubr.bf16.mxu0 0
  %8181 = vmatmul.mubr.bf16.gmra.mrb[0].mxu0 %v8040
  %v8182 = vpop.f32.mrb[0].mxu0
  %v8183 = vadd.f32 0.0, %v8182
  %v8184 = vpop.f32.mrb[0].mxu0
  %v8185 = vpop.f32.mrb[0].mxu0
  %v8186 = vadd.f32 0.0, %v8185
  %v8187 = vpop.f32.mrb[0].mxu0
  %8188 = vmatprep.mubr.bf16.mxu0 0
  %8189 = vmatmul.mubr.bf16.gmra.mrb[0].mxu0 %v8043
  %v8190 = vpop.f32.mrb[0].mxu0
  %v8191 = vadd.f32 0.0, %v8190
  %v8192 = vpop.f32.mrb[0].mxu0
  %v8193 = vpop.f32.mrb[0].mxu0
  %v8194 = vadd.f32 0.0, %v8193
  %v8195 = vpop.f32.mrb[0].mxu0
  %8196 = vmatprep.mubr.bf16.mxu0 0
  %8197 = vmatmul.mubr.bf16.gmra.mrb[0].mxu0 %v8046
  %v8198 = vpop.f32.mrb[0].mxu0
  %v8199 = vadd.f32 0.0, %v8198
  %v8200 = vpop.f32.mrb[0].mxu0
  %v8201 = vpop.f32.mrb[0].mxu0
  %v8202 = vadd.f32 0.0, %v8201
  %v8203 = vpop.f32.mrb[0].mxu0
  %8204 = vmatprep.mubr.bf16.mxu0 0
  %8205 = vmatmul.mubr.bf16.gmra.mrb[0].mxu0 %v8049
  %v8206 = vpop.f32.mrb[0].mxu0
  %v8207 = vadd.f32 0.0, %v8206
  %v8208 = vpop.f32.mrb[0].mxu0
  %v8209 = vpop.f32.mrb[0].mxu0
  %v8210 = vadd.f32 0.0, %v8209
  %v8211 = vpop.f32.mrb[0].mxu0
  %8212 = vmatprep.mubr.bf16.mxu0 0
  %8213 = vmatmul.mubr.bf16.gmra.mrb[0].mxu0 %v8052
  %v8214 = vpop.f32.mrb[0].mxu0
  %v8215 = vadd.f32 0.0, %v8214
  %v8216 = vpop.f32.mrb[0].mxu0
  %v8217 = vpop.f32.mrb[0].mxu0
  %v8218 = vadd.f32 0.0, %v8217
  %v8219 = vpop.f32.mrb[0].mxu0
  %8220 = vmatprep.mubr.bf16.mxu0 0
  %8221 = vmatmul.mubr.bf16.gmra.mrb[0].mxu0 %v8055
  %v8222 = vpop.f32.mrb[0].mxu0
  %v8223 = vadd.f32 0.0, %v8222
  %v8224 = vpop.f32.mrb[0].mxu0
  %v8225 = vpop.f32.mrb[0].mxu0
  %v8226 = vadd.f32 0.0, %v8225
  %v8227 = vpop.f32.mrb[0].mxu0
  %8228 = vmatprep.mubr.bf16.mxu0 0
  %8229 = vmatmul.mubr.bf16.gmra.mrb[0].mxu0 %v8058
  %v8230 = vpop.f32.mrb[0].mxu0
  %v8231 = vadd.f32 0.0, %v8230
  %v8232 = vpop.f32.mrb[0].mxu0
  %v8233 = vpop.f32.mrb[0].mxu0
  %v8234 = vadd.f32 0.0, %v8233
  %v8235 = vpop.f32.mrb[0].mxu0
  %8236 = vmatprep.mubr.bf16.mxu0 0
  %8237 = vmatmul.mubr.bf16.gmra.mrb[0].mxu0 %v8061
  %v8238 = vpop.f32.mrb[0].mxu0
  %v8239 = vadd.f32 0.0, %v8238
  %v8240 = vpop.f32.mrb[0].mxu0
  %v8241 = vpop.f32.mrb[0].mxu0
  %v8242 = vadd.f32 0.0, %v8241
  %v8243 = vpop.f32.mrb[0].mxu0
  %8244 = vmatprep.mubr.bf16.mxu0 0
  %8245 = vmatmul.mubr.bf16.gmra.mrb[0].mxu0 %v8064
  %v8246 = vpop.f32.mrb[0].mxu0
  %v8247 = vadd.f32 0.0, %v8246
  %v8248 = vpop.f32.mrb[0].mxu0
  %v8249 = vpop.f32.mrb[0].mxu0
  %v8250 = vadd.f32 0.0, %v8249
  %v8251 = vpop.f32.mrb[0].mxu0
  %8252 = vmatprep.mubr.bf16.mxu0 0
  %8253 = vmatmul.mubr.bf16.gmra.mrb[0].mxu0 %v8067
  %v8254 = vpop.f32.mrb[0].mxu0
  %v8255 = vadd.f32 0.0, %v8254
  %v8256 = vpop.f32.mrb[0].mxu0
  %v8257 = vpop.f32.mrb[0].mxu0
  %v8258 = vadd.f32 0.0, %v8257
  %v8259 = vpop.f32.mrb[0].mxu0
  %8260 = vmatprep.mubr.bf16.mxu0 0
  %8261 = vmatmul.mubr.bf16.gmra.mrb[0].mxu0 %v8070
  %v8262 = vpop.f32.mrb[0].mxu0
  %v8263 = vadd.f32 0.0, %v8262
  %v8264 = vpop.f32.mrb[0].mxu0
  %v8265 = vpop.f32.mrb[0].mxu0
  %v8266 = vadd.f32 0.0, %v8265
  %v8267 = vpop.f32.mrb[0].mxu0
  %8268 = vdwg.mxu0
  %v8270 = vsel %vm834, %v7970, 0
  %v8273 = vsel %vm834, %v7971, 0
  %v8276 = vsel %vm834, %v7972, 0
  %v8279 = vsel %vm834, %v7973, 0
  %v8282 = vsel %vm834, %v7974, 0
  %v8285 = vsel %vm834, %v7975, 0
  %v8288 = vsel %vm834, %v7976, 0
  %v8291 = vsel %vm834, %v7977, 0
  %v8294 = vsel %vm834, %v7978, 0
  %v8297 = vsel %vm834, %v7979, 0
  %v8300 = vsel %vm834, %v7980, 0
  %v8303 = vsel %vm834, %v7981, 0
  %v8306 = vsel %vm834, %v7982, 0
  %v8309 = vsel %vm834, %v7983, 0
  %v8312 = vsel %vm834, %v7984, 0
  %v8315 = vsel %vm834, %v7985, 0
  %v8318 = vsel %vm834, %v7986, 0
  %v8321 = vsel %vm834, %v7987, 0
  %v8324 = vsel %vm834, %v7988, 0
  %v8327 = vsel %vm834, %v7989, 0
  %v8330 = vsel %vm8072, %v7990, 0
  %8332 = vmatprep.subr.bf16.mxu0 0
  %8333 = vmatpush1.bf16.msra.mxu0 %v8330
  %8334 = vmatprep.subr.bf16.mxu0 0
  %8335 = vmatpush1.bf16.msra.mxu0 0
  %8336 = vmatprep.subr.bf16.mxu0 0
  %8337 = vmatpush1.bf16.msra.mxu0 0
  %8338 = vmatprep.subr.bf16.mxu0 0
  %8339 = vmatpush1.bf16.msra.mxu0 0
  %8340 = vmatprep.subr.bf16.mxu0 0
  %8341 = vmatpush1.bf16.msra.mxu0 0
  %8342 = vmatprep.subr.bf16.mxu0 0
  %8343 = vmatpush1.bf16.msra.mxu0 0
  %8344 = vmatprep.subr.bf16.mxu0 0
  %8345 = vmatpush1.bf16.msra.mxu0 0
  %8346 = vmatprep.subr.bf16.mxu0 0
  %8347 = vmatpush1.bf16.msra.mxu0 0
  %8348 = vmatprep.subr.bf16.mxu0 0
  %8349 = vmatpush1.bf16.msra.mxu0 0
  %8350 = vmatprep.subr.bf16.mxu0 0
  %8351 = vmatpush1.bf16.msra.mxu0 0
  %8352 = vmatprep.subr.bf16.mxu0 0
  %8353 = vmatpush1.bf16.msra.mxu0 0
  %8354 = vmatprep.subr.bf16.mxu0 0
  %8355 = vmatpush1.bf16.msra.mxu0 0
  %8356 = vmatprep.subr.bf16.mxu0 0
  %8357 = vmatpush1.bf16.msra.mxu0 0
  %8358 = vmatprep.subr.bf16.mxu0 0
  %8359 = vmatpush1.bf16.msra.mxu0 0
  %8360 = vmatprep.subr.bf16.mxu0 0
  %8361 = vmatpush1.bf16.msra.mxu0 0
  %8362 = vmatprep.subr.bf16.mxu0 0
  %8363 = vmatpush1.bf16.msra.mxu0 0
  %8364 = vmatprep.mubr.bf16.mxu0 0
  %8365 = vmatmul.mubr.bf16.gmra.mrb[0].mxu0 %v8270
  %v8366 = vpop.f32.mrb[0].mxu0
  %v8367 = vadd.f32 %v8111, %v8366
  %v8368 = vpop.f32.mrb[0].mxu0
  %v8369 = vpop.f32.mrb[0].mxu0
  %v8370 = vadd.f32 %v8114, %v8369
  %v8371 = vpop.f32.mrb[0].mxu0
  %8372 = vmatprep.mubr.bf16.mxu0 0
  %8373 = vmatmul.mubr.bf16.gmra.mrb[0].mxu0 %v8273
  %v8374 = vpop.f32.mrb[0].mxu0
  %v8375 = vadd.f32 %v8119, %v8374
  %v8376 = vpop.f32.mrb[0].mxu0
  %v8377 = vpop.f32.mrb[0].mxu0
  %v8378 = vadd.f32 %v8122, %v8377
  %v8379 = vpop.f32.mrb[0].mxu0
  %8380 = vmatprep.mubr.bf16.mxu0 0
  %8381 = vmatmul.mubr.bf16.gmra.mrb[0].mxu0 %v8276
  %v8382 = vpop.f32.mrb[0].mxu0
  %v8383 = vadd.f32 %v8127, %v8382
  %v8384 = vpop.f32.mrb[0].mxu0
  %v8385 = vpop.f32.mrb[0].mxu0
  %v8386 = vadd.f32 %v8130, %v8385
  %v8387 = vpop.f32.mrb[0].mxu0
  %8388 = vmatprep.mubr.bf16.mxu0 0
  %8389 = vmatmul.mubr.bf16.gmra.mrb[0].mxu0 %v8279
  %v8390 = vpop.f32.mrb[0].mxu0
  %v8391 = vadd.f32 %v8135, %v8390
  %v8392 = vpop.f32.mrb[0].mxu0
  %v8393 = vpop.f32.mrb[0].mxu0
  %v8394 = vadd.f32 %v8138, %v8393
  %v8395 = vpop.f32.mrb[0].mxu0
  %8396 = vmatprep.mubr.bf16.mxu0 0
  %8397 = vmatmul.mubr.bf16.gmra.mrb[0].mxu0 %v8282
  %v8398 = vpop.f32.mrb[0].mxu0
  %v8399 = vadd.f32 %v8143, %v8398
  %v8400 = vpop.f32.mrb[0].mxu0
  %v8401 = vpop.f32.mrb[0].mxu0
  %v8402 = vadd.f32 %v8146, %v8401
  %v8403 = vpop.f32.mrb[0].mxu0
  %8404 = vmatprep.mubr.bf16.mxu0 0
  %8405 = vmatmul.mubr.bf16.gmra.mrb[0].mxu0 %v8285
  %v8406 = vpop.f32.mrb[0].mxu0
  %v8407 = vadd.f32 %v8151, %v8406
  %v8408 = vpop.f32.mrb[0].mxu0
  %v8409 = vpop.f32.mrb[0].mxu0
  %v8410 = vadd.f32 %v8154, %v8409
  %v8411 = vpop.f32.mrb[0].mxu0
  %8412 = vmatprep.mubr.bf16.mxu0 0
  %8413 = vmatmul.mubr.bf16.gmra.mrb[0].mxu0 %v8288
  %v8414 = vpop.f32.mrb[0].mxu0
  %v8415 = vadd.f32 %v8159, %v8414
  %v8416 = vpop.f32.mrb[0].mxu0
  %v8417 = vpop.f32.mrb[0].mxu0
  %v8418 = vadd.f32 %v8162, %v8417
  %v8419 = vpop.f32.mrb[0].mxu0
  %8420 = vmatprep.mubr.bf16.mxu0 0
  %8421 = vmatmul.mubr.bf16.gmra.mrb[0].mxu0 %v8291
  %v8422 = vpop.f32.mrb[0].mxu0
  %v8423 = vadd.f32 %v8167, %v8422
  %v8424 = vpop.f32.mrb[0].mxu0
  %v8425 = vpop.f32.mrb[0].mxu0
  %v8426 = vadd.f32 %v8170, %v8425
  %v8427 = vpop.f32.mrb[0].mxu0
  %8428 = vmatprep.mubr.bf16.mxu0 0
  %8429 = vmatmul.mubr.bf16.gmra.mrb[0].mxu0 %v8294
  %v8430 = vpop.f32.mrb[0].mxu0
  %v8431 = vadd.f32 %v8175, %v8430
  %v8432 = vpop.f32.mrb[0].mxu0
  %v8433 = vpop.f32.mrb[0].mxu0
  %v8434 = vadd.f32 %v8178, %v8433
  %v8435 = vpop.f32.mrb[0].mxu0
  %8436 = vmatprep.mubr.bf16.mxu0 0
  %8437 = vmatmul.mubr.bf16.gmra.mrb[0].mxu0 %v8297
  %v8438 = vpop.f32.mrb[0].mxu0
  %v8439 = vadd.f32 %v8183, %v8438
  %v8440 = vpop.f32.mrb[0].mxu0
  %v8441 = vpop.f32.mrb[0].mxu0
  %v8442 = vadd.f32 %v8186, %v8441
  %v8443 = vpop.f32.mrb[0].mxu0
  %8444 = vmatprep.mubr.bf16.mxu0 0
  %8445 = vmatmul.mubr.bf16.gmra.mrb[0].mxu0 %v8300
  %v8446 = vpop.f32.mrb[0].mxu0
  %v8447 = vadd.f32 %v8191, %v8446
  %v8448 = vpop.f32.mrb[0].mxu0
  %v8449 = vpop.f32.mrb[0].mxu0
  %v8450 = vadd.f32 %v8194, %v8449
  %v8451 = vpop.f32.mrb[0].mxu0
  %8452 = vmatprep.mubr.bf16.mxu0 0
  %8453 = vmatmul.mubr.bf16.gmra.mrb[0].mxu0 %v8303
  %v8454 = vpop.f32.mrb[0].mxu0
  %v8455 = vadd.f32 %v8199, %v8454
  %v8456 = vpop.f32.mrb[0].mxu0
  %v8457 = vpop.f32.mrb[0].mxu0
  %v8458 = vadd.f32 %v8202, %v8457
  %v8459 = vpop.f32.mrb[0].mxu0
  %8460 = vmatprep.mubr.bf16.mxu0 0
  %8461 = vmatmul.mubr.bf16.gmra.mrb[0].mxu0 %v8306
  %v8462 = vpop.f32.mrb[0].mxu0
  %v8463 = vadd.f32 %v8207, %v8462
  %v8464 = vpop.f32.mrb[0].mxu0
  %v8465 = vpop.f32.mrb[0].mxu0
  %v8466 = vadd.f32 %v8210, %v8465
  %v8467 = vpop.f32.mrb[0].mxu0
  %8468 = vmatprep.mubr.bf16.mxu0 0
  %8469 = vmatmul.mubr.bf16.gmra.mrb[0].mxu0 %v8309
  %v8470 = vpop.f32.mrb[0].mxu0
  %v8471 = vadd.f32 %v8215, %v8470
  %v8472 = vpop.f32.mrb[0].mxu0
  %v8473 = vpop.f32.mrb[0].mxu0
  %v8474 = vadd.f32 %v8218, %v8473
  %v8475 = vpop.f32.mrb[0].mxu0
  %8476 = vmatprep.mubr.bf16.mxu0 0
  %8477 = vmatmul.mubr.bf16.gmra.mrb[0].mxu0 %v8312
  %v8478 = vpop.f32.mrb[0].mxu0
  %v8479 = vadd.f32 %v8223, %v8478
  %v8480 = vpop.f32.mrb[0].mxu0
  %v8481 = vpop.f32.mrb[0].mxu0
  %v8482 = vadd.f32 %v8226, %v8481
  %v8483 = vpop.f32.mrb[0].mxu0
  %8484 = vmatprep.mubr.bf16.mxu0 0
  %8485 = vmatmul.mubr.bf16.gmra.mrb[0].mxu0 %v8315
  %v8486 = vpop.f32.mrb[0].mxu0
  %v8487 = vadd.f32 %v8231, %v8486
  %v8488 = vpop.f32.mrb[0].mxu0
  %v8489 = vpop.f32.mrb[0].mxu0
  %v8490 = vadd.f32 %v8234, %v8489
  %v8491 = vpop.f32.mrb[0].mxu0
  %8492 = vmatprep.mubr.bf16.mxu0 0
  %8493 = vmatmul.mubr.bf16.gmra.mrb[0].mxu0 %v8318
  %v8494 = vpop.f32.mrb[0].mxu0
  %v8495 = vadd.f32 %v8239, %v8494
  %v8496 = vpop.f32.mrb[0].mxu0
  %v8497 = vpop.f32.mrb[0].mxu0
  %v8498 = vadd.f32 %v8242, %v8497
  %v8499 = vpop.f32.mrb[0].mxu0
  %8500 = vmatprep.mubr.bf16.mxu0 0
  %8501 = vmatmul.mubr.bf16.gmra.mrb[0].mxu0 %v8321
  %v8502 = vpop.f32.mrb[0].mxu0
  %v8503 = vadd.f32 %v8247, %v8502
  %v8504 = vpop.f32.mrb[0].mxu0
  %v8505 = vpop.f32.mrb[0].mxu0
  %v8506 = vadd.f32 %v8250, %v8505
  %v8507 = vpop.f32.mrb[0].mxu0
  %8508 = vmatprep.mubr.bf16.mxu0 0
  %8509 = vmatmul.mubr.bf16.gmra.mrb[0].mxu0 %v8324
  %v8510 = vpop.f32.mrb[0].mxu0
  %v8511 = vadd.f32 %v8255, %v8510
  %v8512 = vpop.f32.mrb[0].mxu0
  %v8513 = vpop.f32.mrb[0].mxu0
  %v8514 = vadd.f32 %v8258, %v8513
  %v8515 = vpop.f32.mrb[0].mxu0
  %8516 = vmatprep.mubr.bf16.mxu0 0
  %8517 = vmatmul.mubr.bf16.gmra.mrb[0].mxu0 %v8327
  %v8518 = vpop.f32.mrb[0].mxu0
  %v8519 = vadd.f32 %v8263, %v8518
  %v8520 = vpop.f32.mrb[0].mxu0
  %v8521 = vpop.f32.mrb[0].mxu0
  %v8522 = vadd.f32 %v8266, %v8521
  %v8523 = vpop.f32.mrb[0].mxu0
  %8524 = vdwg.mxu0
  %v8525 = vpack.c.bf16 %v6796, %v6793
  %v8526 = vpack.c.bf16 %v6804, %v6801
  %v8527 = vpack.c.bf16 %v6857, %v6854
  %v8528 = vpack.c.bf16 %v6865, %v6862
  %v8529 = vpack.c.bf16 %v6918, %v6915
  %v8530 = vpack.c.bf16 %v6926, %v6923
  %v8531 = vpack.c.bf16 %v6979, %v6976
  %v8532 = vpack.c.bf16 %v6987, %v6984
  %v8533 = vpack.c.bf16 %v7040, %v7037
  %v8534 = vpack.c.bf16 %v7048, %v7045
  %v8535 = vpack.c.bf16 %v7101, %v7098
  %v8536 = vpack.c.bf16 %v7109, %v7106
  %v8537 = vpack.c.bf16 %v7162, %v7159
  %v8538 = vpack.c.bf16 %v7170, %v7167
  %v8539 = vpack.c.bf16 %v7223, %v7220
  %v8540 = vpack.c.bf16 %v7231, %v7228
  %v8541 = vpack.c.bf16 %v7284, %v7281
  %v8542 = vpack.c.bf16 %v7292, %v7289
  %v8543 = vpack.c.bf16 %v7345, %v7342
  %v8544 = vpack.c.bf16 %v7353, %v7350
  %v8545 = vpack.c.bf16 %v7968, %v7968
  %v8547 = vsel %vm834, %v8525, 0
  %v8550 = vsel %vm834, %v8526, 0
  %v8553 = vsel %vm834, %v8527, 0
  %v8556 = vsel %vm834, %v8528, 0
  %v8559 = vsel %vm834, %v8529, 0
  %v8562 = vsel %vm834, %v8530, 0
  %v8565 = vsel %vm834, %v8531, 0
  %v8568 = vsel %vm834, %v8532, 0
  %v8571 = vsel %vm834, %v8533, 0
  %v8574 = vsel %vm834, %v8534, 0
  %v8577 = vsel %vm834, %v8535, 0
  %v8580 = vsel %vm834, %v8536, 0
  %v8583 = vsel %vm834, %v8537, 0
  %v8586 = vsel %vm834, %v8538, 0
  %v8589 = vsel %vm834, %v8539, 0
  %v8592 = vsel %vm834, %v8540, 0
  %v8595 = vsel %vm834, %v8541, 0
  %v8598 = vsel %vm834, %v8542, 0
  %v8601 = vsel %vm834, %v8543, 0
  %v8604 = vsel %vm834, %v8544, 0
  %v8607 = vsel %vm8072, %v8545, 0
  %8609 = vmatprep.subr.bf16.mxu0 0
  %8610 = vmatpush1.bf16.msra.mxu0 %v8607
  %8611 = vmatprep.subr.bf16.mxu0 0
  %8612 = vmatpush1.bf16.msra.mxu0 0
  %8613 = vmatprep.subr.bf16.mxu0 0
  %8614 = vmatpush1.bf16.msra.mxu0 0
  %8615 = vmatprep.subr.bf16.mxu0 0
  %8616 = vmatpush1.bf16.msra.mxu0 0
  %8617 = vmatprep.subr.bf16.mxu0 0
  %8618 = vmatpush1.bf16.msra.mxu0 0
  %8619 = vmatprep.subr.bf16.mxu0 0
  %8620 = vmatpush1.bf16.msra.mxu0 0
  %8621 = vmatprep.subr.bf16.mxu0 0
  %8622 = vmatpush1.bf16.msra.mxu0 0
  %8623 = vmatprep.subr.bf16.mxu0 0
  %8624 = vmatpush1.bf16.msra.mxu0 0
  %8625 = vmatprep.subr.bf16.mxu0 0
  %8626 = vmatpush1.bf16.msra.mxu0 0
  %8627 = vmatprep.subr.bf16.mxu0 0
  %8628 = vmatpush1.bf16.msra.mxu0 0
  %8629 = vmatprep.subr.bf16.mxu0 0
  %8630 = vmatpush1.bf16.msra.mxu0 0
  %8631 = vmatprep.subr.bf16.mxu0 0
  %8632 = vmatpush1.bf16.msra.mxu0 0
  %8633 = vmatprep.subr.bf16.mxu0 0
  %8634 = vmatpush1.bf16.msra.mxu0 0
  %8635 = vmatprep.subr.bf16.mxu0 0
  %8636 = vmatpush1.bf16.msra.mxu0 0
  %8637 = vmatprep.subr.bf16.mxu0 0
  %8638 = vmatpush1.bf16.msra.mxu0 0
  %8639 = vmatprep.subr.bf16.mxu0 0
  %8640 = vmatpush1.bf16.msra.mxu0 0
  %8641 = vmatprep.mubr.bf16.mxu0 0
  %8642 = vmatmul.mubr.bf16.gmra.mrb[0].mxu0 %v8547
  %v8643 = vpop.f32.mrb[0].mxu0
  %v8644 = vadd.f32 0.0, %v8643
  %v8645 = vpop.f32.mrb[0].mxu0
  %v8646 = vpop.f32.mrb[0].mxu0
  %v8647 = vadd.f32 0.0, %v8646
  %v8648 = vpop.f32.mrb[0].mxu0
  %8649 = vmatprep.mubr.bf16.mxu0 0
  %8650 = vmatmul.mubr.bf16.gmra.mrb[0].mxu0 %v8550
  %v8651 = vpop.f32.mrb[0].mxu0
  %v8652 = vadd.f32 0.0, %v8651
  %v8653 = vpop.f32.mrb[0].mxu0
  %v8654 = vpop.f32.mrb[0].mxu0
  %v8655 = vadd.f32 0.0, %v8654
  %v8656 = vpop.f32.mrb[0].mxu0
  %8657 = vmatprep.mubr.bf16.mxu0 0
  %8658 = vmatmul.mubr.bf16.gmra.mrb[0].mxu0 %v8553
  %v8659 = vpop.f32.mrb[0].mxu0
  %v8660 = vadd.f32 0.0, %v8659
  %v8661 = vpop.f32.mrb[0].mxu0
  %v8662 = vpop.f32.mrb[0].mxu0
  %v8663 = vadd.f32 0.0, %v8662
  %v8664 = vpop.f32.mrb[0].mxu0
  %8665 = vmatprep.mubr.bf16.mxu0 0
  %8666 = vmatmul.mubr.bf16.gmra.mrb[0].mxu0 %v8556
  %v8667 = vpop.f32.mrb[0].mxu0
  %v8668 = vadd.f32 0.0, %v8667
  %v8669 = vpop.f32.mrb[0].mxu0
  %v8670 = vpop.f32.mrb[0].mxu0
  %v8671 = vadd.f32 0.0, %v8670
  %v8672 = vpop.f32.mrb[0].mxu0
  %8673 = vmatprep.mubr.bf16.mxu0 0
  %8674 = vmatmul.mubr.bf16.gmra.mrb[0].mxu0 %v8559
  %v8675 = vpop.f32.mrb[0].mxu0
  %v8676 = vadd.f32 0.0, %v8675
  %v8677 = vpop.f32.mrb[0].mxu0
  %v8678 = vpop.f32.mrb[0].mxu0
  %v8679 = vadd.f32 0.0, %v8678
  %v8680 = vpop.f32.mrb[0].mxu0
  %8681 = vmatprep.mubr.bf16.mxu0 0
  %8682 = vmatmul.mubr.bf16.gmra.mrb[0].mxu0 %v8562
  %v8683 = vpop.f32.mrb[0].mxu0
  %v8684 = vadd.f32 0.0, %v8683
  %v8685 = vpop.f32.mrb[0].mxu0
  %v8686 = vpop.f32.mrb[0].mxu0
  %v8687 = vadd.f32 0.0, %v8686
  %v8688 = vpop.f32.mrb[0].mxu0
  %8689 = vmatprep.mubr.bf16.mxu0 0
  %8690 = vmatmul.mubr.bf16.gmra.mrb[0].mxu0 %v8565
  %v8691 = vpop.f32.mrb[0].mxu0
  %v8692 = vadd.f32 0.0, %v8691
  %v8693 = vpop.f32.mrb[0].mxu0
  %v8694 = vpop.f32.mrb[0].mxu0
  %v8695 = vadd.f32 0.0, %v8694
  %v8696 = vpop.f32.mrb[0].mxu0
  %8697 = vmatprep.mubr.bf16.mxu0 0
  %8698 = vmatmul.mubr.bf16.gmra.mrb[0].mxu0 %v8568
  %v8699 = vpop.f32.mrb[0].mxu0
  %v8700 = vadd.f32 0.0, %v8699
  %v8701 = vpop.f32.mrb[0].mxu0
  %v8702 = vpop.f32.mrb[0].mxu0
  %v8703 = vadd.f32 0.0, %v8702
  %v8704 = vpop.f32.mrb[0].mxu0
  %8705 = vmatprep.mubr.bf16.mxu0 0
  %8706 = vmatmul.mubr.bf16.gmra.mrb[0].mxu0 %v8571
  %v8707 = vpop.f32.mrb[0].mxu0
  %v8708 = vadd.f32 0.0, %v8707
  %v8709 = vpop.f32.mrb[0].mxu0
  %v8710 = vpop.f32.mrb[0].mxu0
  %v8711 = vadd.f32 0.0, %v8710
  %v8712 = vpop.f32.mrb[0].mxu0
  %8713 = vmatprep.mubr.bf16.mxu0 0
  %8714 = vmatmul.mubr.bf16.gmra.mrb[0].mxu0 %v8574
  %v8715 = vpop.f32.mrb[0].mxu0
  %v8716 = vadd.f32 0.0, %v8715
  %v8717 = vpop.f32.mrb[0].mxu0
  %v8718 = vpop.f32.mrb[0].mxu0
  %v8719 = vadd.f32 0.0, %v8718
  %v8720 = vpop.f32.mrb[0].mxu0
  %8721 = vmatprep.mubr.bf16.mxu0 0
  %8722 = vmatmul.mubr.bf16.gmra.mrb[0].mxu0 %v8577
  %v8723 = vpop.f32.mrb[0].mxu0
  %v8724 = vadd.f32 0.0, %v8723
  %v8725 = vpop.f32.mrb[0].mxu0
  %v8726 = vpop.f32.mrb[0].mxu0
  %v8727 = vadd.f32 0.0, %v8726
  %v8728 = vpop.f32.mrb[0].mxu0
  %8729 = vmatprep.mubr.bf16.mxu0 0
  %8730 = vmatmul.mubr.bf16.gmra.mrb[0].mxu0 %v8580
  %v8731 = vpop.f32.mrb[0].mxu0
  %v8732 = vadd.f32 0.0, %v8731
  %v8733 = vpop.f32.mrb[0].mxu0
  %v8734 = vpop.f32.mrb[0].mxu0
  %v8735 = vadd.f32 0.0, %v8734
  %v8736 = vpop.f32.mrb[0].mxu0
  %8737 = vmatprep.mubr.bf16.mxu0 0
  %8738 = vmatmul.mubr.bf16.gmra.mrb[0].mxu0 %v8583
  %v8739 = vpop.f32.mrb[0].mxu0
  %v8740 = vadd.f32 0.0, %v8739
  %v8741 = vpop.f32.mrb[0].mxu0
  %v8742 = vpop.f32.mrb[0].mxu0
  %v8743 = vadd.f32 0.0, %v8742
  %v8744 = vpop.f32.mrb[0].mxu0
  %8745 = vmatprep.mubr.bf16.mxu0 0
  %8746 = vmatmul.mubr.bf16.gmra.mrb[0].mxu0 %v8586
  %v8747 = vpop.f32.mrb[0].mxu0
  %v8748 = vadd.f32 0.0, %v8747
  %v8749 = vpop.f32.mrb[0].mxu0
  %v8750 = vpop.f32.mrb[0].mxu0
  %v8751 = vadd.f32 0.0, %v8750
  %v8752 = vpop.f32.mrb[0].mxu0
  %8753 = vmatprep.mubr.bf16.mxu0 0
  %8754 = vmatmul.mubr.bf16.gmra.mrb[0].mxu0 %v8589
  %v8755 = vpop.f32.mrb[0].mxu0
  %v8756 = vadd.f32 0.0, %v8755
  %v8757 = vpop.f32.mrb[0].mxu0
  %v8758 = vpop.f32.mrb[0].mxu0
  %v8759 = vadd.f32 0.0, %v8758
  %v8760 = vpop.f32.mrb[0].mxu0
  %8761 = vmatprep.mubr.bf16.mxu0 0
  %8762 = vmatmul.mubr.bf16.gmra.mrb[0].mxu0 %v8592
  %v8763 = vpop.f32.mrb[0].mxu0
  %v8764 = vadd.f32 0.0, %v8763
  %v8765 = vpop.f32.mrb[0].mxu0
  %v8766 = vpop.f32.mrb[0].mxu0
  %v8767 = vadd.f32 0.0, %v8766
  %v8768 = vpop.f32.mrb[0].mxu0
  %8769 = vmatprep.mubr.bf16.mxu0 0
  %8770 = vmatmul.mubr.bf16.gmra.mrb[0].mxu0 %v8595
  %v8771 = vpop.f32.mrb[0].mxu0
  %v8772 = vadd.f32 0.0, %v8771
  %v8773 = vpop.f32.mrb[0].mxu0
  %v8774 = vpop.f32.mrb[0].mxu0
  %v8775 = vadd.f32 0.0, %v8774
  %v8776 = vpop.f32.mrb[0].mxu0
  %8777 = vmatprep.mubr.bf16.mxu0 0
  %8778 = vmatmul.mubr.bf16.gmra.mrb[0].mxu0 %v8598
  %v8779 = vpop.f32.mrb[0].mxu0
  %v8780 = vadd.f32 0.0, %v8779
  %v8781 = vpop.f32.mrb[0].mxu0
  %v8782 = vpop.f32.mrb[0].mxu0
  %v8783 = vadd.f32 0.0, %v8782
  %v8784 = vpop.f32.mrb[0].mxu0
  %8785 = vmatprep.mubr.bf16.mxu0 0
  %8786 = vmatmul.mubr.bf16.gmra.mrb[0].mxu0 %v8601
  %v8787 = vpop.f32.mrb[0].mxu0
  %v8788 = vadd.f32 0.0, %v8787
  %v8789 = vpop.f32.mrb[0].mxu0
  %v8790 = vpop.f32.mrb[0].mxu0
  %v8791 = vadd.f32 0.0, %v8790
  %v8792 = vpop.f32.mrb[0].mxu0
  %8793 = vmatprep.mubr.bf16.mxu0 0
  %8794 = vmatmul.mubr.bf16.gmra.mrb[0].mxu0 %v8604
  %v8795 = vpop.f32.mrb[0].mxu0
  %v8796 = vadd.f32 0.0, %v8795
  %v8797 = vpop.f32.mrb[0].mxu0
  %v8798 = vpop.f32.mrb[0].mxu0
  %v8799 = vadd.f32 0.0, %v8798
  %v8800 = vpop.f32.mrb[0].mxu0
  %8801 = vdwg.mxu0
  %v8802 = vadd.f32 %v8367, %v8644
  %v8803 = vadd.f32 %v8370, %v8647
  %v8804 = vadd.f32 %v8375, %v8652
  %v8805 = vadd.f32 %v8378, %v8655
  %v8806 = vadd.f32 %v8383, %v8660
  %v8807 = vadd.f32 %v8386, %v8663
  %v8808 = vadd.f32 %v8391, %v8668
  %v8809 = vadd.f32 %v8394, %v8671
  %v8810 = vadd.f32 %v8399, %v8676
  %v8811 = vadd.f32 %v8402, %v8679
  %v8812 = vadd.f32 %v8407, %v8684
  %v8813 = vadd.f32 %v8410, %v8687
  %v8814 = vadd.f32 %v8415, %v8692
  %v8815 = vadd.f32 %v8418, %v8695
  %v8816 = vadd.f32 %v8423, %v8700
  %v8817 = vadd.f32 %v8426, %v8703
  %v8818 = vadd.f32 %v8431, %v8708
  %v8819 = vadd.f32 %v8434, %v8711
  %v8820 = vadd.f32 %v8439, %v8716
  %v8821 = vadd.f32 %v8442, %v8719
  %v8822 = vadd.f32 %v8447, %v8724
  %v8823 = vadd.f32 %v8450, %v8727
  %v8824 = vadd.f32 %v8455, %v8732
  %v8825 = vadd.f32 %v8458, %v8735
  %v8826 = vadd.f32 %v8463, %v8740
  %v8827 = vadd.f32 %v8466, %v8743
  %v8828 = vadd.f32 %v8471, %v8748
  %v8829 = vadd.f32 %v8474, %v8751
  %v8830 = vadd.f32 %v8479, %v8756
  %v8831 = vadd.f32 %v8482, %v8759
  %v8832 = vadd.f32 %v8487, %v8764
  %v8833 = vadd.f32 %v8490, %v8767
  %v8834 = vadd.f32 %v8495, %v8772
  %v8835 = vadd.f32 %v8498, %v8775
  %v8836 = vadd.f32 %v8503, %v8780
  %v8837 = vadd.f32 %v8506, %v8783
  %v8838 = vadd.f32 %v8511, %v8788
  %v8839 = vadd.f32 %v8514, %v8791
  %v8840 = vadd.f32 %v8519, %v8796
  %v8841 = vadd.f32 %v8522, %v8799
  %v8842 = vpack.c.bf16 %v7406, %v7403
  %v8843 = vpack.c.bf16 %v7414, %v7411
  %v8844 = vpack.c.bf16 %v7467, %v7464
  %v8845 = vpack.c.bf16 %v7475, %v7472
  %v8846 = vpack.c.bf16 %v7528, %v7525
  %v8847 = vpack.c.bf16 %v7536, %v7533
  %v8848 = vpack.c.bf16 %v7589, %v7586
  %v8849 = vpack.c.bf16 %v7597, %v7594
  %v8850 = vpack.c.bf16 %v7650, %v7647
  %v8851 = vpack.c.bf16 %v7658, %v7655
  %v8852 = vpack.c.bf16 %v7711, %v7708
  %v8853 = vpack.c.bf16 %v7719, %v7716
  %v8854 = vpack.c.bf16 %v7772, %v7769
  %v8855 = vpack.c.bf16 %v7780, %v7777
  %v8856 = vpack.c.bf16 %v7833, %v7830
  %v8857 = vpack.c.bf16 %v7841, %v7838
  %v8858 = vpack.c.bf16 %v7894, %v7891
  %v8859 = vpack.c.bf16 %v7902, %v7899
  %v8860 = vpack.c.bf16 %v7955, %v7952
  %v8861 = vpack.c.bf16 %v7963, %v7960
  %v8862 = vpack.c.bf16 %v7969, %v7969
  %v8864 = vsel %vm834, %v8842, 0
  %v8867 = vsel %vm834, %v8843, 0
  %v8870 = vsel %vm834, %v8844, 0
  %v8873 = vsel %vm834, %v8845, 0
  %v8876 = vsel %vm834, %v8846, 0
  %v8879 = vsel %vm834, %v8847, 0
  %v8882 = vsel %vm834, %v8848, 0
  %v8885 = vsel %vm834, %v8849, 0
  %v8888 = vsel %vm834, %v8850, 0
  %v8891 = vsel %vm834, %v8851, 0
  %v8894 = vsel %vm834, %v8852, 0
  %v8897 = vsel %vm834, %v8853, 0
  %v8900 = vsel %vm834, %v8854, 0
  %v8903 = vsel %vm834, %v8855, 0
  %v8906 = vsel %vm834, %v8856, 0
  %v8909 = vsel %vm834, %v8857, 0
  %v8912 = vsel %vm834, %v8858, 0
  %v8915 = vsel %vm834, %v8859, 0
  %v8918 = vsel %vm834, %v8860, 0
  %v8921 = vsel %vm834, %v8861, 0
  %v8924 = vsel %vm8072, %v8862, 0
  %8926 = vmatprep.subr.bf16.mxu0 0
  %8927 = vmatpush1.bf16.msra.mxu0 %v8924
  %8928 = vmatprep.subr.bf16.mxu0 0
  %8929 = vmatpush1.bf16.msra.mxu0 0
  %8930 = vmatprep.subr.bf16.mxu0 0
  %8931 = vmatpush1.bf16.msra.mxu0 0
  %8932 = vmatprep.subr.bf16.mxu0 0
  %8933 = vmatpush1.bf16.msra.mxu0 0
  %8934 = vmatprep.subr.bf16.mxu0 0
  %8935 = vmatpush1.bf16.msra.mxu0 0
  %8936 = vmatprep.subr.bf16.mxu0 0
  %8937 = vmatpush1.bf16.msra.mxu0 0
  %8938 = vmatprep.subr.bf16.mxu0 0
  %8939 = vmatpush1.bf16.msra.mxu0 0
  %8940 = vmatprep.subr.bf16.mxu0 0
  %8941 = vmatpush1.bf16.msra.mxu0 0
  %8942 = vmatprep.subr.bf16.mxu0 0
  %8943 = vmatpush1.bf16.msra.mxu0 0
  %8944 = vmatprep.subr.bf16.mxu0 0
  %8945 = vmatpush1.bf16.msra.mxu0 0
  %8946 = vmatprep.subr.bf16.mxu0 0
  %8947 = vmatpush1.bf16.msra.mxu0 0
  %8948 = vmatprep.subr.bf16.mxu0 0
  %8949 = vmatpush1.bf16.msra.mxu0 0
  %8950 = vmatprep.subr.bf16.mxu0 0
  %8951 = vmatpush1.bf16.msra.mxu0 0
  %8952 = vmatprep.subr.bf16.mxu0 0
  %8953 = vmatpush1.bf16.msra.mxu0 0
  %8954 = vmatprep.subr.bf16.mxu0 0
  %8955 = vmatpush1.bf16.msra.mxu0 0
  %8956 = vmatprep.subr.bf16.mxu0 0
  %8957 = vmatpush1.bf16.msra.mxu0 0
  %8958 = vmatprep.mubr.bf16.mxu0 0
  %8959 = vmatmul.mubr.bf16.gmra.mrb[0].mxu0 %v8864
  %v8960 = vpop.f32.mrb[0].mxu0
  %v8961 = vadd.f32 0.0, %v8960
  %v8962 = vpop.f32.mrb[0].mxu0
  %v8963 = vpop.f32.mrb[0].mxu0
  %v8964 = vadd.f32 0.0, %v8963
  %v8965 = vpop.f32.mrb[0].mxu0
  %8966 = vmatprep.mubr.bf16.mxu0 0
  %8967 = vmatmul.mubr.bf16.gmra.mrb[0].mxu0 %v8867
  %v8968 = vpop.f32.mrb[0].mxu0
  %v8969 = vadd.f32 0.0, %v8968
  %v8970 = vpop.f32.mrb[0].mxu0
  %v8971 = vpop.f32.mrb[0].mxu0
  %v8972 = vadd.f32 0.0, %v8971
  %v8973 = vpop.f32.mrb[0].mxu0
  %8974 = vmatprep.mubr.bf16.mxu0 0
  %8975 = vmatmul.mubr.bf16.gmra.mrb[0].mxu0 %v8870
  %v8976 = vpop.f32.mrb[0].mxu0
  %v8977 = vadd.f32 0.0, %v8976
  %v8978 = vpop.f32.mrb[0].mxu0
  %v8979 = vpop.f32.mrb[0].mxu0
  %v8980 = vadd.f32 0.0, %v8979
  %v8981 = vpop.f32.mrb[0].mxu0
  %8982 = vmatprep.mubr.bf16.mxu0 0
  %8983 = vmatmul.mubr.bf16.gmra.mrb[0].mxu0 %v8873
  %v8984 = vpop.f32.mrb[0].mxu0
  %v8985 = vadd.f32 0.0, %v8984
  %v8986 = vpop.f32.mrb[0].mxu0
  %v8987 = vpop.f32.mrb[0].mxu0
  %v8988 = vadd.f32 0.0, %v8987
  %v8989 = vpop.f32.mrb[0].mxu0
  %8990 = vmatprep.mubr.bf16.mxu0 0
  %8991 = vmatmul.mubr.bf16.gmra.mrb[0].mxu0 %v8876
  %v8992 = vpop.f32.mrb[0].mxu0
  %v8993 = vadd.f32 0.0, %v8992
  %v8994 = vpop.f32.mrb[0].mxu0
  %v8995 = vpop.f32.mrb[0].mxu0
  %v8996 = vadd.f32 0.0, %v8995
  %v8997 = vpop.f32.mrb[0].mxu0
  %8998 = vmatprep.mubr.bf16.mxu0 0
  %8999 = vmatmul.mubr.bf16.gmra.mrb[0].mxu0 %v8879
  %v9000 = vpop.f32.mrb[0].mxu0
  %v9001 = vadd.f32 0.0, %v9000
  %v9002 = vpop.f32.mrb[0].mxu0
  %v9003 = vpop.f32.mrb[0].mxu0
  %v9004 = vadd.f32 0.0, %v9003
  %v9005 = vpop.f32.mrb[0].mxu0
  %9006 = vmatprep.mubr.bf16.mxu0 0
  %9007 = vmatmul.mubr.bf16.gmra.mrb[0].mxu0 %v8882
  %v9008 = vpop.f32.mrb[0].mxu0
  %v9009 = vadd.f32 0.0, %v9008
  %v9010 = vpop.f32.mrb[0].mxu0
  %v9011 = vpop.f32.mrb[0].mxu0
  %v9012 = vadd.f32 0.0, %v9011
  %v9013 = vpop.f32.mrb[0].mxu0
  %9014 = vmatprep.mubr.bf16.mxu0 0
  %9015 = vmatmul.mubr.bf16.gmra.mrb[0].mxu0 %v8885
  %v9016 = vpop.f32.mrb[0].mxu0
  %v9017 = vadd.f32 0.0, %v9016
  %v9018 = vpop.f32.mrb[0].mxu0
  %v9019 = vpop.f32.mrb[0].mxu0
  %v9020 = vadd.f32 0.0, %v9019
  %v9021 = vpop.f32.mrb[0].mxu0
  %9022 = vmatprep.mubr.bf16.mxu0 0
  %9023 = vmatmul.mubr.bf16.gmra.mrb[0].mxu0 %v8888
  %v9024 = vpop.f32.mrb[0].mxu0
  %v9025 = vadd.f32 0.0, %v9024
  %v9026 = vpop.f32.mrb[0].mxu0
  %v9027 = vpop.f32.mrb[0].mxu0
  %v9028 = vadd.f32 0.0, %v9027
  %v9029 = vpop.f32.mrb[0].mxu0
  %9030 = vmatprep.mubr.bf16.mxu0 0
  %9031 = vmatmul.mubr.bf16.gmra.mrb[0].mxu0 %v8891
  %v9032 = vpop.f32.mrb[0].mxu0
  %v9033 = vadd.f32 0.0, %v9032
  %v9034 = vpop.f32.mrb[0].mxu0
  %v9035 = vpop.f32.mrb[0].mxu0
  %v9036 = vadd.f32 0.0, %v9035
  %v9037 = vpop.f32.mrb[0].mxu0
  %9038 = vmatprep.mubr.bf16.mxu0 0
  %9039 = vmatmul.mubr.bf16.gmra.mrb[0].mxu0 %v8894
  %v9040 = vpop.f32.mrb[0].mxu0
  %v9041 = vadd.f32 0.0, %v9040
  %v9042 = vpop.f32.mrb[0].mxu0
  %v9043 = vpop.f32.mrb[0].mxu0
  %v9044 = vadd.f32 0.0, %v9043
  %v9045 = vpop.f32.mrb[0].mxu0
  %9046 = vmatprep.mubr.bf16.mxu0 0
  %9047 = vmatmul.mubr.bf16.gmra.mrb[0].mxu0 %v8897
  %v9048 = vpop.f32.mrb[0].mxu0
  %v9049 = vadd.f32 0.0, %v9048
  %v9050 = vpop.f32.mrb[0].mxu0
  %v9051 = vpop.f32.mrb[0].mxu0
  %v9052 = vadd.f32 0.0, %v9051
  %v9053 = vpop.f32.mrb[0].mxu0
  %9054 = vmatprep.mubr.bf16.mxu0 0
  %9055 = vmatmul.mubr.bf16.gmra.mrb[0].mxu0 %v8900
  %v9056 = vpop.f32.mrb[0].mxu0
  %v9057 = vadd.f32 0.0, %v9056
  %v9058 = vpop.f32.mrb[0].mxu0
  %v9059 = vpop.f32.mrb[0].mxu0
  %v9060 = vadd.f32 0.0, %v9059
  %v9061 = vpop.f32.mrb[0].mxu0
  %9062 = vmatprep.mubr.bf16.mxu0 0
  %9063 = vmatmul.mubr.bf16.gmra.mrb[0].mxu0 %v8903
  %v9064 = vpop.f32.mrb[0].mxu0
  %v9065 = vadd.f32 0.0, %v9064
  %v9066 = vpop.f32.mrb[0].mxu0
  %v9067 = vpop.f32.mrb[0].mxu0
  %v9068 = vadd.f32 0.0, %v9067
  %v9069 = vpop.f32.mrb[0].mxu0
  %9070 = vmatprep.mubr.bf16.mxu0 0
  %9071 = vmatmul.mubr.bf16.gmra.mrb[0].mxu0 %v8906
  %v9072 = vpop.f32.mrb[0].mxu0
  %v9073 = vadd.f32 0.0, %v9072
  %v9074 = vpop.f32.mrb[0].mxu0
  %v9075 = vpop.f32.mrb[0].mxu0
  %v9076 = vadd.f32 0.0, %v9075
  %v9077 = vpop.f32.mrb[0].mxu0
  %9078 = vmatprep.mubr.bf16.mxu0 0
  %9079 = vmatmul.mubr.bf16.gmra.mrb[0].mxu0 %v8909
  %v9080 = vpop.f32.mrb[0].mxu0
  %v9081 = vadd.f32 0.0, %v9080
  %v9082 = vpop.f32.mrb[0].mxu0
  %v9083 = vpop.f32.mrb[0].mxu0
  %v9084 = vadd.f32 0.0, %v9083
  %v9085 = vpop.f32.mrb[0].mxu0
  %9086 = vmatprep.mubr.bf16.mxu0 0
  %9087 = vmatmul.mubr.bf16.gmra.mrb[0].mxu0 %v8912
  %v9088 = vpop.f32.mrb[0].mxu0
  %v9089 = vadd.f32 0.0, %v9088
  %v9090 = vpop.f32.mrb[0].mxu0
  %v9091 = vpop.f32.mrb[0].mxu0
  %v9092 = vadd.f32 0.0, %v9091
  %v9093 = vpop.f32.mrb[0].mxu0
  %9094 = vmatprep.mubr.bf16.mxu0 0
  %9095 = vmatmul.mubr.bf16.gmra.mrb[0].mxu0 %v8915
  %v9096 = vpop.f32.mrb[0].mxu0
  %v9097 = vadd.f32 0.0, %v9096
  %v9098 = vpop.f32.mrb[0].mxu0
  %v9099 = vpop.f32.mrb[0].mxu0
  %v9100 = vadd.f32 0.0, %v9099
  %v9101 = vpop.f32.mrb[0].mxu0
  %9102 = vmatprep.mubr.bf16.mxu0 0
  %9103 = vmatmul.mubr.bf16.gmra.mrb[0].mxu0 %v8918
  %v9104 = vpop.f32.mrb[0].mxu0
  %v9105 = vadd.f32 0.0, %v9104
  %v9106 = vpop.f32.mrb[0].mxu0
  %v9107 = vpop.f32.mrb[0].mxu0
  %v9108 = vadd.f32 0.0, %v9107
  %v9109 = vpop.f32.mrb[0].mxu0
  %9110 = vmatprep.mubr.bf16.mxu0 0
  %9111 = vmatmul.mubr.bf16.gmra.mrb[0].mxu0 %v8921
  %v9112 = vpop.f32.mrb[0].mxu0
  %v9113 = vadd.f32 0.0, %v9112
  %v9114 = vpop.f32.mrb[0].mxu0
  %v9115 = vpop.f32.mrb[0].mxu0
  %v9116 = vadd.f32 0.0, %v9115
  %v9117 = vpop.f32.mrb[0].mxu0
  %9118 = vdwg.mxu0
  %v9119 = vadd.f32 %v8802, %v8961
  %v9120 = vadd.f32 %v8803, %v8964
  %v9121 = vadd.f32 %v8804, %v8969
  %v9122 = vadd.f32 %v8805, %v8972
  %v9123 = vadd.f32 %v8806, %v8977
  %v9124 = vadd.f32 %v8807, %v8980
  %v9125 = vadd.f32 %v8808, %v8985
  %v9126 = vadd.f32 %v8809, %v8988
  %v9127 = vadd.f32 %v8810, %v8993
  %v9128 = vadd.f32 %v8811, %v8996
  %v9129 = vadd.f32 %v8812, %v9001
  %v9130 = vadd.f32 %v8813, %v9004
  %v9131 = vadd.f32 %v8814, %v9009
  %v9132 = vadd.f32 %v8815, %v9012
  %v9133 = vadd.f32 %v8816, %v9017
  %v9134 = vadd.f32 %v8817, %v9020
  %v9135 = vadd.f32 %v8818, %v9025
  %v9136 = vadd.f32 %v8819, %v9028
  %v9137 = vadd.f32 %v8820, %v9033
  %v9138 = vadd.f32 %v8821, %v9036
  %v9139 = vadd.f32 %v8822, %v9041
  %v9140 = vadd.f32 %v8823, %v9044
  %v9141 = vadd.f32 %v8824, %v9049
  %v9142 = vadd.f32 %v8825, %v9052
  %v9143 = vadd.f32 %v8826, %v9057
  %v9144 = vadd.f32 %v8827, %v9060
  %v9145 = vadd.f32 %v8828, %v9065
  %v9146 = vadd.f32 %v8829, %v9068
  %v9147 = vadd.f32 %v8830, %v9073
  %v9148 = vadd.f32 %v8831, %v9076
  %v9149 = vadd.f32 %v8832, %v9081
  %v9150 = vadd.f32 %v8833, %v9084
  %v9151 = vadd.f32 %v8834, %v9089
  %v9152 = vadd.f32 %v8835, %v9092
  %v9153 = vadd.f32 %v8836, %v9097
  %v9154 = vadd.f32 %v8837, %v9100
  %v9155 = vadd.f32 %v8838, %v9105
  %v9156 = vadd.f32 %v8839, %v9108
  %v9157 = vadd.f32 %v8840, %v9113
  %v9158 = vadd.f32 %v8841, %v9116
  %v9159 = vld [vmem:[%s4] sm:$0x1]
  %v9161 = vlaneseq
  %v9162 = vshrl.u32 %v9161, 7
  %v9163 = vsub.s32 0, %v9162
  %v9164 = vrot.slane %v9159, %v9163
  %v9166 = vadd.f32 %v9119, %v9164
  %v9167 = vadd.f32 %v9120, %v9164
  %v9168 = vadd.f32 %v9121, %v9164
  %v9169 = vadd.f32 %v9122, %v9164
  %v9170 = vadd.f32 %v9123, %v9164
  %v9171 = vadd.f32 %v9124, %v9164
  %v9172 = vadd.f32 %v9125, %v9164
  %v9173 = vadd.f32 %v9126, %v9164
  %v9174 = vadd.f32 %v9127, %v9164
  %v9175 = vadd.f32 %v9128, %v9164
  %v9176 = vadd.f32 %v9129, %v9164
  %v9177 = vadd.f32 %v9130, %v9164
  %v9178 = vadd.f32 %v9131, %v9164
  %v9179 = vadd.f32 %v9132, %v9164
  %v9180 = vadd.f32 %v9133, %v9164
  %v9181 = vadd.f32 %v9134, %v9164
  %v9182 = vadd.f32 %v9135, %v9164
  %v9183 = vadd.f32 %v9136, %v9164
  %v9184 = vadd.f32 %v9137, %v9164
  %v9185 = vadd.f32 %v9138, %v9164
  %v9186 = vadd.f32 %v9139, %v9164
  %v9187 = vadd.f32 %v9140, %v9164
  %v9188 = vadd.f32 %v9141, %v9164
  %v9189 = vadd.f32 %v9142, %v9164
  %v9190 = vadd.f32 %v9143, %v9164
  %v9191 = vadd.f32 %v9144, %v9164
  %v9192 = vadd.f32 %v9145, %v9164
  %v9193 = vadd.f32 %v9146, %v9164
  %v9194 = vadd.f32 %v9147, %v9164
  %v9195 = vadd.f32 %v9148, %v9164
  %v9196 = vadd.f32 %v9149, %v9164
  %v9197 = vadd.f32 %v9150, %v9164
  %v9198 = vadd.f32 %v9151, %v9164
  %v9199 = vadd.f32 %v9152, %v9164
  %v9200 = vadd.f32 %v9153, %v9164
  %v9201 = vadd.f32 %v9154, %v9164
  %v9202 = vadd.f32 %v9155, %v9164
  %v9203 = vadd.f32 %v9156, %v9164
  %v9204 = vadd.f32 %v9157, %v9164
  %v9205 = vadd.f32 %v9158, %v9164
  %9206 = vst.msk [vmem:[%s6] sm:$0xff] %vm94, %v9166
  %9207 = vst.msk [vmem:[%s6 + $0x8] sm:$0xff] %vm94, %v9167
  %9208 = vst.msk [vmem:[%s6 + $0x10] sm:$0xff] %vm94, %v9168
  %9209 = vst.msk [vmem:[%s6 + $0x18] sm:$0xff] %vm94, %v9169
  %9210 = vst.msk [vmem:[%s6 + $0x20] sm:$0xff] %vm94, %v9170
  %9211 = vst.msk [vmem:[%s6 + $0x28] sm:$0xff] %vm94, %v9171
  %9212 = vst.msk [vmem:[%s6 + $0x30] sm:$0xff] %vm94, %v9172
  %9213 = vst.msk [vmem:[%s6 + $0x38] sm:$0xff] %vm94, %v9173
  %9214 = vst.msk [vmem:[%s6 + $0x40] sm:$0xff] %vm94, %v9174
  %9215 = vst.msk [vmem:[%s6 + $0x48] sm:$0xff] %vm94, %v9175
  %9216 = vst.msk [vmem:[%s6 + $0x50] sm:$0xff] %vm94, %v9176
  %9217 = vst.msk [vmem:[%s6 + $0x58] sm:$0xff] %vm94, %v9177
  %9218 = vst.msk [vmem:[%s6 + $0x60] sm:$0xff] %vm94, %v9178
  %9219 = vst.msk [vmem:[%s6 + $0x68] sm:$0xff] %vm94, %v9179
  %9220 = vst.msk [vmem:[%s6 + $0x70] sm:$0xff] %vm94, %v9180
  %9221 = vst.msk [vmem:[%s6 + $0x78] sm:$0xff] %vm94, %v9181
  %9222 = vst.msk [vmem:[%s6 + $0x80] sm:$0xff] %vm94, %v9182
  %9223 = vst.msk [vmem:[%s6 + $0x88] sm:$0xff] %vm94, %v9183
  %9224 = vst.msk [vmem:[%s6 + $0x90] sm:$0xff] %vm94, %v9184
  %9225 = vst.msk [vmem:[%s6 + $0x98] sm:$0xff] %vm94, %v9185
  %9226 = vst.msk [vmem:[%s6 + $0xa0] sm:$0xff] %vm94, %v9186
  %9227 = vst.msk [vmem:[%s6 + $0xa8] sm:$0xff] %vm94, %v9187
  %9228 = vst.msk [vmem:[%s6 + $0xb0] sm:$0xff] %vm94, %v9188
  %9229 = vst.msk [vmem:[%s6 + $0xb8] sm:$0xff] %vm94, %v9189
  %9230 = vst.msk [vmem:[%s6 + $0xc0] sm:$0xff] %vm94, %v9190
  %9231 = vst.msk [vmem:[%s6 + $0xc8] sm:$0xff] %vm94, %v9191
  %9232 = vst.msk [vmem:[%s6 + $0xd0] sm:$0xff] %vm94, %v9192
  %9233 = vst.msk [vmem:[%s6 + $0xd8] sm:$0xff] %vm94, %v9193
  %9234 = vst.msk [vmem:[%s6 + $0xe0] sm:$0xff] %vm94, %v9194
  %9235 = vst.msk [vmem:[%s6 + $0xe8] sm:$0xff] %vm94, %v9195
  %9236 = vst.msk [vmem:[%s6 + $0xf0] sm:$0xff] %vm94, %v9196
  %9237 = vst.msk [vmem:[%s6 + $0xf8] sm:$0xff] %vm94, %v9197
  %9238 = vst.msk [vmem:[%s6 + $0x100] sm:$0xff] %vm94, %v9198
  %9239 = vst.msk [vmem:[%s6 + $0x108] sm:$0xff] %vm94, %v9199
  %9240 = vst.msk [vmem:[%s6 + $0x110] sm:$0xff] %vm94, %v9200
  %9241 = vst.msk [vmem:[%s6 + $0x118] sm:$0xff] %vm94, %v9201
  %9242 = vst.msk [vmem:[%s6 + $0x120] sm:$0xff] %vm94, %v9202
  %9243 = vst.msk [vmem:[%s6 + $0x128] sm:$0xff] %vm94, %v9203
  %9244 = vst.msk [vmem:[%s6 + $0x130] sm:$0xff] %vm94, %v9204
  %9245 = vst.msk [vmem:[%s6 + $0x138] sm:$0xff] %vm94, %v9205
  // Predicated region
  $region26: #{window_attention_pallas.1} parent=0 // pred_check
    _
  $region27: #{window_attention_pallas.1} parent=0 // pred_check_branch
    %9247 = sbr.rel (0) target = $region29
  $region28: #{window_attention_pallas.1} parent=0 // pred_region
    _
  $region29: #{window_attention_pallas.1} parent=0 // pred_fallthru
    _
  // Predicated region
  $region30: #{window_attention_pallas.1} parent=0 // pred_check
    _
  $region31: #{window_attention_pallas.1} parent=0 // pred_check_branch
    %9249 = sbr.rel (0) target = $region33
  $region32: #{window_attention_pallas.1} parent=0 // pred_region
    _
  $region33: #{window_attention_pallas.1} parent=0 // pred_fallthru
    _

</llo_original>
